<compile_context>
chip_gen: v7x
topology: tpu7x:2x2x1
jax: 0.10.0
libtpu: 0.0.40
codegen_flags: <defaults>
</compile_context>

<pallas_src>
import functools
import math

import jax
import jax.numpy as jnp
from jax.experimental import pallas as pl
from jax.experimental.pallas import tpu as pltpu

EMBED_DIM = 32
NUM_MODES = 4
NUM_HEADS = 4
HEAD_DIM = EMBED_DIM // NUM_HEADS

# indices into the original per-layer linear weights (same parameterization as before)
(I_SA_QC, I_SA_QP, I_SA_KC, I_SA_KP, I_SA_V,
 I_NORM1, I_CA_QPOS, I_CA_QSIN, I_CA_Q, I_CA_K, I_CA_KPOS,
 I_LIN_V1, I_LIN_V2, I_NORM2, I_LIN1, I_LIN2) = range(16)
# layer-norm indices
LN_SA, LN_V1, LN_V2 = 0, 1, 2

# indices into the stacked fused square weights (all [E, E], pre-transposed: kernel does x @ W)
(W_AQ, W_AK, W_AV, W_BQ, W_BK, W_OUTT, W_N1, W_QX, W_QPOS, W_QSIN,
 W_KCA, W_V1, W_V2, W_KPOS, W_F1, W_F2) = range(16)
# indices into the stacked fused biases (all [E])
(B_CQ, B_CK, B_CV, B_OUT, B_N1, B_CAQ, B_QSIN, B_KCA, B_V1, B_V2,
 B_KPOS, B_F1, B_F2) = range(13)
NUM_W, NUM_B = 16, 13


# ----------------------------------------------------------------------------------
# Kernel
# ----------------------------------------------------------------------------------
def route_encoder_kernel(ego_ref, qpos_ref, qsin_ref, edge_ref, node_ref, kvpos_ref,
                         g_ref, gt_ref, r_ref, s_ref, st_ref,
                         w_ref, b_ref, lnw_ref, lnb_ref, out_ref,
                         *, num_nodes, num_heads):
    f32 = jnp.float32
    E = ego_ref.shape[-1]
    H = num_heads
    D = E // H
    N = num_nodes
    MN = ego_ref.shape[0]                    # num_modes * num_nodes, mode-major rows (m, n)

    def W(i):
        return w_ref[i]                      # [E, E]

    def bias(i):
        return b_ref[i:i + 1, :]             # [1, E]

    def dot(a, bm):
        return jnp.dot(a, bm, preferred_element_type=f32)

    LNW = lnw_ref[...]
    LNB = lnb_ref[...]

    def layernorm(x, i):
        mu = jnp.mean(x, axis=-1, keepdims=True)
        xc = x - mu
        var = jnp.mean(xc * xc, axis=-1, keepdims=True)
        return xc * jax.lax.rsqrt(var + 1e-5) * LNW[i:i + 1, :] + LNB[i:i + 1, :]

    ego = ego_ref[...]                       # [MN, E]
    qpos = qpos_ref[...]                     # [MN, E]

    # ---------------- self-attention over modes (per node, per head) ----------------
    tgt = layernorm(ego, LN_SA)
    q = dot(tgt, W(W_AQ)) + dot(qpos, W(W_BQ)) + bias(B_CQ)   # 1/sqrt(D) folded into W/b
    k = dot(tgt, W(W_AK)) + dot(qpos, W(W_BK)) + bias(B_CK)
    v = dot(tgt, W(W_AV)) + bias(B_CV)

    def to_heads(x):                         # [MN, E] -> [H, MN, D] (reshape + one transpose)
        return jnp.transpose(x.reshape(MN, H, D), (1, 0, 2))

    qh, kh, vh = to_heads(q), to_heads(k), to_heads(v)
    # per-head batched matmul (flash-attention layout); the internal k transpose is a
    # per-head [MN, D] tile — negligible vs. the former [128, 128] score path.
    scores = jnp.einsum('hid,hjd->hij', qh, kh, preferred_element_type=f32)   # [H, MN, MN]

    # mode-major rows: row r = m*N + n attends only to rows of the same node n.
    ri = jax.lax.broadcasted_iota(jnp.int32, (MN, MN), 0)
    rj = jax.lax.broadcasted_iota(jnp.int32, (MN, MN), 1)
    neg = jnp.where((ri % N) == (rj % N), 0.0, -1e30)
    scores = scores + neg[None, :, :]
    scores = scores - jnp.max(scores, axis=-1, keepdims=True)
    p = jnp.exp(scores)
    # approx reciprocal (EUP): fine for eval; probabilities don't sum exactly to 1.
    p = p * pl.reciprocal(jnp.sum(p, axis=-1, keepdims=True), approx=True)
    oh = jnp.einsum('hij,hjd->hid', p, vh, preferred_element_type=f32)        # [H, MN, D]

    # fold the head-concat into the out projection: 4 sublane-aligned row-slice matmuls.
    woutt = W(W_OUTT)
    sa = bias(B_OUT)
    for h in range(H):
        sa = sa + dot(oh[h], woutt[h * D:(h + 1) * D, :])
    x = ego + sa                                     # sa_dropout: eval-mode identity

    # -------------- cross-attention over lane-actor edges (scatter softmax) --------------
    x_n1 = dot(x, W(W_N1)) + bias(B_N1)              # "norm1" is an nn.Linear here
    q_ca = dot(x_n1, W(W_QX)) + dot(qpos, W(W_QPOS)) + bias(B_CAQ)   # CA_QPOS folded in
    qsin_p = dot(qsin_ref[...], W(W_QSIN)) + bias(B_QSIN)

    G = g_ref[...].astype(f32)                       # [NeM, MN] one-hot gather (exact)
    GT = gt_ref[...].astype(f32)                     # [MN, NeM]
    qg = dot(G, q_ca)                                # q[batch]    -> edge-mode rows
    qsg = dot(G, qsin_p)

    edge_n = layernorm(edge_ref[...], LN_V1)         # [NeM, E]
    k_ca = dot(edge_n, W(W_KCA)) + bias(B_KCA)
    v1 = dot(edge_n, W(W_V1)) + bias(B_V1)

    node_n = layernorm(node_ref[...], LN_V2)         # [Ne, E]
    v2 = dot(node_n, W(W_V2)) + bias(B_V2)
    kpos = dot(kvpos_ref[...], W(W_KPOS)) + bias(B_KPOS)
    R = r_ref[...].astype(f32)                       # [NeM, Ne] repeat rows over modes
    v2_r = dot(R, v2)
    kpos_r = dot(R, kpos)

    v_ca = v1 + v2_r
    tot = k_ca * qg + kpos_r * qsg                   # [NeM, E]
    logits = dot(tot, s_ref[...])                    # [NeM, H] per-head sums over D
    # global per-head shift (softmax-invariant inside every node segment).
    # TODO(synk): switch to per-(node, mode) segment max if logit magnitudes grow.
    logits = logits - jnp.max(logits, axis=0, keepdims=True)
    ex = jnp.exp(logits)                             # kept f32 through the one-hot dots
    den = dot(GT, ex)                                # per-(mode, node) sums  [MN, H]
    deng = dot(G, den)                               # back to edge rows      [NeM, H]
    alpha = ex * pl.reciprocal(deng + 1e-16, approx=True)
    wv = v_ca * dot(alpha, st_ref[...])              # broadcast head weights across D lanes
    agg = dot(GT, wv)                                # scatter-add            [MN, E]
    x2 = x_n1 + agg

    # -------- feed-forward in [MN, E] (norm2-Linear folded into lin1; no kron pad) --------
    t = jnp.maximum(dot(x2, W(W_F1)) + bias(B_F1), 0.0)
    y = dot(t, W(W_F2)) + bias(B_F2)
    # Output stays [MN, E] (4 KiB): mode-major makes the wrapper reshape to [M, N, E] free.
    # TODO(synk): restore a lane-dense output slab via the out BlockSpec once there is a
    #             node-block grid at production sizes.
    out_ref[...] = x2 + y                            # dropouts: eval-mode identity


# ----------------------------------------------------------------------------------
# Parameter construction / fusion (hoisted out of the hot path — run once)
# ----------------------------------------------------------------------------------
def make_params(key, embed_dim=EMBED_DIM, num_heads=NUM_HEADS):
    E = embed_dim
    k0, k1, k2 = jax.random.split(key, 3)
    bound = math.sqrt(6.0 / (E + E))
    return dict(
        w_lin=jax.random.uniform(k0, (16, E, E), jnp.float32, -bound, bound),
        b_lin=jnp.zeros((16, E), jnp.float32),
        w_in=jax.random.uniform(k1, (3 * E, E), jnp.float32, -bound, bound),
        b_in=jnp.zeros((3 * E,), jnp.float32),
        w_out=jax.random.uniform(k2, (E, E), jnp.float32, -bound, bound),
        b_out=jnp.zeros((E,), jnp.float32),
        ln_w=jnp.ones((3, E), jnp.float32),
        ln_b=jnp.zeros((3, E), jnp.float32),
    )


def prepare_fused_params(params, num_heads=NUM_HEADS):
    """Compose weights once: in-proj / scale / CA_QPOS / norm2-Linear folded in."""
    f32 = jnp.float32
    Wl, bl = params['w_lin'], params['b_lin']
    Win, bin_ = params['w_in'], params['b_in']
    Wout, bout = params['w_out'], params['b_out']
    E = Wl.shape[-1]
    D = E // num_heads
    s = 1.0 / math.sqrt(D)

    WinqT, WinkT, WinvT = Win[:E].T, Win[E:2 * E].T, Win[2 * E:].T
    binq, bink, binv = bin_[:E], bin_[E:2 * E], bin_[2 * E:]

    W = jnp.stack([
        s * (Wl[I_SA_QC].T @ WinqT),        # W_AQ   content q (scaled)
        Wl[I_SA_KC].T @ WinkT,              # W_AK   content k
        Wl[I_SA_V].T @ WinvT,               # W_AV   content v
        s * (Wl[I_SA_QP].T @ WinqT),        # W_BQ   positional q (scaled)
        Wl[I_SA_KP].T @ WinkT,              # W_BK   positional k
        Wout.T,                             # W_OUTT self-attn out projection
        Wl[I_NORM1].T,                      # W_N1
        Wl[I_CA_Q].T,                       # W_QX   CA q from x_n1
        Wl[I_CA_QPOS].T @ Wl[I_CA_Q].T,     # W_QPOS CA q from query_pos (folded)
        Wl[I_CA_QSIN].T,                    # W_QSIN
        Wl[I_CA_K].T,                       # W_KCA
        Wl[I_LIN_V1].T,                     # W_V1
        Wl[I_LIN_V2].T,                     # W_V2
        Wl[I_CA_KPOS].T,                    # W_KPOS
        Wl[I_NORM2].T @ Wl[I_LIN1].T,       # W_F1   norm2-Linear folded into lin1
        Wl[I_LIN2].T,                       # W_F2
    ]).astype(f32)

    B = jnp.stack([
        s * ((bl[I_SA_QC] + bl[I_SA_QP]) @ WinqT + binq),   # B_CQ
        (bl[I_SA_KC] + bl[I_SA_KP]) @ WinkT + bink,          # B_CK
        bl[I_SA_V] @ WinvT + binv,                           # B_CV
        bout,                                                # B_OUT
        bl[I_NORM1],                                         # B_N1
        bl[I_CA_QPOS] @ Wl[I_CA_Q].T + bl[I_CA_Q],           # B_CAQ
        bl[I_CA_QSIN],                                       # B_QSIN
        bl[I_CA_K],                                          # B_KCA
        bl[I_LIN_V1],                                        # B_V1
        bl[I_LIN_V2],                                        # B_V2
        bl[I_CA_KPOS],                                       # B_KPOS
        bl[I_NORM2] @ Wl[I_LIN1].T + bl[I_LIN1],             # B_F1
        bl[I_LIN2],                                          # B_F2
    ]).astype(f32)

    return dict(W=W, B=B,
                ln_w=params['ln_w'].astype(f32), ln_b=params['ln_b'].astype(f32))


# ----------------------------------------------------------------------------------
# Wrapper
# ----------------------------------------------------------------------------------
def route_encoder_layer(fused, batch, ego, query_pos, query_sine_embed, kv_pos,
                        edge_feat, node_feat, num_heads=NUM_HEADS):
    f32, bf16 = jnp.float32, jnp.bfloat16
    M, N, E = ego.shape
    Ne = edge_feat.shape[0]
    H = num_heads
    D = E // H
    MN, NeM = M * N, Ne * M

    # Mode-major (m, n) rows: ego / query_pos / output re-layouts are free reshapes.
    ego2 = ego.reshape(MN, E).astype(f32)
    qpos2 = query_pos.reshape(MN, E).astype(f32)
    # query_sine_embed arrives node-major; one tiny transpose so it shares the gather G.
    # TODO(synk): gather qsin via scalar-prefetched batch at production sizes instead.
    qsin2 = jnp.transpose(query_sine_embed, (1, 0, 2)).reshape(MN, E).astype(f32)
    edge2 = edge_feat.reshape(NeM, E).astype(f32)
    node2 = node_feat.astype(f32)
    kvpos2 = kv_pos.astype(f32)

    # structural gather/scatter one-hots (exact in bf16; halves their DMA bytes)
    col_idx = (jnp.arange(M, dtype=jnp.int32)[None, :] * N
               + batch.astype(jnp.int32)[:, None]).reshape(NeM)
    G = jax.nn.one_hot(col_idx, MN, dtype=bf16)            # [NeM, MN] edge-mode row -> x row
    GT = jnp.transpose(G)                                  # [MN, NeM]
    R = jnp.repeat(jnp.eye(Ne, dtype=bf16), M, axis=0)     # [NeM, Ne] repeat over modes
    S = jnp.repeat(jnp.eye(H, dtype=f32), D, axis=0)       # [E, H] per-head sum
    ST = jnp.transpose(S)                                  # [H, E] per-head broadcast

    operands = (ego2, qpos2, qsin2, edge2, node2, kvpos2,
                G, GT, R, S, ST,
                fused['W'], fused['B'], fused['ln_w'], fused['ln_b'])

    flops = 2 * (
        5 * MN * E * E                         # SA q/k/v content + positional projections
        + 2 * H * MN * MN * D                  # scores + P@V
        + MN * E * E                           # out projection (H head blocks)
        + 4 * MN * E * E                       # x_n1, q_ca (x & pos), qsin_p
        + 2 * NeM * E * E + 2 * Ne * E * E     # edge / node / kv-pos projections
        + 2 * NeM * MN * E                     # q / qsin gathers
        + 2 * NeM * Ne * E                     # mode-repeat of v2 / kpos
        + NeM * E * H + 2 * NeM * MN * H + NeM * H * E   # head sums, den/deng, broadcast
        + NeM * MN * E                         # scatter-add
        + 2 * MN * E * E                       # FFN
    )
    transcendentals = H * MN * MN + NeM * H
    bytes_accessed = int(sum(int(x.size) * x.dtype.itemsize for x in operands)
                         + MN * E * 4)
    cost = pl.CostEstimate(flops=int(flops), transcendentals=int(transcendentals),
                           bytes_accessed=bytes_accessed)

    kern = functools.partial(route_encoder_kernel, num_nodes=N, num_heads=H)
    vmem = pl.BlockSpec(memory_space=pltpu.MemorySpace.VMEM)
    out2 = pl.pallas_call(
        kern,
        out_shape=jax.ShapeDtypeStruct((MN, E), f32),
        in_specs=[vmem] * len(operands),
        out_specs=vmem,
        cost_estimate=cost,
    )(*operands)
    return out2.reshape(M, N, E)              # mode-major rows -> [M, N, E] for free


route_encoder_layer_jit = jax.jit(route_encoder_layer, static_argnames=('num_heads',))


# ----------------------------------------------------------------------------------
# Pure-JAX f32 reference (mirrors the module forward, eval mode) for validation
# ----------------------------------------------------------------------------------
def reference_forward(params, batch, ego, query_pos, query_sine_embed, kv_pos,
                      edge_feat, node_feat, num_heads=NUM_HEADS):
    M, N, E = ego.shape
    Ne = edge_feat.shape[0]
    D = E // num_heads
    Wl, bl = params['w_lin'], params['b_lin']

    def lin(x, i):
        return x @ Wl[i].T + bl[i]

    def ln(x, i):
        mu = jnp.mean(x, -1, keepdims=True)
        xc = x - mu
        var = jnp.mean(xc * xc, -1, keepdims=True)
        return xc * jax.lax.rsqrt(var + 1e-5) * params['ln_w'][i] + params['ln_b'][i]

    # self-attention block ([M, N, E], attention over M per node)
    tgt = ln(ego, LN_SA)
    q = lin(tgt, I_SA_QC) + lin(query_pos, I_SA_QP)
    k = lin(tgt, I_SA_KC) + lin(query_pos, I_SA_KP)
    v = lin(tgt, I_SA_V)
    Win, bin_ = params['w_in'], params['b_in']
    qp = q @ Win[:E].T + bin_[:E]
    kp = k @ Win[E:2 * E].T + bin_[E:2 * E]
    vp = v @ Win[2 * E:].T + bin_[2 * E:]

    def heads(x):
        return jnp.transpose(x.reshape(M, N, num_heads, D), (1, 2, 0, 3))  # [N,H,M,D]

    qh = heads(qp) * (1.0 / math.sqrt(D))
    kh, vh = heads(kp), heads(vp)
    scores = jnp.einsum('nhid,nhjd->nhij', qh, kh)
    p = jax.nn.softmax(scores, axis=-1)
    o = jnp.einsum('nhij,nhjd->nhid', p, vh)
    o = jnp.transpose(o, (2, 0, 1, 3)).reshape(M, N, E)
    sa = o @ params['w_out'].T + params['b_out']
    ego1 = ego + sa

    x = jnp.transpose(ego1, (1, 0, 2))            # [N, M, E]
    qpos_p = jnp.transpose(query_pos, (1, 0, 2))
    x_n1 = lin(x, I_NORM1)
    q_ca = lin(x_n1 + lin(qpos_p, I_CA_QPOS), I_CA_Q)
    qsin = lin(query_sine_embed, I_CA_QSIN)
    edge_n = ln(edge_feat, LN_V1)
    node_n = ln(node_feat, LN_V2)
    k_ca = lin(edge_n, I_CA_K).reshape(Ne, M, num_heads, D)
    kpos = lin(kv_pos, I_CA_KPOS).reshape(Ne, 1, num_heads, D)
    v1 = lin(edge_n, I_LIN_V1).reshape(Ne, M, num_heads, D)
    v2 = lin(node_n, I_LIN_V2).reshape(Ne, 1, num_heads, D)
    v_ca = v1 + v2
    qh4 = q_ca.reshape(N, M, num_heads, D)
    qsin4 = qsin.reshape(N, M, num_heads, D)
    logits = jnp.sum(k_ca * qh4[batch], -1) + jnp.sum(kpos * qsin4[batch], -1)  # [Ne, M, H]
    gmax = jax.ops.segment_max(logits, batch, num_segments=N)
    ex = jnp.exp(logits - gmax[batch])
    den = jax.ops.segment_sum(ex, batch, num_segments=N)
    alpha = ex / (den[batch] + 1e-16)
    agg = jax.ops.segment_sum((v_ca * alpha[..., None]).reshape(Ne, M, E), batch,
                              num_segments=N)
    x2 = x_n1 + agg
    t = lin(x2, I_NORM2)
    t = jnp.maximum(lin(t, I_LIN1), 0.0)
    t = lin(t, I_LIN2)
    out = x2 + t
    return jnp.transpose(out, (1, 0, 2))          # [M, N, E]


if __name__ == "__main__":
    key = jax.random.PRNGKey(0)
    kp, k1, k2, k3, k4, k5, k6 = jax.random.split(key, 7)
    E, M = EMBED_DIM, NUM_MODES
    N = 8     # num_nodes
    Ne = 24   # num_edges (3 per node)

    params = make_params(kp)
    fused = prepare_fused_params(params, num_heads=NUM_HEADS)

    batch = jnp.repeat(jnp.arange(N, dtype=jnp.int32), Ne // N)
    ego = 0.5 * jax.random.normal(k1, (M, N, E), jnp.float32)
    query_pos = 0.5 * jax.random.normal(k2, (M, N, E), jnp.float32)
    query_sine_embed = 0.5 * jax.random.normal(k3, (N, M, E), jnp.float32)
    kv_pos = 0.5 * jax.random.normal(k4, (Ne, E), jnp.float32)
    edge_feat = 0.5 * jax.random.normal(k5, (Ne, M, E), jnp.float32)
    node_feat = 0.5 * jax.random.normal(k6, (Ne, E), jnp.float32)

    out = route_encoder_layer_jit(fused, batch, ego, query_pos, query_sine_embed,
                                  kv_pos, edge_feat, node_feat, num_heads=NUM_HEADS)
    out = jax.block_until_ready(out)

    ref = reference_forward(params, batch, ego, query_pos, query_sine_embed,
                            kv_pos, edge_feat, node_feat)
    ref = jax.block_until_ready(ref)

    assert out.shape == (M, N, E)
    max_diff = float(jnp.max(jnp.abs(out - ref)))
    max_ref = float(jnp.max(jnp.abs(ref)))
    # f32 math end-to-end; slack only covers the approx-reciprocal softmax normalizations.
    assert max_diff <= 5e-2 * (1.0 + max_ref), f"mismatch: {max_diff} (ref scale {max_ref})"
    print("KERNEL_OK")
</pallas_src>

<mosaic_0001>
module attributes {stable_mosaic.version = 11 : i64} {
  func.func @route_encoder_kernel(%arg0: memref<32x32xf32, #tpu.memory_space<vmem>>, %arg1: memref<32x32xf32, #tpu.memory_space<vmem>>, %arg2: memref<32x32xf32, #tpu.memory_space<vmem>>, %arg3: memref<96x32xf32, #tpu.memory_space<vmem>>, %arg4: memref<24x32xf32, #tpu.memory_space<vmem>>, %arg5: memref<24x32xf32, #tpu.memory_space<vmem>>, %arg6: memref<96x32xbf16, #tpu.memory_space<vmem>>, %arg7: memref<32x96xbf16, #tpu.memory_space<vmem>>, %arg8: memref<96x24xbf16, #tpu.memory_space<vmem>>, %arg9: memref<32x4xf32, #tpu.memory_space<vmem>>, %arg10: memref<4x32xf32, #tpu.memory_space<vmem>>, %arg11: memref<16x32x32xf32, #tpu.memory_space<vmem>>, %arg12: memref<13x32xf32, #tpu.memory_space<vmem>>, %arg13: memref<3x32xf32, #tpu.memory_space<vmem>>, %arg14: memref<3x32xf32, #tpu.memory_space<vmem>>, %arg15: memref<32x32xf32, #tpu.memory_space<vmem>>) attributes {dimension_semantics = [], scalar_prefetch = 0 : i64, scratch_operands = 0 : i64, tpu.core_type = #tpu.core_type<tc>} {
    %c0 = arith.constant 0 : index
    %c0_0 = arith.constant 0 : index
    %0 = vector.load %arg13[%c0, %c0_0] : memref<3x32xf32, #tpu.memory_space<vmem>>, vector<3x32xf32>
    %c0_1 = arith.constant 0 : index
    %c0_2 = arith.constant 0 : index
    %1 = vector.load %arg14[%c0_1, %c0_2] : memref<3x32xf32, #tpu.memory_space<vmem>>, vector<3x32xf32>
    %c0_3 = arith.constant 0 : index
    %c0_4 = arith.constant 0 : index
    %2 = vector.load %arg0[%c0_3, %c0_4] : memref<32x32xf32, #tpu.memory_space<vmem>>, vector<32x32xf32>
    %c0_5 = arith.constant 0 : index
    %c0_6 = arith.constant 0 : index
    %3 = vector.load %arg1[%c0_5, %c0_6] : memref<32x32xf32, #tpu.memory_space<vmem>>, vector<32x32xf32>
    %cst = arith.constant dense<0.000000e+00> : vector<32xf32>
    %4 = vector.multi_reduction <add>, %2, %cst [1] : vector<32x32xf32> to vector<32xf32>
    %5 = vector.shape_cast %4 : vector<32xf32> to vector<32x1xf32>
    %cst_7 = arith.constant 3.200000e+01 : f32
    %6 = vector.broadcast %cst_7 : f32 to vector<32x1xf32>
    %7 = arith.divf %5, %6 : vector<32x1xf32>
    %8 = vector.broadcast %7 : vector<32x1xf32> to vector<32x32xf32>
    %9 = arith.subf %2, %8 : vector<32x32xf32>
    %10 = arith.mulf %9, %9 : vector<32x32xf32>
    %cst_8 = arith.constant dense<0.000000e+00> : vector<32xf32>
    %11 = vector.multi_reduction <add>, %10, %cst_8 [1] : vector<32x32xf32> to vector<32xf32>
    %12 = vector.shape_cast %11 : vector<32xf32> to vector<32x1xf32>
    %cst_9 = arith.constant 3.200000e+01 : f32
    %13 = vector.broadcast %cst_9 : f32 to vector<32x1xf32>
    %14 = arith.divf %12, %13 : vector<32x1xf32>
    %cst_10 = arith.constant 9.99999974E-6 : f32
    %15 = vector.broadcast %cst_10 : f32 to vector<32x1xf32>
    %16 = arith.addf %14, %15 : vector<32x1xf32>
    %17 = math.rsqrt %16 : vector<32x1xf32>
    %18 = vector.broadcast %17 : vector<32x1xf32> to vector<32x32xf32>
    %19 = arith.mulf %9, %18 : vector<32x32xf32>
    %20 = vector.extract_strided_slice %0 {offsets = [0, 0], sizes = [1, 32], strides = [1, 1]} : vector<3x32xf32> to vector<1x32xf32>
    %21 = vector.broadcast %20 : vector<1x32xf32> to vector<32x32xf32>
    %22 = arith.mulf %19, %21 : vector<32x32xf32>
    %23 = vector.extract_strided_slice %1 {offsets = [0, 0], sizes = [1, 32], strides = [1, 1]} : vector<3x32xf32> to vector<1x32xf32>
    %24 = vector.broadcast %23 : vector<1x32xf32> to vector<32x32xf32>
    %25 = arith.addf %22, %24 : vector<32x32xf32>
    %c0_11 = arith.constant 0 : index
    %c0_12 = arith.constant 0 : index
    %c0_13 = arith.constant 0 : index
    %26 = vector.load %arg11[%c0_11, %c0_12, %c0_13] : memref<16x32x32xf32, #tpu.memory_space<vmem>>, vector<1x32x32xf32>
    %27 = vector.shape_cast %26 : vector<1x32x32xf32> to vector<32x32xf32>
    %cst_14 = arith.constant dense<0.000000e+00> : vector<32x32xf32>
    %28 = tpu.matmul %25, %27, %cst_14 {dimension_numbers = #tpu.dot_dimension_numbers<[1], [0], [0], [1], [0, 0, 1, 1], [], []>} : vector<32x32xf32>, vector<32x32xf32>, vector<32x32xf32> -> vector<32x32xf32>
    %c3 = arith.constant 3 : index
    %c0_15 = arith.constant 0 : index
    %c0_16 = arith.constant 0 : index
    %29 = vector.load %arg11[%c3, %c0_15, %c0_16] : memref<16x32x32xf32, #tpu.memory_space<vmem>>, vector<1x32x32xf32>
    %30 = vector.shape_cast %29 : vector<1x32x32xf32> to vector<32x32xf32>
    %cst_17 = arith.constant dense<0.000000e+00> : vector<32x32xf32>
    %31 = tpu.matmul %3, %30, %cst_17 {dimension_numbers = #tpu.dot_dimension_numbers<[1], [0], [0], [1], [0, 0, 1, 1], [], []>} : vector<32x32xf32>, vector<32x32xf32>, vector<32x32xf32> -> vector<32x32xf32>
    %32 = arith.addf %28, %31 : vector<32x32xf32>
    %c0_18 = arith.constant 0 : index
    %c0_19 = arith.constant 0 : index
    %33 = vector.load %arg12[%c0_18, %c0_19] : memref<13x32xf32, #tpu.memory_space<vmem>>, vector<1x32xf32>
    %34 = vector.broadcast %33 : vector<1x32xf32> to vector<32x32xf32>
    %35 = arith.addf %32, %34 : vector<32x32xf32>
    %c1 = arith.constant 1 : index
    %c0_20 = arith.constant 0 : index
    %c0_21 = arith.constant 0 : index
    %36 = vector.load %arg11[%c1, %c0_20, %c0_21] : memref<16x32x32xf32, #tpu.memory_space<vmem>>, vector<1x32x32xf32>
    %37 = vector.shape_cast %36 : vector<1x32x32xf32> to vector<32x32xf32>
    %cst_22 = arith.constant dense<0.000000e+00> : vector<32x32xf32>
    %38 = tpu.matmul %25, %37, %cst_22 {dimension_numbers = #tpu.dot_dimension_numbers<[1], [0], [0], [1], [0, 0, 1, 1], [], []>} : vector<32x32xf32>, vector<32x32xf32>, vector<32x32xf32> -> vector<32x32xf32>
    %c4 = arith.constant 4 : index
    %c0_23 = arith.constant 0 : index
    %c0_24 = arith.constant 0 : index
    %39 = vector.load %arg11[%c4, %c0_23, %c0_24] : memref<16x32x32xf32, #tpu.memory_space<vmem>>, vector<1x32x32xf32>
    %40 = vector.shape_cast %39 : vector<1x32x32xf32> to vector<32x32xf32>
    %cst_25 = arith.constant dense<0.000000e+00> : vector<32x32xf32>
    %41 = tpu.matmul %3, %40, %cst_25 {dimension_numbers = #tpu.dot_dimension_numbers<[1], [0], [0], [1], [0, 0, 1, 1], [], []>} : vector<32x32xf32>, vector<32x32xf32>, vector<32x32xf32> -> vector<32x32xf32>
    %42 = arith.addf %38, %41 : vector<32x32xf32>
    %c1_26 = arith.constant 1 : index
    %c0_27 = arith.constant 0 : index
    %43 = vector.load %arg12[%c1_26, %c0_27] : memref<13x32xf32, #tpu.memory_space<vmem>>, vector<1x32xf32>
    %44 = vector.broadcast %43 : vector<1x32xf32> to vector<32x32xf32>
    %45 = arith.addf %42, %44 : vector<32x32xf32>
    %c2 = arith.constant 2 : index
    %c0_28 = arith.constant 0 : index
    %c0_29 = arith.constant 0 : index
    %46 = vector.load %arg11[%c2, %c0_28, %c0_29] : memref<16x32x32xf32, #tpu.memory_space<vmem>>, vector<1x32x32xf32>
    %47 = vector.shape_cast %46 : vector<1x32x32xf32> to vector<32x32xf32>
    %cst_30 = arith.constant dense<0.000000e+00> : vector<32x32xf32>
    %48 = tpu.matmul %25, %47, %cst_30 {dimension_numbers = #tpu.dot_dimension_numbers<[1], [0], [0], [1], [0, 0, 1, 1], [], []>} : vector<32x32xf32>, vector<32x32xf32>, vector<32x32xf32> -> vector<32x32xf32>
    %c2_31 = arith.constant 2 : index
    %c0_32 = arith.constant 0 : index
    %49 = vector.load %arg12[%c2_31, %c0_32] : memref<13x32xf32, #tpu.memory_space<vmem>>, vector<1x32xf32>
    %50 = vector.broadcast %49 : vector<1x32xf32> to vector<32x32xf32>
    %51 = arith.addf %48, %50 : vector<32x32xf32>
    %52 = vector.shape_cast %35 : vector<32x32xf32> to vector<32x4x8xf32>
    %53 = tpu.transpose %52, [1, 0, 2] : vector<32x4x8xf32> -> vector<4x32x8xf32>
    %54 = vector.shape_cast %45 : vector<32x32xf32> to vector<32x4x8xf32>
    %55 = tpu.transpose %54, [1, 0, 2] : vector<32x4x8xf32> -> vector<4x32x8xf32>
    %56 = vector.shape_cast %51 : vector<32x32xf32> to vector<32x4x8xf32>
    %57 = tpu.transpose %56, [1, 0, 2] : vector<32x4x8xf32> -> vector<4x32x8xf32>
    "tpu.trace_start"() <{level = 10 : i32, message = "hid,hjd->hij"}> : () -> ()
    %cst_33 = arith.constant dense<0.000000e+00> : vector<4x32x32xf32>
    %58 = tpu.matmul %53, %55, %cst_33 {dimension_numbers = #tpu.dot_dimension_numbers<[2], [2], [1], [1], [0, 0, 0, 1, 1, 1], [0], [0]>} : vector<4x32x8xf32>, vector<4x32x8xf32>, vector<4x32x32xf32> -> vector<4x32x32xf32>
    "tpu.trace_stop"() : () -> ()
    %59 = tpu.iota {dimensions = array<i32: 0>} : vector<32x32xi32>
    %60 = tpu.iota {dimensions = array<i32: 1>} : vector<32x32xi32>
    %c8_i32 = arith.constant 8 : i32
    %c0_i32 = arith.constant 0 : i32
    %61 = arith.cmpi eq, %c8_i32, %c0_i32 : i32
    %c1_i32 = arith.constant 1 : i32
    %62 = arith.select %61, %c1_i32, %c8_i32 : i32
    %63 = vector.broadcast %62 : i32 to vector<32x32xi32>
    %64 = arith.remsi %59, %63 : vector<32x32xi32>
    %c0_i32_34 = arith.constant 0 : i32
    %65 = vector.broadcast %c0_i32_34 : i32 to vector<32x32xi32>
    %66 = arith.cmpi ne, %64, %65 : vector<32x32xi32>
    %c0_i32_35 = arith.constant 0 : i32
    %67 = vector.broadcast %c0_i32_35 : i32 to vector<32x32xi32>
    %68 = arith.cmpi slt, %64, %67 : vector<32x32xi32>
    %c0_i32_36 = arith.constant 0 : i32
    %69 = arith.cmpi slt, %62, %c0_i32_36 : i32
    %70 = vector.broadcast %69 : i1 to vector<32x32xi1>
    %71 = vector.broadcast %70 : vector<32x32xi1> to vector<32x32xi1>
    %72 = arith.xori %68, %71 : vector<32x32xi1>
    %73 = arith.andi %72, %66 : vector<32x32xi1>
    %74 = vector.broadcast %62 : i32 to vector<32x32xi32>
    %75 = arith.addi %64, %74 : vector<32x32xi32>
    %76 = arith.select %73, %75, %64 : vector<32x32xi1>, vector<32x32xi32>
    %c8_i32_37 = arith.constant 8 : i32
    %c0_i32_38 = arith.constant 0 : i32
    %77 = arith.cmpi eq, %c8_i32_37, %c0_i32_38 : i32
    %c1_i32_39 = arith.constant 1 : i32
    %78 = arith.select %77, %c1_i32_39, %c8_i32_37 : i32
    %79 = vector.broadcast %78 : i32 to vector<32x32xi32>
    %80 = arith.remsi %60, %79 : vector<32x32xi32>
    %c0_i32_40 = arith.constant 0 : i32
    %81 = vector.broadcast %c0_i32_40 : i32 to vector<32x32xi32>
    %82 = arith.cmpi ne, %80, %81 : vector<32x32xi32>
    %c0_i32_41 = arith.constant 0 : i32
    %83 = vector.broadcast %c0_i32_41 : i32 to vector<32x32xi32>
    %84 = arith.cmpi slt, %80, %83 : vector<32x32xi32>
    %c0_i32_42 = arith.constant 0 : i32
    %85 = arith.cmpi slt, %78, %c0_i32_42 : i32
    %86 = vector.broadcast %85 : i1 to vector<32x32xi1>
    %87 = vector.broadcast %86 : vector<32x32xi1> to vector<32x32xi1>
    %88 = arith.xori %84, %87 : vector<32x32xi1>
    %89 = arith.andi %88, %82 : vector<32x32xi1>
    %90 = vector.broadcast %78 : i32 to vector<32x32xi32>
    %91 = arith.addi %80, %90 : vector<32x32xi32>
    %92 = arith.select %89, %91, %80 : vector<32x32xi1>, vector<32x32xi32>
    %93 = arith.cmpi eq, %76, %92 : vector<32x32xi32>
    %cst_43 = arith.constant 0.000000e+00 : f32
    %cst_44 = arith.constant -1.000000e+30 : f32
    %94 = vector.broadcast %cst_43 : f32 to vector<32x32xf32>
    %95 = vector.broadcast %cst_44 : f32 to vector<32x32xf32>
    %96 = arith.select %93, %94, %95 : vector<32x32xi1>, vector<32x32xf32>
    %97 = vector.shape_cast %96 : vector<32x32xf32> to vector<1x32x32xf32>
    %98 = vector.broadcast %97 : vector<1x32x32xf32> to vector<4x32x32xf32>
    %99 = arith.addf %58, %98 : vector<4x32x32xf32>
    %cst_45 = arith.constant dense<0xFF800000> : vector<4x32xf32>
    %100 = vector.multi_reduction <maximumf>, %99, %cst_45 [2] : vector<4x32x32xf32> to vector<4x32xf32>
    %101 = vector.shape_cast %100 : vector<4x32xf32> to vector<4x32x1xf32>
    %102 = vector.broadcast %101 : vector<4x32x1xf32> to vector<4x32x32xf32>
    %103 = arith.subf %99, %102 : vector<4x32x32xf32>
    %104 = math.exp %103 : vector<4x32x32xf32>
    %cst_46 = arith.constant dense<0.000000e+00> : vector<4x32xf32>
    %105 = vector.multi_reduction <add>, %104, %cst_46 [2] : vector<4x32x32xf32> to vector<4x32xf32>
    %106 = vector.shape_cast %105 : vector<4x32xf32> to vector<4x32x1xf32>
    %107 = tpu.reciprocal %106 {approx = true} : vector<4x32x1xf32> -> vector<4x32x1xf32>
    %108 = vector.broadcast %107 : vector<4x32x1xf32> to vector<4x32x32xf32>
    %109 = arith.mulf %104, %108 : vector<4x32x32xf32>
    "tpu.trace_start"() <{level = 10 : i32, message = "hij,hjd->hid"}> : () -> ()
    %cst_47 = arith.constant dense<0.000000e+00> : vector<4x32x8xf32>
    %110 = tpu.matmul %109, %57, %cst_47 {dimension_numbers = #tpu.dot_dimension_numbers<[2], [1], [1], [2], [0, 0, 0, 1, 1, 2], [0], [0]>} : vector<4x32x32xf32>, vector<4x32x8xf32>, vector<4x32x8xf32> -> vector<4x32x8xf32>
    "tpu.trace_stop"() : () -> ()
    %c5 = arith.constant 5 : index
    %c0_48 = arith.constant 0 : index
    %c0_49 = arith.constant 0 : index
    %111 = vector.load %arg11[%c5, %c0_48, %c0_49] : memref<16x32x32xf32, #tpu.memory_space<vmem>>, vector<1x32x32xf32>
    %112 = vector.shape_cast %111 : vector<1x32x32xf32> to vector<32x32xf32>
    %c3_50 = arith.constant 3 : index
    %c0_51 = arith.constant 0 : index
    %113 = vector.load %arg12[%c3_50, %c0_51] : memref<13x32xf32, #tpu.memory_space<vmem>>, vector<1x32xf32>
    %114 = vector.extract_strided_slice %110 {offsets = [0, 0, 0], sizes = [1, 32, 8], strides = [1, 1, 1]} : vector<4x32x8xf32> to vector<1x32x8xf32>
    %115 = vector.shape_cast %114 : vector<1x32x8xf32> to vector<32x8xf32>
    %116 = vector.extract_strided_slice %112 {offsets = [0, 0], sizes = [8, 32], strides = [1, 1]} : vector<32x32xf32> to vector<8x32xf32>
    %cst_52 = arith.constant dense<0.000000e+00> : vector<32x32xf32>
    %117 = tpu.matmul %115, %116, %cst_52 {dimension_numbers = #tpu.dot_dimension_numbers<[1], [0], [0], [1], [0, 0, 1, 1], [], []>} : vector<32x8xf32>, vector<8x32xf32>, vector<32x32xf32> -> vector<32x32xf32>
    %118 = vector.broadcast %113 : vector<1x32xf32> to vector<32x32xf32>
    %119 = arith.addf %118, %117 : vector<32x32xf32>
    %120 = vector.extract_strided_slice %110 {offsets = [1, 0, 0], sizes = [1, 32, 8], strides = [1, 1, 1]} : vector<4x32x8xf32> to vector<1x32x8xf32>
    %121 = vector.shape_cast %120 : vector<1x32x8xf32> to vector<32x8xf32>
    %122 = vector.extract_strided_slice %112 {offsets = [8, 0], sizes = [8, 32], strides = [1, 1]} : vector<32x32xf32> to vector<8x32xf32>
    %cst_53 = arith.constant dense<0.000000e+00> : vector<32x32xf32>
    %123 = tpu.matmul %121, %122, %cst_53 {dimension_numbers = #tpu.dot_dimension_numbers<[1], [0], [0], [1], [0, 0, 1, 1], [], []>} : vector<32x8xf32>, vector<8x32xf32>, vector<32x32xf32> -> vector<32x32xf32>
    %124 = arith.addf %119, %123 : vector<32x32xf32>
    %125 = vector.extract_strided_slice %110 {offsets = [2, 0, 0], sizes = [1, 32, 8], strides = [1, 1, 1]} : vector<4x32x8xf32> to vector<1x32x8xf32>
    %126 = vector.shape_cast %125 : vector<1x32x8xf32> to vector<32x8xf32>
    %127 = vector.extract_strided_slice %112 {offsets = [16, 0], sizes = [8, 32], strides = [1, 1]} : vector<32x32xf32> to vector<8x32xf32>
    %cst_54 = arith.constant dense<0.000000e+00> : vector<32x32xf32>
    %128 = tpu.matmul %126, %127, %cst_54 {dimension_numbers = #tpu.dot_dimension_numbers<[1], [0], [0], [1], [0, 0, 1, 1], [], []>} : vector<32x8xf32>, vector<8x32xf32>, vector<32x32xf32> -> vector<32x32xf32>
    %129 = arith.addf %124, %128 : vector<32x32xf32>
    %130 = vector.extract_strided_slice %110 {offsets = [3, 0, 0], sizes = [1, 32, 8], strides = [1, 1, 1]} : vector<4x32x8xf32> to vector<1x32x8xf32>
    %131 = vector.shape_cast %130 : vector<1x32x8xf32> to vector<32x8xf32>
    %132 = vector.extract_strided_slice %112 {offsets = [24, 0], sizes = [8, 32], strides = [1, 1]} : vector<32x32xf32> to vector<8x32xf32>
    %cst_55 = arith.constant dense<0.000000e+00> : vector<32x32xf32>
    %133 = tpu.matmul %131, %132, %cst_55 {dimension_numbers = #tpu.dot_dimension_numbers<[1], [0], [0], [1], [0, 0, 1, 1], [], []>} : vector<32x8xf32>, vector<8x32xf32>, vector<32x32xf32> -> vector<32x32xf32>
    %134 = arith.addf %129, %133 : vector<32x32xf32>
    %135 = arith.addf %2, %134 : vector<32x32xf32>
    %c6 = arith.constant 6 : index
    %c0_56 = arith.constant 0 : index
    %c0_57 = arith.constant 0 : index
    %136 = vector.load %arg11[%c6, %c0_56, %c0_57] : memref<16x32x32xf32, #tpu.memory_space<vmem>>, vector<1x32x32xf32>
    %137 = vector.shape_cast %136 : vector<1x32x32xf32> to vector<32x32xf32>
    %cst_58 = arith.constant dense<0.000000e+00> : vector<32x32xf32>
    %138 = tpu.matmul %135, %137, %cst_58 {dimension_numbers = #tpu.dot_dimension_numbers<[1], [0], [0], [1], [0, 0, 1, 1], [], []>} : vector<32x32xf32>, vector<32x32xf32>, vector<32x32xf32> -> vector<32x32xf32>
    %c4_59 = arith.constant 4 : index
    %c0_60 = arith.constant 0 : index
    %139 = vector.load %arg12[%c4_59, %c0_60] : memref<13x32xf32, #tpu.memory_space<vmem>>, vector<1x32xf32>
    %140 = vector.broadcast %139 : vector<1x32xf32> to vector<32x32xf32>
    %141 = arith.addf %138, %140 : vector<32x32xf32>
    %c7 = arith.constant 7 : index
    %c0_61 = arith.constant 0 : index
    %c0_62 = arith.constant 0 : index
    %142 = vector.load %arg11[%c7, %c0_61, %c0_62] : memref<16x32x32xf32, #tpu.memory_space<vmem>>, vector<1x32x32xf32>
    %143 = vector.shape_cast %142 : vector<1x32x32xf32> to vector<32x32xf32>
    %cst_63 = arith.constant dense<0.000000e+00> : vector<32x32xf32>
    %144 = tpu.matmul %141, %143, %cst_63 {dimension_numbers = #tpu.dot_dimension_numbers<[1], [0], [0], [1], [0, 0, 1, 1], [], []>} : vector<32x32xf32>, vector<32x32xf32>, vector<32x32xf32> -> vector<32x32xf32>
    %c8 = arith.constant 8 : index
    %c0_64 = arith.constant 0 : index
    %c0_65 = arith.constant 0 : index
    %145 = vector.load %arg11[%c8, %c0_64, %c0_65] : memref<16x32x32xf32, #tpu.memory_space<vmem>>, vector<1x32x32xf32>
    %146 = vector.shape_cast %145 : vector<1x32x32xf32> to vector<32x32xf32>
    %cst_66 = arith.constant dense<0.000000e+00> : vector<32x32xf32>
    %147 = tpu.matmul %3, %146, %cst_66 {dimension_numbers = #tpu.dot_dimension_numbers<[1], [0], [0], [1], [0, 0, 1, 1], [], []>} : vector<32x32xf32>, vector<32x32xf32>, vector<32x32xf32> -> vector<32x32xf32>
    %148 = arith.addf %144, %147 : vector<32x32xf32>
    %c5_67 = arith.constant 5 : index
    %c0_68 = arith.constant 0 : index
    %149 = vector.load %arg12[%c5_67, %c0_68] : memref<13x32xf32, #tpu.memory_space<vmem>>, vector<1x32xf32>
    %150 = vector.broadcast %149 : vector<1x32xf32> to vector<32x32xf32>
    %151 = arith.addf %148, %150 : vector<32x32xf32>
    %c0_69 = arith.constant 0 : index
    %c0_70 = arith.constant 0 : index
    %152 = vector.load %arg2[%c0_69, %c0_70] : memref<32x32xf32, #tpu.memory_space<vmem>>, vector<32x32xf32>
    %c9 = arith.constant 9 : index
    %c0_71 = arith.constant 0 : index
    %c0_72 = arith.constant 0 : index
    %153 = vector.load %arg11[%c9, %c0_71, %c0_72] : memref<16x32x32xf32, #tpu.memory_space<vmem>>, vector<1x32x32xf32>
    %154 = vector.shape_cast %153 : vector<1x32x32xf32> to vector<32x32xf32>
    %cst_73 = arith.constant dense<0.000000e+00> : vector<32x32xf32>
    %155 = tpu.matmul %152, %154, %cst_73 {dimension_numbers = #tpu.dot_dimension_numbers<[1], [0], [0], [1], [0, 0, 1, 1], [], []>} : vector<32x32xf32>, vector<32x32xf32>, vector<32x32xf32> -> vector<32x32xf32>
    %c6_74 = arith.constant 6 : index
    %c0_75 = arith.constant 0 : index
    %156 = vector.load %arg12[%c6_74, %c0_75] : memref<13x32xf32, #tpu.memory_space<vmem>>, vector<1x32xf32>
    %157 = vector.broadcast %156 : vector<1x32xf32> to vector<32x32xf32>
    %158 = arith.addf %155, %157 : vector<32x32xf32>
    %c0_76 = arith.constant 0 : index
    %c0_77 = arith.constant 0 : index
    %159 = vector.load %arg6[%c0_76, %c0_77] : memref<96x32xbf16, #tpu.memory_space<vmem>>, vector<96x32xbf16>
    %160 = arith.extf %159 : vector<96x32xbf16> to vector<96x32xf32>
    %c0_78 = arith.constant 0 : index
    %c0_79 = arith.constant 0 : index
    %161 = vector.load %arg7[%c0_78, %c0_79] : memref<32x96xbf16, #tpu.memory_space<vmem>>, vector<32x96xbf16>
    %162 = arith.extf %161 : vector<32x96xbf16> to vector<32x96xf32>
    %cst_80 = arith.constant dense<0.000000e+00> : vector<96x32xf32>
    %163 = tpu.matmul %160, %151, %cst_80 {dimension_numbers = #tpu.dot_dimension_numbers<[1], [0], [0], [1], [0, 0, 1, 1], [], []>} : vector<96x32xf32>, vector<32x32xf32>, vector<96x32xf32> -> vector<96x32xf32>
    %cst_81 = arith.constant dense<0.000000e+00> : vector<96x32xf32>
    %164 = tpu.matmul %160, %158, %cst_81 {dimension_numbers = #tpu.dot_dimension_numbers<[1], [0], [0], [1], [0, 0, 1, 1], [], []>} : vector<96x32xf32>, vector<32x32xf32>, vector<96x32xf32> -> vector<96x32xf32>
    %c0_82 = arith.constant 0 : index
    %c0_83 = arith.constant 0 : index
    %165 = vector.load %arg3[%c0_82, %c0_83] : memref<96x32xf32, #tpu.memory_space<vmem>>, vector<96x32xf32>
    %cst_84 = arith.constant dense<0.000000e+00> : vector<96xf32>
    %166 = vector.multi_reduction <add>, %165, %cst_84 [1] : vector<96x32xf32> to vector<96xf32>
    %167 = vector.shape_cast %166 : vector<96xf32> to vector<96x1xf32>
    %cst_85 = arith.constant 3.200000e+01 : f32
    %168 = vector.broadcast %cst_85 : f32 to vector<96x1xf32>
    %169 = arith.divf %167, %168 : vector<96x1xf32>
    %170 = vector.broadcast %169 : vector<96x1xf32> to vector<96x32xf32>
    %171 = arith.subf %165, %170 : vector<96x32xf32>
    %172 = arith.mulf %171, %171 : vector<96x32xf32>
    %cst_86 = arith.constant dense<0.000000e+00> : vector<96xf32>
    %173 = vector.multi_reduction <add>, %172, %cst_86 [1] : vector<96x32xf32> to vector<96xf32>
    %174 = vector.shape_cast %173 : vector<96xf32> to vector<96x1xf32>
    %cst_87 = arith.constant 3.200000e+01 : f32
    %175 = vector.broadcast %cst_87 : f32 to vector<96x1xf32>
    %176 = arith.divf %174, %175 : vector<96x1xf32>
    %cst_88 = arith.constant 9.99999974E-6 : f32
    %177 = vector.broadcast %cst_88 : f32 to vector<96x1xf32>
    %178 = arith.addf %176, %177 : vector<96x1xf32>
    %179 = math.rsqrt %178 : vector<96x1xf32>
    %180 = vector.broadcast %179 : vector<96x1xf32> to vector<96x32xf32>
    %181 = arith.mulf %171, %180 : vector<96x32xf32>
    %182 = vector.extract_strided_slice %0 {offsets = [1, 0], sizes = [1, 32], strides = [1, 1]} : vector<3x32xf32> to vector<1x32xf32>
    %183 = vector.broadcast %182 : vector<1x32xf32> to vector<96x32xf32>
    %184 = arith.mulf %181, %183 : vector<96x32xf32>
    %185 = vector.extract_strided_slice %1 {offsets = [1, 0], sizes = [1, 32], strides = [1, 1]} : vector<3x32xf32> to vector<1x32xf32>
    %186 = vector.broadcast %185 : vector<1x32xf32> to vector<96x32xf32>
    %187 = arith.addf %184, %186 : vector<96x32xf32>
    %c10 = arith.constant 10 : index
    %c0_89 = arith.constant 0 : index
    %c0_90 = arith.constant 0 : index
    %188 = vector.load %arg11[%c10, %c0_89, %c0_90] : memref<16x32x32xf32, #tpu.memory_space<vmem>>, vector<1x32x32xf32>
    %189 = vector.shape_cast %188 : vector<1x32x32xf32> to vector<32x32xf32>
    %cst_91 = arith.constant dense<0.000000e+00> : vector<96x32xf32>
    %190 = tpu.matmul %187, %189, %cst_91 {dimension_numbers = #tpu.dot_dimension_numbers<[1], [0], [0], [1], [0, 0, 1, 1], [], []>} : vector<96x32xf32>, vector<32x32xf32>, vector<96x32xf32> -> vector<96x32xf32>
    %c7_92 = arith.constant 7 : index
    %c0_93 = arith.constant 0 : index
    %191 = vector.load %arg12[%c7_92, %c0_93] : memref<13x32xf32, #tpu.memory_space<vmem>>, vector<1x32xf32>
    %192 = vector.broadcast %191 : vector<1x32xf32> to vector<96x32xf32>
    %193 = arith.addf %190, %192 : vector<96x32xf32>
    %c11 = arith.constant 11 : index
    %c0_94 = arith.constant 0 : index
    %c0_95 = arith.constant 0 : index
    %194 = vector.load %arg11[%c11, %c0_94, %c0_95] : memref<16x32x32xf32, #tpu.memory_space<vmem>>, vector<1x32x32xf32>
    %195 = vector.shape_cast %194 : vector<1x32x32xf32> to vector<32x32xf32>
    %cst_96 = arith.constant dense<0.000000e+00> : vector<96x32xf32>
    %196 = tpu.matmul %187, %195, %cst_96 {dimension_numbers = #tpu.dot_dimension_numbers<[1], [0], [0], [1], [0, 0, 1, 1], [], []>} : vector<96x32xf32>, vector<32x32xf32>, vector<96x32xf32> -> vector<96x32xf32>
    %c8_97 = arith.constant 8 : index
    %c0_98 = arith.constant 0 : index
    %197 = vector.load %arg12[%c8_97, %c0_98] : memref<13x32xf32, #tpu.memory_space<vmem>>, vector<1x32xf32>
    %198 = vector.broadcast %197 : vector<1x32xf32> to vector<96x32xf32>
    %199 = arith.addf %196, %198 : vector<96x32xf32>
    %c0_99 = arith.constant 0 : index
    %c0_100 = arith.constant 0 : index
    %200 = vector.load %arg4[%c0_99, %c0_100] : memref<24x32xf32, #tpu.memory_space<vmem>>, vector<24x32xf32>
    %cst_101 = arith.constant dense<0.000000e+00> : vector<24xf32>
    %201 = vector.multi_reduction <add>, %200, %cst_101 [1] : vector<24x32xf32> to vector<24xf32>
    %202 = vector.shape_cast %201 : vector<24xf32> to vector<24x1xf32>
    %cst_102 = arith.constant 3.200000e+01 : f32
    %203 = vector.broadcast %cst_102 : f32 to vector<24x1xf32>
    %204 = arith.divf %202, %203 : vector<24x1xf32>
    %205 = vector.broadcast %204 : vector<24x1xf32> to vector<24x32xf32>
    %206 = arith.subf %200, %205 : vector<24x32xf32>
    %207 = arith.mulf %206, %206 : vector<24x32xf32>
    %cst_103 = arith.constant dense<0.000000e+00> : vector<24xf32>
    %208 = vector.multi_reduction <add>, %207, %cst_103 [1] : vector<24x32xf32> to vector<24xf32>
    %209 = vector.shape_cast %208 : vector<24xf32> to vector<24x1xf32>
    %cst_104 = arith.constant 3.200000e+01 : f32
    %210 = vector.broadcast %cst_104 : f32 to vector<24x1xf32>
    %211 = arith.divf %209, %210 : vector<24x1xf32>
    %cst_105 = arith.constant 9.99999974E-6 : f32
    %212 = vector.broadcast %cst_105 : f32 to vector<24x1xf32>
    %213 = arith.addf %211, %212 : vector<24x1xf32>
    %214 = math.rsqrt %213 : vector<24x1xf32>
    %215 = vector.broadcast %214 : vector<24x1xf32> to vector<24x32xf32>
    %216 = arith.mulf %206, %215 : vector<24x32xf32>
    %217 = vector.extract_strided_slice %0 {offsets = [2, 0], sizes = [1, 32], strides = [1, 1]} : vector<3x32xf32> to vector<1x32xf32>
    %218 = vector.broadcast %217 : vector<1x32xf32> to vector<24x32xf32>
    %219 = arith.mulf %216, %218 : vector<24x32xf32>
    %220 = vector.extract_strided_slice %1 {offsets = [2, 0], sizes = [1, 32], strides = [1, 1]} : vector<3x32xf32> to vector<1x32xf32>
    %221 = vector.broadcast %220 : vector<1x32xf32> to vector<24x32xf32>
    %222 = arith.addf %219, %221 : vector<24x32xf32>
    %c12 = arith.constant 12 : index
    %c0_106 = arith.constant 0 : index
    %c0_107 = arith.constant 0 : index
    %223 = vector.load %arg11[%c12, %c0_106, %c0_107] : memref<16x32x32xf32, #tpu.memory_space<vmem>>, vector<1x32x32xf32>
    %224 = vector.shape_cast %223 : vector<1x32x32xf32> to vector<32x32xf32>
    %cst_108 = arith.constant dense<0.000000e+00> : vector<24x32xf32>
    %225 = tpu.matmul %222, %224, %cst_108 {dimension_numbers = #tpu.dot_dimension_numbers<[1], [0], [0], [1], [0, 0, 1, 1], [], []>} : vector<24x32xf32>, vector<32x32xf32>, vector<24x32xf32> -> vector<24x32xf32>
    %c9_109 = arith.constant 9 : index
    %c0_110 = arith.constant 0 : index
    %226 = vector.load %arg12[%c9_109, %c0_110] : memref<13x32xf32, #tpu.memory_space<vmem>>, vector<1x32xf32>
    %227 = vector.broadcast %226 : vector<1x32xf32> to vector<24x32xf32>
    %228 = arith.addf %225, %227 : vector<24x32xf32>
    %c0_111 = arith.constant 0 : index
    %c0_112 = arith.constant 0 : index
    %229 = vector.load %arg5[%c0_111, %c0_112] : memref<24x32xf32, #tpu.memory_space<vmem>>, vector<24x32xf32>
    %c13 = arith.constant 13 : index
    %c0_113 = arith.constant 0 : index
    %c0_114 = arith.constant 0 : index
    %230 = vector.load %arg11[%c13, %c0_113, %c0_114] : memref<16x32x32xf32, #tpu.memory_space<vmem>>, vector<1x32x32xf32>
    %231 = vector.shape_cast %230 : vector<1x32x32xf32> to vector<32x32xf32>
    %cst_115 = arith.constant dense<0.000000e+00> : vector<24x32xf32>
    %232 = tpu.matmul %229, %231, %cst_115 {dimension_numbers = #tpu.dot_dimension_numbers<[1], [0], [0], [1], [0, 0, 1, 1], [], []>} : vector<24x32xf32>, vector<32x32xf32>, vector<24x32xf32> -> vector<24x32xf32>
    %c10_116 = arith.constant 10 : index
    %c0_117 = arith.constant 0 : index
    %233 = vector.load %arg12[%c10_116, %c0_117] : memref<13x32xf32, #tpu.memory_space<vmem>>, vector<1x32xf32>
    %234 = vector.broadcast %233 : vector<1x32xf32> to vector<24x32xf32>
    %235 = arith.addf %232, %234 : vector<24x32xf32>
    %c0_118 = arith.constant 0 : index
    %c0_119 = arith.constant 0 : index
    %236 = vector.load %arg8[%c0_118, %c0_119] : memref<96x24xbf16, #tpu.memory_space<vmem>>, vector<96x24xbf16>
    %237 = arith.extf %236 : vector<96x24xbf16> to vector<96x24xf32>
    %cst_120 = arith.constant dense<0.000000e+00> : vector<96x32xf32>
    %238 = tpu.matmul %237, %228, %cst_120 {dimension_numbers = #tpu.dot_dimension_numbers<[1], [0], [0], [1], [0, 0, 1, 1], [], []>} : vector<96x24xf32>, vector<24x32xf32>, vector<96x32xf32> -> vector<96x32xf32>
    %cst_121 = arith.constant dense<0.000000e+00> : vector<96x32xf32>
    %239 = tpu.matmul %237, %235, %cst_121 {dimension_numbers = #tpu.dot_dimension_numbers<[1], [0], [0], [1], [0, 0, 1, 1], [], []>} : vector<96x24xf32>, vector<24x32xf32>, vector<96x32xf32> -> vector<96x32xf32>
    %240 = arith.addf %199, %238 : vector<96x32xf32>
    %241 = arith.mulf %193, %163 : vector<96x32xf32>
    %242 = arith.mulf %239, %164 : vector<96x32xf32>
    %243 = arith.addf %241, %242 : vector<96x32xf32>
    %c0_122 = arith.constant 0 : index
    %c0_123 = arith.constant 0 : index
    %244 = vector.load %arg9[%c0_122, %c0_123] : memref<32x4xf32, #tpu.memory_space<vmem>>, vector<32x4xf32>
    %cst_124 = arith.constant dense<0.000000e+00> : vector<96x4xf32>
    %245 = tpu.matmul %243, %244, %cst_124 {dimension_numbers = #tpu.dot_dimension_numbers<[1], [0], [0], [1], [0, 0, 1, 1], [], []>} : vector<96x32xf32>, vector<32x4xf32>, vector<96x4xf32> -> vector<96x4xf32>
    %cst_125 = arith.constant dense<0xFF800000> : vector<4xf32>
    %246 = vector.multi_reduction <maximumf>, %245, %cst_125 [0] : vector<96x4xf32> to vector<4xf32>
    %247 = vector.shape_cast %246 : vector<4xf32> to vector<1x4xf32>
    %248 = vector.broadcast %247 : vector<1x4xf32> to vector<96x4xf32>
    %249 = arith.subf %245, %248 : vector<96x4xf32>
    %250 = math.exp %249 : vector<96x4xf32>
    %cst_126 = arith.constant dense<0.000000e+00> : vector<32x4xf32>
    %251 = tpu.matmul %162, %250, %cst_126 {dimension_numbers = #tpu.dot_dimension_numbers<[1], [0], [0], [1], [0, 0, 1, 1], [], []>} : vector<32x96xf32>, vector<96x4xf32>, vector<32x4xf32> -> vector<32x4xf32>
    %cst_127 = arith.constant dense<0.000000e+00> : vector<96x4xf32>
    %252 = tpu.matmul %160, %251, %cst_127 {dimension_numbers = #tpu.dot_dimension_numbers<[1], [0], [0], [1], [0, 0, 1, 1], [], []>} : vector<96x32xf32>, vector<32x4xf32>, vector<96x4xf32> -> vector<96x4xf32>
    %cst_128 = arith.constant 1.000000e-16 : f32
    %253 = vector.broadcast %cst_128 : f32 to vector<96x4xf32>
    %254 = arith.addf %252, %253 : vector<96x4xf32>
    %255 = tpu.reciprocal %254 {approx = true} : vector<96x4xf32> -> vector<96x4xf32>
    %256 = arith.mulf %250, %255 : vector<96x4xf32>
    %c0_129 = arith.constant 0 : index
    %c0_130 = arith.constant 0 : index
    %257 = vector.load %arg10[%c0_129, %c0_130] : memref<4x32xf32, #tpu.memory_space<vmem>>, vector<4x32xf32>
    %cst_131 = arith.constant dense<0.000000e+00> : vector<96x32xf32>
    %258 = tpu.matmul %256, %257, %cst_131 {dimension_numbers = #tpu.dot_dimension_numbers<[1], [0], [0], [1], [0, 0, 1, 1], [], []>} : vector<96x4xf32>, vector<4x32xf32>, vector<96x32xf32> -> vector<96x32xf32>
    %259 = arith.mulf %240, %258 : vector<96x32xf32>
    %cst_132 = arith.constant dense<0.000000e+00> : vector<32x32xf32>
    %260 = tpu.matmul %162, %259, %cst_132 {dimension_numbers = #tpu.dot_dimension_numbers<[1], [0], [0], [1], [0, 0, 1, 1], [], []>} : vector<32x96xf32>, vector<96x32xf32>, vector<32x32xf32> -> vector<32x32xf32>
    %261 = arith.addf %141, %260 : vector<32x32xf32>
    %c14 = arith.constant 14 : index
    %c0_133 = arith.constant 0 : index
    %c0_134 = arith.constant 0 : index
    %262 = vector.load %arg11[%c14, %c0_133, %c0_134] : memref<16x32x32xf32, #tpu.memory_space<vmem>>, vector<1x32x32xf32>
    %263 = vector.shape_cast %262 : vector<1x32x32xf32> to vector<32x32xf32>
    %cst_135 = arith.constant dense<0.000000e+00> : vector<32x32xf32>
    %264 = tpu.matmul %261, %263, %cst_135 {dimension_numbers = #tpu.dot_dimension_numbers<[1], [0], [0], [1], [0, 0, 1, 1], [], []>} : vector<32x32xf32>, vector<32x32xf32>, vector<32x32xf32> -> vector<32x32xf32>
    %c11_136 = arith.constant 11 : index
    %c0_137 = arith.constant 0 : index
    %265 = vector.load %arg12[%c11_136, %c0_137] : memref<13x32xf32, #tpu.memory_space<vmem>>, vector<1x32xf32>
    %266 = vector.broadcast %265 : vector<1x32xf32> to vector<32x32xf32>
    %267 = arith.addf %264, %266 : vector<32x32xf32>
    %cst_138 = arith.constant 0.000000e+00 : f32
    %268 = vector.broadcast %cst_138 : f32 to vector<32x32xf32>
    %269 = arith.maximumf %267, %268 : vector<32x32xf32>
    %c15 = arith.constant 15 : index
    %c0_139 = arith.constant 0 : index
    %c0_140 = arith.constant 0 : index
    %270 = vector.load %arg11[%c15, %c0_139, %c0_140] : memref<16x32x32xf32, #tpu.memory_space<vmem>>, vector<1x32x32xf32>
    %271 = vector.shape_cast %270 : vector<1x32x32xf32> to vector<32x32xf32>
    %cst_141 = arith.constant dense<0.000000e+00> : vector<32x32xf32>
    %272 = tpu.matmul %269, %271, %cst_141 {dimension_numbers = #tpu.dot_dimension_numbers<[1], [0], [0], [1], [0, 0, 1, 1], [], []>} : vector<32x32xf32>, vector<32x32xf32>, vector<32x32xf32> -> vector<32x32xf32>
    %c12_142 = arith.constant 12 : index
    %c0_143 = arith.constant 0 : index
    %273 = vector.load %arg12[%c12_142, %c0_143] : memref<13x32xf32, #tpu.memory_space<vmem>>, vector<1x32xf32>
    %274 = vector.broadcast %273 : vector<1x32xf32> to vector<32x32xf32>
    %275 = arith.addf %272, %274 : vector<32x32xf32>
    %276 = arith.addf %261, %275 : vector<32x32xf32>
    %c0_144 = arith.constant 0 : index
    %c0_145 = arith.constant 0 : index
    %277 = vector.load %arg15[%c0_144, %c0_145] : memref<32x32xf32, #tpu.memory_space<vmem>>, vector<32x32xf32>
    tpu.vector_store %arg15[%c0_144, %c0_145], %276 {strides = array<i32>} : memref<32x32xf32, #tpu.memory_space<vmem>>, vector<32x32xf32>,
    return
  }
}

</mosaic_0001>

<llo_original>
// kernel: route_encoder_layer.1
$region0: #{route_encoder_layer.1}
  #allocation0 [shape = 'u32[]', space=smem, size = 0x4, offset = 0x4, fixed_abs, tag = 'smem constant byte address 0x4 - core index']
  #allocation1 [shape = 'u32[144,128]{1,0:T(1,128)}', space=vmem, size = 0x12000, scoped, tag = 'internal scratch']
  %s0 = inlined_call_operand.vmem [shape: f32[32,32], index: 0, kind: input, shape index: {}]
  %s1 = inlined_call_operand.vmem [shape: f32[32,32], index: 1, kind: input, shape index: {}]
  %s2 = inlined_call_operand.vmem [shape: f32[32,32], index: 2, kind: input, shape index: {}]
  %s3 = inlined_call_operand.vmem [shape: f32[96,32], index: 3, kind: input, shape index: {}]
  %s4 = inlined_call_operand.vmem [shape: f32[24,32], index: 4, kind: input, shape index: {}]
  %s5 = inlined_call_operand.vmem [shape: f32[24,32], index: 5, kind: input, shape index: {}]
  %s6 = inlined_call_operand.vmem [shape: bf16[96,32], index: 6, kind: input, shape index: {}]
  %s7 = inlined_call_operand.vmem [shape: bf16[32,96], index: 7, kind: input, shape index: {}]
  %s8 = inlined_call_operand.vmem [shape: bf16[96,24], index: 8, kind: input, shape index: {}]
  %s9 = inlined_call_operand.vmem [shape: f32[32,4], index: 9, kind: input, shape index: {}]
  %s10 = inlined_call_operand.vmem [shape: f32[4,32], index: 10, kind: input, shape index: {}]
  %s11 = inlined_call_operand.hbm [shape: f32[16,32,32], index: 11, kind: input, shape index: {}]
  %s12 = inlined_call_operand.vmem [shape: f32[13,32], index: 12, kind: input, shape index: {}]
  %s13 = inlined_call_operand.vmem [shape: f32[3,32], index: 13, kind: input, shape index: {}]
  %s14 = inlined_call_operand.vmem [shape: f32[3,32], index: 14, kind: input, shape index: {}]
  %s15 = inlined_call_operand.hbm [shape: f32[32,32], index: 15, kind: output, shape index: {}]
  %s16 = sld [smem:[#allocation0]]
  $region74: #{route_encoder_layer.1} parent=0
    _
  %s18 = ssub.s32 1, %s16
  %s19 = scalar_select 0, %s18, %s16
  $region1: #{route_encoder_layer.1} parent=0
    #allocation2 [shape = 'u8[262144]{0}', space=vmem, size = 0x40000, scoped, tag = 'input window, operand 11, single buffered']
    #allocation3 [shape = 's32[1]{0}', space=sflag, size = 0x4, scoped, tag = 'scoped memory for route_encoder_layer.1']
    #allocation4 [shape = 's32[1]{0}', space=sflag, size = 0x4, scoped, tag = 'scoped memory for route_encoder_layer.1']
    #allocation5 [shape = 'u8[16384]{0}', space=vmem, size = 0x4000, scoped, tag = 'output window, operand 0, single buffered']
    %20 = vsyncpa [#allocation3], 0
    %21 = vsyncpa [#allocation4], 0
    // Predicated region
    $region2: #{route_encoder_layer.1} parent=1 // pred_check
      _
    $region3: #{route_encoder_layer.1} parent=1 // pred_check_branch
      %23 = sbr.rel (0) target = $region5
    $region4: #{route_encoder_layer.1} parent=1 // pred_region
      _
    $region5: #{route_encoder_layer.1} parent=1 // pred_fallthru
      _
    // Predicated region
    $region6: #{route_encoder_layer.1} parent=1 // pred_check
      _
    $region7: #{route_encoder_layer.1} parent=1 // pred_check_branch
      %25 = sbr.rel (0) target = $region9
    $region8: #{route_encoder_layer.1} parent=1 // pred_region
      _
    $region9: #{route_encoder_layer.1} parent=1 // pred_fallthru
      _
    // Predicated region
    $region10: #{route_encoder_layer.1} parent=1 // pred_check
      _
    $region11: #{route_encoder_layer.1} parent=1 // pred_check_branch
      %27 = sbr.rel (0) target = $region13
    $region12: #{route_encoder_layer.1} parent=1 // pred_region
      _
    $region13: #{route_encoder_layer.1} parent=1 // pred_fallthru
      _
    // Predicated region
    $region14: #{route_encoder_layer.1} parent=1 // pred_check
      _
    $region15: #{route_encoder_layer.1} parent=1 // pred_check_branch
      %29 = sbr.rel (0) target = $region17
    $region16: #{route_encoder_layer.1} parent=1 // pred_region
      _
    $region17: #{route_encoder_layer.1} parent=1 // pred_fallthru
      _
    // Predicated region
    $region18: #{route_encoder_layer.1} parent=1 // pred_check
      _
    $region19: #{route_encoder_layer.1} parent=1 // pred_check_branch
      %31 = sbr.rel (0) target = $region21
    $region20: #{route_encoder_layer.1} parent=1 // pred_region
      _
    $region21: #{route_encoder_layer.1} parent=1 // pred_fallthru
      _
    // Predicated region
    $region22: #{route_encoder_layer.1} parent=1 // pred_check
      _
    $region23: #{route_encoder_layer.1} parent=1 // pred_check_branch
      %33 = sbr.rel (0) target = $region25
    $region24: #{route_encoder_layer.1} parent=1 // pred_region
      _
    $region25: #{route_encoder_layer.1} parent=1 // pred_fallthru
      _
    // Predicated region
    $region26: #{route_encoder_layer.1} parent=1 // pred_check
      _
    $region27: #{route_encoder_layer.1} parent=1 // pred_check_branch
      %35 = sbr.rel (0) target = $region29
    $region28: #{route_encoder_layer.1} parent=1 // pred_region
      _
    $region29: #{route_encoder_layer.1} parent=1 // pred_fallthru
      _
    // Predicated region
    $region30: #{route_encoder_layer.1} parent=1 // pred_check
      _
    $region31: #{route_encoder_layer.1} parent=1 // pred_check_branch
      %37 = sbr.rel (0) target = $region33
    $region32: #{route_encoder_layer.1} parent=1 // pred_region
      _
    $region33: #{route_encoder_layer.1} parent=1 // pred_fallthru
      _
    // Predicated region
    $region34: #{route_encoder_layer.1} parent=1 // pred_check
      _
    $region35: #{route_encoder_layer.1} parent=1 // pred_check_branch
      %39 = sbr.rel (0) target = $region37
    $region36: #{route_encoder_layer.1} parent=1 // pred_region
      _
    $region37: #{route_encoder_layer.1} parent=1 // pred_fallthru
      _
    // Predicated region
    $region38: #{route_encoder_layer.1} parent=1 // pred_check
      _
    $region39: #{route_encoder_layer.1} parent=1 // pred_check_branch
      %41 = sbr.rel (0) target = $region41
    $region40: #{route_encoder_layer.1} parent=1 // pred_region
      _
    $region41: #{route_encoder_layer.1} parent=1 // pred_fallthru
      _
    // Predicated region
    $region42: #{route_encoder_layer.1} parent=1 // pred_check
      _
    $region43: #{route_encoder_layer.1} parent=1 // pred_check_branch
      %43 = sbr.rel (0) target = $region45
    $region44: #{route_encoder_layer.1} parent=1 // pred_region
      _
    $region45: #{route_encoder_layer.1} parent=1 // pred_fallthru
      _
    // Predicated region
    $region46: #{route_encoder_layer.1} parent=1 // pred_check
      _
    $region47: #{route_encoder_layer.1} parent=1 // pred_check_branch
      %45 = sbr.rel (0) target = $region49
    $region48: #{route_encoder_layer.1} parent=1 // pred_region
      %s47 = ssub.s32 8192, 8192
      %48 = vsyncadd [#allocation3], %s47
      %s49 = sshll.u32 [#allocation2], 4
      %s50 = int_to_ptr.vmem [resolvable:$true] %s49
      %55 = dma.hbm_to_vmem [thread:$0]  %s11, 8192, %s50, [#allocation3], 128, 128, 8
    $region49: #{route_encoder_layer.1} parent=1 // pred_fallthru
      _
    // Predicated region
    $region50: #{route_encoder_layer.1} parent=1 // pred_check
      _
    $region51: #{route_encoder_layer.1} parent=1 // pred_check_branch
      %57 = sbr.rel (0) target = $region53
    $region52: #{route_encoder_layer.1} parent=1 // pred_region
      _
    $region53: #{route_encoder_layer.1} parent=1 // pred_fallthru
      _
    // Predicated region
    $region54: #{route_encoder_layer.1} parent=1 // pred_check
      _
    $region55: #{route_encoder_layer.1} parent=1 // pred_check_branch
      %59 = sbr.rel (0) target = $region57
    $region56: #{route_encoder_layer.1} parent=1 // pred_region
      _
    $region57: #{route_encoder_layer.1} parent=1 // pred_fallthru
      _
    // Predicated region
    $region58: #{route_encoder_layer.1} parent=1 // pred_check
      _
    $region59: #{route_encoder_layer.1} parent=1 // pred_check_branch
      %61 = sbr.rel (0) target = $region61
    $region60: #{route_encoder_layer.1} parent=1 // pred_region
      _
    $region61: #{route_encoder_layer.1} parent=1 // pred_fallthru
      _
    // Predicated region
    $region62: #{route_encoder_layer.1} parent=1 // pred_check
      _
    $region63: #{route_encoder_layer.1} parent=1 // pred_check_branch
      %63 = sbr.rel (0) target = $region65
    $region64: #{route_encoder_layer.1} parent=1 // pred_region
      %64 = dma.done [#allocation3], 8192
    $region65: #{route_encoder_layer.1} parent=1 // pred_fallthru
      _
    %v65 = vld [vmem:[%s13] sm:$0x7]
    %v66 = vld [vmem:[%s14] sm:$0x7]
    %v67 = vld [vmem:[%s0] sm:$0xff]
    %v68 = vld [vmem:[%s0 + $0x8] sm:$0xff]
    %v69 = vld [vmem:[%s0 + $0x10] sm:$0xff]
    %v70 = vld [vmem:[%s0 + $0x18] sm:$0xff]
    %v71 = vld [vmem:[%s1] sm:$0xff]
    %v72 = vld [vmem:[%s1 + $0x8] sm:$0xff]
    %v73 = vld [vmem:[%s1 + $0x10] sm:$0xff]
    %v74 = vld [vmem:[%s1 + $0x18] sm:$0xff]
    %vm75 = vcmask 261120
    %v76 = vsel %vm75, %v67, 0.0
    %77 = vadd.xlane.f32.xlu0 %v76
    %v78 = vpop.xlane.xlu0 %77
    %v79 = vsel %vm75, %v68, 0.0
    %80 = vadd.xlane.f32.xlu0 %v79
    %v81 = vpop.xlane.xlu0 %80
    %v82 = vsel %vm75, %v69, 0.0
    %83 = vadd.xlane.f32.xlu0 %v82
    %v84 = vpop.xlane.xlu0 %83
    %v85 = vsel %vm75, %v70, 0.0
    %86 = vadd.xlane.f32.xlu0 %v85
    %v87 = vpop.xlane.xlu0 %86
    %v88 = vrcp.pop 32.0
    %v89 = vmul.f32 %v78, %v88
    %v90 = vmul.f32 %v81, %v88
    %v91 = vmul.f32 %v84, %v88
    %v92 = vmul.f32 %v87, %v88
    %v93 = vsub.f32 %v67, %v89
    %v94 = vsub.f32 %v68, %v90
    %v95 = vsub.f32 %v69, %v91
    %v96 = vsub.f32 %v70, %v92
    %v97 = vmul.f32 %v93, %v93
    %v98 = vmul.f32 %v94, %v94
    %v99 = vmul.f32 %v95, %v95
    %v100 = vmul.f32 %v96, %v96
    %v101 = vsel %vm75, %v97, 0.0
    %102 = vadd.xlane.f32.xlu0 %v101
    %v103 = vpop.xlane.xlu0 %102
    %v104 = vsel %vm75, %v98, 0.0
    %105 = vadd.xlane.f32.xlu0 %v104
    %v106 = vpop.xlane.xlu0 %105
    %v107 = vsel %vm75, %v99, 0.0
    %108 = vadd.xlane.f32.xlu0 %v107
    %v109 = vpop.xlane.xlu0 %108
    %v110 = vsel %vm75, %v100, 0.0
    %111 = vadd.xlane.f32.xlu0 %v110
    %v112 = vpop.xlane.xlu0 %111
    %v113 = vmul.f32 %v103, %v88
    %v114 = vmul.f32 %v106, %v88
    %v115 = vmul.f32 %v109, %v88
    %v116 = vmul.f32 %v112, %v88
    %v117 = vadd.f32 %v113, 1e-05
    %v118 = vadd.f32 %v114, 1e-05
    %v119 = vadd.f32 %v115, 1e-05
    %v120 = vadd.f32 %v116, 1e-05
    %v121 = vrsqrt.pop %v117
    %v122 = vrsqrt.pop %v118
    %v123 = vrsqrt.pop %v119
    %v124 = vrsqrt.pop %v120
    %v125 = vmul.f32 %v93, %v121
    %v126 = vmul.f32 %v94, %v122
    %v127 = vmul.f32 %v95, %v123
    %v128 = vmul.f32 %v96, %v124
    %v129 = vlaneseq
    %v130 = vshrl.u32 %v129, 7
    %v131 = vsub.s32 0, %v130
    %v132 = vrot.slane %v65, %v131
    %v133 = vmul.f32 %v125, %v132
    %v134 = vmul.f32 %v126, %v132
    %v135 = vmul.f32 %v127, %v132
    %v136 = vmul.f32 %v128, %v132
    %v137 = vlaneseq
    %v138 = vshrl.u32 %v137, 7
    %v139 = vsub.s32 0, %v138
    %v140 = vrot.slane %v66, %v139
    %v141 = vadd.f32 %v133, %v140
    %v142 = vadd.f32 %v134, %v140
    %v143 = vadd.f32 %v135, %v140
    %v144 = vadd.f32 %v136, %v140
    %v145 = vld [vmem:[#allocation2] sm:$0xff]
    %v146 = vld [vmem:[#allocation2 + $0x8] sm:$0xff]
    %v147 = vld [vmem:[#allocation2 + $0x10] sm:$0xff]
    %v148 = vld [vmem:[#allocation2 + $0x18] sm:$0xff]
    %s149 = scalar_lea.vmem [#allocation2], 96
    %v150 = vld [vmem:[%s149] sm:$0xff]
    %v151 = vld [vmem:[%s149 + $0x8] sm:$0xff]
    %v152 = vld [vmem:[%s149 + $0x10] sm:$0xff]
    %v153 = vld [vmem:[%s149 + $0x18] sm:$0xff]
    %v155 = vsel %vm75, %v71, 0
    %v158 = vsel %vm75, %v72, 0
    %v161 = vsel %vm75, %v73, 0
    %v164 = vsel %vm75, %v74, 0
    %166 = vmatprep.subr.mxu0 0.0
    %167 = vmatpush1.msra.mxu0 %v150
    %168 = vmatprep.subr.mxu0 0.0
    %169 = vmatpush1.msra.mxu0 %v151
    %170 = vmatprep.subr.mxu0 0.0
    %171 = vmatpush1.msra.mxu0 %v152
    %172 = vmatprep.subr.mxu0 0.0
    %173 = vmatpush1.msra.mxu0 %v153
    %174 = vmatprep.subr.mxu0 0.0
    %175 = vmatpush1.msra.mxu0 0.0
    %176 = vmatprep.subr.mxu0 0.0
    %177 = vmatpush1.msra.mxu0 0.0
    %178 = vmatprep.subr.mxu0 0.0
    %179 = vmatpush1.msra.mxu0 0.0
    %180 = vmatprep.subr.mxu0 0.0
    %181 = vmatpush1.msra.mxu0 0.0
    %182 = vmatprep.subr.mxu0 0.0
    %183 = vmatpush1.msra.mxu0 0.0
    %184 = vmatprep.subr.mxu0 0.0
    %185 = vmatpush1.msra.mxu0 0.0
    %186 = vmatprep.subr.mxu0 0.0
    %187 = vmatpush1.msra.mxu0 0.0
    %188 = vmatprep.subr.mxu0 0.0
    %189 = vmatpush1.msra.mxu0 0.0
    %190 = vmatprep.subr.mxu0 0.0
    %191 = vmatpush1.msra.mxu0 0.0
    %192 = vmatprep.subr.mxu0 0.0
    %193 = vmatpush1.msra.mxu0 0.0
    %194 = vmatprep.subr.mxu0 0.0
    %195 = vmatpush1.msra.mxu0 0.0
    %196 = vmatprep.subr.mxu0 0.0
    %197 = vmatpush1.msra.mxu0 0.0
    %198 = vmatprep.subr.mxu0 0.0
    %199 = vmatpush1.msra.mxu0 0.0
    %200 = vmatprep.subr.mxu0 0.0
    %201 = vmatpush1.msra.mxu0 0.0
    %202 = vmatprep.subr.mxu0 0.0
    %203 = vmatpush1.msra.mxu0 0.0
    %204 = vmatprep.subr.mxu0 0.0
    %205 = vmatpush1.msra.mxu0 0.0
    %206 = vmatprep.subr.mxu0 0.0
    %207 = vmatpush1.msra.mxu0 0.0
    %208 = vmatprep.subr.mxu0 0.0
    %209 = vmatpush1.msra.mxu0 0.0
    %210 = vmatprep.subr.mxu0 0.0
    %211 = vmatpush1.msra.mxu0 0.0
    %212 = vmatprep.subr.mxu0 0.0
    %213 = vmatpush1.msra.mxu0 0.0
    %214 = vmatprep.subr.mxu0 0.0
    %215 = vmatpush1.msra.mxu0 0.0
    %216 = vmatprep.subr.mxu0 0.0
    %217 = vmatpush1.msra.mxu0 0.0
    %218 = vmatprep.subr.mxu0 0.0
    %219 = vmatpush1.msra.mxu0 0.0
    %220 = vmatprep.subr.mxu0 0.0
    %221 = vmatpush1.msra.mxu0 0.0
    %222 = vmatprep.subr.mxu0 0.0
    %223 = vmatpush1.msra.mxu0 0.0
    %224 = vmatprep.subr.mxu0 0.0
    %225 = vmatpush1.msra.mxu0 0.0
    %226 = vmatprep.subr.mxu0 0.0
    %227 = vmatpush1.msra.mxu0 0.0
    %228 = vmatprep.subr.mxu0 0.0
    %229 = vmatpush1.msra.mxu0 0.0
    %230 = vmatprep.mubr.f32.mxu0 0.0
    %231 = vmatmul.mubr.f32.gmra.mrb[0].mxu0 %v155
    %v232 = vpop.f32.mrb[0].mxu0
    %v233 = vadd.f32 0.0, %v232
    %v234 = vpop.f32.mrb[0].mxu0
    %235 = vmatprep.mubr.f32.mxu0 0.0
    %236 = vmatmul.mubr.f32.gmra.mrb[0].mxu0 %v158
    %v237 = vpop.f32.mrb[0].mxu0
    %v238 = vadd.f32 0.0, %v237
    %v239 = vpop.f32.mrb[0].mxu0
    %240 = vmatprep.mubr.f32.mxu0 0.0
    %241 = vmatmul.mubr.f32.gmra.mrb[0].mxu0 %v161
    %v242 = vpop.f32.mrb[0].mxu0
    %v243 = vadd.f32 0.0, %v242
    %v244 = vpop.f32.mrb[0].mxu0
    %245 = vmatprep.mubr.f32.mxu0 0.0
    %246 = vmatmul.mubr.f32.gmra.mrb[0].mxu0 %v164
    %v247 = vpop.f32.mrb[0].mxu0
    %v248 = vadd.f32 0.0, %v247
    %v249 = vpop.f32.mrb[0].mxu0
    %250 = vdwg.mxu0
    %v252 = vsel %vm75, %v141, 0
    %v255 = vsel %vm75, %v142, 0
    %v258 = vsel %vm75, %v143, 0
    %v261 = vsel %vm75, %v144, 0
    %263 = vmatprep.subr.mxu0 0.0
    %264 = vmatpush1.msra.mxu0 %v145
    %265 = vmatprep.subr.mxu0 0.0
    %266 = vmatpush1.msra.mxu0 %v146
    %267 = vmatprep.subr.mxu0 0.0
    %268 = vmatpush1.msra.mxu0 %v147
    %269 = vmatprep.subr.mxu0 0.0
    %270 = vmatpush1.msra.mxu0 %v148
    %271 = vmatprep.subr.mxu0 0.0
    %272 = vmatpush1.msra.mxu0 0.0
    %273 = vmatprep.subr.mxu0 0.0
    %274 = vmatpush1.msra.mxu0 0.0
    %275 = vmatprep.subr.mxu0 0.0
    %276 = vmatpush1.msra.mxu0 0.0
    %277 = vmatprep.subr.mxu0 0.0
    %278 = vmatpush1.msra.mxu0 0.0
    %279 = vmatprep.subr.mxu0 0.0
    %280 = vmatpush1.msra.mxu0 0.0
    %281 = vmatprep.subr.mxu0 0.0
    %282 = vmatpush1.msra.mxu0 0.0
    %283 = vmatprep.subr.mxu0 0.0
    %284 = vmatpush1.msra.mxu0 0.0
    %285 = vmatprep.subr.mxu0 0.0
    %286 = vmatpush1.msra.mxu0 0.0
    %287 = vmatprep.subr.mxu0 0.0
    %288 = vmatpush1.msra.mxu0 0.0
    %289 = vmatprep.subr.mxu0 0.0
    %290 = vmatpush1.msra.mxu0 0.0
    %291 = vmatprep.subr.mxu0 0.0
    %292 = vmatpush1.msra.mxu0 0.0
    %293 = vmatprep.subr.mxu0 0.0
    %294 = vmatpush1.msra.mxu0 0.0
    %295 = vmatprep.subr.mxu0 0.0
    %296 = vmatpush1.msra.mxu0 0.0
    %297 = vmatprep.subr.mxu0 0.0
    %298 = vmatpush1.msra.mxu0 0.0
    %299 = vmatprep.subr.mxu0 0.0
    %300 = vmatpush1.msra.mxu0 0.0
    %301 = vmatprep.subr.mxu0 0.0
    %302 = vmatpush1.msra.mxu0 0.0
    %303 = vmatprep.subr.mxu0 0.0
    %304 = vmatpush1.msra.mxu0 0.0
    %305 = vmatprep.subr.mxu0 0.0
    %306 = vmatpush1.msra.mxu0 0.0
    %307 = vmatprep.subr.mxu0 0.0
    %308 = vmatpush1.msra.mxu0 0.0
    %309 = vmatprep.subr.mxu0 0.0
    %310 = vmatpush1.msra.mxu0 0.0
    %311 = vmatprep.subr.mxu0 0.0
    %312 = vmatpush1.msra.mxu0 0.0
    %313 = vmatprep.subr.mxu0 0.0
    %314 = vmatpush1.msra.mxu0 0.0
    %315 = vmatprep.subr.mxu0 0.0
    %316 = vmatpush1.msra.mxu0 0.0
    %317 = vmatprep.subr.mxu0 0.0
    %318 = vmatpush1.msra.mxu0 0.0
    %319 = vmatprep.subr.mxu0 0.0
    %320 = vmatpush1.msra.mxu0 0.0
    %321 = vmatprep.subr.mxu0 0.0
    %322 = vmatpush1.msra.mxu0 0.0
    %323 = vmatprep.subr.mxu0 0.0
    %324 = vmatpush1.msra.mxu0 0.0
    %325 = vmatprep.subr.mxu0 0.0
    %326 = vmatpush1.msra.mxu0 0.0
    %327 = vmatprep.mubr.f32.mxu0 0.0
    %328 = vmatmul.mubr.f32.gmra.mrb[0].mxu0 %v252
    %v329 = vpop.f32.mrb[0].mxu0
    %v330 = vadd.f32 %v233, %v329
    %v331 = vpop.f32.mrb[0].mxu0
    %332 = vmatprep.mubr.f32.mxu0 0.0
    %333 = vmatmul.mubr.f32.gmra.mrb[0].mxu0 %v255
    %v334 = vpop.f32.mrb[0].mxu0
    %v335 = vadd.f32 %v238, %v334
    %v336 = vpop.f32.mrb[0].mxu0
    %337 = vmatprep.mubr.f32.mxu0 0.0
    %338 = vmatmul.mubr.f32.gmra.mrb[0].mxu0 %v258
    %v339 = vpop.f32.mrb[0].mxu0
    %v340 = vadd.f32 %v243, %v339
    %v341 = vpop.f32.mrb[0].mxu0
    %342 = vmatprep.mubr.f32.mxu0 0.0
    %343 = vmatmul.mubr.f32.gmra.mrb[0].mxu0 %v261
    %v344 = vpop.f32.mrb[0].mxu0
    %v345 = vadd.f32 %v248, %v344
    %v346 = vpop.f32.mrb[0].mxu0
    %347 = vdwg.mxu0
    %v348 = vld [vmem:[%s12] sm:$0x1]
    %v349 = vlaneseq
    %v350 = vshrl.u32 %v349, 7
    %v351 = vsub.s32 0, %v350
    %v352 = vrot.slane %v348, %v351
    %v353 = vadd.f32 %v330, %v352
    %v354 = vadd.f32 %v335, %v352
    %v355 = vadd.f32 %v340, %v352
    %v356 = vadd.f32 %v345, %v352
    %s357 = scalar_lea.vmem [#allocation2], 32
    %v358 = vld [vmem:[%s357] sm:$0xff]
    %v359 = vld [vmem:[%s357 + $0x8] sm:$0xff]
    %v360 = vld [vmem:[%s357 + $0x10] sm:$0xff]
    %v361 = vld [vmem:[%s357 + $0x18] sm:$0xff]
    %s362 = scalar_lea.vmem [#allocation2], 128
    %v363 = vld [vmem:[%s362] sm:$0xff]
    %v364 = vld [vmem:[%s362 + $0x8] sm:$0xff]
    %v365 = vld [vmem:[%s362 + $0x10] sm:$0xff]
    %v366 = vld [vmem:[%s362 + $0x18] sm:$0xff]
    %367 = vmatprep.subr.mxu0 0.0
    %368 = vmatpush1.msra.mxu0 %v363
    %369 = vmatprep.subr.mxu0 0.0
    %370 = vmatpush1.msra.mxu0 %v364
    %371 = vmatprep.subr.mxu0 0.0
    %372 = vmatpush1.msra.mxu0 %v365
    %373 = vmatprep.subr.mxu0 0.0
    %374 = vmatpush1.msra.mxu0 %v366
    %375 = vmatprep.subr.mxu0 0.0
    %376 = vmatpush1.msra.mxu0 0.0
    %377 = vmatprep.subr.mxu0 0.0
    %378 = vmatpush1.msra.mxu0 0.0
    %379 = vmatprep.subr.mxu0 0.0
    %380 = vmatpush1.msra.mxu0 0.0
    %381 = vmatprep.subr.mxu0 0.0
    %382 = vmatpush1.msra.mxu0 0.0
    %383 = vmatprep.subr.mxu0 0.0
    %384 = vmatpush1.msra.mxu0 0.0
    %385 = vmatprep.subr.mxu0 0.0
    %386 = vmatpush1.msra.mxu0 0.0
    %387 = vmatprep.subr.mxu0 0.0
    %388 = vmatpush1.msra.mxu0 0.0
    %389 = vmatprep.subr.mxu0 0.0
    %390 = vmatpush1.msra.mxu0 0.0
    %391 = vmatprep.subr.mxu0 0.0
    %392 = vmatpush1.msra.mxu0 0.0
    %393 = vmatprep.subr.mxu0 0.0
    %394 = vmatpush1.msra.mxu0 0.0
    %395 = vmatprep.subr.mxu0 0.0
    %396 = vmatpush1.msra.mxu0 0.0
    %397 = vmatprep.subr.mxu0 0.0
    %398 = vmatpush1.msra.mxu0 0.0
    %399 = vmatprep.subr.mxu0 0.0
    %400 = vmatpush1.msra.mxu0 0.0
    %401 = vmatprep.subr.mxu0 0.0
    %402 = vmatpush1.msra.mxu0 0.0
    %403 = vmatprep.subr.mxu0 0.0
    %404 = vmatpush1.msra.mxu0 0.0
    %405 = vmatprep.subr.mxu0 0.0
    %406 = vmatpush1.msra.mxu0 0.0
    %407 = vmatprep.subr.mxu0 0.0
    %408 = vmatpush1.msra.mxu0 0.0
    %409 = vmatprep.subr.mxu0 0.0
    %410 = vmatpush1.msra.mxu0 0.0
    %411 = vmatprep.subr.mxu0 0.0
    %412 = vmatpush1.msra.mxu0 0.0
    %413 = vmatprep.subr.mxu0 0.0
    %414 = vmatpush1.msra.mxu0 0.0
    %415 = vmatprep.subr.mxu0 0.0
    %416 = vmatpush1.msra.mxu0 0.0
    %417 = vmatprep.subr.mxu0 0.0
    %418 = vmatpush1.msra.mxu0 0.0
    %419 = vmatprep.subr.mxu0 0.0
    %420 = vmatpush1.msra.mxu0 0.0
    %421 = vmatprep.subr.mxu0 0.0
    %422 = vmatpush1.msra.mxu0 0.0
    %423 = vmatprep.subr.mxu0 0.0
    %424 = vmatpush1.msra.mxu0 0.0
    %425 = vmatprep.subr.mxu0 0.0
    %426 = vmatpush1.msra.mxu0 0.0
    %427 = vmatprep.subr.mxu0 0.0
    %428 = vmatpush1.msra.mxu0 0.0
    %429 = vmatprep.subr.mxu0 0.0
    %430 = vmatpush1.msra.mxu0 0.0
    %431 = vmatprep.mubr.f32.mxu0 0.0
    %432 = vmatmul.mubr.f32.gmra.mrb[0].mxu0 %v155
    %v433 = vpop.f32.mrb[0].mxu0
    %v434 = vadd.f32 0.0, %v433
    %v435 = vpop.f32.mrb[0].mxu0
    %436 = vmatprep.mubr.f32.mxu0 0.0
    %437 = vmatmul.mubr.f32.gmra.mrb[0].mxu0 %v158
    %v438 = vpop.f32.mrb[0].mxu0
    %v439 = vadd.f32 0.0, %v438
    %v440 = vpop.f32.mrb[0].mxu0
    %441 = vmatprep.mubr.f32.mxu0 0.0
    %442 = vmatmul.mubr.f32.gmra.mrb[0].mxu0 %v161
    %v443 = vpop.f32.mrb[0].mxu0
    %v444 = vadd.f32 0.0, %v443
    %v445 = vpop.f32.mrb[0].mxu0
    %446 = vmatprep.mubr.f32.mxu0 0.0
    %447 = vmatmul.mubr.f32.gmra.mrb[0].mxu0 %v164
    %v448 = vpop.f32.mrb[0].mxu0
    %v449 = vadd.f32 0.0, %v448
    %v450 = vpop.f32.mrb[0].mxu0
    %451 = vdwg.mxu0
    %452 = vmatprep.subr.mxu0 0.0
    %453 = vmatpush1.msra.mxu0 %v358
    %454 = vmatprep.subr.mxu0 0.0
    %455 = vmatpush1.msra.mxu0 %v359
    %456 = vmatprep.subr.mxu0 0.0
    %457 = vmatpush1.msra.mxu0 %v360
    %458 = vmatprep.subr.mxu0 0.0
    %459 = vmatpush1.msra.mxu0 %v361
    %460 = vmatprep.subr.mxu0 0.0
    %461 = vmatpush1.msra.mxu0 0.0
    %462 = vmatprep.subr.mxu0 0.0
    %463 = vmatpush1.msra.mxu0 0.0
    %464 = vmatprep.subr.mxu0 0.0
    %465 = vmatpush1.msra.mxu0 0.0
    %466 = vmatprep.subr.mxu0 0.0
    %467 = vmatpush1.msra.mxu0 0.0
    %468 = vmatprep.subr.mxu0 0.0
    %469 = vmatpush1.msra.mxu0 0.0
    %470 = vmatprep.subr.mxu0 0.0
    %471 = vmatpush1.msra.mxu0 0.0
    %472 = vmatprep.subr.mxu0 0.0
    %473 = vmatpush1.msra.mxu0 0.0
    %474 = vmatprep.subr.mxu0 0.0
    %475 = vmatpush1.msra.mxu0 0.0
    %476 = vmatprep.subr.mxu0 0.0
    %477 = vmatpush1.msra.mxu0 0.0
    %478 = vmatprep.subr.mxu0 0.0
    %479 = vmatpush1.msra.mxu0 0.0
    %480 = vmatprep.subr.mxu0 0.0
    %481 = vmatpush1.msra.mxu0 0.0
    %482 = vmatprep.subr.mxu0 0.0
    %483 = vmatpush1.msra.mxu0 0.0
    %484 = vmatprep.subr.mxu0 0.0
    %485 = vmatpush1.msra.mxu0 0.0
    %486 = vmatprep.subr.mxu0 0.0
    %487 = vmatpush1.msra.mxu0 0.0
    %488 = vmatprep.subr.mxu0 0.0
    %489 = vmatpush1.msra.mxu0 0.0
    %490 = vmatprep.subr.mxu0 0.0
    %491 = vmatpush1.msra.mxu0 0.0
    %492 = vmatprep.subr.mxu0 0.0
    %493 = vmatpush1.msra.mxu0 0.0
    %494 = vmatprep.subr.mxu0 0.0
    %495 = vmatpush1.msra.mxu0 0.0
    %496 = vmatprep.subr.mxu0 0.0
    %497 = vmatpush1.msra.mxu0 0.0
    %498 = vmatprep.subr.mxu0 0.0
    %499 = vmatpush1.msra.mxu0 0.0
    %500 = vmatprep.subr.mxu0 0.0
    %501 = vmatpush1.msra.mxu0 0.0
    %502 = vmatprep.subr.mxu0 0.0
    %503 = vmatpush1.msra.mxu0 0.0
    %504 = vmatprep.subr.mxu0 0.0
    %505 = vmatpush1.msra.mxu0 0.0
    %506 = vmatprep.subr.mxu0 0.0
    %507 = vmatpush1.msra.mxu0 0.0
    %508 = vmatprep.subr.mxu0 0.0
    %509 = vmatpush1.msra.mxu0 0.0
    %510 = vmatprep.subr.mxu0 0.0
    %511 = vmatpush1.msra.mxu0 0.0
    %512 = vmatprep.subr.mxu0 0.0
    %513 = vmatpush1.msra.mxu0 0.0
    %514 = vmatprep.subr.mxu0 0.0
    %515 = vmatpush1.msra.mxu0 0.0
    %516 = vmatprep.mubr.f32.mxu0 0.0
    %517 = vmatmul.mubr.f32.gmra.mrb[0].mxu0 %v252
    %v518 = vpop.f32.mrb[0].mxu0
    %v519 = vadd.f32 %v434, %v518
    %v520 = vpop.f32.mrb[0].mxu0
    %521 = vmatprep.mubr.f32.mxu0 0.0
    %522 = vmatmul.mubr.f32.gmra.mrb[0].mxu0 %v255
    %v523 = vpop.f32.mrb[0].mxu0
    %v524 = vadd.f32 %v439, %v523
    %v525 = vpop.f32.mrb[0].mxu0
    %526 = vmatprep.mubr.f32.mxu0 0.0
    %527 = vmatmul.mubr.f32.gmra.mrb[0].mxu0 %v258
    %v528 = vpop.f32.mrb[0].mxu0
    %v529 = vadd.f32 %v444, %v528
    %v530 = vpop.f32.mrb[0].mxu0
    %531 = vmatprep.mubr.f32.mxu0 0.0
    %532 = vmatmul.mubr.f32.gmra.mrb[0].mxu0 %v261
    %v533 = vpop.f32.mrb[0].mxu0
    %v534 = vadd.f32 %v449, %v533
    %v535 = vpop.f32.mrb[0].mxu0
    %536 = vdwg.mxu0
    %v537 = vld [vmem:[%s12 + $0x1] sm:$0x1]
    %v538 = vlaneseq
    %v539 = vshrl.u32 %v538, 7
    %v540 = vsub.s32 0, %v539
    %v541 = vrot.slane %v537, %v540
    %v542 = vadd.f32 %v519, %v541
    %v543 = vadd.f32 %v524, %v541
    %v544 = vadd.f32 %v529, %v541
    %v545 = vadd.f32 %v534, %v541
    %s546 = scalar_lea.vmem [#allocation2], 64
    %v547 = vld [vmem:[%s546] sm:$0xff]
    %v548 = vld [vmem:[%s546 + $0x8] sm:$0xff]
    %v549 = vld [vmem:[%s546 + $0x10] sm:$0xff]
    %v550 = vld [vmem:[%s546 + $0x18] sm:$0xff]
    %v551 = vld [vmem:[%s12 + $0x2] sm:$0x1]
    %v552 = vlaneseq
    %v553 = vshrl.u32 %v552, 7
    %v554 = vsub.s32 0, %v553
    %v555 = vrot.slane %v551, %v554
    %556 = vmatprep.subr.mxu0 0.0
    %557 = vmatpush1.msra.mxu0 %v547
    %558 = vmatprep.subr.mxu0 0.0
    %559 = vmatpush1.msra.mxu0 %v548
    %560 = vmatprep.subr.mxu0 0.0
    %561 = vmatpush1.msra.mxu0 %v549
    %562 = vmatprep.subr.mxu0 0.0
    %563 = vmatpush1.msra.mxu0 %v550
    %564 = vmatprep.subr.mxu0 0.0
    %565 = vmatpush1.msra.mxu0 0.0
    %566 = vmatprep.subr.mxu0 0.0
    %567 = vmatpush1.msra.mxu0 0.0
    %568 = vmatprep.subr.mxu0 0.0
    %569 = vmatpush1.msra.mxu0 0.0
    %570 = vmatprep.subr.mxu0 0.0
    %571 = vmatpush1.msra.mxu0 0.0
    %572 = vmatprep.subr.mxu0 0.0
    %573 = vmatpush1.msra.mxu0 0.0
    %574 = vmatprep.subr.mxu0 0.0
    %575 = vmatpush1.msra.mxu0 0.0
    %576 = vmatprep.subr.mxu0 0.0
    %577 = vmatpush1.msra.mxu0 0.0
    %578 = vmatprep.subr.mxu0 0.0
    %579 = vmatpush1.msra.mxu0 0.0
    %580 = vmatprep.subr.mxu0 0.0
    %581 = vmatpush1.msra.mxu0 0.0
    %582 = vmatprep.subr.mxu0 0.0
    %583 = vmatpush1.msra.mxu0 0.0
    %584 = vmatprep.subr.mxu0 0.0
    %585 = vmatpush1.msra.mxu0 0.0
    %586 = vmatprep.subr.mxu0 0.0
    %587 = vmatpush1.msra.mxu0 0.0
    %588 = vmatprep.subr.mxu0 0.0
    %589 = vmatpush1.msra.mxu0 0.0
    %590 = vmatprep.subr.mxu0 0.0
    %591 = vmatpush1.msra.mxu0 0.0
    %592 = vmatprep.subr.mxu0 0.0
    %593 = vmatpush1.msra.mxu0 0.0
    %594 = vmatprep.subr.mxu0 0.0
    %595 = vmatpush1.msra.mxu0 0.0
    %596 = vmatprep.subr.mxu0 0.0
    %597 = vmatpush1.msra.mxu0 0.0
    %598 = vmatprep.subr.mxu0 0.0
    %599 = vmatpush1.msra.mxu0 0.0
    %600 = vmatprep.subr.mxu0 0.0
    %601 = vmatpush1.msra.mxu0 0.0
    %602 = vmatprep.subr.mxu0 0.0
    %603 = vmatpush1.msra.mxu0 0.0
    %604 = vmatprep.subr.mxu0 0.0
    %605 = vmatpush1.msra.mxu0 0.0
    %606 = vmatprep.subr.mxu0 0.0
    %607 = vmatpush1.msra.mxu0 0.0
    %608 = vmatprep.subr.mxu0 0.0
    %609 = vmatpush1.msra.mxu0 0.0
    %610 = vmatprep.subr.mxu0 0.0
    %611 = vmatpush1.msra.mxu0 0.0
    %612 = vmatprep.subr.mxu0 0.0
    %613 = vmatpush1.msra.mxu0 0.0
    %614 = vmatprep.subr.mxu0 0.0
    %615 = vmatpush1.msra.mxu0 0.0
    %616 = vmatprep.subr.mxu0 0.0
    %617 = vmatpush1.msra.mxu0 0.0
    %618 = vmatprep.subr.mxu0 0.0
    %619 = vmatpush1.msra.mxu0 0.0
    %620 = vmatprep.mubr.f32.mxu0 0.0
    %621 = vmatmul.mubr.f32.gmra.mrb[0].mxu0 %v252
    %v622 = vpop.f32.mrb[0].mxu0
    %v623 = vadd.f32 %v555, %v622
    %v624 = vpop.f32.mrb[0].mxu0
    %625 = vmatprep.mubr.f32.mxu0 0.0
    %626 = vmatmul.mubr.f32.gmra.mrb[0].mxu0 %v255
    %v627 = vpop.f32.mrb[0].mxu0
    %v628 = vadd.f32 %v555, %v627
    %v629 = vpop.f32.mrb[0].mxu0
    %630 = vmatprep.mubr.f32.mxu0 0.0
    %631 = vmatmul.mubr.f32.gmra.mrb[0].mxu0 %v258
    %v632 = vpop.f32.mrb[0].mxu0
    %v633 = vadd.f32 %v555, %v632
    %v634 = vpop.f32.mrb[0].mxu0
    %635 = vmatprep.mubr.f32.mxu0 0.0
    %636 = vmatmul.mubr.f32.gmra.mrb[0].mxu0 %v261
    %v637 = vpop.f32.mrb[0].mxu0
    %v638 = vadd.f32 %v555, %v637
    %v639 = vpop.f32.mrb[0].mxu0
    %640 = vdwg.mxu0
    %645 = vrot.lane.b32.xlu0 %v353, 120
    %v646 = vpop.permute.xlu0 %645
    %647 = vrot.lane.b32.xlu0 %v354, 120
    %v648 = vpop.permute.xlu0 %647
    %649 = vrot.lane.b32.xlu0 %v355, 120
    %v650 = vpop.permute.xlu0 %649
    %651 = vrot.lane.b32.xlu0 %v356, 120
    %v652 = vpop.permute.xlu0 %651
    %657 = vrot.lane.b32.xlu0 %v353, 112
    %v658 = vpop.permute.xlu0 %657
    %659 = vrot.lane.b32.xlu0 %v354, 112
    %v660 = vpop.permute.xlu0 %659
    %661 = vrot.lane.b32.xlu0 %v355, 112
    %v662 = vpop.permute.xlu0 %661
    %663 = vrot.lane.b32.xlu0 %v356, 112
    %v664 = vpop.permute.xlu0 %663
    %669 = vrot.lane.b32.xlu0 %v353, 104
    %v670 = vpop.permute.xlu0 %669
    %671 = vrot.lane.b32.xlu0 %v354, 104
    %v672 = vpop.permute.xlu0 %671
    %673 = vrot.lane.b32.xlu0 %v355, 104
    %v674 = vpop.permute.xlu0 %673
    %675 = vrot.lane.b32.xlu0 %v356, 104
    %v676 = vpop.permute.xlu0 %675
    %v681 = vcombine.low %v353, %v658
    %v682 = vcombine.high %v353, %v658
    %v684 = vunpack.c.l.s4 1983009808
    %v685 = vunpack.c.0.s8 %v684
    %v686 = vlaneseq
    %v687 = vshrl.u32 %v686, 7
    %v688 = vsub.s32 %v685, %v687
    %v689 = vrot.slane %v681, %v688
    %v691 = vunpack.c.l.s4 1983009808
    %v692 = vunpack.c.0.s8 %v691
    %v693 = vlaneseq
    %v694 = vshrl.u32 %v693, 7
    %v695 = vsub.s32 %v692, %v694
    %v696 = vrot.slane %v682, %v695
    %v697 = vcombine.low %v646, %v670
    %v698 = vcombine.high %v646, %v670
    %v700 = vunpack.c.l.s4 1983009808
    %v701 = vunpack.c.0.s8 %v700
    %v702 = vlaneseq
    %v703 = vshrl.u32 %v702, 7
    %v704 = vsub.s32 %v701, %v703
    %v705 = vrot.slane %v697, %v704
    %v707 = vunpack.c.l.s4 1983009808
    %v708 = vunpack.c.0.s8 %v707
    %v709 = vlaneseq
    %v710 = vshrl.u32 %v709, 7
    %v711 = vsub.s32 %v708, %v710
    %v712 = vrot.slane %v698, %v711
    %v713 = vcombine.low %v689, %v705
    %v714 = vcombine.high %v689, %v705
    %v716 = vunpack.c.l.s4 1934713408
    %v717 = vunpack.c.0.s8 %v716
    %v718 = vlaneseq
    %v719 = vshrl.u32 %v718, 7
    %v720 = vsub.s32 %v717, %v719
    %v721 = vrot.slane %v713, %v720
    %v723 = vunpack.c.l.s4 1934713408
    %v724 = vunpack.c.0.s8 %v723
    %v725 = vlaneseq
    %v726 = vshrl.u32 %v725, 7
    %v727 = vsub.s32 %v724, %v726
    %v728 = vrot.slane %v714, %v727
    %v729 = vcombine.low %v696, %v712
    %v730 = vcombine.high %v696, %v712
    %v732 = vunpack.c.l.s4 1934713408
    %v733 = vunpack.c.0.s8 %v732
    %v734 = vlaneseq
    %v735 = vshrl.u32 %v734, 7
    %v736 = vsub.s32 %v733, %v735
    %v737 = vrot.slane %v729, %v736
    %v739 = vunpack.c.l.s4 1934713408
    %v740 = vunpack.c.0.s8 %v739
    %v741 = vlaneseq
    %v742 = vshrl.u32 %v741, 7
    %v743 = vsub.s32 %v740, %v742
    %v744 = vrot.slane %v730, %v743
    %v745 = vcombine.high %v721, 0.0
    %v746 = vcombine.high %v728, 0.0
    %v747 = vcombine.high %v737, 0.0
    %v748 = vcombine.high %v744, 0.0
    %v749 = vcombine.low %v354, %v660
    %v750 = vcombine.high %v354, %v660
    %v752 = vunpack.c.l.s4 1983009808
    %v753 = vunpack.c.0.s8 %v752
    %v754 = vlaneseq
    %v755 = vshrl.u32 %v754, 7
    %v756 = vsub.s32 %v753, %v755
    %v757 = vrot.slane %v749, %v756
    %v759 = vunpack.c.l.s4 1983009808
    %v760 = vunpack.c.0.s8 %v759
    %v761 = vlaneseq
    %v762 = vshrl.u32 %v761, 7
    %v763 = vsub.s32 %v760, %v762
    %v764 = vrot.slane %v750, %v763
    %v765 = vcombine.low %v648, %v672
    %v766 = vcombine.high %v648, %v672
    %v768 = vunpack.c.l.s4 1983009808
    %v769 = vunpack.c.0.s8 %v768
    %v770 = vlaneseq
    %v771 = vshrl.u32 %v770, 7
    %v772 = vsub.s32 %v769, %v771
    %v773 = vrot.slane %v765, %v772
    %v775 = vunpack.c.l.s4 1983009808
    %v776 = vunpack.c.0.s8 %v775
    %v777 = vlaneseq
    %v778 = vshrl.u32 %v777, 7
    %v779 = vsub.s32 %v776, %v778
    %v780 = vrot.slane %v766, %v779
    %v781 = vcombine.low %v757, %v773
    %v782 = vcombine.high %v757, %v773
    %v784 = vunpack.c.l.s4 1934713408
    %v785 = vunpack.c.0.s8 %v784
    %v786 = vlaneseq
    %v787 = vshrl.u32 %v786, 7
    %v788 = vsub.s32 %v785, %v787
    %v789 = vrot.slane %v781, %v788
    %v791 = vunpack.c.l.s4 1934713408
    %v792 = vunpack.c.0.s8 %v791
    %v793 = vlaneseq
    %v794 = vshrl.u32 %v793, 7
    %v795 = vsub.s32 %v792, %v794
    %v796 = vrot.slane %v782, %v795
    %v797 = vcombine.low %v764, %v780
    %v798 = vcombine.high %v764, %v780
    %v800 = vunpack.c.l.s4 1934713408
    %v801 = vunpack.c.0.s8 %v800
    %v802 = vlaneseq
    %v803 = vshrl.u32 %v802, 7
    %v804 = vsub.s32 %v801, %v803
    %v805 = vrot.slane %v797, %v804
    %v807 = vunpack.c.l.s4 1934713408
    %v808 = vunpack.c.0.s8 %v807
    %v809 = vlaneseq
    %v810 = vshrl.u32 %v809, 7
    %v811 = vsub.s32 %v808, %v810
    %v812 = vrot.slane %v798, %v811
    %v813 = vcombine.high %v789, 0.0
    %v814 = vcombine.high %v796, 0.0
    %v815 = vcombine.high %v805, 0.0
    %v816 = vcombine.high %v812, 0.0
    %v817 = vcombine.low %v355, %v662
    %v818 = vcombine.high %v355, %v662
    %v820 = vunpack.c.l.s4 1983009808
    %v821 = vunpack.c.0.s8 %v820
    %v822 = vlaneseq
    %v823 = vshrl.u32 %v822, 7
    %v824 = vsub.s32 %v821, %v823
    %v825 = vrot.slane %v817, %v824
    %v827 = vunpack.c.l.s4 1983009808
    %v828 = vunpack.c.0.s8 %v827
    %v829 = vlaneseq
    %v830 = vshrl.u32 %v829, 7
    %v831 = vsub.s32 %v828, %v830
    %v832 = vrot.slane %v818, %v831
    %v833 = vcombine.low %v650, %v674
    %v834 = vcombine.high %v650, %v674
    %v836 = vunpack.c.l.s4 1983009808
    %v837 = vunpack.c.0.s8 %v836
    %v838 = vlaneseq
    %v839 = vshrl.u32 %v838, 7
    %v840 = vsub.s32 %v837, %v839
    %v841 = vrot.slane %v833, %v840
    %v843 = vunpack.c.l.s4 1983009808
    %v844 = vunpack.c.0.s8 %v843
    %v845 = vlaneseq
    %v846 = vshrl.u32 %v845, 7
    %v847 = vsub.s32 %v844, %v846
    %v848 = vrot.slane %v834, %v847
    %v849 = vcombine.low %v825, %v841
    %v850 = vcombine.high %v825, %v841
    %v852 = vunpack.c.l.s4 1934713408
    %v853 = vunpack.c.0.s8 %v852
    %v854 = vlaneseq
    %v855 = vshrl.u32 %v854, 7
    %v856 = vsub.s32 %v853, %v855
    %v857 = vrot.slane %v849, %v856
    %v859 = vunpack.c.l.s4 1934713408
    %v860 = vunpack.c.0.s8 %v859
    %v861 = vlaneseq
    %v862 = vshrl.u32 %v861, 7
    %v863 = vsub.s32 %v860, %v862
    %v864 = vrot.slane %v850, %v863
    %v865 = vcombine.low %v832, %v848
    %v866 = vcombine.high %v832, %v848
    %v868 = vunpack.c.l.s4 1934713408
    %v869 = vunpack.c.0.s8 %v868
    %v870 = vlaneseq
    %v871 = vshrl.u32 %v870, 7
    %v872 = vsub.s32 %v869, %v871
    %v873 = vrot.slane %v865, %v872
    %v875 = vunpack.c.l.s4 1934713408
    %v876 = vunpack.c.0.s8 %v875
    %v877 = vlaneseq
    %v878 = vshrl.u32 %v877, 7
    %v879 = vsub.s32 %v876, %v878
    %v880 = vrot.slane %v866, %v879
    %v881 = vcombine.high %v857, 0.0
    %v882 = vcombine.high %v864, 0.0
    %v883 = vcombine.high %v873, 0.0
    %v884 = vcombine.high %v880, 0.0
    %v885 = vcombine.low %v356, %v664
    %v886 = vcombine.high %v356, %v664
    %v888 = vunpack.c.l.s4 1983009808
    %v889 = vunpack.c.0.s8 %v888
    %v890 = vlaneseq
    %v891 = vshrl.u32 %v890, 7
    %v892 = vsub.s32 %v889, %v891
    %v893 = vrot.slane %v885, %v892
    %v895 = vunpack.c.l.s4 1983009808
    %v896 = vunpack.c.0.s8 %v895
    %v897 = vlaneseq
    %v898 = vshrl.u32 %v897, 7
    %v899 = vsub.s32 %v896, %v898
    %v900 = vrot.slane %v886, %v899
    %v901 = vcombine.low %v652, %v676
    %v902 = vcombine.high %v652, %v676
    %v904 = vunpack.c.l.s4 1983009808
    %v905 = vunpack.c.0.s8 %v904
    %v906 = vlaneseq
    %v907 = vshrl.u32 %v906, 7
    %v908 = vsub.s32 %v905, %v907
    %v909 = vrot.slane %v901, %v908
    %v911 = vunpack.c.l.s4 1983009808
    %v912 = vunpack.c.0.s8 %v911
    %v913 = vlaneseq
    %v914 = vshrl.u32 %v913, 7
    %v915 = vsub.s32 %v912, %v914
    %v916 = vrot.slane %v902, %v915
    %v917 = vcombine.low %v893, %v909
    %v918 = vcombine.high %v893, %v909
    %v920 = vunpack.c.l.s4 1934713408
    %v921 = vunpack.c.0.s8 %v920
    %v922 = vlaneseq
    %v923 = vshrl.u32 %v922, 7
    %v924 = vsub.s32 %v921, %v923
    %v925 = vrot.slane %v917, %v924
    %v927 = vunpack.c.l.s4 1934713408
    %v928 = vunpack.c.0.s8 %v927
    %v929 = vlaneseq
    %v930 = vshrl.u32 %v929, 7
    %v931 = vsub.s32 %v928, %v930
    %v932 = vrot.slane %v918, %v931
    %v933 = vcombine.low %v900, %v916
    %v934 = vcombine.high %v900, %v916
    %v936 = vunpack.c.l.s4 1934713408
    %v937 = vunpack.c.0.s8 %v936
    %v938 = vlaneseq
    %v939 = vshrl.u32 %v938, 7
    %v940 = vsub.s32 %v937, %v939
    %v941 = vrot.slane %v933, %v940
    %v943 = vunpack.c.l.s4 1934713408
    %v944 = vunpack.c.0.s8 %v943
    %v945 = vlaneseq
    %v946 = vshrl.u32 %v945, 7
    %v947 = vsub.s32 %v944, %v946
    %v948 = vrot.slane %v934, %v947
    %v949 = vcombine.high %v925, 0.0
    %v950 = vcombine.high %v932, 0.0
    %v951 = vcombine.high %v941, 0.0
    %v952 = vcombine.high %v948, 0.0
    %v953 = vcombine.low %v721, %v728
    %v955 = vunpack.c.l.s4 1983009808
    %v956 = vunpack.c.0.s8 %v955
    %v957 = vlaneseq
    %v958 = vshrl.u32 %v957, 7
    %v959 = vsub.s32 %v956, %v958
    %v960 = vrot.slane %v953, %v959
    %v961 = vcombine.low %v745, %v746
    %v963 = vunpack.c.l.s4 1983009808
    %v964 = vunpack.c.0.s8 %v963
    %v965 = vlaneseq
    %v966 = vshrl.u32 %v965, 7
    %v967 = vsub.s32 %v964, %v966
    %v968 = vrot.slane %v961, %v967
    %v969 = vcombine.low %v737, %v744
    %v971 = vunpack.c.l.s4 1983009808
    %v972 = vunpack.c.0.s8 %v971
    %v973 = vlaneseq
    %v974 = vshrl.u32 %v973, 7
    %v975 = vsub.s32 %v972, %v974
    %v976 = vrot.slane %v969, %v975
    %v977 = vcombine.low %v747, %v748
    %v979 = vunpack.c.l.s4 1983009808
    %v980 = vunpack.c.0.s8 %v979
    %v981 = vlaneseq
    %v982 = vshrl.u32 %v981, 7
    %v983 = vsub.s32 %v980, %v982
    %v984 = vrot.slane %v977, %v983
    %v985 = vcombine.low %v960, %v968
    %v986 = vcombine.high %v960, %v968
    %v988 = vunpack.c.l.s4 1934713408
    %v989 = vunpack.c.0.s8 %v988
    %v990 = vlaneseq
    %v991 = vshrl.u32 %v990, 7
    %v992 = vsub.s32 %v989, %v991
    %v993 = vrot.slane %v985, %v992
    %v995 = vunpack.c.l.s4 1934713408
    %v996 = vunpack.c.0.s8 %v995
    %v997 = vlaneseq
    %v998 = vshrl.u32 %v997, 7
    %v999 = vsub.s32 %v996, %v998
    %v1000 = vrot.slane %v986, %v999
    %v1001 = vcombine.low %v976, %v984
    %v1002 = vcombine.high %v976, %v984
    %v1004 = vunpack.c.l.s4 1934713408
    %v1005 = vunpack.c.0.s8 %v1004
    %v1006 = vlaneseq
    %v1007 = vshrl.u32 %v1006, 7
    %v1008 = vsub.s32 %v1005, %v1007
    %v1009 = vrot.slane %v1001, %v1008
    %v1011 = vunpack.c.l.s4 1934713408
    %v1012 = vunpack.c.0.s8 %v1011
    %v1013 = vlaneseq
    %v1014 = vshrl.u32 %v1013, 7
    %v1015 = vsub.s32 %v1012, %v1014
    %v1016 = vrot.slane %v1002, %v1015
    %v1017 = vcombine.low %v993, %v1009
    %v1018 = vcombine.high %v993, %v1009
    %v1019 = vcombine.low %v1000, %v1016
    %v1020 = vcombine.high %v1000, %v1016
    %v1021 = vcombine.low %v789, %v796
    %v1023 = vunpack.c.l.s4 1983009808
    %v1024 = vunpack.c.0.s8 %v1023
    %v1025 = vlaneseq
    %v1026 = vshrl.u32 %v1025, 7
    %v1027 = vsub.s32 %v1024, %v1026
    %v1028 = vrot.slane %v1021, %v1027
    %v1029 = vcombine.low %v813, %v814
    %v1031 = vunpack.c.l.s4 1983009808
    %v1032 = vunpack.c.0.s8 %v1031
    %v1033 = vlaneseq
    %v1034 = vshrl.u32 %v1033, 7
    %v1035 = vsub.s32 %v1032, %v1034
    %v1036 = vrot.slane %v1029, %v1035
    %v1037 = vcombine.low %v805, %v812
    %v1039 = vunpack.c.l.s4 1983009808
    %v1040 = vunpack.c.0.s8 %v1039
    %v1041 = vlaneseq
    %v1042 = vshrl.u32 %v1041, 7
    %v1043 = vsub.s32 %v1040, %v1042
    %v1044 = vrot.slane %v1037, %v1043
    %v1045 = vcombine.low %v815, %v816
    %v1047 = vunpack.c.l.s4 1983009808
    %v1048 = vunpack.c.0.s8 %v1047
    %v1049 = vlaneseq
    %v1050 = vshrl.u32 %v1049, 7
    %v1051 = vsub.s32 %v1048, %v1050
    %v1052 = vrot.slane %v1045, %v1051
    %v1053 = vcombine.low %v1028, %v1036
    %v1054 = vcombine.high %v1028, %v1036
    %v1056 = vunpack.c.l.s4 1934713408
    %v1057 = vunpack.c.0.s8 %v1056
    %v1058 = vlaneseq
    %v1059 = vshrl.u32 %v1058, 7
    %v1060 = vsub.s32 %v1057, %v1059
    %v1061 = vrot.slane %v1053, %v1060
    %v1063 = vunpack.c.l.s4 1934713408
    %v1064 = vunpack.c.0.s8 %v1063
    %v1065 = vlaneseq
    %v1066 = vshrl.u32 %v1065, 7
    %v1067 = vsub.s32 %v1064, %v1066
    %v1068 = vrot.slane %v1054, %v1067
    %v1069 = vcombine.low %v1044, %v1052
    %v1070 = vcombine.high %v1044, %v1052
    %v1072 = vunpack.c.l.s4 1934713408
    %v1073 = vunpack.c.0.s8 %v1072
    %v1074 = vlaneseq
    %v1075 = vshrl.u32 %v1074, 7
    %v1076 = vsub.s32 %v1073, %v1075
    %v1077 = vrot.slane %v1069, %v1076
    %v1079 = vunpack.c.l.s4 1934713408
    %v1080 = vunpack.c.0.s8 %v1079
    %v1081 = vlaneseq
    %v1082 = vshrl.u32 %v1081, 7
    %v1083 = vsub.s32 %v1080, %v1082
    %v1084 = vrot.slane %v1070, %v1083
    %v1085 = vcombine.low %v1061, %v1077
    %v1086 = vcombine.high %v1061, %v1077
    %v1087 = vcombine.low %v1068, %v1084
    %v1088 = vcombine.high %v1068, %v1084
    %v1089 = vcombine.low %v857, %v864
    %v1091 = vunpack.c.l.s4 1983009808
    %v1092 = vunpack.c.0.s8 %v1091
    %v1093 = vlaneseq
    %v1094 = vshrl.u32 %v1093, 7
    %v1095 = vsub.s32 %v1092, %v1094
    %v1096 = vrot.slane %v1089, %v1095
    %v1097 = vcombine.low %v881, %v882
    %v1099 = vunpack.c.l.s4 1983009808
    %v1100 = vunpack.c.0.s8 %v1099
    %v1101 = vlaneseq
    %v1102 = vshrl.u32 %v1101, 7
    %v1103 = vsub.s32 %v1100, %v1102
    %v1104 = vrot.slane %v1097, %v1103
    %v1105 = vcombine.low %v873, %v880
    %v1107 = vunpack.c.l.s4 1983009808
    %v1108 = vunpack.c.0.s8 %v1107
    %v1109 = vlaneseq
    %v1110 = vshrl.u32 %v1109, 7
    %v1111 = vsub.s32 %v1108, %v1110
    %v1112 = vrot.slane %v1105, %v1111
    %v1113 = vcombine.low %v883, %v884
    %v1115 = vunpack.c.l.s4 1983009808
    %v1116 = vunpack.c.0.s8 %v1115
    %v1117 = vlaneseq
    %v1118 = vshrl.u32 %v1117, 7
    %v1119 = vsub.s32 %v1116, %v1118
    %v1120 = vrot.slane %v1113, %v1119
    %v1121 = vcombine.low %v1096, %v1104
    %v1122 = vcombine.high %v1096, %v1104
    %v1124 = vunpack.c.l.s4 1934713408
    %v1125 = vunpack.c.0.s8 %v1124
    %v1126 = vlaneseq
    %v1127 = vshrl.u32 %v1126, 7
    %v1128 = vsub.s32 %v1125, %v1127
    %v1129 = vrot.slane %v1121, %v1128
    %v1131 = vunpack.c.l.s4 1934713408
    %v1132 = vunpack.c.0.s8 %v1131
    %v1133 = vlaneseq
    %v1134 = vshrl.u32 %v1133, 7
    %v1135 = vsub.s32 %v1132, %v1134
    %v1136 = vrot.slane %v1122, %v1135
    %v1137 = vcombine.low %v1112, %v1120
    %v1138 = vcombine.high %v1112, %v1120
    %v1140 = vunpack.c.l.s4 1934713408
    %v1141 = vunpack.c.0.s8 %v1140
    %v1142 = vlaneseq
    %v1143 = vshrl.u32 %v1142, 7
    %v1144 = vsub.s32 %v1141, %v1143
    %v1145 = vrot.slane %v1137, %v1144
    %v1147 = vunpack.c.l.s4 1934713408
    %v1148 = vunpack.c.0.s8 %v1147
    %v1149 = vlaneseq
    %v1150 = vshrl.u32 %v1149, 7
    %v1151 = vsub.s32 %v1148, %v1150
    %v1152 = vrot.slane %v1138, %v1151
    %v1153 = vcombine.low %v1129, %v1145
    %v1154 = vcombine.high %v1129, %v1145
    %v1155 = vcombine.low %v1136, %v1152
    %v1156 = vcombine.high %v1136, %v1152
    %v1157 = vcombine.low %v925, %v932
    %v1159 = vunpack.c.l.s4 1983009808
    %v1160 = vunpack.c.0.s8 %v1159
    %v1161 = vlaneseq
    %v1162 = vshrl.u32 %v1161, 7
    %v1163 = vsub.s32 %v1160, %v1162
    %v1164 = vrot.slane %v1157, %v1163
    %v1165 = vcombine.low %v949, %v950
    %v1167 = vunpack.c.l.s4 1983009808
    %v1168 = vunpack.c.0.s8 %v1167
    %v1169 = vlaneseq
    %v1170 = vshrl.u32 %v1169, 7
    %v1171 = vsub.s32 %v1168, %v1170
    %v1172 = vrot.slane %v1165, %v1171
    %v1173 = vcombine.low %v941, %v948
    %v1175 = vunpack.c.l.s4 1983009808
    %v1176 = vunpack.c.0.s8 %v1175
    %v1177 = vlaneseq
    %v1178 = vshrl.u32 %v1177, 7
    %v1179 = vsub.s32 %v1176, %v1178
    %v1180 = vrot.slane %v1173, %v1179
    %v1181 = vcombine.low %v951, %v952
    %v1183 = vunpack.c.l.s4 1983009808
    %v1184 = vunpack.c.0.s8 %v1183
    %v1185 = vlaneseq
    %v1186 = vshrl.u32 %v1185, 7
    %v1187 = vsub.s32 %v1184, %v1186
    %v1188 = vrot.slane %v1181, %v1187
    %v1189 = vcombine.low %v1164, %v1172
    %v1190 = vcombine.high %v1164, %v1172
    %v1192 = vunpack.c.l.s4 1934713408
    %v1193 = vunpack.c.0.s8 %v1192
    %v1194 = vlaneseq
    %v1195 = vshrl.u32 %v1194, 7
    %v1196 = vsub.s32 %v1193, %v1195
    %v1197 = vrot.slane %v1189, %v1196
    %v1199 = vunpack.c.l.s4 1934713408
    %v1200 = vunpack.c.0.s8 %v1199
    %v1201 = vlaneseq
    %v1202 = vshrl.u32 %v1201, 7
    %v1203 = vsub.s32 %v1200, %v1202
    %v1204 = vrot.slane %v1190, %v1203
    %v1205 = vcombine.low %v1180, %v1188
    %v1206 = vcombine.high %v1180, %v1188
    %v1208 = vunpack.c.l.s4 1934713408
    %v1209 = vunpack.c.0.s8 %v1208
    %v1210 = vlaneseq
    %v1211 = vshrl.u32 %v1210, 7
    %v1212 = vsub.s32 %v1209, %v1211
    %v1213 = vrot.slane %v1205, %v1212
    %v1215 = vunpack.c.l.s4 1934713408
    %v1216 = vunpack.c.0.s8 %v1215
    %v1217 = vlaneseq
    %v1218 = vshrl.u32 %v1217, 7
    %v1219 = vsub.s32 %v1216, %v1218
    %v1220 = vrot.slane %v1206, %v1219
    %v1221 = vcombine.low %v1197, %v1213
    %v1222 = vcombine.high %v1197, %v1213
    %v1223 = vcombine.low %v1204, %v1220
    %v1224 = vcombine.high %v1204, %v1220
    %1229 = vrot.lane.b32.xlu0 %v542, 120
    %v1230 = vpop.permute.xlu0 %1229
    %1231 = vrot.lane.b32.xlu0 %v543, 120
    %v1232 = vpop.permute.xlu0 %1231
    %1233 = vrot.lane.b32.xlu0 %v544, 120
    %v1234 = vpop.permute.xlu0 %1233
    %1235 = vrot.lane.b32.xlu0 %v545, 120
    %v1236 = vpop.permute.xlu0 %1235
    %1241 = vrot.lane.b32.xlu0 %v542, 112
    %v1242 = vpop.permute.xlu0 %1241
    %1243 = vrot.lane.b32.xlu0 %v543, 112
    %v1244 = vpop.permute.xlu0 %1243
    %1245 = vrot.lane.b32.xlu0 %v544, 112
    %v1246 = vpop.permute.xlu0 %1245
    %1247 = vrot.lane.b32.xlu0 %v545, 112
    %v1248 = vpop.permute.xlu0 %1247
    %1253 = vrot.lane.b32.xlu0 %v542, 104
    %v1254 = vpop.permute.xlu0 %1253
    %1255 = vrot.lane.b32.xlu0 %v543, 104
    %v1256 = vpop.permute.xlu0 %1255
    %1257 = vrot.lane.b32.xlu0 %v544, 104
    %v1258 = vpop.permute.xlu0 %1257
    %1259 = vrot.lane.b32.xlu0 %v545, 104
    %v1260 = vpop.permute.xlu0 %1259
    %v1265 = vcombine.low %v542, %v1242
    %v1266 = vcombine.high %v542, %v1242
    %v1268 = vunpack.c.l.s4 1983009808
    %v1269 = vunpack.c.0.s8 %v1268
    %v1270 = vlaneseq
    %v1271 = vshrl.u32 %v1270, 7
    %v1272 = vsub.s32 %v1269, %v1271
    %v1273 = vrot.slane %v1265, %v1272
    %v1275 = vunpack.c.l.s4 1983009808
    %v1276 = vunpack.c.0.s8 %v1275
    %v1277 = vlaneseq
    %v1278 = vshrl.u32 %v1277, 7
    %v1279 = vsub.s32 %v1276, %v1278
    %v1280 = vrot.slane %v1266, %v1279
    %v1281 = vcombine.low %v1230, %v1254
    %v1282 = vcombine.high %v1230, %v1254
    %v1284 = vunpack.c.l.s4 1983009808
    %v1285 = vunpack.c.0.s8 %v1284
    %v1286 = vlaneseq
    %v1287 = vshrl.u32 %v1286, 7
    %v1288 = vsub.s32 %v1285, %v1287
    %v1289 = vrot.slane %v1281, %v1288
    %v1291 = vunpack.c.l.s4 1983009808
    %v1292 = vunpack.c.0.s8 %v1291
    %v1293 = vlaneseq
    %v1294 = vshrl.u32 %v1293, 7
    %v1295 = vsub.s32 %v1292, %v1294
    %v1296 = vrot.slane %v1282, %v1295
    %v1297 = vcombine.low %v1273, %v1289
    %v1298 = vcombine.high %v1273, %v1289
    %v1300 = vunpack.c.l.s4 1934713408
    %v1301 = vunpack.c.0.s8 %v1300
    %v1302 = vlaneseq
    %v1303 = vshrl.u32 %v1302, 7
    %v1304 = vsub.s32 %v1301, %v1303
    %v1305 = vrot.slane %v1297, %v1304
    %v1307 = vunpack.c.l.s4 1934713408
    %v1308 = vunpack.c.0.s8 %v1307
    %v1309 = vlaneseq
    %v1310 = vshrl.u32 %v1309, 7
    %v1311 = vsub.s32 %v1308, %v1310
    %v1312 = vrot.slane %v1298, %v1311
    %v1313 = vcombine.low %v1280, %v1296
    %v1314 = vcombine.high %v1280, %v1296
    %v1316 = vunpack.c.l.s4 1934713408
    %v1317 = vunpack.c.0.s8 %v1316
    %v1318 = vlaneseq
    %v1319 = vshrl.u32 %v1318, 7
    %v1320 = vsub.s32 %v1317, %v1319
    %v1321 = vrot.slane %v1313, %v1320
    %v1323 = vunpack.c.l.s4 1934713408
    %v1324 = vunpack.c.0.s8 %v1323
    %v1325 = vlaneseq
    %v1326 = vshrl.u32 %v1325, 7
    %v1327 = vsub.s32 %v1324, %v1326
    %v1328 = vrot.slane %v1314, %v1327
    %v1329 = vcombine.high %v1305, 0.0
    %v1330 = vcombine.high %v1312, 0.0
    %v1331 = vcombine.high %v1321, 0.0
    %v1332 = vcombine.high %v1328, 0.0
    %v1333 = vcombine.low %v543, %v1244
    %v1334 = vcombine.high %v543, %v1244
    %v1336 = vunpack.c.l.s4 1983009808
    %v1337 = vunpack.c.0.s8 %v1336
    %v1338 = vlaneseq
    %v1339 = vshrl.u32 %v1338, 7
    %v1340 = vsub.s32 %v1337, %v1339
    %v1341 = vrot.slane %v1333, %v1340
    %v1343 = vunpack.c.l.s4 1983009808
    %v1344 = vunpack.c.0.s8 %v1343
    %v1345 = vlaneseq
    %v1346 = vshrl.u32 %v1345, 7
    %v1347 = vsub.s32 %v1344, %v1346
    %v1348 = vrot.slane %v1334, %v1347
    %v1349 = vcombine.low %v1232, %v1256
    %v1350 = vcombine.high %v1232, %v1256
    %v1352 = vunpack.c.l.s4 1983009808
    %v1353 = vunpack.c.0.s8 %v1352
    %v1354 = vlaneseq
    %v1355 = vshrl.u32 %v1354, 7
    %v1356 = vsub.s32 %v1353, %v1355
    %v1357 = vrot.slane %v1349, %v1356
    %v1359 = vunpack.c.l.s4 1983009808
    %v1360 = vunpack.c.0.s8 %v1359
    %v1361 = vlaneseq
    %v1362 = vshrl.u32 %v1361, 7
    %v1363 = vsub.s32 %v1360, %v1362
    %v1364 = vrot.slane %v1350, %v1363
    %v1365 = vcombine.low %v1341, %v1357
    %v1366 = vcombine.high %v1341, %v1357
    %v1368 = vunpack.c.l.s4 1934713408
    %v1369 = vunpack.c.0.s8 %v1368
    %v1370 = vlaneseq
    %v1371 = vshrl.u32 %v1370, 7
    %v1372 = vsub.s32 %v1369, %v1371
    %v1373 = vrot.slane %v1365, %v1372
    %v1375 = vunpack.c.l.s4 1934713408
    %v1376 = vunpack.c.0.s8 %v1375
    %v1377 = vlaneseq
    %v1378 = vshrl.u32 %v1377, 7
    %v1379 = vsub.s32 %v1376, %v1378
    %v1380 = vrot.slane %v1366, %v1379
    %v1381 = vcombine.low %v1348, %v1364
    %v1382 = vcombine.high %v1348, %v1364
    %v1384 = vunpack.c.l.s4 1934713408
    %v1385 = vunpack.c.0.s8 %v1384
    %v1386 = vlaneseq
    %v1387 = vshrl.u32 %v1386, 7
    %v1388 = vsub.s32 %v1385, %v1387
    %v1389 = vrot.slane %v1381, %v1388
    %v1391 = vunpack.c.l.s4 1934713408
    %v1392 = vunpack.c.0.s8 %v1391
    %v1393 = vlaneseq
    %v1394 = vshrl.u32 %v1393, 7
    %v1395 = vsub.s32 %v1392, %v1394
    %v1396 = vrot.slane %v1382, %v1395
    %v1397 = vcombine.high %v1373, 0.0
    %v1398 = vcombine.high %v1380, 0.0
    %v1399 = vcombine.high %v1389, 0.0
    %v1400 = vcombine.high %v1396, 0.0
    %v1401 = vcombine.low %v544, %v1246
    %v1402 = vcombine.high %v544, %v1246
    %v1404 = vunpack.c.l.s4 1983009808
    %v1405 = vunpack.c.0.s8 %v1404
    %v1406 = vlaneseq
    %v1407 = vshrl.u32 %v1406, 7
    %v1408 = vsub.s32 %v1405, %v1407
    %v1409 = vrot.slane %v1401, %v1408
    %v1411 = vunpack.c.l.s4 1983009808
    %v1412 = vunpack.c.0.s8 %v1411
    %v1413 = vlaneseq
    %v1414 = vshrl.u32 %v1413, 7
    %v1415 = vsub.s32 %v1412, %v1414
    %v1416 = vrot.slane %v1402, %v1415
    %v1417 = vcombine.low %v1234, %v1258
    %v1418 = vcombine.high %v1234, %v1258
    %v1420 = vunpack.c.l.s4 1983009808
    %v1421 = vunpack.c.0.s8 %v1420
    %v1422 = vlaneseq
    %v1423 = vshrl.u32 %v1422, 7
    %v1424 = vsub.s32 %v1421, %v1423
    %v1425 = vrot.slane %v1417, %v1424
    %v1427 = vunpack.c.l.s4 1983009808
    %v1428 = vunpack.c.0.s8 %v1427
    %v1429 = vlaneseq
    %v1430 = vshrl.u32 %v1429, 7
    %v1431 = vsub.s32 %v1428, %v1430
    %v1432 = vrot.slane %v1418, %v1431
    %v1433 = vcombine.low %v1409, %v1425
    %v1434 = vcombine.high %v1409, %v1425
    %v1436 = vunpack.c.l.s4 1934713408
    %v1437 = vunpack.c.0.s8 %v1436
    %v1438 = vlaneseq
    %v1439 = vshrl.u32 %v1438, 7
    %v1440 = vsub.s32 %v1437, %v1439
    %v1441 = vrot.slane %v1433, %v1440
    %v1443 = vunpack.c.l.s4 1934713408
    %v1444 = vunpack.c.0.s8 %v1443
    %v1445 = vlaneseq
    %v1446 = vshrl.u32 %v1445, 7
    %v1447 = vsub.s32 %v1444, %v1446
    %v1448 = vrot.slane %v1434, %v1447
    %v1449 = vcombine.low %v1416, %v1432
    %v1450 = vcombine.high %v1416, %v1432
    %v1452 = vunpack.c.l.s4 1934713408
    %v1453 = vunpack.c.0.s8 %v1452
    %v1454 = vlaneseq
    %v1455 = vshrl.u32 %v1454, 7
    %v1456 = vsub.s32 %v1453, %v1455
    %v1457 = vrot.slane %v1449, %v1456
    %v1459 = vunpack.c.l.s4 1934713408
    %v1460 = vunpack.c.0.s8 %v1459
    %v1461 = vlaneseq
    %v1462 = vshrl.u32 %v1461, 7
    %v1463 = vsub.s32 %v1460, %v1462
    %v1464 = vrot.slane %v1450, %v1463
    %v1465 = vcombine.high %v1441, 0.0
    %v1466 = vcombine.high %v1448, 0.0
    %v1467 = vcombine.high %v1457, 0.0
    %v1468 = vcombine.high %v1464, 0.0
    %v1469 = vcombine.low %v545, %v1248
    %v1470 = vcombine.high %v545, %v1248
    %v1472 = vunpack.c.l.s4 1983009808
    %v1473 = vunpack.c.0.s8 %v1472
    %v1474 = vlaneseq
    %v1475 = vshrl.u32 %v1474, 7
    %v1476 = vsub.s32 %v1473, %v1475
    %v1477 = vrot.slane %v1469, %v1476
    %v1479 = vunpack.c.l.s4 1983009808
    %v1480 = vunpack.c.0.s8 %v1479
    %v1481 = vlaneseq
    %v1482 = vshrl.u32 %v1481, 7
    %v1483 = vsub.s32 %v1480, %v1482
    %v1484 = vrot.slane %v1470, %v1483
    %v1485 = vcombine.low %v1236, %v1260
    %v1486 = vcombine.high %v1236, %v1260
    %v1488 = vunpack.c.l.s4 1983009808
    %v1489 = vunpack.c.0.s8 %v1488
    %v1490 = vlaneseq
    %v1491 = vshrl.u32 %v1490, 7
    %v1492 = vsub.s32 %v1489, %v1491
    %v1493 = vrot.slane %v1485, %v1492
    %v1495 = vunpack.c.l.s4 1983009808
    %v1496 = vunpack.c.0.s8 %v1495
    %v1497 = vlaneseq
    %v1498 = vshrl.u32 %v1497, 7
    %v1499 = vsub.s32 %v1496, %v1498
    %v1500 = vrot.slane %v1486, %v1499
    %v1501 = vcombine.low %v1477, %v1493
    %v1502 = vcombine.high %v1477, %v1493
    %v1504 = vunpack.c.l.s4 1934713408
    %v1505 = vunpack.c.0.s8 %v1504
    %v1506 = vlaneseq
    %v1507 = vshrl.u32 %v1506, 7
    %v1508 = vsub.s32 %v1505, %v1507
    %v1509 = vrot.slane %v1501, %v1508
    %v1511 = vunpack.c.l.s4 1934713408
    %v1512 = vunpack.c.0.s8 %v1511
    %v1513 = vlaneseq
    %v1514 = vshrl.u32 %v1513, 7
    %v1515 = vsub.s32 %v1512, %v1514
    %v1516 = vrot.slane %v1502, %v1515
    %v1517 = vcombine.low %v1484, %v1500
    %v1518 = vcombine.high %v1484, %v1500
    %v1520 = vunpack.c.l.s4 1934713408
    %v1521 = vunpack.c.0.s8 %v1520
    %v1522 = vlaneseq
    %v1523 = vshrl.u32 %v1522, 7
    %v1524 = vsub.s32 %v1521, %v1523
    %v1525 = vrot.slane %v1517, %v1524
    %v1527 = vunpack.c.l.s4 1934713408
    %v1528 = vunpack.c.0.s8 %v1527
    %v1529 = vlaneseq
    %v1530 = vshrl.u32 %v1529, 7
    %v1531 = vsub.s32 %v1528, %v1530
    %v1532 = vrot.slane %v1518, %v1531
    %v1533 = vcombine.high %v1509, 0.0
    %v1534 = vcombine.high %v1516, 0.0
    %v1535 = vcombine.high %v1525, 0.0
    %v1536 = vcombine.high %v1532, 0.0
    %v1537 = vcombine.low %v1305, %v1312
    %v1539 = vunpack.c.l.s4 1983009808
    %v1540 = vunpack.c.0.s8 %v1539
    %v1541 = vlaneseq
    %v1542 = vshrl.u32 %v1541, 7
    %v1543 = vsub.s32 %v1540, %v1542
    %v1544 = vrot.slane %v1537, %v1543
    %v1545 = vcombine.low %v1329, %v1330
    %v1547 = vunpack.c.l.s4 1983009808
    %v1548 = vunpack.c.0.s8 %v1547
    %v1549 = vlaneseq
    %v1550 = vshrl.u32 %v1549, 7
    %v1551 = vsub.s32 %v1548, %v1550
    %v1552 = vrot.slane %v1545, %v1551
    %v1553 = vcombine.low %v1321, %v1328
    %v1555 = vunpack.c.l.s4 1983009808
    %v1556 = vunpack.c.0.s8 %v1555
    %v1557 = vlaneseq
    %v1558 = vshrl.u32 %v1557, 7
    %v1559 = vsub.s32 %v1556, %v1558
    %v1560 = vrot.slane %v1553, %v1559
    %v1561 = vcombine.low %v1331, %v1332
    %v1563 = vunpack.c.l.s4 1983009808
    %v1564 = vunpack.c.0.s8 %v1563
    %v1565 = vlaneseq
    %v1566 = vshrl.u32 %v1565, 7
    %v1567 = vsub.s32 %v1564, %v1566
    %v1568 = vrot.slane %v1561, %v1567
    %v1569 = vcombine.low %v1544, %v1552
    %v1570 = vcombine.high %v1544, %v1552
    %v1572 = vunpack.c.l.s4 1934713408
    %v1573 = vunpack.c.0.s8 %v1572
    %v1574 = vlaneseq
    %v1575 = vshrl.u32 %v1574, 7
    %v1576 = vsub.s32 %v1573, %v1575
    %v1577 = vrot.slane %v1569, %v1576
    %v1579 = vunpack.c.l.s4 1934713408
    %v1580 = vunpack.c.0.s8 %v1579
    %v1581 = vlaneseq
    %v1582 = vshrl.u32 %v1581, 7
    %v1583 = vsub.s32 %v1580, %v1582
    %v1584 = vrot.slane %v1570, %v1583
    %v1585 = vcombine.low %v1560, %v1568
    %v1586 = vcombine.high %v1560, %v1568
    %v1588 = vunpack.c.l.s4 1934713408
    %v1589 = vunpack.c.0.s8 %v1588
    %v1590 = vlaneseq
    %v1591 = vshrl.u32 %v1590, 7
    %v1592 = vsub.s32 %v1589, %v1591
    %v1593 = vrot.slane %v1585, %v1592
    %v1595 = vunpack.c.l.s4 1934713408
    %v1596 = vunpack.c.0.s8 %v1595
    %v1597 = vlaneseq
    %v1598 = vshrl.u32 %v1597, 7
    %v1599 = vsub.s32 %v1596, %v1598
    %v1600 = vrot.slane %v1586, %v1599
    %v1601 = vcombine.low %v1577, %v1593
    %v1602 = vcombine.high %v1577, %v1593
    %v1603 = vcombine.low %v1584, %v1600
    %v1604 = vcombine.high %v1584, %v1600
    %v1605 = vcombine.low %v1373, %v1380
    %v1607 = vunpack.c.l.s4 1983009808
    %v1608 = vunpack.c.0.s8 %v1607
    %v1609 = vlaneseq
    %v1610 = vshrl.u32 %v1609, 7
    %v1611 = vsub.s32 %v1608, %v1610
    %v1612 = vrot.slane %v1605, %v1611
    %v1613 = vcombine.low %v1397, %v1398
    %v1615 = vunpack.c.l.s4 1983009808
    %v1616 = vunpack.c.0.s8 %v1615
    %v1617 = vlaneseq
    %v1618 = vshrl.u32 %v1617, 7
    %v1619 = vsub.s32 %v1616, %v1618
    %v1620 = vrot.slane %v1613, %v1619
    %v1621 = vcombine.low %v1389, %v1396
    %v1623 = vunpack.c.l.s4 1983009808
    %v1624 = vunpack.c.0.s8 %v1623
    %v1625 = vlaneseq
    %v1626 = vshrl.u32 %v1625, 7
    %v1627 = vsub.s32 %v1624, %v1626
    %v1628 = vrot.slane %v1621, %v1627
    %v1629 = vcombine.low %v1399, %v1400
    %v1631 = vunpack.c.l.s4 1983009808
    %v1632 = vunpack.c.0.s8 %v1631
    %v1633 = vlaneseq
    %v1634 = vshrl.u32 %v1633, 7
    %v1635 = vsub.s32 %v1632, %v1634
    %v1636 = vrot.slane %v1629, %v1635
    %v1637 = vcombine.low %v1612, %v1620
    %v1638 = vcombine.high %v1612, %v1620
    %v1640 = vunpack.c.l.s4 1934713408
    %v1641 = vunpack.c.0.s8 %v1640
    %v1642 = vlaneseq
    %v1643 = vshrl.u32 %v1642, 7
    %v1644 = vsub.s32 %v1641, %v1643
    %v1645 = vrot.slane %v1637, %v1644
    %v1647 = vunpack.c.l.s4 1934713408
    %v1648 = vunpack.c.0.s8 %v1647
    %v1649 = vlaneseq
    %v1650 = vshrl.u32 %v1649, 7
    %v1651 = vsub.s32 %v1648, %v1650
    %v1652 = vrot.slane %v1638, %v1651
    %v1653 = vcombine.low %v1628, %v1636
    %v1654 = vcombine.high %v1628, %v1636
    %v1656 = vunpack.c.l.s4 1934713408
    %v1657 = vunpack.c.0.s8 %v1656
    %v1658 = vlaneseq
    %v1659 = vshrl.u32 %v1658, 7
    %v1660 = vsub.s32 %v1657, %v1659
    %v1661 = vrot.slane %v1653, %v1660
    %v1663 = vunpack.c.l.s4 1934713408
    %v1664 = vunpack.c.0.s8 %v1663
    %v1665 = vlaneseq
    %v1666 = vshrl.u32 %v1665, 7
    %v1667 = vsub.s32 %v1664, %v1666
    %v1668 = vrot.slane %v1654, %v1667
    %v1669 = vcombine.low %v1645, %v1661
    %v1670 = vcombine.high %v1645, %v1661
    %v1671 = vcombine.low %v1652, %v1668
    %v1672 = vcombine.high %v1652, %v1668
    %v1673 = vcombine.low %v1441, %v1448
    %v1675 = vunpack.c.l.s4 1983009808
    %v1676 = vunpack.c.0.s8 %v1675
    %v1677 = vlaneseq
    %v1678 = vshrl.u32 %v1677, 7
    %v1679 = vsub.s32 %v1676, %v1678
    %v1680 = vrot.slane %v1673, %v1679
    %v1681 = vcombine.low %v1465, %v1466
    %v1683 = vunpack.c.l.s4 1983009808
    %v1684 = vunpack.c.0.s8 %v1683
    %v1685 = vlaneseq
    %v1686 = vshrl.u32 %v1685, 7
    %v1687 = vsub.s32 %v1684, %v1686
    %v1688 = vrot.slane %v1681, %v1687
    %v1689 = vcombine.low %v1457, %v1464
    %v1691 = vunpack.c.l.s4 1983009808
    %v1692 = vunpack.c.0.s8 %v1691
    %v1693 = vlaneseq
    %v1694 = vshrl.u32 %v1693, 7
    %v1695 = vsub.s32 %v1692, %v1694
    %v1696 = vrot.slane %v1689, %v1695
    %v1697 = vcombine.low %v1467, %v1468
    %v1699 = vunpack.c.l.s4 1983009808
    %v1700 = vunpack.c.0.s8 %v1699
    %v1701 = vlaneseq
    %v1702 = vshrl.u32 %v1701, 7
    %v1703 = vsub.s32 %v1700, %v1702
    %v1704 = vrot.slane %v1697, %v1703
    %v1705 = vcombine.low %v1680, %v1688
    %v1706 = vcombine.high %v1680, %v1688
    %v1708 = vunpack.c.l.s4 1934713408
    %v1709 = vunpack.c.0.s8 %v1708
    %v1710 = vlaneseq
    %v1711 = vshrl.u32 %v1710, 7
    %v1712 = vsub.s32 %v1709, %v1711
    %v1713 = vrot.slane %v1705, %v1712
    %v1715 = vunpack.c.l.s4 1934713408
    %v1716 = vunpack.c.0.s8 %v1715
    %v1717 = vlaneseq
    %v1718 = vshrl.u32 %v1717, 7
    %v1719 = vsub.s32 %v1716, %v1718
    %v1720 = vrot.slane %v1706, %v1719
    %v1721 = vcombine.low %v1696, %v1704
    %v1722 = vcombine.high %v1696, %v1704
    %v1724 = vunpack.c.l.s4 1934713408
    %v1725 = vunpack.c.0.s8 %v1724
    %v1726 = vlaneseq
    %v1727 = vshrl.u32 %v1726, 7
    %v1728 = vsub.s32 %v1725, %v1727
    %v1729 = vrot.slane %v1721, %v1728
    %v1731 = vunpack.c.l.s4 1934713408
    %v1732 = vunpack.c.0.s8 %v1731
    %v1733 = vlaneseq
    %v1734 = vshrl.u32 %v1733, 7
    %v1735 = vsub.s32 %v1732, %v1734
    %v1736 = vrot.slane %v1722, %v1735
    %v1737 = vcombine.low %v1713, %v1729
    %v1738 = vcombine.high %v1713, %v1729
    %v1739 = vcombine.low %v1720, %v1736
    %v1740 = vcombine.high %v1720, %v1736
    %v1741 = vcombine.low %v1509, %v1516
    %v1743 = vunpack.c.l.s4 1983009808
    %v1744 = vunpack.c.0.s8 %v1743
    %v1745 = vlaneseq
    %v1746 = vshrl.u32 %v1745, 7
    %v1747 = vsub.s32 %v1744, %v1746
    %v1748 = vrot.slane %v1741, %v1747
    %v1749 = vcombine.low %v1533, %v1534
    %v1751 = vunpack.c.l.s4 1983009808
    %v1752 = vunpack.c.0.s8 %v1751
    %v1753 = vlaneseq
    %v1754 = vshrl.u32 %v1753, 7
    %v1755 = vsub.s32 %v1752, %v1754
    %v1756 = vrot.slane %v1749, %v1755
    %v1757 = vcombine.low %v1525, %v1532
    %v1759 = vunpack.c.l.s4 1983009808
    %v1760 = vunpack.c.0.s8 %v1759
    %v1761 = vlaneseq
    %v1762 = vshrl.u32 %v1761, 7
    %v1763 = vsub.s32 %v1760, %v1762
    %v1764 = vrot.slane %v1757, %v1763
    %v1765 = vcombine.low %v1535, %v1536
    %v1767 = vunpack.c.l.s4 1983009808
    %v1768 = vunpack.c.0.s8 %v1767
    %v1769 = vlaneseq
    %v1770 = vshrl.u32 %v1769, 7
    %v1771 = vsub.s32 %v1768, %v1770
    %v1772 = vrot.slane %v1765, %v1771
    %v1773 = vcombine.low %v1748, %v1756
    %v1774 = vcombine.high %v1748, %v1756
    %v1776 = vunpack.c.l.s4 1934713408
    %v1777 = vunpack.c.0.s8 %v1776
    %v1778 = vlaneseq
    %v1779 = vshrl.u32 %v1778, 7
    %v1780 = vsub.s32 %v1777, %v1779
    %v1781 = vrot.slane %v1773, %v1780
    %v1783 = vunpack.c.l.s4 1934713408
    %v1784 = vunpack.c.0.s8 %v1783
    %v1785 = vlaneseq
    %v1786 = vshrl.u32 %v1785, 7
    %v1787 = vsub.s32 %v1784, %v1786
    %v1788 = vrot.slane %v1774, %v1787
    %v1789 = vcombine.low %v1764, %v1772
    %v1790 = vcombine.high %v1764, %v1772
    %v1792 = vunpack.c.l.s4 1934713408
    %v1793 = vunpack.c.0.s8 %v1792
    %v1794 = vlaneseq
    %v1795 = vshrl.u32 %v1794, 7
    %v1796 = vsub.s32 %v1793, %v1795
    %v1797 = vrot.slane %v1789, %v1796
    %v1799 = vunpack.c.l.s4 1934713408
    %v1800 = vunpack.c.0.s8 %v1799
    %v1801 = vlaneseq
    %v1802 = vshrl.u32 %v1801, 7
    %v1803 = vsub.s32 %v1800, %v1802
    %v1804 = vrot.slane %v1790, %v1803
    %v1805 = vcombine.low %v1781, %v1797
    %v1806 = vcombine.high %v1781, %v1797
    %v1807 = vcombine.low %v1788, %v1804
    %v1808 = vcombine.high %v1788, %v1804
    %1813 = vrot.lane.b32.xlu0 %v623, 120
    %v1814 = vpop.permute.xlu0 %1813
    %1815 = vrot.lane.b32.xlu0 %v628, 120
    %v1816 = vpop.permute.xlu0 %1815
    %1817 = vrot.lane.b32.xlu0 %v633, 120
    %v1818 = vpop.permute.xlu0 %1817
    %1819 = vrot.lane.b32.xlu0 %v638, 120
    %v1820 = vpop.permute.xlu0 %1819
    %1825 = vrot.lane.b32.xlu0 %v623, 112
    %v1826 = vpop.permute.xlu0 %1825
    %1827 = vrot.lane.b32.xlu0 %v628, 112
    %v1828 = vpop.permute.xlu0 %1827
    %1829 = vrot.lane.b32.xlu0 %v633, 112
    %v1830 = vpop.permute.xlu0 %1829
    %1831 = vrot.lane.b32.xlu0 %v638, 112
    %v1832 = vpop.permute.xlu0 %1831
    %1837 = vrot.lane.b32.xlu0 %v623, 104
    %v1838 = vpop.permute.xlu0 %1837
    %1839 = vrot.lane.b32.xlu0 %v628, 104
    %v1840 = vpop.permute.xlu0 %1839
    %1841 = vrot.lane.b32.xlu0 %v633, 104
    %v1842 = vpop.permute.xlu0 %1841
    %1843 = vrot.lane.b32.xlu0 %v638, 104
    %v1844 = vpop.permute.xlu0 %1843
    %v1849 = vcombine.low %v623, %v1826
    %v1850 = vcombine.high %v623, %v1826
    %v1852 = vunpack.c.l.s4 1983009808
    %v1853 = vunpack.c.0.s8 %v1852
    %v1854 = vlaneseq
    %v1855 = vshrl.u32 %v1854, 7
    %v1856 = vsub.s32 %v1853, %v1855
    %v1857 = vrot.slane %v1849, %v1856
    %v1859 = vunpack.c.l.s4 1983009808
    %v1860 = vunpack.c.0.s8 %v1859
    %v1861 = vlaneseq
    %v1862 = vshrl.u32 %v1861, 7
    %v1863 = vsub.s32 %v1860, %v1862
    %v1864 = vrot.slane %v1850, %v1863
    %v1865 = vcombine.low %v1814, %v1838
    %v1866 = vcombine.high %v1814, %v1838
    %v1868 = vunpack.c.l.s4 1983009808
    %v1869 = vunpack.c.0.s8 %v1868
    %v1870 = vlaneseq
    %v1871 = vshrl.u32 %v1870, 7
    %v1872 = vsub.s32 %v1869, %v1871
    %v1873 = vrot.slane %v1865, %v1872
    %v1875 = vunpack.c.l.s4 1983009808
    %v1876 = vunpack.c.0.s8 %v1875
    %v1877 = vlaneseq
    %v1878 = vshrl.u32 %v1877, 7
    %v1879 = vsub.s32 %v1876, %v1878
    %v1880 = vrot.slane %v1866, %v1879
    %v1881 = vcombine.low %v1857, %v1873
    %v1882 = vcombine.high %v1857, %v1873
    %v1884 = vunpack.c.l.s4 1934713408
    %v1885 = vunpack.c.0.s8 %v1884
    %v1886 = vlaneseq
    %v1887 = vshrl.u32 %v1886, 7
    %v1888 = vsub.s32 %v1885, %v1887
    %v1889 = vrot.slane %v1881, %v1888
    %v1891 = vunpack.c.l.s4 1934713408
    %v1892 = vunpack.c.0.s8 %v1891
    %v1893 = vlaneseq
    %v1894 = vshrl.u32 %v1893, 7
    %v1895 = vsub.s32 %v1892, %v1894
    %v1896 = vrot.slane %v1882, %v1895
    %v1897 = vcombine.low %v1864, %v1880
    %v1898 = vcombine.high %v1864, %v1880
    %v1900 = vunpack.c.l.s4 1934713408
    %v1901 = vunpack.c.0.s8 %v1900
    %v1902 = vlaneseq
    %v1903 = vshrl.u32 %v1902, 7
    %v1904 = vsub.s32 %v1901, %v1903
    %v1905 = vrot.slane %v1897, %v1904
    %v1907 = vunpack.c.l.s4 1934713408
    %v1908 = vunpack.c.0.s8 %v1907
    %v1909 = vlaneseq
    %v1910 = vshrl.u32 %v1909, 7
    %v1911 = vsub.s32 %v1908, %v1910
    %v1912 = vrot.slane %v1898, %v1911
    %v1913 = vcombine.high %v1889, 0.0
    %v1914 = vcombine.high %v1896, 0.0
    %v1915 = vcombine.high %v1905, 0.0
    %v1916 = vcombine.high %v1912, 0.0
    %v1917 = vcombine.low %v628, %v1828
    %v1918 = vcombine.high %v628, %v1828
    %v1920 = vunpack.c.l.s4 1983009808
    %v1921 = vunpack.c.0.s8 %v1920
    %v1922 = vlaneseq
    %v1923 = vshrl.u32 %v1922, 7
    %v1924 = vsub.s32 %v1921, %v1923
    %v1925 = vrot.slane %v1917, %v1924
    %v1927 = vunpack.c.l.s4 1983009808
    %v1928 = vunpack.c.0.s8 %v1927
    %v1929 = vlaneseq
    %v1930 = vshrl.u32 %v1929, 7
    %v1931 = vsub.s32 %v1928, %v1930
    %v1932 = vrot.slane %v1918, %v1931
    %v1933 = vcombine.low %v1816, %v1840
    %v1934 = vcombine.high %v1816, %v1840
    %v1936 = vunpack.c.l.s4 1983009808
    %v1937 = vunpack.c.0.s8 %v1936
    %v1938 = vlaneseq
    %v1939 = vshrl.u32 %v1938, 7
    %v1940 = vsub.s32 %v1937, %v1939
    %v1941 = vrot.slane %v1933, %v1940
    %v1943 = vunpack.c.l.s4 1983009808
    %v1944 = vunpack.c.0.s8 %v1943
    %v1945 = vlaneseq
    %v1946 = vshrl.u32 %v1945, 7
    %v1947 = vsub.s32 %v1944, %v1946
    %v1948 = vrot.slane %v1934, %v1947
    %v1949 = vcombine.low %v1925, %v1941
    %v1950 = vcombine.high %v1925, %v1941
    %v1952 = vunpack.c.l.s4 1934713408
    %v1953 = vunpack.c.0.s8 %v1952
    %v1954 = vlaneseq
    %v1955 = vshrl.u32 %v1954, 7
    %v1956 = vsub.s32 %v1953, %v1955
    %v1957 = vrot.slane %v1949, %v1956
    %v1959 = vunpack.c.l.s4 1934713408
    %v1960 = vunpack.c.0.s8 %v1959
    %v1961 = vlaneseq
    %v1962 = vshrl.u32 %v1961, 7
    %v1963 = vsub.s32 %v1960, %v1962
    %v1964 = vrot.slane %v1950, %v1963
    %v1965 = vcombine.low %v1932, %v1948
    %v1966 = vcombine.high %v1932, %v1948
    %v1968 = vunpack.c.l.s4 1934713408
    %v1969 = vunpack.c.0.s8 %v1968
    %v1970 = vlaneseq
    %v1971 = vshrl.u32 %v1970, 7
    %v1972 = vsub.s32 %v1969, %v1971
    %v1973 = vrot.slane %v1965, %v1972
    %v1975 = vunpack.c.l.s4 1934713408
    %v1976 = vunpack.c.0.s8 %v1975
    %v1977 = vlaneseq
    %v1978 = vshrl.u32 %v1977, 7
    %v1979 = vsub.s32 %v1976, %v1978
    %v1980 = vrot.slane %v1966, %v1979
    %v1981 = vcombine.high %v1957, 0.0
    %v1982 = vcombine.high %v1964, 0.0
    %v1983 = vcombine.high %v1973, 0.0
    %v1984 = vcombine.high %v1980, 0.0
    %v1985 = vcombine.low %v633, %v1830
    %v1986 = vcombine.high %v633, %v1830
    %v1988 = vunpack.c.l.s4 1983009808
    %v1989 = vunpack.c.0.s8 %v1988
    %v1990 = vlaneseq
    %v1991 = vshrl.u32 %v1990, 7
    %v1992 = vsub.s32 %v1989, %v1991
    %v1993 = vrot.slane %v1985, %v1992
    %v1995 = vunpack.c.l.s4 1983009808
    %v1996 = vunpack.c.0.s8 %v1995
    %v1997 = vlaneseq
    %v1998 = vshrl.u32 %v1997, 7
    %v1999 = vsub.s32 %v1996, %v1998
    %v2000 = vrot.slane %v1986, %v1999
    %v2001 = vcombine.low %v1818, %v1842
    %v2002 = vcombine.high %v1818, %v1842
    %v2004 = vunpack.c.l.s4 1983009808
    %v2005 = vunpack.c.0.s8 %v2004
    %v2006 = vlaneseq
    %v2007 = vshrl.u32 %v2006, 7
    %v2008 = vsub.s32 %v2005, %v2007
    %v2009 = vrot.slane %v2001, %v2008
    %v2011 = vunpack.c.l.s4 1983009808
    %v2012 = vunpack.c.0.s8 %v2011
    %v2013 = vlaneseq
    %v2014 = vshrl.u32 %v2013, 7
    %v2015 = vsub.s32 %v2012, %v2014
    %v2016 = vrot.slane %v2002, %v2015
    %v2017 = vcombine.low %v1993, %v2009
    %v2018 = vcombine.high %v1993, %v2009
    %v2020 = vunpack.c.l.s4 1934713408
    %v2021 = vunpack.c.0.s8 %v2020
    %v2022 = vlaneseq
    %v2023 = vshrl.u32 %v2022, 7
    %v2024 = vsub.s32 %v2021, %v2023
    %v2025 = vrot.slane %v2017, %v2024
    %v2027 = vunpack.c.l.s4 1934713408
    %v2028 = vunpack.c.0.s8 %v2027
    %v2029 = vlaneseq
    %v2030 = vshrl.u32 %v2029, 7
    %v2031 = vsub.s32 %v2028, %v2030
    %v2032 = vrot.slane %v2018, %v2031
    %v2033 = vcombine.low %v2000, %v2016
    %v2034 = vcombine.high %v2000, %v2016
    %v2036 = vunpack.c.l.s4 1934713408
    %v2037 = vunpack.c.0.s8 %v2036
    %v2038 = vlaneseq
    %v2039 = vshrl.u32 %v2038, 7
    %v2040 = vsub.s32 %v2037, %v2039
    %v2041 = vrot.slane %v2033, %v2040
    %v2043 = vunpack.c.l.s4 1934713408
    %v2044 = vunpack.c.0.s8 %v2043
    %v2045 = vlaneseq
    %v2046 = vshrl.u32 %v2045, 7
    %v2047 = vsub.s32 %v2044, %v2046
    %v2048 = vrot.slane %v2034, %v2047
    %v2049 = vcombine.high %v2025, 0.0
    %v2050 = vcombine.high %v2032, 0.0
    %v2051 = vcombine.high %v2041, 0.0
    %v2052 = vcombine.high %v2048, 0.0
    %v2053 = vcombine.low %v638, %v1832
    %v2054 = vcombine.high %v638, %v1832
    %v2056 = vunpack.c.l.s4 1983009808
    %v2057 = vunpack.c.0.s8 %v2056
    %v2058 = vlaneseq
    %v2059 = vshrl.u32 %v2058, 7
    %v2060 = vsub.s32 %v2057, %v2059
    %v2061 = vrot.slane %v2053, %v2060
    %v2063 = vunpack.c.l.s4 1983009808
    %v2064 = vunpack.c.0.s8 %v2063
    %v2065 = vlaneseq
    %v2066 = vshrl.u32 %v2065, 7
    %v2067 = vsub.s32 %v2064, %v2066
    %v2068 = vrot.slane %v2054, %v2067
    %v2069 = vcombine.low %v1820, %v1844
    %v2070 = vcombine.high %v1820, %v1844
    %v2072 = vunpack.c.l.s4 1983009808
    %v2073 = vunpack.c.0.s8 %v2072
    %v2074 = vlaneseq
    %v2075 = vshrl.u32 %v2074, 7
    %v2076 = vsub.s32 %v2073, %v2075
    %v2077 = vrot.slane %v2069, %v2076
    %v2079 = vunpack.c.l.s4 1983009808
    %v2080 = vunpack.c.0.s8 %v2079
    %v2081 = vlaneseq
    %v2082 = vshrl.u32 %v2081, 7
    %v2083 = vsub.s32 %v2080, %v2082
    %v2084 = vrot.slane %v2070, %v2083
    %v2085 = vcombine.low %v2061, %v2077
    %v2086 = vcombine.high %v2061, %v2077
    %v2088 = vunpack.c.l.s4 1934713408
    %v2089 = vunpack.c.0.s8 %v2088
    %v2090 = vlaneseq
    %v2091 = vshrl.u32 %v2090, 7
    %v2092 = vsub.s32 %v2089, %v2091
    %v2093 = vrot.slane %v2085, %v2092
    %v2095 = vunpack.c.l.s4 1934713408
    %v2096 = vunpack.c.0.s8 %v2095
    %v2097 = vlaneseq
    %v2098 = vshrl.u32 %v2097, 7
    %v2099 = vsub.s32 %v2096, %v2098
    %v2100 = vrot.slane %v2086, %v2099
    %v2101 = vcombine.low %v2068, %v2084
    %v2102 = vcombine.high %v2068, %v2084
    %v2104 = vunpack.c.l.s4 1934713408
    %v2105 = vunpack.c.0.s8 %v2104
    %v2106 = vlaneseq
    %v2107 = vshrl.u32 %v2106, 7
    %v2108 = vsub.s32 %v2105, %v2107
    %v2109 = vrot.slane %v2101, %v2108
    %v2111 = vunpack.c.l.s4 1934713408
    %v2112 = vunpack.c.0.s8 %v2111
    %v2113 = vlaneseq
    %v2114 = vshrl.u32 %v2113, 7
    %v2115 = vsub.s32 %v2112, %v2114
    %v2116 = vrot.slane %v2102, %v2115
    %v2117 = vcombine.high %v2093, 0.0
    %v2118 = vcombine.high %v2100, 0.0
    %v2119 = vcombine.high %v2109, 0.0
    %v2120 = vcombine.high %v2116, 0.0
    %v2121 = vcombine.low %v1889, %v1896
    %v2123 = vunpack.c.l.s4 1983009808
    %v2124 = vunpack.c.0.s8 %v2123
    %v2125 = vlaneseq
    %v2126 = vshrl.u32 %v2125, 7
    %v2127 = vsub.s32 %v2124, %v2126
    %v2128 = vrot.slane %v2121, %v2127
    %v2129 = vcombine.low %v1913, %v1914
    %v2131 = vunpack.c.l.s4 1983009808
    %v2132 = vunpack.c.0.s8 %v2131
    %v2133 = vlaneseq
    %v2134 = vshrl.u32 %v2133, 7
    %v2135 = vsub.s32 %v2132, %v2134
    %v2136 = vrot.slane %v2129, %v2135
    %v2137 = vcombine.low %v1905, %v1912
    %v2139 = vunpack.c.l.s4 1983009808
    %v2140 = vunpack.c.0.s8 %v2139
    %v2141 = vlaneseq
    %v2142 = vshrl.u32 %v2141, 7
    %v2143 = vsub.s32 %v2140, %v2142
    %v2144 = vrot.slane %v2137, %v2143
    %v2145 = vcombine.low %v1915, %v1916
    %v2147 = vunpack.c.l.s4 1983009808
    %v2148 = vunpack.c.0.s8 %v2147
    %v2149 = vlaneseq
    %v2150 = vshrl.u32 %v2149, 7
    %v2151 = vsub.s32 %v2148, %v2150
    %v2152 = vrot.slane %v2145, %v2151
    %v2153 = vcombine.low %v2128, %v2136
    %v2154 = vcombine.high %v2128, %v2136
    %v2156 = vunpack.c.l.s4 1934713408
    %v2157 = vunpack.c.0.s8 %v2156
    %v2158 = vlaneseq
    %v2159 = vshrl.u32 %v2158, 7
    %v2160 = vsub.s32 %v2157, %v2159
    %v2161 = vrot.slane %v2153, %v2160
    %v2163 = vunpack.c.l.s4 1934713408
    %v2164 = vunpack.c.0.s8 %v2163
    %v2165 = vlaneseq
    %v2166 = vshrl.u32 %v2165, 7
    %v2167 = vsub.s32 %v2164, %v2166
    %v2168 = vrot.slane %v2154, %v2167
    %v2169 = vcombine.low %v2144, %v2152
    %v2170 = vcombine.high %v2144, %v2152
    %v2172 = vunpack.c.l.s4 1934713408
    %v2173 = vunpack.c.0.s8 %v2172
    %v2174 = vlaneseq
    %v2175 = vshrl.u32 %v2174, 7
    %v2176 = vsub.s32 %v2173, %v2175
    %v2177 = vrot.slane %v2169, %v2176
    %v2179 = vunpack.c.l.s4 1934713408
    %v2180 = vunpack.c.0.s8 %v2179
    %v2181 = vlaneseq
    %v2182 = vshrl.u32 %v2181, 7
    %v2183 = vsub.s32 %v2180, %v2182
    %v2184 = vrot.slane %v2170, %v2183
    %v2185 = vcombine.low %v2161, %v2177
    %v2186 = vcombine.high %v2161, %v2177
    %v2187 = vcombine.low %v2168, %v2184
    %v2188 = vcombine.high %v2168, %v2184
    %v2189 = vcombine.low %v1957, %v1964
    %v2191 = vunpack.c.l.s4 1983009808
    %v2192 = vunpack.c.0.s8 %v2191
    %v2193 = vlaneseq
    %v2194 = vshrl.u32 %v2193, 7
    %v2195 = vsub.s32 %v2192, %v2194
    %v2196 = vrot.slane %v2189, %v2195
    %v2197 = vcombine.low %v1981, %v1982
    %v2199 = vunpack.c.l.s4 1983009808
    %v2200 = vunpack.c.0.s8 %v2199
    %v2201 = vlaneseq
    %v2202 = vshrl.u32 %v2201, 7
    %v2203 = vsub.s32 %v2200, %v2202
    %v2204 = vrot.slane %v2197, %v2203
    %v2205 = vcombine.low %v1973, %v1980
    %v2207 = vunpack.c.l.s4 1983009808
    %v2208 = vunpack.c.0.s8 %v2207
    %v2209 = vlaneseq
    %v2210 = vshrl.u32 %v2209, 7
    %v2211 = vsub.s32 %v2208, %v2210
    %v2212 = vrot.slane %v2205, %v2211
    %v2213 = vcombine.low %v1983, %v1984
    %v2215 = vunpack.c.l.s4 1983009808
    %v2216 = vunpack.c.0.s8 %v2215
    %v2217 = vlaneseq
    %v2218 = vshrl.u32 %v2217, 7
    %v2219 = vsub.s32 %v2216, %v2218
    %v2220 = vrot.slane %v2213, %v2219
    %v2221 = vcombine.low %v2196, %v2204
    %v2222 = vcombine.high %v2196, %v2204
    %v2224 = vunpack.c.l.s4 1934713408
    %v2225 = vunpack.c.0.s8 %v2224
    %v2226 = vlaneseq
    %v2227 = vshrl.u32 %v2226, 7
    %v2228 = vsub.s32 %v2225, %v2227
    %v2229 = vrot.slane %v2221, %v2228
    %v2231 = vunpack.c.l.s4 1934713408
    %v2232 = vunpack.c.0.s8 %v2231
    %v2233 = vlaneseq
    %v2234 = vshrl.u32 %v2233, 7
    %v2235 = vsub.s32 %v2232, %v2234
    %v2236 = vrot.slane %v2222, %v2235
    %v2237 = vcombine.low %v2212, %v2220
    %v2238 = vcombine.high %v2212, %v2220
    %v2240 = vunpack.c.l.s4 1934713408
    %v2241 = vunpack.c.0.s8 %v2240
    %v2242 = vlaneseq
    %v2243 = vshrl.u32 %v2242, 7
    %v2244 = vsub.s32 %v2241, %v2243
    %v2245 = vrot.slane %v2237, %v2244
    %v2247 = vunpack.c.l.s4 1934713408
    %v2248 = vunpack.c.0.s8 %v2247
    %v2249 = vlaneseq
    %v2250 = vshrl.u32 %v2249, 7
    %v2251 = vsub.s32 %v2248, %v2250
    %v2252 = vrot.slane %v2238, %v2251
    %v2253 = vcombine.low %v2229, %v2245
    %v2254 = vcombine.high %v2229, %v2245
    %v2255 = vcombine.low %v2236, %v2252
    %v2256 = vcombine.high %v2236, %v2252
    %v2257 = vcombine.low %v2025, %v2032
    %v2259 = vunpack.c.l.s4 1983009808
    %v2260 = vunpack.c.0.s8 %v2259
    %v2261 = vlaneseq
    %v2262 = vshrl.u32 %v2261, 7
    %v2263 = vsub.s32 %v2260, %v2262
    %v2264 = vrot.slane %v2257, %v2263
    %v2265 = vcombine.low %v2049, %v2050
    %v2267 = vunpack.c.l.s4 1983009808
    %v2268 = vunpack.c.0.s8 %v2267
    %v2269 = vlaneseq
    %v2270 = vshrl.u32 %v2269, 7
    %v2271 = vsub.s32 %v2268, %v2270
    %v2272 = vrot.slane %v2265, %v2271
    %v2273 = vcombine.low %v2041, %v2048
    %v2275 = vunpack.c.l.s4 1983009808
    %v2276 = vunpack.c.0.s8 %v2275
    %v2277 = vlaneseq
    %v2278 = vshrl.u32 %v2277, 7
    %v2279 = vsub.s32 %v2276, %v2278
    %v2280 = vrot.slane %v2273, %v2279
    %v2281 = vcombine.low %v2051, %v2052
    %v2283 = vunpack.c.l.s4 1983009808
    %v2284 = vunpack.c.0.s8 %v2283
    %v2285 = vlaneseq
    %v2286 = vshrl.u32 %v2285, 7
    %v2287 = vsub.s32 %v2284, %v2286
    %v2288 = vrot.slane %v2281, %v2287
    %v2289 = vcombine.low %v2264, %v2272
    %v2290 = vcombine.high %v2264, %v2272
    %v2292 = vunpack.c.l.s4 1934713408
    %v2293 = vunpack.c.0.s8 %v2292
    %v2294 = vlaneseq
    %v2295 = vshrl.u32 %v2294, 7
    %v2296 = vsub.s32 %v2293, %v2295
    %v2297 = vrot.slane %v2289, %v2296
    %v2299 = vunpack.c.l.s4 1934713408
    %v2300 = vunpack.c.0.s8 %v2299
    %v2301 = vlaneseq
    %v2302 = vshrl.u32 %v2301, 7
    %v2303 = vsub.s32 %v2300, %v2302
    %v2304 = vrot.slane %v2290, %v2303
    %v2305 = vcombine.low %v2280, %v2288
    %v2306 = vcombine.high %v2280, %v2288
    %v2308 = vunpack.c.l.s4 1934713408
    %v2309 = vunpack.c.0.s8 %v2308
    %v2310 = vlaneseq
    %v2311 = vshrl.u32 %v2310, 7
    %v2312 = vsub.s32 %v2309, %v2311
    %v2313 = vrot.slane %v2305, %v2312
    %v2315 = vunpack.c.l.s4 1934713408
    %v2316 = vunpack.c.0.s8 %v2315
    %v2317 = vlaneseq
    %v2318 = vshrl.u32 %v2317, 7
    %v2319 = vsub.s32 %v2316, %v2318
    %v2320 = vrot.slane %v2306, %v2319
    %v2321 = vcombine.low %v2297, %v2313
    %v2322 = vcombine.high %v2297, %v2313
    %v2323 = vcombine.low %v2304, %v2320
    %v2324 = vcombine.high %v2304, %v2320
    %v2325 = vcombine.low %v2093, %v2100
    %v2327 = vunpack.c.l.s4 1983009808
    %v2328 = vunpack.c.0.s8 %v2327
    %v2329 = vlaneseq
    %v2330 = vshrl.u32 %v2329, 7
    %v2331 = vsub.s32 %v2328, %v2330
    %v2332 = vrot.slane %v2325, %v2331
    %v2333 = vcombine.low %v2117, %v2118
    %v2335 = vunpack.c.l.s4 1983009808
    %v2336 = vunpack.c.0.s8 %v2335
    %v2337 = vlaneseq
    %v2338 = vshrl.u32 %v2337, 7
    %v2339 = vsub.s32 %v2336, %v2338
    %v2340 = vrot.slane %v2333, %v2339
    %v2341 = vcombine.low %v2109, %v2116
    %v2343 = vunpack.c.l.s4 1983009808
    %v2344 = vunpack.c.0.s8 %v2343
    %v2345 = vlaneseq
    %v2346 = vshrl.u32 %v2345, 7
    %v2347 = vsub.s32 %v2344, %v2346
    %v2348 = vrot.slane %v2341, %v2347
    %v2349 = vcombine.low %v2119, %v2120
    %v2351 = vunpack.c.l.s4 1983009808
    %v2352 = vunpack.c.0.s8 %v2351
    %v2353 = vlaneseq
    %v2354 = vshrl.u32 %v2353, 7
    %v2355 = vsub.s32 %v2352, %v2354
    %v2356 = vrot.slane %v2349, %v2355
    %v2357 = vcombine.low %v2332, %v2340
    %v2358 = vcombine.high %v2332, %v2340
    %v2360 = vunpack.c.l.s4 1934713408
    %v2361 = vunpack.c.0.s8 %v2360
    %v2362 = vlaneseq
    %v2363 = vshrl.u32 %v2362, 7
    %v2364 = vsub.s32 %v2361, %v2363
    %v2365 = vrot.slane %v2357, %v2364
    %v2367 = vunpack.c.l.s4 1934713408
    %v2368 = vunpack.c.0.s8 %v2367
    %v2369 = vlaneseq
    %v2370 = vshrl.u32 %v2369, 7
    %v2371 = vsub.s32 %v2368, %v2370
    %v2372 = vrot.slane %v2358, %v2371
    %v2373 = vcombine.low %v2348, %v2356
    %v2374 = vcombine.high %v2348, %v2356
    %v2376 = vunpack.c.l.s4 1934713408
    %v2377 = vunpack.c.0.s8 %v2376
    %v2378 = vlaneseq
    %v2379 = vshrl.u32 %v2378, 7
    %v2380 = vsub.s32 %v2377, %v2379
    %v2381 = vrot.slane %v2373, %v2380
    %v2383 = vunpack.c.l.s4 1934713408
    %v2384 = vunpack.c.0.s8 %v2383
    %v2385 = vlaneseq
    %v2386 = vshrl.u32 %v2385, 7
    %v2387 = vsub.s32 %v2384, %v2386
    %v2388 = vrot.slane %v2374, %v2387
    %v2389 = vcombine.low %v2365, %v2381
    %v2390 = vcombine.high %v2365, %v2381
    %v2391 = vcombine.low %v2372, %v2388
    %v2392 = vcombine.high %v2372, %v2388
    %v2393 = vlaneseq
    %v2394 = vshrl.u32 %v2393, 7
    %v2395 = vadd.s32 %v2394, 8
    %v2396 = vadd.s32 %v2394, 16
    %v2397 = vadd.s32 %v2394, 24
    %v2398 = vlaneseq
    %v2399 = vand.u32 %v2398, 127
    %vm2400 = vcmp.lt.s32.totalorder %v2394, 0
    %v2401 = vsub.s32 0, %v2394
    %v2402 = vsel %vm2400, %v2401, %v2394
    %v2403 = vshrl.u32 %v2402, 3
    %v2404 = vand.u32 %v2402, 7
    %v2405 = vsub.s32 0, %v2404
    %v2406 = vsel %vm2400, %v2405, %v2404
    %vm2407 = vcmp.lt.s32.totalorder %v2395, 0
    %v2408 = vsub.s32 0, %v2395
    %v2409 = vsel %vm2407, %v2408, %v2395
    %v2410 = vshrl.u32 %v2409, 3
    %v2411 = vand.u32 %v2409, 7
    %v2412 = vsub.s32 0, %v2411
    %v2413 = vsel %vm2407, %v2412, %v2411
    %vm2414 = vcmp.lt.s32.totalorder %v2396, 0
    %v2415 = vsub.s32 0, %v2396
    %v2416 = vsel %vm2414, %v2415, %v2396
    %v2417 = vshrl.u32 %v2416, 3
    %v2418 = vand.u32 %v2416, 7
    %v2419 = vsub.s32 0, %v2418
    %v2420 = vsel %vm2414, %v2419, %v2418
    %vm2421 = vcmp.lt.s32.totalorder %v2397, 0
    %v2422 = vsub.s32 0, %v2397
    %v2423 = vsel %vm2421, %v2422, %v2397
    %v2424 = vshrl.u32 %v2423, 3
    %v2425 = vand.u32 %v2423, 7
    %v2426 = vsub.s32 0, %v2425
    %v2427 = vsel %vm2421, %v2426, %v2425
    %vm2428 = vcmp.ne.s32.totalorder %v2406, 0
    %vm2429 = vcmp.ne.s32.totalorder %v2413, 0
    %vm2430 = vcmp.ne.s32.totalorder %v2420, 0
    %vm2431 = vcmp.ne.s32.totalorder %v2427, 0
    %vm2432 = vcmp.lt.s32.totalorder %v2406, 0
    %vm2433 = vcmp.lt.s32.totalorder %v2413, 0
    %vm2434 = vcmp.lt.s32.totalorder %v2420, 0
    %vm2435 = vcmp.lt.s32.totalorder %v2427, 0
    %vm2436 = vmand %vm2432, %vm2428
    %vm2437 = vmand %vm2433, %vm2429
    %vm2438 = vmand %vm2434, %vm2430
    %vm2439 = vmand %vm2435, %vm2431
    %v2440 = vadd.s32 %v2406, 8
    %v2441 = vadd.s32 %v2413, 8
    %v2442 = vadd.s32 %v2420, 8
    %v2443 = vadd.s32 %v2427, 8
    %v2444 = vsel %vm2436, %v2440, %v2406
    %v2445 = vsel %vm2437, %v2441, %v2413
    %v2446 = vsel %vm2438, %v2442, %v2420
    %v2447 = vsel %vm2439, %v2443, %v2427
    %vm2448 = vcmp.lt.s32.totalorder %v2399, 0
    %v2449 = vsub.s32 0, %v2399
    %v2450 = vsel %vm2448, %v2449, %v2399
    %v2451 = vshrl.u32 %v2450, 3
    %v2452 = vand.u32 %v2450, 7
    %v2453 = vsub.s32 0, %v2452
    %v2454 = vsel %vm2448, %v2453, %v2452
    %vm2455 = vcmp.ne.s32.totalorder %v2454, 0
    %vm2456 = vcmp.lt.s32.totalorder %v2454, 0
    %vm2457 = vmand %vm2456, %vm2455
    %v2458 = vadd.s32 %v2454, 8
    %v2459 = vsel %vm2457, %v2458, %v2454
    %vm2460 = vcmp.eq.s32.totalorder %v2444, %v2459
    %vm2461 = vcmp.eq.s32.totalorder %v2445, %v2459
    %vm2462 = vcmp.eq.s32.totalorder %v2446, %v2459
    %vm2463 = vcmp.eq.s32.totalorder %v2447, %v2459
    %v2464 = vsel %vm2460, 0.0, -1e+30
    %v2465 = vsel %vm2461, 0.0, -1e+30
    %v2466 = vsel %vm2462, 0.0, -1e+30
    %v2467 = vsel %vm2463, 0.0, -1e+30
    %vm2468 = vcmask 64512
    %v2470 = vsel %vm2468, %v1017, 0
    %v2473 = vsel %vm2468, %v1085, 0
    %v2476 = vsel %vm2468, %v1153, 0
    %v2479 = vsel %vm2468, %v1221, 0
    %v2482 = vsel %vm2468, %v1601, 0
    %v2485 = vsel %vm2468, %v1669, 0
    %v2488 = vsel %vm2468, %v1737, 0
    %v2491 = vsel %vm2468, %v1805, 0
    %2493 = vmatprep.subr.mxu0 0.0
    %2494 = vmatpush1.xpose.msra.mxu0 %v2482
    %2495 = vmatprep.subr.mxu0 0.0
    %2496 = vmatpush1.xpose.msra.mxu0 %v2485
    %2497 = vmatprep.subr.mxu0 0.0
    %2498 = vmatpush1.xpose.msra.mxu0 %v2488
    %2499 = vmatprep.subr.mxu0 0.0
    %2500 = vmatpush1.xpose.msra.mxu0 %v2491
    %2501 = vmatprep.subr.mxu0 0.0
    %2502 = vmatpush1.xpose.msra.mxu0 0.0
    %2503 = vmatprep.subr.mxu0 0.0
    %2504 = vmatpush1.xpose.msra.mxu0 0.0
    %2505 = vmatprep.subr.mxu0 0.0
    %2506 = vmatpush1.xpose.msra.mxu0 0.0
    %2507 = vmatprep.subr.mxu0 0.0
    %2508 = vmatpush1.xpose.msra.mxu0 0.0
    %2509 = vmatprep.subr.mxu0 0.0
    %2510 = vmatpush1.xpose.msra.mxu0 0.0
    %2511 = vmatprep.subr.mxu0 0.0
    %2512 = vmatpush1.xpose.msra.mxu0 0.0
    %2513 = vmatprep.subr.mxu0 0.0
    %2514 = vmatpush1.xpose.msra.mxu0 0.0
    %2515 = vmatprep.subr.mxu0 0.0
    %2516 = vmatpush1.xpose.msra.mxu0 0.0
    %2517 = vmatprep.subr.mxu0 0.0
    %2518 = vmatpush1.xpose.msra.mxu0 0.0
    %2519 = vmatprep.subr.mxu0 0.0
    %2520 = vmatpush1.xpose.msra.mxu0 0.0
    %2521 = vmatprep.subr.mxu0 0.0
    %2522 = vmatpush1.xpose.msra.mxu0 0.0
    %2523 = vmatprep.subr.mxu0 0.0
    %2524 = vmatpush1.xpose.msra.mxu0 0.0
    %2525 = vmatprep.subr.mxu0 0.0
    %2526 = vmatpush1.xpose.msra.mxu0 0.0
    %2527 = vmatprep.subr.mxu0 0.0
    %2528 = vmatpush1.xpose.msra.mxu0 0.0
    %2529 = vmatprep.subr.mxu0 0.0
    %2530 = vmatpush1.xpose.msra.mxu0 0.0
    %2531 = vmatprep.subr.mxu0 0.0
    %2532 = vmatpush1.xpose.msra.mxu0 0.0
    %2533 = vmatprep.subr.mxu0 0.0
    %2534 = vmatpush1.xpose.msra.mxu0 0.0
    %2535 = vmatprep.subr.mxu0 0.0
    %2536 = vmatpush1.xpose.msra.mxu0 0.0
    %2537 = vmatprep.subr.mxu0 0.0
    %2538 = vmatpush1.xpose.msra.mxu0 0.0
    %2539 = vmatprep.subr.mxu0 0.0
    %2540 = vmatpush1.xpose.msra.mxu0 0.0
    %2541 = vmatprep.subr.mxu0 0.0
    %2542 = vmatpush1.xpose.msra.mxu0 0.0
    %2543 = vmatprep.subr.mxu0 0.0
    %2544 = vmatpush1.xpose.msra.mxu0 0.0
    %2545 = vmatprep.subr.mxu0 0.0
    %2546 = vmatpush1.xpose.msra.mxu0 0.0
    %2547 = vmatprep.subr.mxu0 0.0
    %2548 = vmatpush1.xpose.msra.mxu0 0.0
    %2549 = vmatprep.subr.mxu0 0.0
    %2550 = vmatpush1.xpose.msra.mxu0 0.0
    %2551 = vmatprep.subr.mxu0 0.0
    %2552 = vmatpush1.xpose.msra.mxu0 0.0
    %2553 = vmatprep.subr.mxu0 0.0
    %2554 = vmatpush1.xpose.msra.mxu0 0.0
    %2555 = vmatprep.subr.mxu0 0.0
    %2556 = vmatpush1.xpose.msra.mxu0 0.0
    %2557 = vmatprep.mubr.f32.mxu0 0.0
    %2558 = vmatmul.mubr.f32.gmra.mrb[0].mxu0 %v2470
    %v2559 = vpop.f32.mrb[0].mxu0
    %v2560 = vadd.f32 %v2464, %v2559
    %v2561 = vpop.f32.mrb[0].mxu0
    %2562 = vmatprep.mubr.f32.mxu0 0.0
    %2563 = vmatmul.mubr.f32.gmra.mrb[0].mxu0 %v2473
    %v2564 = vpop.f32.mrb[0].mxu0
    %v2565 = vadd.f32 %v2465, %v2564
    %v2566 = vpop.f32.mrb[0].mxu0
    %2567 = vmatprep.mubr.f32.mxu0 0.0
    %2568 = vmatmul.mubr.f32.gmra.mrb[0].mxu0 %v2476
    %v2569 = vpop.f32.mrb[0].mxu0
    %v2570 = vadd.f32 %v2466, %v2569
    %v2571 = vpop.f32.mrb[0].mxu0
    %2572 = vmatprep.mubr.f32.mxu0 0.0
    %2573 = vmatmul.mubr.f32.gmra.mrb[0].mxu0 %v2479
    %v2574 = vpop.f32.mrb[0].mxu0
    %v2575 = vadd.f32 %v2467, %v2574
    %v2576 = vpop.f32.mrb[0].mxu0
    %2577 = vdwg.mxu0
    %v2579 = vsel %vm2468, %v1018, 0
    %v2582 = vsel %vm2468, %v1086, 0
    %v2585 = vsel %vm2468, %v1154, 0
    %v2588 = vsel %vm2468, %v1222, 0
    %v2591 = vsel %vm2468, %v1602, 0
    %v2594 = vsel %vm2468, %v1670, 0
    %v2597 = vsel %vm2468, %v1738, 0
    %v2600 = vsel %vm2468, %v1806, 0
    %2602 = vmatprep.subr.mxu0 0.0
    %2603 = vmatpush1.xpose.msra.mxu0 %v2591
    %2604 = vmatprep.subr.mxu0 0.0
    %2605 = vmatpush1.xpose.msra.mxu0 %v2594
    %2606 = vmatprep.subr.mxu0 0.0
    %2607 = vmatpush1.xpose.msra.mxu0 %v2597
    %2608 = vmatprep.subr.mxu0 0.0
    %2609 = vmatpush1.xpose.msra.mxu0 %v2600
    %2610 = vmatprep.subr.mxu0 0.0
    %2611 = vmatpush1.xpose.msra.mxu0 0.0
    %2612 = vmatprep.subr.mxu0 0.0
    %2613 = vmatpush1.xpose.msra.mxu0 0.0
    %2614 = vmatprep.subr.mxu0 0.0
    %2615 = vmatpush1.xpose.msra.mxu0 0.0
    %2616 = vmatprep.subr.mxu0 0.0
    %2617 = vmatpush1.xpose.msra.mxu0 0.0
    %2618 = vmatprep.subr.mxu0 0.0
    %2619 = vmatpush1.xpose.msra.mxu0 0.0
    %2620 = vmatprep.subr.mxu0 0.0
    %2621 = vmatpush1.xpose.msra.mxu0 0.0
    %2622 = vmatprep.subr.mxu0 0.0
    %2623 = vmatpush1.xpose.msra.mxu0 0.0
    %2624 = vmatprep.subr.mxu0 0.0
    %2625 = vmatpush1.xpose.msra.mxu0 0.0
    %2626 = vmatprep.subr.mxu0 0.0
    %2627 = vmatpush1.xpose.msra.mxu0 0.0
    %2628 = vmatprep.subr.mxu0 0.0
    %2629 = vmatpush1.xpose.msra.mxu0 0.0
    %2630 = vmatprep.subr.mxu0 0.0
    %2631 = vmatpush1.xpose.msra.mxu0 0.0
    %2632 = vmatprep.subr.mxu0 0.0
    %2633 = vmatpush1.xpose.msra.mxu0 0.0
    %2634 = vmatprep.subr.mxu0 0.0
    %2635 = vmatpush1.xpose.msra.mxu0 0.0
    %2636 = vmatprep.subr.mxu0 0.0
    %2637 = vmatpush1.xpose.msra.mxu0 0.0
    %2638 = vmatprep.subr.mxu0 0.0
    %2639 = vmatpush1.xpose.msra.mxu0 0.0
    %2640 = vmatprep.subr.mxu0 0.0
    %2641 = vmatpush1.xpose.msra.mxu0 0.0
    %2642 = vmatprep.subr.mxu0 0.0
    %2643 = vmatpush1.xpose.msra.mxu0 0.0
    %2644 = vmatprep.subr.mxu0 0.0
    %2645 = vmatpush1.xpose.msra.mxu0 0.0
    %2646 = vmatprep.subr.mxu0 0.0
    %2647 = vmatpush1.xpose.msra.mxu0 0.0
    %2648 = vmatprep.subr.mxu0 0.0
    %2649 = vmatpush1.xpose.msra.mxu0 0.0
    %2650 = vmatprep.subr.mxu0 0.0
    %2651 = vmatpush1.xpose.msra.mxu0 0.0
    %2652 = vmatprep.subr.mxu0 0.0
    %2653 = vmatpush1.xpose.msra.mxu0 0.0
    %2654 = vmatprep.subr.mxu0 0.0
    %2655 = vmatpush1.xpose.msra.mxu0 0.0
    %2656 = vmatprep.subr.mxu0 0.0
    %2657 = vmatpush1.xpose.msra.mxu0 0.0
    %2658 = vmatprep.subr.mxu0 0.0
    %2659 = vmatpush1.xpose.msra.mxu0 0.0
    %2660 = vmatprep.subr.mxu0 0.0
    %2661 = vmatpush1.xpose.msra.mxu0 0.0
    %2662 = vmatprep.subr.mxu0 0.0
    %2663 = vmatpush1.xpose.msra.mxu0 0.0
    %2664 = vmatprep.subr.mxu0 0.0
    %2665 = vmatpush1.xpose.msra.mxu0 0.0
    %2666 = vmatprep.mubr.f32.mxu0 0.0
    %2667 = vmatmul.mubr.f32.gmra.mrb[0].mxu0 %v2579
    %v2668 = vpop.f32.mrb[0].mxu0
    %v2669 = vadd.f32 %v2464, %v2668
    %v2670 = vpop.f32.mrb[0].mxu0
    %2671 = vmatprep.mubr.f32.mxu0 0.0
    %2672 = vmatmul.mubr.f32.gmra.mrb[0].mxu0 %v2582
    %v2673 = vpop.f32.mrb[0].mxu0
    %v2674 = vadd.f32 %v2465, %v2673
    %v2675 = vpop.f32.mrb[0].mxu0
    %2676 = vmatprep.mubr.f32.mxu0 0.0
    %2677 = vmatmul.mubr.f32.gmra.mrb[0].mxu0 %v2585
    %v2678 = vpop.f32.mrb[0].mxu0
    %v2679 = vadd.f32 %v2466, %v2678
    %v2680 = vpop.f32.mrb[0].mxu0
    %2681 = vmatprep.mubr.f32.mxu0 0.0
    %2682 = vmatmul.mubr.f32.gmra.mrb[0].mxu0 %v2588
    %v2683 = vpop.f32.mrb[0].mxu0
    %v2684 = vadd.f32 %v2467, %v2683
    %v2685 = vpop.f32.mrb[0].mxu0
    %2686 = vdwg.mxu0
    %v2688 = vsel %vm2468, %v1019, 0
    %v2691 = vsel %vm2468, %v1087, 0
    %v2694 = vsel %vm2468, %v1155, 0
    %v2697 = vsel %vm2468, %v1223, 0
    %v2700 = vsel %vm2468, %v1603, 0
    %v2703 = vsel %vm2468, %v1671, 0
    %v2706 = vsel %vm2468, %v1739, 0
    %v2709 = vsel %vm2468, %v1807, 0
    %2711 = vmatprep.subr.mxu0 0.0
    %2712 = vmatpush1.xpose.msra.mxu0 %v2700
    %2713 = vmatprep.subr.mxu0 0.0
    %2714 = vmatpush1.xpose.msra.mxu0 %v2703
    %2715 = vmatprep.subr.mxu0 0.0
    %2716 = vmatpush1.xpose.msra.mxu0 %v2706
    %2717 = vmatprep.subr.mxu0 0.0
    %2718 = vmatpush1.xpose.msra.mxu0 %v2709
    %2719 = vmatprep.subr.mxu0 0.0
    %2720 = vmatpush1.xpose.msra.mxu0 0.0
    %2721 = vmatprep.subr.mxu0 0.0
    %2722 = vmatpush1.xpose.msra.mxu0 0.0
    %2723 = vmatprep.subr.mxu0 0.0
    %2724 = vmatpush1.xpose.msra.mxu0 0.0
    %2725 = vmatprep.subr.mxu0 0.0
    %2726 = vmatpush1.xpose.msra.mxu0 0.0
    %2727 = vmatprep.subr.mxu0 0.0
    %2728 = vmatpush1.xpose.msra.mxu0 0.0
    %2729 = vmatprep.subr.mxu0 0.0
    %2730 = vmatpush1.xpose.msra.mxu0 0.0
    %2731 = vmatprep.subr.mxu0 0.0
    %2732 = vmatpush1.xpose.msra.mxu0 0.0
    %2733 = vmatprep.subr.mxu0 0.0
    %2734 = vmatpush1.xpose.msra.mxu0 0.0
    %2735 = vmatprep.subr.mxu0 0.0
    %2736 = vmatpush1.xpose.msra.mxu0 0.0
    %2737 = vmatprep.subr.mxu0 0.0
    %2738 = vmatpush1.xpose.msra.mxu0 0.0
    %2739 = vmatprep.subr.mxu0 0.0
    %2740 = vmatpush1.xpose.msra.mxu0 0.0
    %2741 = vmatprep.subr.mxu0 0.0
    %2742 = vmatpush1.xpose.msra.mxu0 0.0
    %2743 = vmatprep.subr.mxu0 0.0
    %2744 = vmatpush1.xpose.msra.mxu0 0.0
    %2745 = vmatprep.subr.mxu0 0.0
    %2746 = vmatpush1.xpose.msra.mxu0 0.0
    %2747 = vmatprep.subr.mxu0 0.0
    %2748 = vmatpush1.xpose.msra.mxu0 0.0
    %2749 = vmatprep.subr.mxu0 0.0
    %2750 = vmatpush1.xpose.msra.mxu0 0.0
    %2751 = vmatprep.subr.mxu0 0.0
    %2752 = vmatpush1.xpose.msra.mxu0 0.0
    %2753 = vmatprep.subr.mxu0 0.0
    %2754 = vmatpush1.xpose.msra.mxu0 0.0
    %2755 = vmatprep.subr.mxu0 0.0
    %2756 = vmatpush1.xpose.msra.mxu0 0.0
    %2757 = vmatprep.subr.mxu0 0.0
    %2758 = vmatpush1.xpose.msra.mxu0 0.0
    %2759 = vmatprep.subr.mxu0 0.0
    %2760 = vmatpush1.xpose.msra.mxu0 0.0
    %2761 = vmatprep.subr.mxu0 0.0
    %2762 = vmatpush1.xpose.msra.mxu0 0.0
    %2763 = vmatprep.subr.mxu0 0.0
    %2764 = vmatpush1.xpose.msra.mxu0 0.0
    %2765 = vmatprep.subr.mxu0 0.0
    %2766 = vmatpush1.xpose.msra.mxu0 0.0
    %2767 = vmatprep.subr.mxu0 0.0
    %2768 = vmatpush1.xpose.msra.mxu0 0.0
    %2769 = vmatprep.subr.mxu0 0.0
    %2770 = vmatpush1.xpose.msra.mxu0 0.0
    %2771 = vmatprep.subr.mxu0 0.0
    %2772 = vmatpush1.xpose.msra.mxu0 0.0
    %2773 = vmatprep.subr.mxu0 0.0
    %2774 = vmatpush1.xpose.msra.mxu0 0.0
    %2775 = vmatprep.mubr.f32.mxu0 0.0
    %2776 = vmatmul.mubr.f32.gmra.mrb[0].mxu0 %v2688
    %v2777 = vpop.f32.mrb[0].mxu0
    %v2778 = vadd.f32 %v2464, %v2777
    %v2779 = vpop.f32.mrb[0].mxu0
    %2780 = vmatprep.mubr.f32.mxu0 0.0
    %2781 = vmatmul.mubr.f32.gmra.mrb[0].mxu0 %v2691
    %v2782 = vpop.f32.mrb[0].mxu0
    %v2783 = vadd.f32 %v2465, %v2782
    %v2784 = vpop.f32.mrb[0].mxu0
    %2785 = vmatprep.mubr.f32.mxu0 0.0
    %2786 = vmatmul.mubr.f32.gmra.mrb[0].mxu0 %v2694
    %v2787 = vpop.f32.mrb[0].mxu0
    %v2788 = vadd.f32 %v2466, %v2787
    %v2789 = vpop.f32.mrb[0].mxu0
    %2790 = vmatprep.mubr.f32.mxu0 0.0
    %2791 = vmatmul.mubr.f32.gmra.mrb[0].mxu0 %v2697
    %v2792 = vpop.f32.mrb[0].mxu0
    %v2793 = vadd.f32 %v2467, %v2792
    %v2794 = vpop.f32.mrb[0].mxu0
    %2795 = vdwg.mxu0
    %v2797 = vsel %vm2468, %v1020, 0
    %v2800 = vsel %vm2468, %v1088, 0
    %v2803 = vsel %vm2468, %v1156, 0
    %v2806 = vsel %vm2468, %v1224, 0
    %v2809 = vsel %vm2468, %v1604, 0
    %v2812 = vsel %vm2468, %v1672, 0
    %v2815 = vsel %vm2468, %v1740, 0
    %v2818 = vsel %vm2468, %v1808, 0
    %2820 = vmatprep.subr.mxu0 0.0
    %2821 = vmatpush1.xpose.msra.mxu0 %v2809
    %2822 = vmatprep.subr.mxu0 0.0
    %2823 = vmatpush1.xpose.msra.mxu0 %v2812
    %2824 = vmatprep.subr.mxu0 0.0
    %2825 = vmatpush1.xpose.msra.mxu0 %v2815
    %2826 = vmatprep.subr.mxu0 0.0
    %2827 = vmatpush1.xpose.msra.mxu0 %v2818
    %2828 = vmatprep.subr.mxu0 0.0
    %2829 = vmatpush1.xpose.msra.mxu0 0.0
    %2830 = vmatprep.subr.mxu0 0.0
    %2831 = vmatpush1.xpose.msra.mxu0 0.0
    %2832 = vmatprep.subr.mxu0 0.0
    %2833 = vmatpush1.xpose.msra.mxu0 0.0
    %2834 = vmatprep.subr.mxu0 0.0
    %2835 = vmatpush1.xpose.msra.mxu0 0.0
    %2836 = vmatprep.subr.mxu0 0.0
    %2837 = vmatpush1.xpose.msra.mxu0 0.0
    %2838 = vmatprep.subr.mxu0 0.0
    %2839 = vmatpush1.xpose.msra.mxu0 0.0
    %2840 = vmatprep.subr.mxu0 0.0
    %2841 = vmatpush1.xpose.msra.mxu0 0.0
    %2842 = vmatprep.subr.mxu0 0.0
    %2843 = vmatpush1.xpose.msra.mxu0 0.0
    %2844 = vmatprep.subr.mxu0 0.0
    %2845 = vmatpush1.xpose.msra.mxu0 0.0
    %2846 = vmatprep.subr.mxu0 0.0
    %2847 = vmatpush1.xpose.msra.mxu0 0.0
    %2848 = vmatprep.subr.mxu0 0.0
    %2849 = vmatpush1.xpose.msra.mxu0 0.0
    %2850 = vmatprep.subr.mxu0 0.0
    %2851 = vmatpush1.xpose.msra.mxu0 0.0
    %2852 = vmatprep.subr.mxu0 0.0
    %2853 = vmatpush1.xpose.msra.mxu0 0.0
    %2854 = vmatprep.subr.mxu0 0.0
    %2855 = vmatpush1.xpose.msra.mxu0 0.0
    %2856 = vmatprep.subr.mxu0 0.0
    %2857 = vmatpush1.xpose.msra.mxu0 0.0
    %2858 = vmatprep.subr.mxu0 0.0
    %2859 = vmatpush1.xpose.msra.mxu0 0.0
    %2860 = vmatprep.subr.mxu0 0.0
    %2861 = vmatpush1.xpose.msra.mxu0 0.0
    %2862 = vmatprep.subr.mxu0 0.0
    %2863 = vmatpush1.xpose.msra.mxu0 0.0
    %2864 = vmatprep.subr.mxu0 0.0
    %2865 = vmatpush1.xpose.msra.mxu0 0.0
    %2866 = vmatprep.subr.mxu0 0.0
    %2867 = vmatpush1.xpose.msra.mxu0 0.0
    %2868 = vmatprep.subr.mxu0 0.0
    %2869 = vmatpush1.xpose.msra.mxu0 0.0
    %2870 = vmatprep.subr.mxu0 0.0
    %2871 = vmatpush1.xpose.msra.mxu0 0.0
    %2872 = vmatprep.subr.mxu0 0.0
    %2873 = vmatpush1.xpose.msra.mxu0 0.0
    %2874 = vmatprep.subr.mxu0 0.0
    %2875 = vmatpush1.xpose.msra.mxu0 0.0
    %2876 = vmatprep.subr.mxu0 0.0
    %2877 = vmatpush1.xpose.msra.mxu0 0.0
    %2878 = vmatprep.subr.mxu0 0.0
    %2879 = vmatpush1.xpose.msra.mxu0 0.0
    %2880 = vmatprep.subr.mxu0 0.0
    %2881 = vmatpush1.xpose.msra.mxu0 0.0
    %2882 = vmatprep.subr.mxu0 0.0
    %2883 = vmatpush1.xpose.msra.mxu0 0.0
    %2884 = vmatprep.mubr.f32.mxu0 0.0
    %2885 = vmatmul.mubr.f32.gmra.mrb[0].mxu0 %v2797
    %v2886 = vpop.f32.mrb[0].mxu0
    %v2887 = vadd.f32 %v2464, %v2886
    %v2888 = vpop.f32.mrb[0].mxu0
    %2889 = vmatprep.mubr.f32.mxu0 0.0
    %2890 = vmatmul.mubr.f32.gmra.mrb[0].mxu0 %v2800
    %v2891 = vpop.f32.mrb[0].mxu0
    %v2892 = vadd.f32 %v2465, %v2891
    %v2893 = vpop.f32.mrb[0].mxu0
    %2894 = vmatprep.mubr.f32.mxu0 0.0
    %2895 = vmatmul.mubr.f32.gmra.mrb[0].mxu0 %v2803
    %v2896 = vpop.f32.mrb[0].mxu0
    %v2897 = vadd.f32 %v2466, %v2896
    %v2898 = vpop.f32.mrb[0].mxu0
    %2899 = vmatprep.mubr.f32.mxu0 0.0
    %2900 = vmatmul.mubr.f32.gmra.mrb[0].mxu0 %v2806
    %v2901 = vpop.f32.mrb[0].mxu0
    %v2902 = vadd.f32 %v2467, %v2901
    %v2903 = vpop.f32.mrb[0].mxu0
    %2904 = vdwg.mxu0
    %v2905 = vsel %vm75, %v2560, -inf
    %2906 = vmax.xlane.f32.xlu0 %v2905
    %v2907 = vpop.xlane.xlu0 %2906
    %v2908 = vsel %vm75, %v2565, -inf
    %2909 = vmax.xlane.f32.xlu0 %v2908
    %v2910 = vpop.xlane.xlu0 %2909
    %v2911 = vsel %vm75, %v2570, -inf
    %2912 = vmax.xlane.f32.xlu0 %v2911
    %v2913 = vpop.xlane.xlu0 %2912
    %v2914 = vsel %vm75, %v2575, -inf
    %2915 = vmax.xlane.f32.xlu0 %v2914
    %v2916 = vpop.xlane.xlu0 %2915
    %v2917 = vsel %vm75, %v2669, -inf
    %2918 = vmax.xlane.f32.xlu0 %v2917
    %v2919 = vpop.xlane.xlu0 %2918
    %v2920 = vsel %vm75, %v2674, -inf
    %2921 = vmax.xlane.f32.xlu0 %v2920
    %v2922 = vpop.xlane.xlu0 %2921
    %v2923 = vsel %vm75, %v2679, -inf
    %2924 = vmax.xlane.f32.xlu0 %v2923
    %v2925 = vpop.xlane.xlu0 %2924
    %v2926 = vsel %vm75, %v2684, -inf
    %2927 = vmax.xlane.f32.xlu0 %v2926
    %v2928 = vpop.xlane.xlu0 %2927
    %v2929 = vsel %vm75, %v2778, -inf
    %2930 = vmax.xlane.f32.xlu0 %v2929
    %v2931 = vpop.xlane.xlu0 %2930
    %v2932 = vsel %vm75, %v2783, -inf
    %2933 = vmax.xlane.f32.xlu0 %v2932
    %v2934 = vpop.xlane.xlu0 %2933
    %v2935 = vsel %vm75, %v2788, -inf
    %2936 = vmax.xlane.f32.xlu0 %v2935
    %v2937 = vpop.xlane.xlu0 %2936
    %v2938 = vsel %vm75, %v2793, -inf
    %2939 = vmax.xlane.f32.xlu0 %v2938
    %v2940 = vpop.xlane.xlu0 %2939
    %v2941 = vsel %vm75, %v2887, -inf
    %2942 = vmax.xlane.f32.xlu0 %v2941
    %v2943 = vpop.xlane.xlu0 %2942
    %v2944 = vsel %vm75, %v2892, -inf
    %2945 = vmax.xlane.f32.xlu0 %v2944
    %v2946 = vpop.xlane.xlu0 %2945
    %v2947 = vsel %vm75, %v2897, -inf
    %2948 = vmax.xlane.f32.xlu0 %v2947
    %v2949 = vpop.xlane.xlu0 %2948
    %v2950 = vsel %vm75, %v2902, -inf
    %2951 = vmax.xlane.f32.xlu0 %v2950
    %v2952 = vpop.xlane.xlu0 %2951
    %v2953 = vsub.f32 %v2560, %v2907
    %v2954 = vsub.f32 %v2565, %v2910
    %v2955 = vsub.f32 %v2570, %v2913
    %v2956 = vsub.f32 %v2575, %v2916
    %v2957 = vsub.f32 %v2669, %v2919
    %v2958 = vsub.f32 %v2674, %v2922
    %v2959 = vsub.f32 %v2679, %v2925
    %v2960 = vsub.f32 %v2684, %v2928
    %v2961 = vsub.f32 %v2778, %v2931
    %v2962 = vsub.f32 %v2783, %v2934
    %v2963 = vsub.f32 %v2788, %v2937
    %v2964 = vsub.f32 %v2793, %v2940
    %v2965 = vsub.f32 %v2887, %v2943
    %v2966 = vsub.f32 %v2892, %v2946
    %v2967 = vsub.f32 %v2897, %v2949
    %v2968 = vsub.f32 %v2902, %v2952
    %v2969 = vmul.f32 %v2953, 1.442695
    %v2970 = vpow.pop %v2969
    %v2971 = vmul.f32 %v2954, 1.442695
    %v2972 = vpow.pop %v2971
    %v2973 = vmul.f32 %v2955, 1.442695
    %v2974 = vpow.pop %v2973
    %v2975 = vmul.f32 %v2956, 1.442695
    %v2976 = vpow.pop %v2975
    %v2977 = vmul.f32 %v2957, 1.442695
    %v2978 = vpow.pop %v2977
    %v2979 = vmul.f32 %v2958, 1.442695
    %v2980 = vpow.pop %v2979
    %v2981 = vmul.f32 %v2959, 1.442695
    %v2982 = vpow.pop %v2981
    %v2983 = vmul.f32 %v2960, 1.442695
    %v2984 = vpow.pop %v2983
    %v2985 = vmul.f32 %v2961, 1.442695
    %v2986 = vpow.pop %v2985
    %v2987 = vmul.f32 %v2962, 1.442695
    %v2988 = vpow.pop %v2987
    %v2989 = vmul.f32 %v2963, 1.442695
    %v2990 = vpow.pop %v2989
    %v2991 = vmul.f32 %v2964, 1.442695
    %v2992 = vpow.pop %v2991
    %v2993 = vmul.f32 %v2965, 1.442695
    %v2994 = vpow.pop %v2993
    %v2995 = vmul.f32 %v2966, 1.442695
    %v2996 = vpow.pop %v2995
    %v2997 = vmul.f32 %v2967, 1.442695
    %v2998 = vpow.pop %v2997
    %v2999 = vmul.f32 %v2968, 1.442695
    %v3000 = vpow.pop %v2999
    %v3001 = vsel %vm75, %v2970, 0.0
    %3002 = vadd.xlane.f32.xlu0 %v3001
    %v3003 = vpop.xlane.xlu0 %3002
    %v3004 = vsel %vm75, %v2972, 0.0
    %3005 = vadd.xlane.f32.xlu0 %v3004
    %v3006 = vpop.xlane.xlu0 %3005
    %v3007 = vsel %vm75, %v2974, 0.0
    %3008 = vadd.xlane.f32.xlu0 %v3007
    %v3009 = vpop.xlane.xlu0 %3008
    %v3010 = vsel %vm75, %v2976, 0.0
    %3011 = vadd.xlane.f32.xlu0 %v3010
    %v3012 = vpop.xlane.xlu0 %3011
    %v3013 = vsel %vm75, %v2978, 0.0
    %3014 = vadd.xlane.f32.xlu0 %v3013
    %v3015 = vpop.xlane.xlu0 %3014
    %v3016 = vsel %vm75, %v2980, 0.0
    %3017 = vadd.xlane.f32.xlu0 %v3016
    %v3018 = vpop.xlane.xlu0 %3017
    %v3019 = vsel %vm75, %v2982, 0.0
    %3020 = vadd.xlane.f32.xlu0 %v3019
    %v3021 = vpop.xlane.xlu0 %3020
    %v3022 = vsel %vm75, %v2984, 0.0
    %3023 = vadd.xlane.f32.xlu0 %v3022
    %v3024 = vpop.xlane.xlu0 %3023
    %v3025 = vsel %vm75, %v2986, 0.0
    %3026 = vadd.xlane.f32.xlu0 %v3025
    %v3027 = vpop.xlane.xlu0 %3026
    %v3028 = vsel %vm75, %v2988, 0.0
    %3029 = vadd.xlane.f32.xlu0 %v3028
    %v3030 = vpop.xlane.xlu0 %3029
    %v3031 = vsel %vm75, %v2990, 0.0
    %3032 = vadd.xlane.f32.xlu0 %v3031
    %v3033 = vpop.xlane.xlu0 %3032
    %v3034 = vsel %vm75, %v2992, 0.0
    %3035 = vadd.xlane.f32.xlu0 %v3034
    %v3036 = vpop.xlane.xlu0 %3035
    %v3037 = vsel %vm75, %v2994, 0.0
    %3038 = vadd.xlane.f32.xlu0 %v3037
    %v3039 = vpop.xlane.xlu0 %3038
    %v3040 = vsel %vm75, %v2996, 0.0
    %3041 = vadd.xlane.f32.xlu0 %v3040
    %v3042 = vpop.xlane.xlu0 %3041
    %v3043 = vsel %vm75, %v2998, 0.0
    %3044 = vadd.xlane.f32.xlu0 %v3043
    %v3045 = vpop.xlane.xlu0 %3044
    %v3046 = vsel %vm75, %v3000, 0.0
    %3047 = vadd.xlane.f32.xlu0 %v3046
    %v3048 = vpop.xlane.xlu0 %3047
    %v3049 = vrcp.pop %v3003
    %v3050 = vrcp.pop %v3006
    %v3051 = vrcp.pop %v3009
    %v3052 = vrcp.pop %v3012
    %v3053 = vrcp.pop %v3015
    %v3054 = vrcp.pop %v3018
    %v3055 = vrcp.pop %v3021
    %v3056 = vrcp.pop %v3024
    %v3057 = vrcp.pop %v3027
    %v3058 = vrcp.pop %v3030
    %v3059 = vrcp.pop %v3033
    %v3060 = vrcp.pop %v3036
    %v3061 = vrcp.pop %v3039
    %v3062 = vrcp.pop %v3042
    %v3063 = vrcp.pop %v3045
    %v3064 = vrcp.pop %v3048
    %v3065 = vmul.f32 %v2970, %v3049
    %v3066 = vmul.f32 %v2972, %v3050
    %v3067 = vmul.f32 %v2974, %v3051
    %v3068 = vmul.f32 %v2976, %v3052
    %v3069 = vmul.f32 %v2978, %v3053
    %v3070 = vmul.f32 %v2980, %v3054
    %v3071 = vmul.f32 %v2982, %v3055
    %v3072 = vmul.f32 %v2984, %v3056
    %v3073 = vmul.f32 %v2986, %v3057
    %v3074 = vmul.f32 %v2988, %v3058
    %v3075 = vmul.f32 %v2990, %v3059
    %v3076 = vmul.f32 %v2992, %v3060
    %v3077 = vmul.f32 %v2994, %v3061
    %v3078 = vmul.f32 %v2996, %v3062
    %v3079 = vmul.f32 %v2998, %v3063
    %v3080 = vmul.f32 %v3000, %v3064
    %v3082 = vsel %vm75, %v3065, 0
    %v3085 = vsel %vm75, %v3066, 0
    %v3088 = vsel %vm75, %v3067, 0
    %v3091 = vsel %vm75, %v3068, 0
    %3093 = vmatprep.subr.mxu0 0.0
    %3094 = vmatpush1.msra.mxu0 %v2185
    %3095 = vmatprep.subr.mxu0 0.0
    %3096 = vmatpush1.msra.mxu0 %v2253
    %3097 = vmatprep.subr.mxu0 0.0
    %3098 = vmatpush1.msra.mxu0 %v2321
    %3099 = vmatprep.subr.mxu0 0.0
    %3100 = vmatpush1.msra.mxu0 %v2389
    %3101 = vmatprep.subr.mxu0 0.0
    %3102 = vmatpush1.msra.mxu0 0.0
    %3103 = vmatprep.subr.mxu0 0.0
    %3104 = vmatpush1.msra.mxu0 0.0
    %3105 = vmatprep.subr.mxu0 0.0
    %3106 = vmatpush1.msra.mxu0 0.0
    %3107 = vmatprep.subr.mxu0 0.0
    %3108 = vmatpush1.msra.mxu0 0.0
    %3109 = vmatprep.subr.mxu0 0.0
    %3110 = vmatpush1.msra.mxu0 0.0
    %3111 = vmatprep.subr.mxu0 0.0
    %3112 = vmatpush1.msra.mxu0 0.0
    %3113 = vmatprep.subr.mxu0 0.0
    %3114 = vmatpush1.msra.mxu0 0.0
    %3115 = vmatprep.subr.mxu0 0.0
    %3116 = vmatpush1.msra.mxu0 0.0
    %3117 = vmatprep.subr.mxu0 0.0
    %3118 = vmatpush1.msra.mxu0 0.0
    %3119 = vmatprep.subr.mxu0 0.0
    %3120 = vmatpush1.msra.mxu0 0.0
    %3121 = vmatprep.subr.mxu0 0.0
    %3122 = vmatpush1.msra.mxu0 0.0
    %3123 = vmatprep.subr.mxu0 0.0
    %3124 = vmatpush1.msra.mxu0 0.0
    %3125 = vmatprep.subr.mxu0 0.0
    %3126 = vmatpush1.msra.mxu0 0.0
    %3127 = vmatprep.subr.mxu0 0.0
    %3128 = vmatpush1.msra.mxu0 0.0
    %3129 = vmatprep.subr.mxu0 0.0
    %3130 = vmatpush1.msra.mxu0 0.0
    %3131 = vmatprep.subr.mxu0 0.0
    %3132 = vmatpush1.msra.mxu0 0.0
    %3133 = vmatprep.subr.mxu0 0.0
    %3134 = vmatpush1.msra.mxu0 0.0
    %3135 = vmatprep.subr.mxu0 0.0
    %3136 = vmatpush1.msra.mxu0 0.0
    %3137 = vmatprep.subr.mxu0 0.0
    %3138 = vmatpush1.msra.mxu0 0.0
    %3139 = vmatprep.subr.mxu0 0.0
    %3140 = vmatpush1.msra.mxu0 0.0
    %3141 = vmatprep.subr.mxu0 0.0
    %3142 = vmatpush1.msra.mxu0 0.0
    %3143 = vmatprep.subr.mxu0 0.0
    %3144 = vmatpush1.msra.mxu0 0.0
    %3145 = vmatprep.subr.mxu0 0.0
    %3146 = vmatpush1.msra.mxu0 0.0
    %3147 = vmatprep.subr.mxu0 0.0
    %3148 = vmatpush1.msra.mxu0 0.0
    %3149 = vmatprep.subr.mxu0 0.0
    %3150 = vmatpush1.msra.mxu0 0.0
    %3151 = vmatprep.subr.mxu0 0.0
    %3152 = vmatpush1.msra.mxu0 0.0
    %3153 = vmatprep.subr.mxu0 0.0
    %3154 = vmatpush1.msra.mxu0 0.0
    %3155 = vmatprep.subr.mxu0 0.0
    %3156 = vmatpush1.msra.mxu0 0.0
    %3157 = vmatprep.mubr.f32.mxu0 0.0
    %3158 = vmatmul.mubr.f32.gmra.mrb[0].mxu0 %v3082
    %v3159 = vpop.f32.mrb[0].mxu0
    %v3160 = vadd.f32 0.0, %v3159
    %v3161 = vpop.f32.mrb[0].mxu0
    %3162 = vmatprep.mubr.f32.mxu0 0.0
    %3163 = vmatmul.mubr.f32.gmra.mrb[0].mxu0 %v3085
    %v3164 = vpop.f32.mrb[0].mxu0
    %v3165 = vadd.f32 0.0, %v3164
    %v3166 = vpop.f32.mrb[0].mxu0
    %3167 = vmatprep.mubr.f32.mxu0 0.0
    %3168 = vmatmul.mubr.f32.gmra.mrb[0].mxu0 %v3088
    %v3169 = vpop.f32.mrb[0].mxu0
    %v3170 = vadd.f32 0.0, %v3169
    %v3171 = vpop.f32.mrb[0].mxu0
    %3172 = vmatprep.mubr.f32.mxu0 0.0
    %3173 = vmatmul.mubr.f32.gmra.mrb[0].mxu0 %v3091
    %v3174 = vpop.f32.mrb[0].mxu0
    %v3175 = vadd.f32 0.0, %v3174
    %v3176 = vpop.f32.mrb[0].mxu0
    %3177 = vdwg.mxu0
    %v3179 = vsel %vm75, %v3069, 0
    %v3182 = vsel %vm75, %v3070, 0
    %v3185 = vsel %vm75, %v3071, 0
    %v3188 = vsel %vm75, %v3072, 0
    %3190 = vmatprep.subr.mxu0 0.0
    %3191 = vmatpush1.msra.mxu0 %v2186
    %3192 = vmatprep.subr.mxu0 0.0
    %3193 = vmatpush1.msra.mxu0 %v2254
    %3194 = vmatprep.subr.mxu0 0.0
    %3195 = vmatpush1.msra.mxu0 %v2322
    %3196 = vmatprep.subr.mxu0 0.0
    %3197 = vmatpush1.msra.mxu0 %v2390
    %3198 = vmatprep.subr.mxu0 0.0
    %3199 = vmatpush1.msra.mxu0 0.0
    %3200 = vmatprep.subr.mxu0 0.0
    %3201 = vmatpush1.msra.mxu0 0.0
    %3202 = vmatprep.subr.mxu0 0.0
    %3203 = vmatpush1.msra.mxu0 0.0
    %3204 = vmatprep.subr.mxu0 0.0
    %3205 = vmatpush1.msra.mxu0 0.0
    %3206 = vmatprep.subr.mxu0 0.0
    %3207 = vmatpush1.msra.mxu0 0.0
    %3208 = vmatprep.subr.mxu0 0.0
    %3209 = vmatpush1.msra.mxu0 0.0
    %3210 = vmatprep.subr.mxu0 0.0
    %3211 = vmatpush1.msra.mxu0 0.0
    %3212 = vmatprep.subr.mxu0 0.0
    %3213 = vmatpush1.msra.mxu0 0.0
    %3214 = vmatprep.subr.mxu0 0.0
    %3215 = vmatpush1.msra.mxu0 0.0
    %3216 = vmatprep.subr.mxu0 0.0
    %3217 = vmatpush1.msra.mxu0 0.0
    %3218 = vmatprep.subr.mxu0 0.0
    %3219 = vmatpush1.msra.mxu0 0.0
    %3220 = vmatprep.subr.mxu0 0.0
    %3221 = vmatpush1.msra.mxu0 0.0
    %3222 = vmatprep.subr.mxu0 0.0
    %3223 = vmatpush1.msra.mxu0 0.0
    %3224 = vmatprep.subr.mxu0 0.0
    %3225 = vmatpush1.msra.mxu0 0.0
    %3226 = vmatprep.subr.mxu0 0.0
    %3227 = vmatpush1.msra.mxu0 0.0
    %3228 = vmatprep.subr.mxu0 0.0
    %3229 = vmatpush1.msra.mxu0 0.0
    %3230 = vmatprep.subr.mxu0 0.0
    %3231 = vmatpush1.msra.mxu0 0.0
    %3232 = vmatprep.subr.mxu0 0.0
    %3233 = vmatpush1.msra.mxu0 0.0
    %3234 = vmatprep.subr.mxu0 0.0
    %3235 = vmatpush1.msra.mxu0 0.0
    %3236 = vmatprep.subr.mxu0 0.0
    %3237 = vmatpush1.msra.mxu0 0.0
    %3238 = vmatprep.subr.mxu0 0.0
    %3239 = vmatpush1.msra.mxu0 0.0
    %3240 = vmatprep.subr.mxu0 0.0
    %3241 = vmatpush1.msra.mxu0 0.0
    %3242 = vmatprep.subr.mxu0 0.0
    %3243 = vmatpush1.msra.mxu0 0.0
    %3244 = vmatprep.subr.mxu0 0.0
    %3245 = vmatpush1.msra.mxu0 0.0
    %3246 = vmatprep.subr.mxu0 0.0
    %3247 = vmatpush1.msra.mxu0 0.0
    %3248 = vmatprep.subr.mxu0 0.0
    %3249 = vmatpush1.msra.mxu0 0.0
    %3250 = vmatprep.subr.mxu0 0.0
    %3251 = vmatpush1.msra.mxu0 0.0
    %3252 = vmatprep.subr.mxu0 0.0
    %3253 = vmatpush1.msra.mxu0 0.0
    %3254 = vmatprep.mubr.f32.mxu0 0.0
    %3255 = vmatmul.mubr.f32.gmra.mrb[0].mxu0 %v3179
    %v3256 = vpop.f32.mrb[0].mxu0
    %v3257 = vadd.f32 0.0, %v3256
    %v3258 = vpop.f32.mrb[0].mxu0
    %3259 = vmatprep.mubr.f32.mxu0 0.0
    %3260 = vmatmul.mubr.f32.gmra.mrb[0].mxu0 %v3182
    %v3261 = vpop.f32.mrb[0].mxu0
    %v3262 = vadd.f32 0.0, %v3261
    %v3263 = vpop.f32.mrb[0].mxu0
    %3264 = vmatprep.mubr.f32.mxu0 0.0
    %3265 = vmatmul.mubr.f32.gmra.mrb[0].mxu0 %v3185
    %v3266 = vpop.f32.mrb[0].mxu0
    %v3267 = vadd.f32 0.0, %v3266
    %v3268 = vpop.f32.mrb[0].mxu0
    %3269 = vmatprep.mubr.f32.mxu0 0.0
    %3270 = vmatmul.mubr.f32.gmra.mrb[0].mxu0 %v3188
    %v3271 = vpop.f32.mrb[0].mxu0
    %v3272 = vadd.f32 0.0, %v3271
    %v3273 = vpop.f32.mrb[0].mxu0
    %3274 = vdwg.mxu0
    %v3276 = vsel %vm75, %v3073, 0
    %v3279 = vsel %vm75, %v3074, 0
    %v3282 = vsel %vm75, %v3075, 0
    %v3285 = vsel %vm75, %v3076, 0
    %3287 = vmatprep.subr.mxu0 0.0
    %3288 = vmatpush1.msra.mxu0 %v2187
    %3289 = vmatprep.subr.mxu0 0.0
    %3290 = vmatpush1.msra.mxu0 %v2255
    %3291 = vmatprep.subr.mxu0 0.0
    %3292 = vmatpush1.msra.mxu0 %v2323
    %3293 = vmatprep.subr.mxu0 0.0
    %3294 = vmatpush1.msra.mxu0 %v2391
    %3295 = vmatprep.subr.mxu0 0.0
    %3296 = vmatpush1.msra.mxu0 0.0
    %3297 = vmatprep.subr.mxu0 0.0
    %3298 = vmatpush1.msra.mxu0 0.0
    %3299 = vmatprep.subr.mxu0 0.0
    %3300 = vmatpush1.msra.mxu0 0.0
    %3301 = vmatprep.subr.mxu0 0.0
    %3302 = vmatpush1.msra.mxu0 0.0
    %3303 = vmatprep.subr.mxu0 0.0
    %3304 = vmatpush1.msra.mxu0 0.0
    %3305 = vmatprep.subr.mxu0 0.0
    %3306 = vmatpush1.msra.mxu0 0.0
    %3307 = vmatprep.subr.mxu0 0.0
    %3308 = vmatpush1.msra.mxu0 0.0
    %3309 = vmatprep.subr.mxu0 0.0
    %3310 = vmatpush1.msra.mxu0 0.0
    %3311 = vmatprep.subr.mxu0 0.0
    %3312 = vmatpush1.msra.mxu0 0.0
    %3313 = vmatprep.subr.mxu0 0.0
    %3314 = vmatpush1.msra.mxu0 0.0
    %3315 = vmatprep.subr.mxu0 0.0
    %3316 = vmatpush1.msra.mxu0 0.0
    %3317 = vmatprep.subr.mxu0 0.0
    %3318 = vmatpush1.msra.mxu0 0.0
    %3319 = vmatprep.subr.mxu0 0.0
    %3320 = vmatpush1.msra.mxu0 0.0
    %3321 = vmatprep.subr.mxu0 0.0
    %3322 = vmatpush1.msra.mxu0 0.0
    %3323 = vmatprep.subr.mxu0 0.0
    %3324 = vmatpush1.msra.mxu0 0.0
    %3325 = vmatprep.subr.mxu0 0.0
    %3326 = vmatpush1.msra.mxu0 0.0
    %3327 = vmatprep.subr.mxu0 0.0
    %3328 = vmatpush1.msra.mxu0 0.0
    %3329 = vmatprep.subr.mxu0 0.0
    %3330 = vmatpush1.msra.mxu0 0.0
    %3331 = vmatprep.subr.mxu0 0.0
    %3332 = vmatpush1.msra.mxu0 0.0
    %3333 = vmatprep.subr.mxu0 0.0
    %3334 = vmatpush1.msra.mxu0 0.0
    %3335 = vmatprep.subr.mxu0 0.0
    %3336 = vmatpush1.msra.mxu0 0.0
    %3337 = vmatprep.subr.mxu0 0.0
    %3338 = vmatpush1.msra.mxu0 0.0
    %3339 = vmatprep.subr.mxu0 0.0
    %3340 = vmatpush1.msra.mxu0 0.0
    %3341 = vmatprep.subr.mxu0 0.0
    %3342 = vmatpush1.msra.mxu0 0.0
    %3343 = vmatprep.subr.mxu0 0.0
    %3344 = vmatpush1.msra.mxu0 0.0
    %3345 = vmatprep.subr.mxu0 0.0
    %3346 = vmatpush1.msra.mxu0 0.0
    %3347 = vmatprep.subr.mxu0 0.0
    %3348 = vmatpush1.msra.mxu0 0.0
    %3349 = vmatprep.subr.mxu0 0.0
    %3350 = vmatpush1.msra.mxu0 0.0
    %3351 = vmatprep.mubr.f32.mxu0 0.0
    %3352 = vmatmul.mubr.f32.gmra.mrb[0].mxu0 %v3276
    %v3353 = vpop.f32.mrb[0].mxu0
    %v3354 = vadd.f32 0.0, %v3353
    %v3355 = vpop.f32.mrb[0].mxu0
    %3356 = vmatprep.mubr.f32.mxu0 0.0
    %3357 = vmatmul.mubr.f32.gmra.mrb[0].mxu0 %v3279
    %v3358 = vpop.f32.mrb[0].mxu0
    %v3359 = vadd.f32 0.0, %v3358
    %v3360 = vpop.f32.mrb[0].mxu0
    %3361 = vmatprep.mubr.f32.mxu0 0.0
    %3362 = vmatmul.mubr.f32.gmra.mrb[0].mxu0 %v3282
    %v3363 = vpop.f32.mrb[0].mxu0
    %v3364 = vadd.f32 0.0, %v3363
    %v3365 = vpop.f32.mrb[0].mxu0
    %3366 = vmatprep.mubr.f32.mxu0 0.0
    %3367 = vmatmul.mubr.f32.gmra.mrb[0].mxu0 %v3285
    %v3368 = vpop.f32.mrb[0].mxu0
    %v3369 = vadd.f32 0.0, %v3368
    %v3370 = vpop.f32.mrb[0].mxu0
    %3371 = vdwg.mxu0
    %v3373 = vsel %vm75, %v3077, 0
    %v3376 = vsel %vm75, %v3078, 0
    %v3379 = vsel %vm75, %v3079, 0
    %v3382 = vsel %vm75, %v3080, 0
    %3384 = vmatprep.subr.mxu0 0.0
    %3385 = vmatpush1.msra.mxu0 %v2188
    %3386 = vmatprep.subr.mxu0 0.0
    %3387 = vmatpush1.msra.mxu0 %v2256
    %3388 = vmatprep.subr.mxu0 0.0
    %3389 = vmatpush1.msra.mxu0 %v2324
    %3390 = vmatprep.subr.mxu0 0.0
    %3391 = vmatpush1.msra.mxu0 %v2392
    %3392 = vmatprep.subr.mxu0 0.0
    %3393 = vmatpush1.msra.mxu0 0.0
    %3394 = vmatprep.subr.mxu0 0.0
    %3395 = vmatpush1.msra.mxu0 0.0
    %3396 = vmatprep.subr.mxu0 0.0
    %3397 = vmatpush1.msra.mxu0 0.0
    %3398 = vmatprep.subr.mxu0 0.0
    %3399 = vmatpush1.msra.mxu0 0.0
    %3400 = vmatprep.subr.mxu0 0.0
    %3401 = vmatpush1.msra.mxu0 0.0
    %3402 = vmatprep.subr.mxu0 0.0
    %3403 = vmatpush1.msra.mxu0 0.0
    %3404 = vmatprep.subr.mxu0 0.0
    %3405 = vmatpush1.msra.mxu0 0.0
    %3406 = vmatprep.subr.mxu0 0.0
    %3407 = vmatpush1.msra.mxu0 0.0
    %3408 = vmatprep.subr.mxu0 0.0
    %3409 = vmatpush1.msra.mxu0 0.0
    %3410 = vmatprep.subr.mxu0 0.0
    %3411 = vmatpush1.msra.mxu0 0.0
    %3412 = vmatprep.subr.mxu0 0.0
    %3413 = vmatpush1.msra.mxu0 0.0
    %3414 = vmatprep.subr.mxu0 0.0
    %3415 = vmatpush1.msra.mxu0 0.0
    %3416 = vmatprep.subr.mxu0 0.0
    %3417 = vmatpush1.msra.mxu0 0.0
    %3418 = vmatprep.subr.mxu0 0.0
    %3419 = vmatpush1.msra.mxu0 0.0
    %3420 = vmatprep.subr.mxu0 0.0
    %3421 = vmatpush1.msra.mxu0 0.0
    %3422 = vmatprep.subr.mxu0 0.0
    %3423 = vmatpush1.msra.mxu0 0.0
    %3424 = vmatprep.subr.mxu0 0.0
    %3425 = vmatpush1.msra.mxu0 0.0
    %3426 = vmatprep.subr.mxu0 0.0
    %3427 = vmatpush1.msra.mxu0 0.0
    %3428 = vmatprep.subr.mxu0 0.0
    %3429 = vmatpush1.msra.mxu0 0.0
    %3430 = vmatprep.subr.mxu0 0.0
    %3431 = vmatpush1.msra.mxu0 0.0
    %3432 = vmatprep.subr.mxu0 0.0
    %3433 = vmatpush1.msra.mxu0 0.0
    %3434 = vmatprep.subr.mxu0 0.0
    %3435 = vmatpush1.msra.mxu0 0.0
    %3436 = vmatprep.subr.mxu0 0.0
    %3437 = vmatpush1.msra.mxu0 0.0
    %3438 = vmatprep.subr.mxu0 0.0
    %3439 = vmatpush1.msra.mxu0 0.0
    %3440 = vmatprep.subr.mxu0 0.0
    %3441 = vmatpush1.msra.mxu0 0.0
    %3442 = vmatprep.subr.mxu0 0.0
    %3443 = vmatpush1.msra.mxu0 0.0
    %3444 = vmatprep.subr.mxu0 0.0
    %3445 = vmatpush1.msra.mxu0 0.0
    %3446 = vmatprep.subr.mxu0 0.0
    %3447 = vmatpush1.msra.mxu0 0.0
    %3448 = vmatprep.mubr.f32.mxu0 0.0
    %3449 = vmatmul.mubr.f32.gmra.mrb[0].mxu0 %v3373
    %v3450 = vpop.f32.mrb[0].mxu0
    %v3451 = vadd.f32 0.0, %v3450
    %v3452 = vpop.f32.mrb[0].mxu0
    %3453 = vmatprep.mubr.f32.mxu0 0.0
    %3454 = vmatmul.mubr.f32.gmra.mrb[0].mxu0 %v3376
    %v3455 = vpop.f32.mrb[0].mxu0
    %v3456 = vadd.f32 0.0, %v3455
    %v3457 = vpop.f32.mrb[0].mxu0
    %3458 = vmatprep.mubr.f32.mxu0 0.0
    %3459 = vmatmul.mubr.f32.gmra.mrb[0].mxu0 %v3379
    %v3460 = vpop.f32.mrb[0].mxu0
    %v3461 = vadd.f32 0.0, %v3460
    %v3462 = vpop.f32.mrb[0].mxu0
    %3463 = vmatprep.mubr.f32.mxu0 0.0
    %3464 = vmatmul.mubr.f32.gmra.mrb[0].mxu0 %v3382
    %v3465 = vpop.f32.mrb[0].mxu0
    %v3466 = vadd.f32 0.0, %v3465
    %v3467 = vpop.f32.mrb[0].mxu0
    %3468 = vdwg.mxu0
    %s3469 = scalar_lea.vmem [#allocation2], 160
    %v3470 = vld [vmem:[%s3469] sm:$0xff]
    %v3471 = vld [vmem:[%s3469 + $0x8] sm:$0xff]
    %v3472 = vld [vmem:[%s3469 + $0x10] sm:$0xff]
    %v3473 = vld [vmem:[%s3469 + $0x18] sm:$0xff]
    %v3474 = vld [vmem:[%s12 + $0x3] sm:$0x1]
    %v3476 = vsel %vm2468, %v3160, 0
    %v3479 = vsel %vm2468, %v3165, 0
    %v3482 = vsel %vm2468, %v3170, 0
    %v3485 = vsel %vm2468, %v3175, 0
    %3487 = vmatprep.subr.mxu0 0.0
    %3488 = vmatpush1.msra.mxu0 %v3470
    %3489 = vmatprep.subr.mxu0 0.0
    %3490 = vmatpush1.msra.mxu0 0.0
    %3491 = vmatprep.subr.mxu0 0.0
    %3492 = vmatpush1.msra.mxu0 0.0
    %3493 = vmatprep.subr.mxu0 0.0
    %3494 = vmatpush1.msra.mxu0 0.0
    %3495 = vmatprep.subr.mxu0 0.0
    %3496 = vmatpush1.msra.mxu0 0.0
    %3497 = vmatprep.subr.mxu0 0.0
    %3498 = vmatpush1.msra.mxu0 0.0
    %3499 = vmatprep.subr.mxu0 0.0
    %3500 = vmatpush1.msra.mxu0 0.0
    %3501 = vmatprep.subr.mxu0 0.0
    %3502 = vmatpush1.msra.mxu0 0.0
    %3503 = vmatprep.subr.mxu0 0.0
    %3504 = vmatpush1.msra.mxu0 0.0
    %3505 = vmatprep.subr.mxu0 0.0
    %3506 = vmatpush1.msra.mxu0 0.0
    %3507 = vmatprep.subr.mxu0 0.0
    %3508 = vmatpush1.msra.mxu0 0.0
    %3509 = vmatprep.subr.mxu0 0.0
    %3510 = vmatpush1.msra.mxu0 0.0
    %3511 = vmatprep.subr.mxu0 0.0
    %3512 = vmatpush1.msra.mxu0 0.0
    %3513 = vmatprep.subr.mxu0 0.0
    %3514 = vmatpush1.msra.mxu0 0.0
    %3515 = vmatprep.subr.mxu0 0.0
    %3516 = vmatpush1.msra.mxu0 0.0
    %3517 = vmatprep.subr.mxu0 0.0
    %3518 = vmatpush1.msra.mxu0 0.0
    %3519 = vmatprep.subr.mxu0 0.0
    %3520 = vmatpush1.msra.mxu0 0.0
    %3521 = vmatprep.subr.mxu0 0.0
    %3522 = vmatpush1.msra.mxu0 0.0
    %3523 = vmatprep.subr.mxu0 0.0
    %3524 = vmatpush1.msra.mxu0 0.0
    %3525 = vmatprep.subr.mxu0 0.0
    %3526 = vmatpush1.msra.mxu0 0.0
    %3527 = vmatprep.subr.mxu0 0.0
    %3528 = vmatpush1.msra.mxu0 0.0
    %3529 = vmatprep.subr.mxu0 0.0
    %3530 = vmatpush1.msra.mxu0 0.0
    %3531 = vmatprep.subr.mxu0 0.0
    %3532 = vmatpush1.msra.mxu0 0.0
    %3533 = vmatprep.subr.mxu0 0.0
    %3534 = vmatpush1.msra.mxu0 0.0
    %3535 = vmatprep.subr.mxu0 0.0
    %3536 = vmatpush1.msra.mxu0 0.0
    %3537 = vmatprep.subr.mxu0 0.0
    %3538 = vmatpush1.msra.mxu0 0.0
    %3539 = vmatprep.subr.mxu0 0.0
    %3540 = vmatpush1.msra.mxu0 0.0
    %3541 = vmatprep.subr.mxu0 0.0
    %3542 = vmatpush1.msra.mxu0 0.0
    %3543 = vmatprep.subr.mxu0 0.0
    %3544 = vmatpush1.msra.mxu0 0.0
    %3545 = vmatprep.subr.mxu0 0.0
    %3546 = vmatpush1.msra.mxu0 0.0
    %3547 = vmatprep.subr.mxu0 0.0
    %3548 = vmatpush1.msra.mxu0 0.0
    %3549 = vmatprep.subr.mxu0 0.0
    %3550 = vmatpush1.msra.mxu0 0.0
    %3551 = vmatprep.mubr.f32.mxu0 0.0
    %3552 = vmatmul.mubr.f32.gmra.mrb[0].mxu0 %v3476
    %v3553 = vpop.f32.mrb[0].mxu0
    %v3554 = vadd.f32 0.0, %v3553
    %v3555 = vpop.f32.mrb[0].mxu0
    %3556 = vmatprep.mubr.f32.mxu0 0.0
    %3557 = vmatmul.mubr.f32.gmra.mrb[0].mxu0 %v3479
    %v3558 = vpop.f32.mrb[0].mxu0
    %v3559 = vadd.f32 0.0, %v3558
    %v3560 = vpop.f32.mrb[0].mxu0
    %3561 = vmatprep.mubr.f32.mxu0 0.0
    %3562 = vmatmul.mubr.f32.gmra.mrb[0].mxu0 %v3482
    %v3563 = vpop.f32.mrb[0].mxu0
    %v3564 = vadd.f32 0.0, %v3563
    %v3565 = vpop.f32.mrb[0].mxu0
    %3566 = vmatprep.mubr.f32.mxu0 0.0
    %3567 = vmatmul.mubr.f32.gmra.mrb[0].mxu0 %v3485
    %v3568 = vpop.f32.mrb[0].mxu0
    %v3569 = vadd.f32 0.0, %v3568
    %v3570 = vpop.f32.mrb[0].mxu0
    %3571 = vdwg.mxu0
    %v3572 = vlaneseq
    %v3573 = vshrl.u32 %v3572, 7
    %v3574 = vsub.s32 0, %v3573
    %v3575 = vrot.slane %v3474, %v3574
    %v3576 = vadd.f32 %v3575, %v3554
    %v3577 = vadd.f32 %v3575, %v3559
    %v3578 = vadd.f32 %v3575, %v3564
    %v3579 = vadd.f32 %v3575, %v3569
    %v3581 = vsel %vm2468, %v3257, 0
    %v3584 = vsel %vm2468, %v3262, 0
    %v3587 = vsel %vm2468, %v3267, 0
    %v3590 = vsel %vm2468, %v3272, 0
    %3592 = vmatprep.subr.mxu0 0.0
    %3593 = vmatpush1.msra.mxu0 %v3471
    %3594 = vmatprep.subr.mxu0 0.0
    %3595 = vmatpush1.msra.mxu0 0.0
    %3596 = vmatprep.subr.mxu0 0.0
    %3597 = vmatpush1.msra.mxu0 0.0
    %3598 = vmatprep.subr.mxu0 0.0
    %3599 = vmatpush1.msra.mxu0 0.0
    %3600 = vmatprep.subr.mxu0 0.0
    %3601 = vmatpush1.msra.mxu0 0.0
    %3602 = vmatprep.subr.mxu0 0.0
    %3603 = vmatpush1.msra.mxu0 0.0
    %3604 = vmatprep.subr.mxu0 0.0
    %3605 = vmatpush1.msra.mxu0 0.0
    %3606 = vmatprep.subr.mxu0 0.0
    %3607 = vmatpush1.msra.mxu0 0.0
    %3608 = vmatprep.subr.mxu0 0.0
    %3609 = vmatpush1.msra.mxu0 0.0
    %3610 = vmatprep.subr.mxu0 0.0
    %3611 = vmatpush1.msra.mxu0 0.0
    %3612 = vmatprep.subr.mxu0 0.0
    %3613 = vmatpush1.msra.mxu0 0.0
    %3614 = vmatprep.subr.mxu0 0.0
    %3615 = vmatpush1.msra.mxu0 0.0
    %3616 = vmatprep.subr.mxu0 0.0
    %3617 = vmatpush1.msra.mxu0 0.0
    %3618 = vmatprep.subr.mxu0 0.0
    %3619 = vmatpush1.msra.mxu0 0.0
    %3620 = vmatprep.subr.mxu0 0.0
    %3621 = vmatpush1.msra.mxu0 0.0
    %3622 = vmatprep.subr.mxu0 0.0
    %3623 = vmatpush1.msra.mxu0 0.0
    %3624 = vmatprep.subr.mxu0 0.0
    %3625 = vmatpush1.msra.mxu0 0.0
    %3626 = vmatprep.subr.mxu0 0.0
    %3627 = vmatpush1.msra.mxu0 0.0
    %3628 = vmatprep.subr.mxu0 0.0
    %3629 = vmatpush1.msra.mxu0 0.0
    %3630 = vmatprep.subr.mxu0 0.0
    %3631 = vmatpush1.msra.mxu0 0.0
    %3632 = vmatprep.subr.mxu0 0.0
    %3633 = vmatpush1.msra.mxu0 0.0
    %3634 = vmatprep.subr.mxu0 0.0
    %3635 = vmatpush1.msra.mxu0 0.0
    %3636 = vmatprep.subr.mxu0 0.0
    %3637 = vmatpush1.msra.mxu0 0.0
    %3638 = vmatprep.subr.mxu0 0.0
    %3639 = vmatpush1.msra.mxu0 0.0
    %3640 = vmatprep.subr.mxu0 0.0
    %3641 = vmatpush1.msra.mxu0 0.0
    %3642 = vmatprep.subr.mxu0 0.0
    %3643 = vmatpush1.msra.mxu0 0.0
    %3644 = vmatprep.subr.mxu0 0.0
    %3645 = vmatpush1.msra.mxu0 0.0
    %3646 = vmatprep.subr.mxu0 0.0
    %3647 = vmatpush1.msra.mxu0 0.0
    %3648 = vmatprep.subr.mxu0 0.0
    %3649 = vmatpush1.msra.mxu0 0.0
    %3650 = vmatprep.subr.mxu0 0.0
    %3651 = vmatpush1.msra.mxu0 0.0
    %3652 = vmatprep.subr.mxu0 0.0
    %3653 = vmatpush1.msra.mxu0 0.0
    %3654 = vmatprep.subr.mxu0 0.0
    %3655 = vmatpush1.msra.mxu0 0.0
    %3656 = vmatprep.mubr.f32.mxu0 0.0
    %3657 = vmatmul.mubr.f32.gmra.mrb[0].mxu0 %v3581
    %v3658 = vpop.f32.mrb[0].mxu0
    %v3659 = vadd.f32 0.0, %v3658
    %v3660 = vpop.f32.mrb[0].mxu0
    %3661 = vmatprep.mubr.f32.mxu0 0.0
    %3662 = vmatmul.mubr.f32.gmra.mrb[0].mxu0 %v3584
    %v3663 = vpop.f32.mrb[0].mxu0
    %v3664 = vadd.f32 0.0, %v3663
    %v3665 = vpop.f32.mrb[0].mxu0
    %3666 = vmatprep.mubr.f32.mxu0 0.0
    %3667 = vmatmul.mubr.f32.gmra.mrb[0].mxu0 %v3587
    %v3668 = vpop.f32.mrb[0].mxu0
    %v3669 = vadd.f32 0.0, %v3668
    %v3670 = vpop.f32.mrb[0].mxu0
    %3671 = vmatprep.mubr.f32.mxu0 0.0
    %3672 = vmatmul.mubr.f32.gmra.mrb[0].mxu0 %v3590
    %v3673 = vpop.f32.mrb[0].mxu0
    %v3674 = vadd.f32 0.0, %v3673
    %v3675 = vpop.f32.mrb[0].mxu0
    %3676 = vdwg.mxu0
    %v3677 = vadd.f32 %v3576, %v3659
    %v3678 = vadd.f32 %v3577, %v3664
    %v3679 = vadd.f32 %v3578, %v3669
    %v3680 = vadd.f32 %v3579, %v3674
    %v3682 = vsel %vm2468, %v3354, 0
    %v3685 = vsel %vm2468, %v3359, 0
    %v3688 = vsel %vm2468, %v3364, 0
    %v3691 = vsel %vm2468, %v3369, 0
    %3693 = vmatprep.subr.mxu0 0.0
    %3694 = vmatpush1.msra.mxu0 %v3472
    %3695 = vmatprep.subr.mxu0 0.0
    %3696 = vmatpush1.msra.mxu0 0.0
    %3697 = vmatprep.subr.mxu0 0.0
    %3698 = vmatpush1.msra.mxu0 0.0
    %3699 = vmatprep.subr.mxu0 0.0
    %3700 = vmatpush1.msra.mxu0 0.0
    %3701 = vmatprep.subr.mxu0 0.0
    %3702 = vmatpush1.msra.mxu0 0.0
    %3703 = vmatprep.subr.mxu0 0.0
    %3704 = vmatpush1.msra.mxu0 0.0
    %3705 = vmatprep.subr.mxu0 0.0
    %3706 = vmatpush1.msra.mxu0 0.0
    %3707 = vmatprep.subr.mxu0 0.0
    %3708 = vmatpush1.msra.mxu0 0.0
    %3709 = vmatprep.subr.mxu0 0.0
    %3710 = vmatpush1.msra.mxu0 0.0
    %3711 = vmatprep.subr.mxu0 0.0
    %3712 = vmatpush1.msra.mxu0 0.0
    %3713 = vmatprep.subr.mxu0 0.0
    %3714 = vmatpush1.msra.mxu0 0.0
    %3715 = vmatprep.subr.mxu0 0.0
    %3716 = vmatpush1.msra.mxu0 0.0
    %3717 = vmatprep.subr.mxu0 0.0
    %3718 = vmatpush1.msra.mxu0 0.0
    %3719 = vmatprep.subr.mxu0 0.0
    %3720 = vmatpush1.msra.mxu0 0.0
    %3721 = vmatprep.subr.mxu0 0.0
    %3722 = vmatpush1.msra.mxu0 0.0
    %3723 = vmatprep.subr.mxu0 0.0
    %3724 = vmatpush1.msra.mxu0 0.0
    %3725 = vmatprep.subr.mxu0 0.0
    %3726 = vmatpush1.msra.mxu0 0.0
    %3727 = vmatprep.subr.mxu0 0.0
    %3728 = vmatpush1.msra.mxu0 0.0
    %3729 = vmatprep.subr.mxu0 0.0
    %3730 = vmatpush1.msra.mxu0 0.0
    %3731 = vmatprep.subr.mxu0 0.0
    %3732 = vmatpush1.msra.mxu0 0.0
    %3733 = vmatprep.subr.mxu0 0.0
    %3734 = vmatpush1.msra.mxu0 0.0
    %3735 = vmatprep.subr.mxu0 0.0
    %3736 = vmatpush1.msra.mxu0 0.0
    %3737 = vmatprep.subr.mxu0 0.0
    %3738 = vmatpush1.msra.mxu0 0.0
    %3739 = vmatprep.subr.mxu0 0.0
    %3740 = vmatpush1.msra.mxu0 0.0
    %3741 = vmatprep.subr.mxu0 0.0
    %3742 = vmatpush1.msra.mxu0 0.0
    %3743 = vmatprep.subr.mxu0 0.0
    %3744 = vmatpush1.msra.mxu0 0.0
    %3745 = vmatprep.subr.mxu0 0.0
    %3746 = vmatpush1.msra.mxu0 0.0
    %3747 = vmatprep.subr.mxu0 0.0
    %3748 = vmatpush1.msra.mxu0 0.0
    %3749 = vmatprep.subr.mxu0 0.0
    %3750 = vmatpush1.msra.mxu0 0.0
    %3751 = vmatprep.subr.mxu0 0.0
    %3752 = vmatpush1.msra.mxu0 0.0
    %3753 = vmatprep.subr.mxu0 0.0
    %3754 = vmatpush1.msra.mxu0 0.0
    %3755 = vmatprep.subr.mxu0 0.0
    %3756 = vmatpush1.msra.mxu0 0.0
    %3757 = vmatprep.mubr.f32.mxu0 0.0
    %3758 = vmatmul.mubr.f32.gmra.mrb[0].mxu0 %v3682
    %v3759 = vpop.f32.mrb[0].mxu0
    %v3760 = vadd.f32 0.0, %v3759
    %v3761 = vpop.f32.mrb[0].mxu0
    %3762 = vmatprep.mubr.f32.mxu0 0.0
    %3763 = vmatmul.mubr.f32.gmra.mrb[0].mxu0 %v3685
    %v3764 = vpop.f32.mrb[0].mxu0
    %v3765 = vadd.f32 0.0, %v3764
    %v3766 = vpop.f32.mrb[0].mxu0
    %3767 = vmatprep.mubr.f32.mxu0 0.0
    %3768 = vmatmul.mubr.f32.gmra.mrb[0].mxu0 %v3688
    %v3769 = vpop.f32.mrb[0].mxu0
    %v3770 = vadd.f32 0.0, %v3769
    %v3771 = vpop.f32.mrb[0].mxu0
    %3772 = vmatprep.mubr.f32.mxu0 0.0
    %3773 = vmatmul.mubr.f32.gmra.mrb[0].mxu0 %v3691
    %v3774 = vpop.f32.mrb[0].mxu0
    %v3775 = vadd.f32 0.0, %v3774
    %v3776 = vpop.f32.mrb[0].mxu0
    %3777 = vdwg.mxu0
    %v3778 = vadd.f32 %v3677, %v3760
    %v3779 = vadd.f32 %v3678, %v3765
    %v3780 = vadd.f32 %v3679, %v3770
    %v3781 = vadd.f32 %v3680, %v3775
    %v3783 = vsel %vm2468, %v3451, 0
    %v3786 = vsel %vm2468, %v3456, 0
    %v3789 = vsel %vm2468, %v3461, 0
    %v3792 = vsel %vm2468, %v3466, 0
    %3794 = vmatprep.subr.mxu0 0.0
    %3795 = vmatpush1.msra.mxu0 %v3473
    %3796 = vmatprep.subr.mxu0 0.0
    %3797 = vmatpush1.msra.mxu0 0.0
    %3798 = vmatprep.subr.mxu0 0.0
    %3799 = vmatpush1.msra.mxu0 0.0
    %3800 = vmatprep.subr.mxu0 0.0
    %3801 = vmatpush1.msra.mxu0 0.0
    %3802 = vmatprep.subr.mxu0 0.0
    %3803 = vmatpush1.msra.mxu0 0.0
    %3804 = vmatprep.subr.mxu0 0.0
    %3805 = vmatpush1.msra.mxu0 0.0
    %3806 = vmatprep.subr.mxu0 0.0
    %3807 = vmatpush1.msra.mxu0 0.0
    %3808 = vmatprep.subr.mxu0 0.0
    %3809 = vmatpush1.msra.mxu0 0.0
    %3810 = vmatprep.subr.mxu0 0.0
    %3811 = vmatpush1.msra.mxu0 0.0
    %3812 = vmatprep.subr.mxu0 0.0
    %3813 = vmatpush1.msra.mxu0 0.0
    %3814 = vmatprep.subr.mxu0 0.0
    %3815 = vmatpush1.msra.mxu0 0.0
    %3816 = vmatprep.subr.mxu0 0.0
    %3817 = vmatpush1.msra.mxu0 0.0
    %3818 = vmatprep.subr.mxu0 0.0
    %3819 = vmatpush1.msra.mxu0 0.0
    %3820 = vmatprep.subr.mxu0 0.0
    %3821 = vmatpush1.msra.mxu0 0.0
    %3822 = vmatprep.subr.mxu0 0.0
    %3823 = vmatpush1.msra.mxu0 0.0
    %3824 = vmatprep.subr.mxu0 0.0
    %3825 = vmatpush1.msra.mxu0 0.0
    %3826 = vmatprep.subr.mxu0 0.0
    %3827 = vmatpush1.msra.mxu0 0.0
    %3828 = vmatprep.subr.mxu0 0.0
    %3829 = vmatpush1.msra.mxu0 0.0
    %3830 = vmatprep.subr.mxu0 0.0
    %3831 = vmatpush1.msra.mxu0 0.0
    %3832 = vmatprep.subr.mxu0 0.0
    %3833 = vmatpush1.msra.mxu0 0.0
    %3834 = vmatprep.subr.mxu0 0.0
    %3835 = vmatpush1.msra.mxu0 0.0
    %3836 = vmatprep.subr.mxu0 0.0
    %3837 = vmatpush1.msra.mxu0 0.0
    %3838 = vmatprep.subr.mxu0 0.0
    %3839 = vmatpush1.msra.mxu0 0.0
    %3840 = vmatprep.subr.mxu0 0.0
    %3841 = vmatpush1.msra.mxu0 0.0
    %3842 = vmatprep.subr.mxu0 0.0
    %3843 = vmatpush1.msra.mxu0 0.0
    %3844 = vmatprep.subr.mxu0 0.0
    %3845 = vmatpush1.msra.mxu0 0.0
    %3846 = vmatprep.subr.mxu0 0.0
    %3847 = vmatpush1.msra.mxu0 0.0
    %3848 = vmatprep.subr.mxu0 0.0
    %3849 = vmatpush1.msra.mxu0 0.0
    %3850 = vmatprep.subr.mxu0 0.0
    %3851 = vmatpush1.msra.mxu0 0.0
    %3852 = vmatprep.subr.mxu0 0.0
    %3853 = vmatpush1.msra.mxu0 0.0
    %3854 = vmatprep.subr.mxu0 0.0
    %3855 = vmatpush1.msra.mxu0 0.0
    %3856 = vmatprep.subr.mxu0 0.0
    %3857 = vmatpush1.msra.mxu0 0.0
    %3858 = vmatprep.mubr.f32.mxu0 0.0
    %3859 = vmatmul.mubr.f32.gmra.mrb[0].mxu0 %v3783
    %v3860 = vpop.f32.mrb[0].mxu0
    %v3861 = vadd.f32 0.0, %v3860
    %v3862 = vpop.f32.mrb[0].mxu0
    %3863 = vmatprep.mubr.f32.mxu0 0.0
    %3864 = vmatmul.mubr.f32.gmra.mrb[0].mxu0 %v3786
    %v3865 = vpop.f32.mrb[0].mxu0
    %v3866 = vadd.f32 0.0, %v3865
    %v3867 = vpop.f32.mrb[0].mxu0
    %3868 = vmatprep.mubr.f32.mxu0 0.0
    %3869 = vmatmul.mubr.f32.gmra.mrb[0].mxu0 %v3789
    %v3870 = vpop.f32.mrb[0].mxu0
    %v3871 = vadd.f32 0.0, %v3870
    %v3872 = vpop.f32.mrb[0].mxu0
    %3873 = vmatprep.mubr.f32.mxu0 0.0
    %3874 = vmatmul.mubr.f32.gmra.mrb[0].mxu0 %v3792
    %v3875 = vpop.f32.mrb[0].mxu0
    %v3876 = vadd.f32 0.0, %v3875
    %v3877 = vpop.f32.mrb[0].mxu0
    %3878 = vdwg.mxu0
    %v3879 = vadd.f32 %v3778, %v3861
    %v3880 = vadd.f32 %v3779, %v3866
    %v3881 = vadd.f32 %v3780, %v3871
    %v3882 = vadd.f32 %v3781, %v3876
    %v3883 = vadd.f32 %v67, %v3879
    %v3884 = vadd.f32 %v68, %v3880
    %v3885 = vadd.f32 %v69, %v3881
    %v3886 = vadd.f32 %v70, %v3882
    %s3887 = scalar_lea.vmem [#allocation2], 192
    %v3888 = vld [vmem:[%s3887] sm:$0xff]
    %v3889 = vld [vmem:[%s3887 + $0x8] sm:$0xff]
    %v3890 = vld [vmem:[%s3887 + $0x10] sm:$0xff]
    %v3891 = vld [vmem:[%s3887 + $0x18] sm:$0xff]
    %v3892 = vld [vmem:[%s12 + $0x4] sm:$0x1]
    %v3893 = vlaneseq
    %v3894 = vshrl.u32 %v3893, 7
    %v3895 = vsub.s32 0, %v3894
    %v3896 = vrot.slane %v3892, %v3895
    %v3898 = vsel %vm75, %v3883, 0
    %v3901 = vsel %vm75, %v3884, 0
    %v3904 = vsel %vm75, %v3885, 0
    %v3907 = vsel %vm75, %v3886, 0
    %3909 = vmatprep.subr.mxu0 0.0
    %3910 = vmatpush1.msra.mxu0 %v3888
    %3911 = vmatprep.subr.mxu0 0.0
    %3912 = vmatpush1.msra.mxu0 %v3889
    %3913 = vmatprep.subr.mxu0 0.0
    %3914 = vmatpush1.msra.mxu0 %v3890
    %3915 = vmatprep.subr.mxu0 0.0
    %3916 = vmatpush1.msra.mxu0 %v3891
    %3917 = vmatprep.subr.mxu0 0.0
    %3918 = vmatpush1.msra.mxu0 0.0
    %3919 = vmatprep.subr.mxu0 0.0
    %3920 = vmatpush1.msra.mxu0 0.0
    %3921 = vmatprep.subr.mxu0 0.0
    %3922 = vmatpush1.msra.mxu0 0.0
    %3923 = vmatprep.subr.mxu0 0.0
    %3924 = vmatpush1.msra.mxu0 0.0
    %3925 = vmatprep.subr.mxu0 0.0
    %3926 = vmatpush1.msra.mxu0 0.0
    %3927 = vmatprep.subr.mxu0 0.0
    %3928 = vmatpush1.msra.mxu0 0.0
    %3929 = vmatprep.subr.mxu0 0.0
    %3930 = vmatpush1.msra.mxu0 0.0
    %3931 = vmatprep.subr.mxu0 0.0
    %3932 = vmatpush1.msra.mxu0 0.0
    %3933 = vmatprep.subr.mxu0 0.0
    %3934 = vmatpush1.msra.mxu0 0.0
    %3935 = vmatprep.subr.mxu0 0.0
    %3936 = vmatpush1.msra.mxu0 0.0
    %3937 = vmatprep.subr.mxu0 0.0
    %3938 = vmatpush1.msra.mxu0 0.0
    %3939 = vmatprep.subr.mxu0 0.0
    %3940 = vmatpush1.msra.mxu0 0.0
    %3941 = vmatprep.subr.mxu0 0.0
    %3942 = vmatpush1.msra.mxu0 0.0
    %3943 = vmatprep.subr.mxu0 0.0
    %3944 = vmatpush1.msra.mxu0 0.0
    %3945 = vmatprep.subr.mxu0 0.0
    %3946 = vmatpush1.msra.mxu0 0.0
    %3947 = vmatprep.subr.mxu0 0.0
    %3948 = vmatpush1.msra.mxu0 0.0
    %3949 = vmatprep.subr.mxu0 0.0
    %3950 = vmatpush1.msra.mxu0 0.0
    %3951 = vmatprep.subr.mxu0 0.0
    %3952 = vmatpush1.msra.mxu0 0.0
    %3953 = vmatprep.subr.mxu0 0.0
    %3954 = vmatpush1.msra.mxu0 0.0
    %3955 = vmatprep.subr.mxu0 0.0
    %3956 = vmatpush1.msra.mxu0 0.0
    %3957 = vmatprep.subr.mxu0 0.0
    %3958 = vmatpush1.msra.mxu0 0.0
    %3959 = vmatprep.subr.mxu0 0.0
    %3960 = vmatpush1.msra.mxu0 0.0
    %3961 = vmatprep.subr.mxu0 0.0
    %3962 = vmatpush1.msra.mxu0 0.0
    %3963 = vmatprep.subr.mxu0 0.0
    %3964 = vmatpush1.msra.mxu0 0.0
    %3965 = vmatprep.subr.mxu0 0.0
    %3966 = vmatpush1.msra.mxu0 0.0
    %3967 = vmatprep.subr.mxu0 0.0
    %3968 = vmatpush1.msra.mxu0 0.0
    %3969 = vmatprep.subr.mxu0 0.0
    %3970 = vmatpush1.msra.mxu0 0.0
    %3971 = vmatprep.subr.mxu0 0.0
    %3972 = vmatpush1.msra.mxu0 0.0
    %3973 = vmatprep.mubr.f32.mxu0 0.0
    %3974 = vmatmul.mubr.f32.gmra.mrb[0].mxu0 %v3898
    %v3975 = vpop.f32.mrb[0].mxu0
    %v3976 = vadd.f32 %v3896, %v3975
    %v3977 = vpop.f32.mrb[0].mxu0
    %3978 = vmatprep.mubr.f32.mxu0 0.0
    %3979 = vmatmul.mubr.f32.gmra.mrb[0].mxu0 %v3901
    %v3980 = vpop.f32.mrb[0].mxu0
    %v3981 = vadd.f32 %v3896, %v3980
    %v3982 = vpop.f32.mrb[0].mxu0
    %3983 = vmatprep.mubr.f32.mxu0 0.0
    %3984 = vmatmul.mubr.f32.gmra.mrb[0].mxu0 %v3904
    %v3985 = vpop.f32.mrb[0].mxu0
    %v3986 = vadd.f32 %v3896, %v3985
    %v3987 = vpop.f32.mrb[0].mxu0
    %3988 = vmatprep.mubr.f32.mxu0 0.0
    %3989 = vmatmul.mubr.f32.gmra.mrb[0].mxu0 %v3907
    %v3990 = vpop.f32.mrb[0].mxu0
    %v3991 = vadd.f32 %v3896, %v3990
    %v3992 = vpop.f32.mrb[0].mxu0
    %3993 = vdwg.mxu0
    %s3994 = scalar_lea.vmem [#allocation2], 224
    %v3995 = vld [vmem:[%s3994] sm:$0xff]
    %v3996 = vld [vmem:[%s3994 + $0x8] sm:$0xff]
    %v3997 = vld [vmem:[%s3994 + $0x10] sm:$0xff]
    %v3998 = vld [vmem:[%s3994 + $0x18] sm:$0xff]
    %s3999 = scalar_lea.vmem [#allocation2], 256
    %v4000 = vld [vmem:[%s3999] sm:$0xff]
    %v4001 = vld [vmem:[%s3999 + $0x8] sm:$0xff]
    %v4002 = vld [vmem:[%s3999 + $0x10] sm:$0xff]
    %v4003 = vld [vmem:[%s3999 + $0x18] sm:$0xff]
    %4004 = vmatprep.subr.mxu0 0.0
    %4005 = vmatpush1.msra.mxu0 %v4000
    %4006 = vmatprep.subr.mxu0 0.0
    %4007 = vmatpush1.msra.mxu0 %v4001
    %4008 = vmatprep.subr.mxu0 0.0
    %4009 = vmatpush1.msra.mxu0 %v4002
    %4010 = vmatprep.subr.mxu0 0.0
    %4011 = vmatpush1.msra.mxu0 %v4003
    %4012 = vmatprep.subr.mxu0 0.0
    %4013 = vmatpush1.msra.mxu0 0.0
    %4014 = vmatprep.subr.mxu0 0.0
    %4015 = vmatpush1.msra.mxu0 0.0
    %4016 = vmatprep.subr.mxu0 0.0
    %4017 = vmatpush1.msra.mxu0 0.0
    %4018 = vmatprep.subr.mxu0 0.0
    %4019 = vmatpush1.msra.mxu0 0.0
    %4020 = vmatprep.subr.mxu0 0.0
    %4021 = vmatpush1.msra.mxu0 0.0
    %4022 = vmatprep.subr.mxu0 0.0
    %4023 = vmatpush1.msra.mxu0 0.0
    %4024 = vmatprep.subr.mxu0 0.0
    %4025 = vmatpush1.msra.mxu0 0.0
    %4026 = vmatprep.subr.mxu0 0.0
    %4027 = vmatpush1.msra.mxu0 0.0
    %4028 = vmatprep.subr.mxu0 0.0
    %4029 = vmatpush1.msra.mxu0 0.0
    %4030 = vmatprep.subr.mxu0 0.0
    %4031 = vmatpush1.msra.mxu0 0.0
    %4032 = vmatprep.subr.mxu0 0.0
    %4033 = vmatpush1.msra.mxu0 0.0
    %4034 = vmatprep.subr.mxu0 0.0
    %4035 = vmatpush1.msra.mxu0 0.0
    %4036 = vmatprep.subr.mxu0 0.0
    %4037 = vmatpush1.msra.mxu0 0.0
    %4038 = vmatprep.subr.mxu0 0.0
    %4039 = vmatpush1.msra.mxu0 0.0
    %4040 = vmatprep.subr.mxu0 0.0
    %4041 = vmatpush1.msra.mxu0 0.0
    %4042 = vmatprep.subr.mxu0 0.0
    %4043 = vmatpush1.msra.mxu0 0.0
    %4044 = vmatprep.subr.mxu0 0.0
    %4045 = vmatpush1.msra.mxu0 0.0
    %4046 = vmatprep.subr.mxu0 0.0
    %4047 = vmatpush1.msra.mxu0 0.0
    %4048 = vmatprep.subr.mxu0 0.0
    %4049 = vmatpush1.msra.mxu0 0.0
    %4050 = vmatprep.subr.mxu0 0.0
    %4051 = vmatpush1.msra.mxu0 0.0
    %4052 = vmatprep.subr.mxu0 0.0
    %4053 = vmatpush1.msra.mxu0 0.0
    %4054 = vmatprep.subr.mxu0 0.0
    %4055 = vmatpush1.msra.mxu0 0.0
    %4056 = vmatprep.subr.mxu0 0.0
    %4057 = vmatpush1.msra.mxu0 0.0
    %4058 = vmatprep.subr.mxu0 0.0
    %4059 = vmatpush1.msra.mxu0 0.0
    %4060 = vmatprep.subr.mxu0 0.0
    %4061 = vmatpush1.msra.mxu0 0.0
    %4062 = vmatprep.subr.mxu0 0.0
    %4063 = vmatpush1.msra.mxu0 0.0
    %4064 = vmatprep.subr.mxu0 0.0
    %4065 = vmatpush1.msra.mxu0 0.0
    %4066 = vmatprep.subr.mxu0 0.0
    %4067 = vmatpush1.msra.mxu0 0.0
    %4068 = vmatprep.mubr.f32.mxu0 0.0
    %4069 = vmatmul.mubr.f32.gmra.mrb[0].mxu0 %v155
    %v4070 = vpop.f32.mrb[0].mxu0
    %v4071 = vadd.f32 0.0, %v4070
    %v4072 = vpop.f32.mrb[0].mxu0
    %4073 = vmatprep.mubr.f32.mxu0 0.0
    %4074 = vmatmul.mubr.f32.gmra.mrb[0].mxu0 %v158
    %v4075 = vpop.f32.mrb[0].mxu0
    %v4076 = vadd.f32 0.0, %v4075
    %v4077 = vpop.f32.mrb[0].mxu0
    %4078 = vmatprep.mubr.f32.mxu0 0.0
    %4079 = vmatmul.mubr.f32.gmra.mrb[0].mxu0 %v161
    %v4080 = vpop.f32.mrb[0].mxu0
    %v4081 = vadd.f32 0.0, %v4080
    %v4082 = vpop.f32.mrb[0].mxu0
    %4083 = vmatprep.mubr.f32.mxu0 0.0
    %4084 = vmatmul.mubr.f32.gmra.mrb[0].mxu0 %v164
    %v4085 = vpop.f32.mrb[0].mxu0
    %v4086 = vadd.f32 0.0, %v4085
    %v4087 = vpop.f32.mrb[0].mxu0
    %4088 = vdwg.mxu0
    %v4090 = vsel %vm75, %v3976, 0
    %v4093 = vsel %vm75, %v3981, 0
    %v4096 = vsel %vm75, %v3986, 0
    %v4099 = vsel %vm75, %v3991, 0
    %4101 = vmatprep.subr.mxu0 0.0
    %4102 = vmatpush1.msra.mxu0 %v3995
    %4103 = vmatprep.subr.mxu0 0.0
    %4104 = vmatpush1.msra.mxu0 %v3996
    %4105 = vmatprep.subr.mxu0 0.0
    %4106 = vmatpush1.msra.mxu0 %v3997
    %4107 = vmatprep.subr.mxu0 0.0
    %4108 = vmatpush1.msra.mxu0 %v3998
    %4109 = vmatprep.subr.mxu0 0.0
    %4110 = vmatpush1.msra.mxu0 0.0
    %4111 = vmatprep.subr.mxu0 0.0
    %4112 = vmatpush1.msra.mxu0 0.0
    %4113 = vmatprep.subr.mxu0 0.0
    %4114 = vmatpush1.msra.mxu0 0.0
    %4115 = vmatprep.subr.mxu0 0.0
    %4116 = vmatpush1.msra.mxu0 0.0
    %4117 = vmatprep.subr.mxu0 0.0
    %4118 = vmatpush1.msra.mxu0 0.0
    %4119 = vmatprep.subr.mxu0 0.0
    %4120 = vmatpush1.msra.mxu0 0.0
    %4121 = vmatprep.subr.mxu0 0.0
    %4122 = vmatpush1.msra.mxu0 0.0
    %4123 = vmatprep.subr.mxu0 0.0
    %4124 = vmatpush1.msra.mxu0 0.0
    %4125 = vmatprep.subr.mxu0 0.0
    %4126 = vmatpush1.msra.mxu0 0.0
    %4127 = vmatprep.subr.mxu0 0.0
    %4128 = vmatpush1.msra.mxu0 0.0
    %4129 = vmatprep.subr.mxu0 0.0
    %4130 = vmatpush1.msra.mxu0 0.0
    %4131 = vmatprep.subr.mxu0 0.0
    %4132 = vmatpush1.msra.mxu0 0.0
    %4133 = vmatprep.subr.mxu0 0.0
    %4134 = vmatpush1.msra.mxu0 0.0
    %4135 = vmatprep.subr.mxu0 0.0
    %4136 = vmatpush1.msra.mxu0 0.0
    %4137 = vmatprep.subr.mxu0 0.0
    %4138 = vmatpush1.msra.mxu0 0.0
    %4139 = vmatprep.subr.mxu0 0.0
    %4140 = vmatpush1.msra.mxu0 0.0
    %4141 = vmatprep.subr.mxu0 0.0
    %4142 = vmatpush1.msra.mxu0 0.0
    %4143 = vmatprep.subr.mxu0 0.0
    %4144 = vmatpush1.msra.mxu0 0.0
    %4145 = vmatprep.subr.mxu0 0.0
    %4146 = vmatpush1.msra.mxu0 0.0
    %4147 = vmatprep.subr.mxu0 0.0
    %4148 = vmatpush1.msra.mxu0 0.0
    %4149 = vmatprep.subr.mxu0 0.0
    %4150 = vmatpush1.msra.mxu0 0.0
    %4151 = vmatprep.subr.mxu0 0.0
    %4152 = vmatpush1.msra.mxu0 0.0
    %4153 = vmatprep.subr.mxu0 0.0
    %4154 = vmatpush1.msra.mxu0 0.0
    %4155 = vmatprep.subr.mxu0 0.0
    %4156 = vmatpush1.msra.mxu0 0.0
    %4157 = vmatprep.subr.mxu0 0.0
    %4158 = vmatpush1.msra.mxu0 0.0
    %4159 = vmatprep.subr.mxu0 0.0
    %4160 = vmatpush1.msra.mxu0 0.0
    %4161 = vmatprep.subr.mxu0 0.0
    %4162 = vmatpush1.msra.mxu0 0.0
    %4163 = vmatprep.subr.mxu0 0.0
    %4164 = vmatpush1.msra.mxu0 0.0
    %4165 = vmatprep.mubr.f32.mxu0 0.0
    %4166 = vmatmul.mubr.f32.gmra.mrb[0].mxu0 %v4090
    %v4167 = vpop.f32.mrb[0].mxu0
    %v4168 = vadd.f32 %v4071, %v4167
    %v4169 = vpop.f32.mrb[0].mxu0
    %4170 = vmatprep.mubr.f32.mxu0 0.0
    %4171 = vmatmul.mubr.f32.gmra.mrb[0].mxu0 %v4093
    %v4172 = vpop.f32.mrb[0].mxu0
    %v4173 = vadd.f32 %v4076, %v4172
    %v4174 = vpop.f32.mrb[0].mxu0
    %4175 = vmatprep.mubr.f32.mxu0 0.0
    %4176 = vmatmul.mubr.f32.gmra.mrb[0].mxu0 %v4096
    %v4177 = vpop.f32.mrb[0].mxu0
    %v4178 = vadd.f32 %v4081, %v4177
    %v4179 = vpop.f32.mrb[0].mxu0
    %4180 = vmatprep.mubr.f32.mxu0 0.0
    %4181 = vmatmul.mubr.f32.gmra.mrb[0].mxu0 %v4099
    %v4182 = vpop.f32.mrb[0].mxu0
    %v4183 = vadd.f32 %v4086, %v4182
    %v4184 = vpop.f32.mrb[0].mxu0
    %4185 = vdwg.mxu0
    %v4186 = vld [vmem:[%s12 + $0x5] sm:$0x1]
    %v4187 = vlaneseq
    %v4188 = vshrl.u32 %v4187, 7
    %v4189 = vsub.s32 0, %v4188
    %v4190 = vrot.slane %v4186, %v4189
    %v4191 = vadd.f32 %v4168, %v4190
    %v4192 = vadd.f32 %v4173, %v4190
    %v4193 = vadd.f32 %v4178, %v4190
    %v4194 = vadd.f32 %v4183, %v4190
    %v4195 = vld [vmem:[%s2] sm:$0xff]
    %v4196 = vld [vmem:[%s2 + $0x8] sm:$0xff]
    %v4197 = vld [vmem:[%s2 + $0x10] sm:$0xff]
    %v4198 = vld [vmem:[%s2 + $0x18] sm:$0xff]
    %s4199 = scalar_lea.vmem [#allocation2], 288
    %v4200 = vld [vmem:[%s4199] sm:$0xff]
    %v4201 = vld [vmem:[%s4199 + $0x8] sm:$0xff]
    %v4202 = vld [vmem:[%s4199 + $0x10] sm:$0xff]
    %v4203 = vld [vmem:[%s4199 + $0x18] sm:$0xff]
    %v4204 = vld [vmem:[%s12 + $0x6] sm:$0x1]
    %v4205 = vlaneseq
    %v4206 = vshrl.u32 %v4205, 7
    %v4207 = vsub.s32 0, %v4206
    %v4208 = vrot.slane %v4204, %v4207
    %v4210 = vsel %vm75, %v4195, 0
    %v4213 = vsel %vm75, %v4196, 0
    %v4216 = vsel %vm75, %v4197, 0
    %v4219 = vsel %vm75, %v4198, 0
    %4221 = vmatprep.subr.mxu0 0.0
    %4222 = vmatpush1.msra.mxu0 %v4200
    %4223 = vmatprep.subr.mxu0 0.0
    %4224 = vmatpush1.msra.mxu0 %v4201
    %4225 = vmatprep.subr.mxu0 0.0
    %4226 = vmatpush1.msra.mxu0 %v4202
    %4227 = vmatprep.subr.mxu0 0.0
    %4228 = vmatpush1.msra.mxu0 %v4203
    %4229 = vmatprep.subr.mxu0 0.0
    %4230 = vmatpush1.msra.mxu0 0.0
    %4231 = vmatprep.subr.mxu0 0.0
    %4232 = vmatpush1.msra.mxu0 0.0
    %4233 = vmatprep.subr.mxu0 0.0
    %4234 = vmatpush1.msra.mxu0 0.0
    %4235 = vmatprep.subr.mxu0 0.0
    %4236 = vmatpush1.msra.mxu0 0.0
    %4237 = vmatprep.subr.mxu0 0.0
    %4238 = vmatpush1.msra.mxu0 0.0
    %4239 = vmatprep.subr.mxu0 0.0
    %4240 = vmatpush1.msra.mxu0 0.0
    %4241 = vmatprep.subr.mxu0 0.0
    %4242 = vmatpush1.msra.mxu0 0.0
    %4243 = vmatprep.subr.mxu0 0.0
    %4244 = vmatpush1.msra.mxu0 0.0
    %4245 = vmatprep.subr.mxu0 0.0
    %4246 = vmatpush1.msra.mxu0 0.0
    %4247 = vmatprep.subr.mxu0 0.0
    %4248 = vmatpush1.msra.mxu0 0.0
    %4249 = vmatprep.subr.mxu0 0.0
    %4250 = vmatpush1.msra.mxu0 0.0
    %4251 = vmatprep.subr.mxu0 0.0
    %4252 = vmatpush1.msra.mxu0 0.0
    %4253 = vmatprep.subr.mxu0 0.0
    %4254 = vmatpush1.msra.mxu0 0.0
    %4255 = vmatprep.subr.mxu0 0.0
    %4256 = vmatpush1.msra.mxu0 0.0
    %4257 = vmatprep.subr.mxu0 0.0
    %4258 = vmatpush1.msra.mxu0 0.0
    %4259 = vmatprep.subr.mxu0 0.0
    %4260 = vmatpush1.msra.mxu0 0.0
    %4261 = vmatprep.subr.mxu0 0.0
    %4262 = vmatpush1.msra.mxu0 0.0
    %4263 = vmatprep.subr.mxu0 0.0
    %4264 = vmatpush1.msra.mxu0 0.0
    %4265 = vmatprep.subr.mxu0 0.0
    %4266 = vmatpush1.msra.mxu0 0.0
    %4267 = vmatprep.subr.mxu0 0.0
    %4268 = vmatpush1.msra.mxu0 0.0
    %4269 = vmatprep.subr.mxu0 0.0
    %4270 = vmatpush1.msra.mxu0 0.0
    %4271 = vmatprep.subr.mxu0 0.0
    %4272 = vmatpush1.msra.mxu0 0.0
    %4273 = vmatprep.subr.mxu0 0.0
    %4274 = vmatpush1.msra.mxu0 0.0
    %4275 = vmatprep.subr.mxu0 0.0
    %4276 = vmatpush1.msra.mxu0 0.0
    %4277 = vmatprep.subr.mxu0 0.0
    %4278 = vmatpush1.msra.mxu0 0.0
    %4279 = vmatprep.subr.mxu0 0.0
    %4280 = vmatpush1.msra.mxu0 0.0
    %4281 = vmatprep.subr.mxu0 0.0
    %4282 = vmatpush1.msra.mxu0 0.0
    %4283 = vmatprep.subr.mxu0 0.0
    %4284 = vmatpush1.msra.mxu0 0.0
    %4285 = vmatprep.mubr.f32.mxu0 0.0
    %4286 = vmatmul.mubr.f32.gmra.mrb[0].mxu0 %v4210
    %v4287 = vpop.f32.mrb[0].mxu0
    %v4288 = vadd.f32 %v4208, %v4287
    %v4289 = vpop.f32.mrb[0].mxu0
    %4290 = vmatprep.mubr.f32.mxu0 0.0
    %4291 = vmatmul.mubr.f32.gmra.mrb[0].mxu0 %v4213
    %v4292 = vpop.f32.mrb[0].mxu0
    %v4293 = vadd.f32 %v4208, %v4292
    %v4294 = vpop.f32.mrb[0].mxu0
    %4295 = vmatprep.mubr.f32.mxu0 0.0
    %4296 = vmatmul.mubr.f32.gmra.mrb[0].mxu0 %v4216
    %v4297 = vpop.f32.mrb[0].mxu0
    %v4298 = vadd.f32 %v4208, %v4297
    %v4299 = vpop.f32.mrb[0].mxu0
    %4300 = vmatprep.mubr.f32.mxu0 0.0
    %4301 = vmatmul.mubr.f32.gmra.mrb[0].mxu0 %v4219
    %v4302 = vpop.f32.mrb[0].mxu0
    %v4303 = vadd.f32 %v4208, %v4302
    %v4304 = vpop.f32.mrb[0].mxu0
    %4305 = vdwg.mxu0
    %v4306 = vld [vmem:[%s6] sm:$0xf]
    %v4307 = vld [vmem:[%s6 + $0x4] sm:$0xf]
    %v4308 = vld [vmem:[%s6 + $0x8] sm:$0xf]
    %v4309 = vld [vmem:[%s6 + $0xc] sm:$0xf]
    %v4310 = vld [vmem:[%s6 + $0x10] sm:$0xf]
    %v4311 = vld [vmem:[%s6 + $0x14] sm:$0xf]
    %v4312 = vld [vmem:[%s6 + $0x18] sm:$0xf]
    %v4313 = vld [vmem:[%s6 + $0x1c] sm:$0xf]
    %v4314 = vld [vmem:[%s6 + $0x20] sm:$0xf]
    %v4315 = vld [vmem:[%s6 + $0x24] sm:$0xf]
    %v4316 = vld [vmem:[%s6 + $0x28] sm:$0xf]
    %v4317 = vld [vmem:[%s6 + $0x2c] sm:$0xf]
    %v4318 = vunpack.c.l.bf16 %v4306
    %v4319 = vunpack.c.l.bf16 %v4307
    %v4320 = vunpack.c.l.bf16 %v4308
    %v4321 = vunpack.c.l.bf16 %v4309
    %v4322 = vunpack.c.l.bf16 %v4310
    %v4323 = vunpack.c.l.bf16 %v4311
    %v4324 = vunpack.c.l.bf16 %v4312
    %v4325 = vunpack.c.l.bf16 %v4313
    %v4326 = vunpack.c.l.bf16 %v4314
    %v4327 = vunpack.c.l.bf16 %v4315
    %v4328 = vunpack.c.l.bf16 %v4316
    %v4329 = vunpack.c.l.bf16 %v4317
    %v4330 = vld [vmem:[%s7] sm:$0xf]
    %v4331 = vld [vmem:[%s7 + $0x4] sm:$0xf]
    %v4332 = vld [vmem:[%s7 + $0x8] sm:$0xf]
    %v4333 = vld [vmem:[%s7 + $0xc] sm:$0xf]
    %v4334 = vunpack.c.l.bf16 %v4330
    %v4335 = vunpack.c.l.bf16 %v4331
    %v4336 = vunpack.c.l.bf16 %v4332
    %v4337 = vunpack.c.l.bf16 %v4333
    %v4339 = vsel %vm75, %v4318, 0
    %v4342 = vsel %vm75, %v4319, 0
    %v4345 = vsel %vm75, %v4320, 0
    %v4348 = vsel %vm75, %v4321, 0
    %v4351 = vsel %vm75, %v4322, 0
    %v4354 = vsel %vm75, %v4323, 0
    %v4357 = vsel %vm75, %v4324, 0
    %v4360 = vsel %vm75, %v4325, 0
    %v4363 = vsel %vm75, %v4326, 0
    %v4366 = vsel %vm75, %v4327, 0
    %v4369 = vsel %vm75, %v4328, 0
    %v4372 = vsel %vm75, %v4329, 0
    %4374 = vmatprep.subr.mxu0 0.0
    %4375 = vmatpush1.msra.mxu0 %v4191
    %4376 = vmatprep.subr.mxu0 0.0
    %4377 = vmatpush1.msra.mxu0 %v4192
    %4378 = vmatprep.subr.mxu0 0.0
    %4379 = vmatpush1.msra.mxu0 %v4193
    %4380 = vmatprep.subr.mxu0 0.0
    %4381 = vmatpush1.msra.mxu0 %v4194
    %4382 = vmatprep.subr.mxu0 0.0
    %4383 = vmatpush1.msra.mxu0 0.0
    %4384 = vmatprep.subr.mxu0 0.0
    %4385 = vmatpush1.msra.mxu0 0.0
    %4386 = vmatprep.subr.mxu0 0.0
    %4387 = vmatpush1.msra.mxu0 0.0
    %4388 = vmatprep.subr.mxu0 0.0
    %4389 = vmatpush1.msra.mxu0 0.0
    %4390 = vmatprep.subr.mxu0 0.0
    %4391 = vmatpush1.msra.mxu0 0.0
    %4392 = vmatprep.subr.mxu0 0.0
    %4393 = vmatpush1.msra.mxu0 0.0
    %4394 = vmatprep.subr.mxu0 0.0
    %4395 = vmatpush1.msra.mxu0 0.0
    %4396 = vmatprep.subr.mxu0 0.0
    %4397 = vmatpush1.msra.mxu0 0.0
    %4398 = vmatprep.subr.mxu0 0.0
    %4399 = vmatpush1.msra.mxu0 0.0
    %4400 = vmatprep.subr.mxu0 0.0
    %4401 = vmatpush1.msra.mxu0 0.0
    %4402 = vmatprep.subr.mxu0 0.0
    %4403 = vmatpush1.msra.mxu0 0.0
    %4404 = vmatprep.subr.mxu0 0.0
    %4405 = vmatpush1.msra.mxu0 0.0
    %4406 = vmatprep.subr.mxu0 0.0
    %4407 = vmatpush1.msra.mxu0 0.0
    %4408 = vmatprep.subr.mxu0 0.0
    %4409 = vmatpush1.msra.mxu0 0.0
    %4410 = vmatprep.subr.mxu0 0.0
    %4411 = vmatpush1.msra.mxu0 0.0
    %4412 = vmatprep.subr.mxu0 0.0
    %4413 = vmatpush1.msra.mxu0 0.0
    %4414 = vmatprep.subr.mxu0 0.0
    %4415 = vmatpush1.msra.mxu0 0.0
    %4416 = vmatprep.subr.mxu0 0.0
    %4417 = vmatpush1.msra.mxu0 0.0
    %4418 = vmatprep.subr.mxu0 0.0
    %4419 = vmatpush1.msra.mxu0 0.0
    %4420 = vmatprep.subr.mxu0 0.0
    %4421 = vmatpush1.msra.mxu0 0.0
    %4422 = vmatprep.subr.mxu0 0.0
    %4423 = vmatpush1.msra.mxu0 0.0
    %4424 = vmatprep.subr.mxu0 0.0
    %4425 = vmatpush1.msra.mxu0 0.0
    %4426 = vmatprep.subr.mxu0 0.0
    %4427 = vmatpush1.msra.mxu0 0.0
    %4428 = vmatprep.subr.mxu0 0.0
    %4429 = vmatpush1.msra.mxu0 0.0
    %4430 = vmatprep.subr.mxu0 0.0
    %4431 = vmatpush1.msra.mxu0 0.0
    %4432 = vmatprep.subr.mxu0 0.0
    %4433 = vmatpush1.msra.mxu0 0.0
    %4434 = vmatprep.subr.mxu0 0.0
    %4435 = vmatpush1.msra.mxu0 0.0
    %4436 = vmatprep.subr.mxu0 0.0
    %4437 = vmatpush1.msra.mxu0 0.0
    %4438 = vmatprep.mubr.f32.mxu0 0.0
    %4439 = vmatmul.mubr.f32.gmra.mrb[0].mxu0 %v4339
    %v4440 = vpop.f32.mrb[0].mxu0
    %v4441 = vadd.f32 0.0, %v4440
    %v4442 = vpop.f32.mrb[0].mxu0
    %4443 = vmatprep.mubr.f32.mxu0 0.0
    %4444 = vmatmul.mubr.f32.gmra.mrb[0].mxu0 %v4342
    %v4445 = vpop.f32.mrb[0].mxu0
    %v4446 = vadd.f32 0.0, %v4445
    %v4447 = vpop.f32.mrb[0].mxu0
    %4448 = vmatprep.mubr.f32.mxu0 0.0
    %4449 = vmatmul.mubr.f32.gmra.mrb[0].mxu0 %v4345
    %v4450 = vpop.f32.mrb[0].mxu0
    %v4451 = vadd.f32 0.0, %v4450
    %v4452 = vpop.f32.mrb[0].mxu0
    %4453 = vmatprep.mubr.f32.mxu0 0.0
    %4454 = vmatmul.mubr.f32.gmra.mrb[0].mxu0 %v4348
    %v4455 = vpop.f32.mrb[0].mxu0
    %v4456 = vadd.f32 0.0, %v4455
    %v4457 = vpop.f32.mrb[0].mxu0
    %4458 = vmatprep.mubr.f32.mxu0 0.0
    %4459 = vmatmul.mubr.f32.gmra.mrb[0].mxu0 %v4351
    %v4460 = vpop.f32.mrb[0].mxu0
    %v4461 = vadd.f32 0.0, %v4460
    %v4462 = vpop.f32.mrb[0].mxu0
    %4463 = vmatprep.mubr.f32.mxu0 0.0
    %4464 = vmatmul.mubr.f32.gmra.mrb[0].mxu0 %v4354
    %v4465 = vpop.f32.mrb[0].mxu0
    %v4466 = vadd.f32 0.0, %v4465
    %v4467 = vpop.f32.mrb[0].mxu0
    %4468 = vmatprep.mubr.f32.mxu0 0.0
    %4469 = vmatmul.mubr.f32.gmra.mrb[0].mxu0 %v4357
    %v4470 = vpop.f32.mrb[0].mxu0
    %v4471 = vadd.f32 0.0, %v4470
    %v4472 = vpop.f32.mrb[0].mxu0
    %4473 = vmatprep.mubr.f32.mxu0 0.0
    %4474 = vmatmul.mubr.f32.gmra.mrb[0].mxu0 %v4360
    %v4475 = vpop.f32.mrb[0].mxu0
    %v4476 = vadd.f32 0.0, %v4475
    %v4477 = vpop.f32.mrb[0].mxu0
    %4478 = vmatprep.mubr.f32.mxu0 0.0
    %4479 = vmatmul.mubr.f32.gmra.mrb[0].mxu0 %v4363
    %v4480 = vpop.f32.mrb[0].mxu0
    %v4481 = vadd.f32 0.0, %v4480
    %v4482 = vpop.f32.mrb[0].mxu0
    %4483 = vmatprep.mubr.f32.mxu0 0.0
    %4484 = vmatmul.mubr.f32.gmra.mrb[0].mxu0 %v4366
    %v4485 = vpop.f32.mrb[0].mxu0
    %v4486 = vadd.f32 0.0, %v4485
    %v4487 = vpop.f32.mrb[0].mxu0
    %4488 = vmatprep.mubr.f32.mxu0 0.0
    %4489 = vmatmul.mubr.f32.gmra.mrb[0].mxu0 %v4369
    %v4490 = vpop.f32.mrb[0].mxu0
    %v4491 = vadd.f32 0.0, %v4490
    %v4492 = vpop.f32.mrb[0].mxu0
    %4493 = vmatprep.mubr.f32.mxu0 0.0
    %4494 = vmatmul.mubr.f32.gmra.mrb[0].mxu0 %v4372
    %v4495 = vpop.f32.mrb[0].mxu0
    %v4496 = vadd.f32 0.0, %v4495
    %v4497 = vpop.f32.mrb[0].mxu0
    %4498 = vdwg.mxu0
    %4499 = vmatprep.subr.mxu0 0.0
    %4500 = vmatpush1.msra.mxu0 %v4288
    %4501 = vmatprep.subr.mxu0 0.0
    %4502 = vmatpush1.msra.mxu0 %v4293
    %4503 = vmatprep.subr.mxu0 0.0
    %4504 = vmatpush1.msra.mxu0 %v4298
    %4505 = vmatprep.subr.mxu0 0.0
    %4506 = vmatpush1.msra.mxu0 %v4303
    %4507 = vmatprep.subr.mxu0 0.0
    %4508 = vmatpush1.msra.mxu0 0.0
    %4509 = vmatprep.subr.mxu0 0.0
    %4510 = vmatpush1.msra.mxu0 0.0
    %4511 = vmatprep.subr.mxu0 0.0
    %4512 = vmatpush1.msra.mxu0 0.0
    %4513 = vmatprep.subr.mxu0 0.0
    %4514 = vmatpush1.msra.mxu0 0.0
    %4515 = vmatprep.subr.mxu0 0.0
    %4516 = vmatpush1.msra.mxu0 0.0
    %4517 = vmatprep.subr.mxu0 0.0
    %4518 = vmatpush1.msra.mxu0 0.0
    %4519 = vmatprep.subr.mxu0 0.0
    %4520 = vmatpush1.msra.mxu0 0.0
    %4521 = vmatprep.subr.mxu0 0.0
    %4522 = vmatpush1.msra.mxu0 0.0
    %4523 = vmatprep.subr.mxu0 0.0
    %4524 = vmatpush1.msra.mxu0 0.0
    %4525 = vmatprep.subr.mxu0 0.0
    %4526 = vmatpush1.msra.mxu0 0.0
    %4527 = vmatprep.subr.mxu0 0.0
    %4528 = vmatpush1.msra.mxu0 0.0
    %4529 = vmatprep.subr.mxu0 0.0
    %4530 = vmatpush1.msra.mxu0 0.0
    %4531 = vmatprep.subr.mxu0 0.0
    %4532 = vmatpush1.msra.mxu0 0.0
    %4533 = vmatprep.subr.mxu0 0.0
    %4534 = vmatpush1.msra.mxu0 0.0
    %4535 = vmatprep.subr.mxu0 0.0
    %4536 = vmatpush1.msra.mxu0 0.0
    %4537 = vmatprep.subr.mxu0 0.0
    %4538 = vmatpush1.msra.mxu0 0.0
    %4539 = vmatprep.subr.mxu0 0.0
    %4540 = vmatpush1.msra.mxu0 0.0
    %4541 = vmatprep.subr.mxu0 0.0
    %4542 = vmatpush1.msra.mxu0 0.0
    %4543 = vmatprep.subr.mxu0 0.0
    %4544 = vmatpush1.msra.mxu0 0.0
    %4545 = vmatprep.subr.mxu0 0.0
    %4546 = vmatpush1.msra.mxu0 0.0
    %4547 = vmatprep.subr.mxu0 0.0
    %4548 = vmatpush1.msra.mxu0 0.0
    %4549 = vmatprep.subr.mxu0 0.0
    %4550 = vmatpush1.msra.mxu0 0.0
    %4551 = vmatprep.subr.mxu0 0.0
    %4552 = vmatpush1.msra.mxu0 0.0
    %4553 = vmatprep.subr.mxu0 0.0
    %4554 = vmatpush1.msra.mxu0 0.0
    %4555 = vmatprep.subr.mxu0 0.0
    %4556 = vmatpush1.msra.mxu0 0.0
    %4557 = vmatprep.subr.mxu0 0.0
    %4558 = vmatpush1.msra.mxu0 0.0
    %4559 = vmatprep.subr.mxu0 0.0
    %4560 = vmatpush1.msra.mxu0 0.0
    %4561 = vmatprep.subr.mxu0 0.0
    %4562 = vmatpush1.msra.mxu0 0.0
    %4563 = vmatprep.mubr.f32.mxu0 0.0
    %4564 = vmatmul.mubr.f32.gmra.mrb[0].mxu0 %v4339
    %v4565 = vpop.f32.mrb[0].mxu0
    %v4566 = vadd.f32 0.0, %v4565
    %v4567 = vpop.f32.mrb[0].mxu0
    %4568 = vmatprep.mubr.f32.mxu0 0.0
    %4569 = vmatmul.mubr.f32.gmra.mrb[0].mxu0 %v4342
    %v4570 = vpop.f32.mrb[0].mxu0
    %v4571 = vadd.f32 0.0, %v4570
    %v4572 = vpop.f32.mrb[0].mxu0
    %4573 = vmatprep.mubr.f32.mxu0 0.0
    %4574 = vmatmul.mubr.f32.gmra.mrb[0].mxu0 %v4345
    %v4575 = vpop.f32.mrb[0].mxu0
    %v4576 = vadd.f32 0.0, %v4575
    %v4577 = vpop.f32.mrb[0].mxu0
    %4578 = vmatprep.mubr.f32.mxu0 0.0
    %4579 = vmatmul.mubr.f32.gmra.mrb[0].mxu0 %v4348
    %v4580 = vpop.f32.mrb[0].mxu0
    %v4581 = vadd.f32 0.0, %v4580
    %v4582 = vpop.f32.mrb[0].mxu0
    %4583 = vmatprep.mubr.f32.mxu0 0.0
    %4584 = vmatmul.mubr.f32.gmra.mrb[0].mxu0 %v4351
    %v4585 = vpop.f32.mrb[0].mxu0
    %v4586 = vadd.f32 0.0, %v4585
    %v4587 = vpop.f32.mrb[0].mxu0
    %4588 = vmatprep.mubr.f32.mxu0 0.0
    %4589 = vmatmul.mubr.f32.gmra.mrb[0].mxu0 %v4354
    %v4590 = vpop.f32.mrb[0].mxu0
    %v4591 = vadd.f32 0.0, %v4590
    %v4592 = vpop.f32.mrb[0].mxu0
    %4593 = vmatprep.mubr.f32.mxu0 0.0
    %4594 = vmatmul.mubr.f32.gmra.mrb[0].mxu0 %v4357
    %v4595 = vpop.f32.mrb[0].mxu0
    %v4596 = vadd.f32 0.0, %v4595
    %v4597 = vpop.f32.mrb[0].mxu0
    %4598 = vmatprep.mubr.f32.mxu0 0.0
    %4599 = vmatmul.mubr.f32.gmra.mrb[0].mxu0 %v4360
    %v4600 = vpop.f32.mrb[0].mxu0
    %v4601 = vadd.f32 0.0, %v4600
    %v4602 = vpop.f32.mrb[0].mxu0
    %4603 = vmatprep.mubr.f32.mxu0 0.0
    %4604 = vmatmul.mubr.f32.gmra.mrb[0].mxu0 %v4363
    %v4605 = vpop.f32.mrb[0].mxu0
    %v4606 = vadd.f32 0.0, %v4605
    %v4607 = vpop.f32.mrb[0].mxu0
    %4608 = vmatprep.mubr.f32.mxu0 0.0
    %4609 = vmatmul.mubr.f32.gmra.mrb[0].mxu0 %v4366
    %v4610 = vpop.f32.mrb[0].mxu0
    %v4611 = vadd.f32 0.0, %v4610
    %v4612 = vpop.f32.mrb[0].mxu0
    %4613 = vmatprep.mubr.f32.mxu0 0.0
    %4614 = vmatmul.mubr.f32.gmra.mrb[0].mxu0 %v4369
    %v4615 = vpop.f32.mrb[0].mxu0
    %v4616 = vadd.f32 0.0, %v4615
    %v4617 = vpop.f32.mrb[0].mxu0
    %4618 = vmatprep.mubr.f32.mxu0 0.0
    %4619 = vmatmul.mubr.f32.gmra.mrb[0].mxu0 %v4372
    %v4620 = vpop.f32.mrb[0].mxu0
    %v4621 = vadd.f32 0.0, %v4620
    %v4622 = vpop.f32.mrb[0].mxu0
    %4623 = vdwg.mxu0
    %v4624 = vld [vmem:[%s3] sm:$0xff]
    %v4625 = vld [vmem:[%s3 + $0x8] sm:$0xff]
    %v4626 = vld [vmem:[%s3 + $0x10] sm:$0xff]
    %v4627 = vld [vmem:[%s3 + $0x18] sm:$0xff]
    %v4628 = vld [vmem:[%s3 + $0x20] sm:$0xff]
    %v4629 = vld [vmem:[%s3 + $0x28] sm:$0xff]
    %v4630 = vld [vmem:[%s3 + $0x30] sm:$0xff]
    %v4631 = vld [vmem:[%s3 + $0x38] sm:$0xff]
    %v4632 = vld [vmem:[%s3 + $0x40] sm:$0xff]
    %v4633 = vld [vmem:[%s3 + $0x48] sm:$0xff]
    %v4634 = vld [vmem:[%s3 + $0x50] sm:$0xff]
    %v4635 = vld [vmem:[%s3 + $0x58] sm:$0xff]
    %v4636 = vsel %vm75, %v4624, 0.0
    %4637 = vadd.xlane.f32.xlu0 %v4636
    %v4638 = vpop.xlane.xlu0 %4637
    %v4639 = vsel %vm75, %v4625, 0.0
    %4640 = vadd.xlane.f32.xlu0 %v4639
    %v4641 = vpop.xlane.xlu0 %4640
    %v4642 = vsel %vm75, %v4626, 0.0
    %4643 = vadd.xlane.f32.xlu0 %v4642
    %v4644 = vpop.xlane.xlu0 %4643
    %v4645 = vsel %vm75, %v4627, 0.0
    %4646 = vadd.xlane.f32.xlu0 %v4645
    %v4647 = vpop.xlane.xlu0 %4646
    %v4648 = vsel %vm75, %v4628, 0.0
    %4649 = vadd.xlane.f32.xlu0 %v4648
    %v4650 = vpop.xlane.xlu0 %4649
    %v4651 = vsel %vm75, %v4629, 0.0
    %4652 = vadd.xlane.f32.xlu0 %v4651
    %v4653 = vpop.xlane.xlu0 %4652
    %v4654 = vsel %vm75, %v4630, 0.0
    %4655 = vadd.xlane.f32.xlu0 %v4654
    %v4656 = vpop.xlane.xlu0 %4655
    %v4657 = vsel %vm75, %v4631, 0.0
    %4658 = vadd.xlane.f32.xlu0 %v4657
    %v4659 = vpop.xlane.xlu0 %4658
    %v4660 = vsel %vm75, %v4632, 0.0
    %4661 = vadd.xlane.f32.xlu0 %v4660
    %v4662 = vpop.xlane.xlu0 %4661
    %v4663 = vsel %vm75, %v4633, 0.0
    %4664 = vadd.xlane.f32.xlu0 %v4663
    %v4665 = vpop.xlane.xlu0 %4664
    %v4666 = vsel %vm75, %v4634, 0.0
    %4667 = vadd.xlane.f32.xlu0 %v4666
    %v4668 = vpop.xlane.xlu0 %4667
    %v4669 = vsel %vm75, %v4635, 0.0
    %4670 = vadd.xlane.f32.xlu0 %v4669
    %v4671 = vpop.xlane.xlu0 %4670
    %v4672 = vmul.f32 %v4638, %v88
    %v4673 = vmul.f32 %v4641, %v88
    %v4674 = vmul.f32 %v4644, %v88
    %v4675 = vmul.f32 %v4647, %v88
    %v4676 = vmul.f32 %v4650, %v88
    %v4677 = vmul.f32 %v4653, %v88
    %v4678 = vmul.f32 %v4656, %v88
    %v4679 = vmul.f32 %v4659, %v88
    %v4680 = vmul.f32 %v4662, %v88
    %v4681 = vmul.f32 %v4665, %v88
    %v4682 = vmul.f32 %v4668, %v88
    %v4683 = vmul.f32 %v4671, %v88
    %v4684 = vsub.f32 %v4624, %v4672
    %v4685 = vsub.f32 %v4625, %v4673
    %v4686 = vsub.f32 %v4626, %v4674
    %v4687 = vsub.f32 %v4627, %v4675
    %v4688 = vsub.f32 %v4628, %v4676
    %v4689 = vsub.f32 %v4629, %v4677
    %v4690 = vsub.f32 %v4630, %v4678
    %v4691 = vsub.f32 %v4631, %v4679
    %v4692 = vsub.f32 %v4632, %v4680
    %v4693 = vsub.f32 %v4633, %v4681
    %v4694 = vsub.f32 %v4634, %v4682
    %v4695 = vsub.f32 %v4635, %v4683
    %v4696 = vmul.f32 %v4684, %v4684
    %v4697 = vmul.f32 %v4685, %v4685
    %v4698 = vmul.f32 %v4686, %v4686
    %v4699 = vmul.f32 %v4687, %v4687
    %v4700 = vmul.f32 %v4688, %v4688
    %v4701 = vmul.f32 %v4689, %v4689
    %v4702 = vmul.f32 %v4690, %v4690
    %v4703 = vmul.f32 %v4691, %v4691
    %v4704 = vmul.f32 %v4692, %v4692
    %v4705 = vmul.f32 %v4693, %v4693
    %v4706 = vmul.f32 %v4694, %v4694
    %v4707 = vmul.f32 %v4695, %v4695
    %v4708 = vsel %vm75, %v4696, 0.0
    %4709 = vadd.xlane.f32.xlu0 %v4708
    %v4710 = vpop.xlane.xlu0 %4709
    %v4711 = vsel %vm75, %v4697, 0.0
    %4712 = vadd.xlane.f32.xlu0 %v4711
    %v4713 = vpop.xlane.xlu0 %4712
    %v4714 = vsel %vm75, %v4698, 0.0
    %4715 = vadd.xlane.f32.xlu0 %v4714
    %v4716 = vpop.xlane.xlu0 %4715
    %v4717 = vsel %vm75, %v4699, 0.0
    %4718 = vadd.xlane.f32.xlu0 %v4717
    %v4719 = vpop.xlane.xlu0 %4718
    %v4720 = vsel %vm75, %v4700, 0.0
    %4721 = vadd.xlane.f32.xlu0 %v4720
    %v4722 = vpop.xlane.xlu0 %4721
    %v4723 = vsel %vm75, %v4701, 0.0
    %4724 = vadd.xlane.f32.xlu0 %v4723
    %v4725 = vpop.xlane.xlu0 %4724
    %v4726 = vsel %vm75, %v4702, 0.0
    %4727 = vadd.xlane.f32.xlu0 %v4726
    %v4728 = vpop.xlane.xlu0 %4727
    %v4729 = vsel %vm75, %v4703, 0.0
    %4730 = vadd.xlane.f32.xlu0 %v4729
    %v4731 = vpop.xlane.xlu0 %4730
    %v4732 = vsel %vm75, %v4704, 0.0
    %4733 = vadd.xlane.f32.xlu0 %v4732
    %v4734 = vpop.xlane.xlu0 %4733
    %v4735 = vsel %vm75, %v4705, 0.0
    %4736 = vadd.xlane.f32.xlu0 %v4735
    %v4737 = vpop.xlane.xlu0 %4736
    %v4738 = vsel %vm75, %v4706, 0.0
    %4739 = vadd.xlane.f32.xlu0 %v4738
    %v4740 = vpop.xlane.xlu0 %4739
    %v4741 = vsel %vm75, %v4707, 0.0
    %4742 = vadd.xlane.f32.xlu0 %v4741
    %v4743 = vpop.xlane.xlu0 %4742
    %v4744 = vmul.f32 %v4710, %v88
    %v4745 = vmul.f32 %v4713, %v88
    %v4746 = vmul.f32 %v4716, %v88
    %v4747 = vmul.f32 %v4719, %v88
    %v4748 = vmul.f32 %v4722, %v88
    %v4749 = vmul.f32 %v4725, %v88
    %v4750 = vmul.f32 %v4728, %v88
    %v4751 = vmul.f32 %v4731, %v88
    %v4752 = vmul.f32 %v4734, %v88
    %v4753 = vmul.f32 %v4737, %v88
    %v4754 = vmul.f32 %v4740, %v88
    %v4755 = vmul.f32 %v4743, %v88
    %v4756 = vadd.f32 %v4744, 1e-05
    %v4757 = vadd.f32 %v4745, 1e-05
    %v4758 = vadd.f32 %v4746, 1e-05
    %v4759 = vadd.f32 %v4747, 1e-05
    %v4760 = vadd.f32 %v4748, 1e-05
    %v4761 = vadd.f32 %v4749, 1e-05
    %v4762 = vadd.f32 %v4750, 1e-05
    %v4763 = vadd.f32 %v4751, 1e-05
    %v4764 = vadd.f32 %v4752, 1e-05
    %v4765 = vadd.f32 %v4753, 1e-05
    %v4766 = vadd.f32 %v4754, 1e-05
    %v4767 = vadd.f32 %v4755, 1e-05
    %v4768 = vrsqrt.pop %v4756
    %v4769 = vrsqrt.pop %v4757
    %v4770 = vrsqrt.pop %v4758
    %v4771 = vrsqrt.pop %v4759
    %v4772 = vrsqrt.pop %v4760
    %v4773 = vrsqrt.pop %v4761
    %v4774 = vrsqrt.pop %v4762
    %v4775 = vrsqrt.pop %v4763
    %v4776 = vrsqrt.pop %v4764
    %v4777 = vrsqrt.pop %v4765
    %v4778 = vrsqrt.pop %v4766
    %v4779 = vrsqrt.pop %v4767
    %v4780 = vmul.f32 %v4684, %v4768
    %v4781 = vmul.f32 %v4685, %v4769
    %v4782 = vmul.f32 %v4686, %v4770
    %v4783 = vmul.f32 %v4687, %v4771
    %v4784 = vmul.f32 %v4688, %v4772
    %v4785 = vmul.f32 %v4689, %v4773
    %v4786 = vmul.f32 %v4690, %v4774
    %v4787 = vmul.f32 %v4691, %v4775
    %v4788 = vmul.f32 %v4692, %v4776
    %v4789 = vmul.f32 %v4693, %v4777
    %v4790 = vmul.f32 %v4694, %v4778
    %v4791 = vmul.f32 %v4695, %v4779
    %v4792 = vlaneseq
    %v4793 = vshrl.u32 %v4792, 7
    %v4794 = vsub.s32 1, %v4793
    %v4795 = vrot.slane %v65, %v4794
    %v4796 = vmul.f32 %v4780, %v4795
    %v4797 = vmul.f32 %v4781, %v4795
    %v4798 = vmul.f32 %v4782, %v4795
    %v4799 = vmul.f32 %v4783, %v4795
    %v4800 = vmul.f32 %v4784, %v4795
    %v4801 = vmul.f32 %v4785, %v4795
    %v4802 = vmul.f32 %v4786, %v4795
    %v4803 = vmul.f32 %v4787, %v4795
    %v4804 = vmul.f32 %v4788, %v4795
    %v4805 = vmul.f32 %v4789, %v4795
    %v4806 = vmul.f32 %v4790, %v4795
    %v4807 = vmul.f32 %v4791, %v4795
    %v4808 = vlaneseq
    %v4809 = vshrl.u32 %v4808, 7
    %v4810 = vsub.s32 1, %v4809
    %v4811 = vrot.slane %v66, %v4810
    %v4812 = vadd.f32 %v4796, %v4811
    %v4813 = vadd.f32 %v4797, %v4811
    %v4814 = vadd.f32 %v4798, %v4811
    %v4815 = vadd.f32 %v4799, %v4811
    %v4816 = vadd.f32 %v4800, %v4811
    %v4817 = vadd.f32 %v4801, %v4811
    %v4818 = vadd.f32 %v4802, %v4811
    %v4819 = vadd.f32 %v4803, %v4811
    %v4820 = vadd.f32 %v4804, %v4811
    %v4821 = vadd.f32 %v4805, %v4811
    %v4822 = vadd.f32 %v4806, %v4811
    %v4823 = vadd.f32 %v4807, %v4811
    %s4824 = scalar_lea.vmem [#allocation2], 320
    %v4825 = vld [vmem:[%s4824] sm:$0xff]
    %v4826 = vld [vmem:[%s4824 + $0x8] sm:$0xff]
    %v4827 = vld [vmem:[%s4824 + $0x10] sm:$0xff]
    %v4828 = vld [vmem:[%s4824 + $0x18] sm:$0xff]
    %v4829 = vld [vmem:[%s12 + $0x7] sm:$0x1]
    %v4830 = vlaneseq
    %v4831 = vshrl.u32 %v4830, 7
    %v4832 = vsub.s32 0, %v4831
    %v4833 = vrot.slane %v4829, %v4832
    %v4835 = vsel %vm75, %v4812, 0
    %v4838 = vsel %vm75, %v4813, 0
    %v4841 = vsel %vm75, %v4814, 0
    %v4844 = vsel %vm75, %v4815, 0
    %v4847 = vsel %vm75, %v4816, 0
    %v4850 = vsel %vm75, %v4817, 0
    %v4853 = vsel %vm75, %v4818, 0
    %v4856 = vsel %vm75, %v4819, 0
    %v4859 = vsel %vm75, %v4820, 0
    %v4862 = vsel %vm75, %v4821, 0
    %v4865 = vsel %vm75, %v4822, 0
    %v4868 = vsel %vm75, %v4823, 0
    %4870 = vmatprep.subr.mxu0 0.0
    %4871 = vmatpush1.msra.mxu0 %v4825
    %4872 = vmatprep.subr.mxu0 0.0
    %4873 = vmatpush1.msra.mxu0 %v4826
    %4874 = vmatprep.subr.mxu0 0.0
    %4875 = vmatpush1.msra.mxu0 %v4827
    %4876 = vmatprep.subr.mxu0 0.0
    %4877 = vmatpush1.msra.mxu0 %v4828
    %4878 = vmatprep.subr.mxu0 0.0
    %4879 = vmatpush1.msra.mxu0 0.0
    %4880 = vmatprep.subr.mxu0 0.0
    %4881 = vmatpush1.msra.mxu0 0.0
    %4882 = vmatprep.subr.mxu0 0.0
    %4883 = vmatpush1.msra.mxu0 0.0
    %4884 = vmatprep.subr.mxu0 0.0
    %4885 = vmatpush1.msra.mxu0 0.0
    %4886 = vmatprep.subr.mxu0 0.0
    %4887 = vmatpush1.msra.mxu0 0.0
    %4888 = vmatprep.subr.mxu0 0.0
    %4889 = vmatpush1.msra.mxu0 0.0
    %4890 = vmatprep.subr.mxu0 0.0
    %4891 = vmatpush1.msra.mxu0 0.0
    %4892 = vmatprep.subr.mxu0 0.0
    %4893 = vmatpush1.msra.mxu0 0.0
    %4894 = vmatprep.subr.mxu0 0.0
    %4895 = vmatpush1.msra.mxu0 0.0
    %4896 = vmatprep.subr.mxu0 0.0
    %4897 = vmatpush1.msra.mxu0 0.0
    %4898 = vmatprep.subr.mxu0 0.0
    %4899 = vmatpush1.msra.mxu0 0.0
    %4900 = vmatprep.subr.mxu0 0.0
    %4901 = vmatpush1.msra.mxu0 0.0
    %4902 = vmatprep.subr.mxu0 0.0
    %4903 = vmatpush1.msra.mxu0 0.0
    %4904 = vmatprep.subr.mxu0 0.0
    %4905 = vmatpush1.msra.mxu0 0.0
    %4906 = vmatprep.subr.mxu0 0.0
    %4907 = vmatpush1.msra.mxu0 0.0
    %4908 = vmatprep.subr.mxu0 0.0
    %4909 = vmatpush1.msra.mxu0 0.0
    %4910 = vmatprep.subr.mxu0 0.0
    %4911 = vmatpush1.msra.mxu0 0.0
    %4912 = vmatprep.subr.mxu0 0.0
    %4913 = vmatpush1.msra.mxu0 0.0
    %4914 = vmatprep.subr.mxu0 0.0
    %4915 = vmatpush1.msra.mxu0 0.0
    %4916 = vmatprep.subr.mxu0 0.0
    %4917 = vmatpush1.msra.mxu0 0.0
    %4918 = vmatprep.subr.mxu0 0.0
    %4919 = vmatpush1.msra.mxu0 0.0
    %4920 = vmatprep.subr.mxu0 0.0
    %4921 = vmatpush1.msra.mxu0 0.0
    %4922 = vmatprep.subr.mxu0 0.0
    %4923 = vmatpush1.msra.mxu0 0.0
    %4924 = vmatprep.subr.mxu0 0.0
    %4925 = vmatpush1.msra.mxu0 0.0
    %4926 = vmatprep.subr.mxu0 0.0
    %4927 = vmatpush1.msra.mxu0 0.0
    %4928 = vmatprep.subr.mxu0 0.0
    %4929 = vmatpush1.msra.mxu0 0.0
    %4930 = vmatprep.subr.mxu0 0.0
    %4931 = vmatpush1.msra.mxu0 0.0
    %4932 = vmatprep.subr.mxu0 0.0
    %4933 = vmatpush1.msra.mxu0 0.0
    %4934 = vmatprep.mubr.f32.mxu0 0.0
    %4935 = vmatmul.mubr.f32.gmra.mrb[0].mxu0 %v4835
    %v4936 = vpop.f32.mrb[0].mxu0
    %v4937 = vadd.f32 %v4833, %v4936
    %v4938 = vpop.f32.mrb[0].mxu0
    %4939 = vmatprep.mubr.f32.mxu0 0.0
    %4940 = vmatmul.mubr.f32.gmra.mrb[0].mxu0 %v4838
    %v4941 = vpop.f32.mrb[0].mxu0
    %v4942 = vadd.f32 %v4833, %v4941
    %v4943 = vpop.f32.mrb[0].mxu0
    %4944 = vmatprep.mubr.f32.mxu0 0.0
    %4945 = vmatmul.mubr.f32.gmra.mrb[0].mxu0 %v4841
    %v4946 = vpop.f32.mrb[0].mxu0
    %v4947 = vadd.f32 %v4833, %v4946
    %v4948 = vpop.f32.mrb[0].mxu0
    %4949 = vmatprep.mubr.f32.mxu0 0.0
    %4950 = vmatmul.mubr.f32.gmra.mrb[0].mxu0 %v4844
    %v4951 = vpop.f32.mrb[0].mxu0
    %v4952 = vadd.f32 %v4833, %v4951
    %v4953 = vpop.f32.mrb[0].mxu0
    %4954 = vmatprep.mubr.f32.mxu0 0.0
    %4955 = vmatmul.mubr.f32.gmra.mrb[0].mxu0 %v4847
    %v4956 = vpop.f32.mrb[0].mxu0
    %v4957 = vadd.f32 %v4833, %v4956
    %v4958 = vpop.f32.mrb[0].mxu0
    %4959 = vmatprep.mubr.f32.mxu0 0.0
    %4960 = vmatmul.mubr.f32.gmra.mrb[0].mxu0 %v4850
    %v4961 = vpop.f32.mrb[0].mxu0
    %v4962 = vadd.f32 %v4833, %v4961
    %v4963 = vpop.f32.mrb[0].mxu0
    %4964 = vmatprep.mubr.f32.mxu0 0.0
    %4965 = vmatmul.mubr.f32.gmra.mrb[0].mxu0 %v4853
    %v4966 = vpop.f32.mrb[0].mxu0
    %v4967 = vadd.f32 %v4833, %v4966
    %v4968 = vpop.f32.mrb[0].mxu0
    %4969 = vmatprep.mubr.f32.mxu0 0.0
    %4970 = vmatmul.mubr.f32.gmra.mrb[0].mxu0 %v4856
    %v4971 = vpop.f32.mrb[0].mxu0
    %v4972 = vadd.f32 %v4833, %v4971
    %v4973 = vpop.f32.mrb[0].mxu0
    %4974 = vmatprep.mubr.f32.mxu0 0.0
    %4975 = vmatmul.mubr.f32.gmra.mrb[0].mxu0 %v4859
    %v4976 = vpop.f32.mrb[0].mxu0
    %v4977 = vadd.f32 %v4833, %v4976
    %v4978 = vpop.f32.mrb[0].mxu0
    %4979 = vmatprep.mubr.f32.mxu0 0.0
    %4980 = vmatmul.mubr.f32.gmra.mrb[0].mxu0 %v4862
    %v4981 = vpop.f32.mrb[0].mxu0
    %v4982 = vadd.f32 %v4833, %v4981
    %v4983 = vpop.f32.mrb[0].mxu0
    %4984 = vmatprep.mubr.f32.mxu0 0.0
    %4985 = vmatmul.mubr.f32.gmra.mrb[0].mxu0 %v4865
    %v4986 = vpop.f32.mrb[0].mxu0
    %v4987 = vadd.f32 %v4833, %v4986
    %v4988 = vpop.f32.mrb[0].mxu0
    %4989 = vmatprep.mubr.f32.mxu0 0.0
    %4990 = vmatmul.mubr.f32.gmra.mrb[0].mxu0 %v4868
    %v4991 = vpop.f32.mrb[0].mxu0
    %v4992 = vadd.f32 %v4833, %v4991
    %v4993 = vpop.f32.mrb[0].mxu0
    %4994 = vdwg.mxu0
    %s4995 = scalar_lea.vmem [#allocation2], 352
    %v4996 = vld [vmem:[%s4995] sm:$0xff]
    %v4997 = vld [vmem:[%s4995 + $0x8] sm:$0xff]
    %v4998 = vld [vmem:[%s4995 + $0x10] sm:$0xff]
    %v4999 = vld [vmem:[%s4995 + $0x18] sm:$0xff]
    %v5000 = vld [vmem:[%s12 + $0x8] sm:$0x1]
    %v5001 = vlaneseq
    %v5002 = vshrl.u32 %v5001, 7
    %v5003 = vsub.s32 0, %v5002
    %v5004 = vrot.slane %v5000, %v5003
    %5005 = vmatprep.subr.mxu0 0.0
    %5006 = vmatpush1.msra.mxu0 %v4996
    %5007 = vmatprep.subr.mxu0 0.0
    %5008 = vmatpush1.msra.mxu0 %v4997
    %5009 = vmatprep.subr.mxu0 0.0
    %5010 = vmatpush1.msra.mxu0 %v4998
    %5011 = vmatprep.subr.mxu0 0.0
    %5012 = vmatpush1.msra.mxu0 %v4999
    %5013 = vmatprep.subr.mxu0 0.0
    %5014 = vmatpush1.msra.mxu0 0.0
    %5015 = vmatprep.subr.mxu0 0.0
    %5016 = vmatpush1.msra.mxu0 0.0
    %5017 = vmatprep.subr.mxu0 0.0
    %5018 = vmatpush1.msra.mxu0 0.0
    %5019 = vmatprep.subr.mxu0 0.0
    %5020 = vmatpush1.msra.mxu0 0.0
    %5021 = vmatprep.subr.mxu0 0.0
    %5022 = vmatpush1.msra.mxu0 0.0
    %5023 = vmatprep.subr.mxu0 0.0
    %5024 = vmatpush1.msra.mxu0 0.0
    %5025 = vmatprep.subr.mxu0 0.0
    %5026 = vmatpush1.msra.mxu0 0.0
    %5027 = vmatprep.subr.mxu0 0.0
    %5028 = vmatpush1.msra.mxu0 0.0
    %5029 = vmatprep.subr.mxu0 0.0
    %5030 = vmatpush1.msra.mxu0 0.0
    %5031 = vmatprep.subr.mxu0 0.0
    %5032 = vmatpush1.msra.mxu0 0.0
    %5033 = vmatprep.subr.mxu0 0.0
    %5034 = vmatpush1.msra.mxu0 0.0
    %5035 = vmatprep.subr.mxu0 0.0
    %5036 = vmatpush1.msra.mxu0 0.0
    %5037 = vmatprep.subr.mxu0 0.0
    %5038 = vmatpush1.msra.mxu0 0.0
    %5039 = vmatprep.subr.mxu0 0.0
    %5040 = vmatpush1.msra.mxu0 0.0
    %5041 = vmatprep.subr.mxu0 0.0
    %5042 = vmatpush1.msra.mxu0 0.0
    %5043 = vmatprep.subr.mxu0 0.0
    %5044 = vmatpush1.msra.mxu0 0.0
    %5045 = vmatprep.subr.mxu0 0.0
    %5046 = vmatpush1.msra.mxu0 0.0
    %5047 = vmatprep.subr.mxu0 0.0
    %5048 = vmatpush1.msra.mxu0 0.0
    %5049 = vmatprep.subr.mxu0 0.0
    %5050 = vmatpush1.msra.mxu0 0.0
    %5051 = vmatprep.subr.mxu0 0.0
    %5052 = vmatpush1.msra.mxu0 0.0
    %5053 = vmatprep.subr.mxu0 0.0
    %5054 = vmatpush1.msra.mxu0 0.0
    %5055 = vmatprep.subr.mxu0 0.0
    %5056 = vmatpush1.msra.mxu0 0.0
    %5057 = vmatprep.subr.mxu0 0.0
    %5058 = vmatpush1.msra.mxu0 0.0
    %5059 = vmatprep.subr.mxu0 0.0
    %5060 = vmatpush1.msra.mxu0 0.0
    %5061 = vmatprep.subr.mxu0 0.0
    %5062 = vmatpush1.msra.mxu0 0.0
    %5063 = vmatprep.subr.mxu0 0.0
    %5064 = vmatpush1.msra.mxu0 0.0
    %5065 = vmatprep.subr.mxu0 0.0
    %5066 = vmatpush1.msra.mxu0 0.0
    %5067 = vmatprep.subr.mxu0 0.0
    %5068 = vmatpush1.msra.mxu0 0.0
    %5069 = vmatprep.mubr.f32.mxu0 0.0
    %5070 = vmatmul.mubr.f32.gmra.mrb[0].mxu0 %v4835
    %v5071 = vpop.f32.mrb[0].mxu0
    %v5072 = vadd.f32 %v5004, %v5071
    %v5073 = vpop.f32.mrb[0].mxu0
    %5074 = vmatprep.mubr.f32.mxu0 0.0
    %5075 = vmatmul.mubr.f32.gmra.mrb[0].mxu0 %v4838
    %v5076 = vpop.f32.mrb[0].mxu0
    %v5077 = vadd.f32 %v5004, %v5076
    %v5078 = vpop.f32.mrb[0].mxu0
    %5079 = vmatprep.mubr.f32.mxu0 0.0
    %5080 = vmatmul.mubr.f32.gmra.mrb[0].mxu0 %v4841
    %v5081 = vpop.f32.mrb[0].mxu0
    %v5082 = vadd.f32 %v5004, %v5081
    %v5083 = vpop.f32.mrb[0].mxu0
    %5084 = vmatprep.mubr.f32.mxu0 0.0
    %5085 = vmatmul.mubr.f32.gmra.mrb[0].mxu0 %v4844
    %v5086 = vpop.f32.mrb[0].mxu0
    %v5087 = vadd.f32 %v5004, %v5086
    %v5088 = vpop.f32.mrb[0].mxu0
    %5089 = vmatprep.mubr.f32.mxu0 0.0
    %5090 = vmatmul.mubr.f32.gmra.mrb[0].mxu0 %v4847
    %v5091 = vpop.f32.mrb[0].mxu0
    %v5092 = vadd.f32 %v5004, %v5091
    %v5093 = vpop.f32.mrb[0].mxu0
    %5094 = vmatprep.mubr.f32.mxu0 0.0
    %5095 = vmatmul.mubr.f32.gmra.mrb[0].mxu0 %v4850
    %v5096 = vpop.f32.mrb[0].mxu0
    %v5097 = vadd.f32 %v5004, %v5096
    %v5098 = vpop.f32.mrb[0].mxu0
    %5099 = vmatprep.mubr.f32.mxu0 0.0
    %5100 = vmatmul.mubr.f32.gmra.mrb[0].mxu0 %v4853
    %v5101 = vpop.f32.mrb[0].mxu0
    %v5102 = vadd.f32 %v5004, %v5101
    %v5103 = vpop.f32.mrb[0].mxu0
    %5104 = vmatprep.mubr.f32.mxu0 0.0
    %5105 = vmatmul.mubr.f32.gmra.mrb[0].mxu0 %v4856
    %v5106 = vpop.f32.mrb[0].mxu0
    %v5107 = vadd.f32 %v5004, %v5106
    %v5108 = vpop.f32.mrb[0].mxu0
    %5109 = vmatprep.mubr.f32.mxu0 0.0
    %5110 = vmatmul.mubr.f32.gmra.mrb[0].mxu0 %v4859
    %v5111 = vpop.f32.mrb[0].mxu0
    %v5112 = vadd.f32 %v5004, %v5111
    %v5113 = vpop.f32.mrb[0].mxu0
    %5114 = vmatprep.mubr.f32.mxu0 0.0
    %5115 = vmatmul.mubr.f32.gmra.mrb[0].mxu0 %v4862
    %v5116 = vpop.f32.mrb[0].mxu0
    %v5117 = vadd.f32 %v5004, %v5116
    %v5118 = vpop.f32.mrb[0].mxu0
    %5119 = vmatprep.mubr.f32.mxu0 0.0
    %5120 = vmatmul.mubr.f32.gmra.mrb[0].mxu0 %v4865
    %v5121 = vpop.f32.mrb[0].mxu0
    %v5122 = vadd.f32 %v5004, %v5121
    %v5123 = vpop.f32.mrb[0].mxu0
    %5124 = vmatprep.mubr.f32.mxu0 0.0
    %5125 = vmatmul.mubr.f32.gmra.mrb[0].mxu0 %v4868
    %v5126 = vpop.f32.mrb[0].mxu0
    %v5127 = vadd.f32 %v5004, %v5126
    %v5128 = vpop.f32.mrb[0].mxu0
    %5129 = vdwg.mxu0
    %v5130 = vld [vmem:[%s4] sm:$0xff]
    %v5131 = vld [vmem:[%s4 + $0x8] sm:$0xff]
    %v5132 = vld [vmem:[%s4 + $0x10] sm:$0xff]
    %v5133 = vsel %vm75, %v5130, 0.0
    %5134 = vadd.xlane.f32.xlu0 %v5133
    %v5135 = vpop.xlane.xlu0 %5134
    %v5136 = vsel %vm75, %v5131, 0.0
    %5137 = vadd.xlane.f32.xlu0 %v5136
    %v5138 = vpop.xlane.xlu0 %5137
    %v5139 = vsel %vm75, %v5132, 0.0
    %5140 = vadd.xlane.f32.xlu0 %v5139
    %v5141 = vpop.xlane.xlu0 %5140
    %v5142 = vmul.f32 %v5135, %v88
    %v5143 = vmul.f32 %v5138, %v88
    %v5144 = vmul.f32 %v5141, %v88
    %v5145 = vsub.f32 %v5130, %v5142
    %v5146 = vsub.f32 %v5131, %v5143
    %v5147 = vsub.f32 %v5132, %v5144
    %v5148 = vmul.f32 %v5145, %v5145
    %v5149 = vmul.f32 %v5146, %v5146
    %v5150 = vmul.f32 %v5147, %v5147
    %v5151 = vsel %vm75, %v5148, 0.0
    %5152 = vadd.xlane.f32.xlu0 %v5151
    %v5153 = vpop.xlane.xlu0 %5152
    %v5154 = vsel %vm75, %v5149, 0.0
    %5155 = vadd.xlane.f32.xlu0 %v5154
    %v5156 = vpop.xlane.xlu0 %5155
    %v5157 = vsel %vm75, %v5150, 0.0
    %5158 = vadd.xlane.f32.xlu0 %v5157
    %v5159 = vpop.xlane.xlu0 %5158
    %v5160 = vmul.f32 %v5153, %v88
    %v5161 = vmul.f32 %v5156, %v88
    %v5162 = vmul.f32 %v5159, %v88
    %v5163 = vadd.f32 %v5160, 1e-05
    %v5164 = vadd.f32 %v5161, 1e-05
    %v5165 = vadd.f32 %v5162, 1e-05
    %v5166 = vrsqrt.pop %v5163
    %v5167 = vrsqrt.pop %v5164
    %v5168 = vrsqrt.pop %v5165
    %v5169 = vmul.f32 %v5145, %v5166
    %v5170 = vmul.f32 %v5146, %v5167
    %v5171 = vmul.f32 %v5147, %v5168
    %v5172 = vlaneseq
    %v5173 = vshrl.u32 %v5172, 7
    %v5174 = vsub.s32 2, %v5173
    %v5175 = vrot.slane %v65, %v5174
    %v5176 = vmul.f32 %v5169, %v5175
    %v5177 = vmul.f32 %v5170, %v5175
    %v5178 = vmul.f32 %v5171, %v5175
    %v5179 = vlaneseq
    %v5180 = vshrl.u32 %v5179, 7
    %v5181 = vsub.s32 2, %v5180
    %v5182 = vrot.slane %v66, %v5181
    %v5183 = vadd.f32 %v5176, %v5182
    %v5184 = vadd.f32 %v5177, %v5182
    %v5185 = vadd.f32 %v5178, %v5182
    %s5186 = scalar_lea.vmem [#allocation2], 384
    %v5187 = vld [vmem:[%s5186] sm:$0xff]
    %v5188 = vld [vmem:[%s5186 + $0x8] sm:$0xff]
    %v5189 = vld [vmem:[%s5186 + $0x10] sm:$0xff]
    %v5190 = vld [vmem:[%s5186 + $0x18] sm:$0xff]
    %v5191 = vld [vmem:[%s12 + $0x9] sm:$0x1]
    %v5192 = vlaneseq
    %v5193 = vshrl.u32 %v5192, 7
    %v5194 = vsub.s32 0, %v5193
    %v5195 = vrot.slane %v5191, %v5194
    %v5197 = vsel %vm75, %v5183, 0
    %v5200 = vsel %vm75, %v5184, 0
    %v5203 = vsel %vm75, %v5185, 0
    %5205 = vmatprep.subr.mxu0 0.0
    %5206 = vmatpush1.msra.mxu0 %v5187
    %5207 = vmatprep.subr.mxu0 0.0
    %5208 = vmatpush1.msra.mxu0 %v5188
    %5209 = vmatprep.subr.mxu0 0.0
    %5210 = vmatpush1.msra.mxu0 %v5189
    %5211 = vmatprep.subr.mxu0 0.0
    %5212 = vmatpush1.msra.mxu0 %v5190
    %5213 = vmatprep.subr.mxu0 0.0
    %5214 = vmatpush1.msra.mxu0 0.0
    %5215 = vmatprep.subr.mxu0 0.0
    %5216 = vmatpush1.msra.mxu0 0.0
    %5217 = vmatprep.subr.mxu0 0.0
    %5218 = vmatpush1.msra.mxu0 0.0
    %5219 = vmatprep.subr.mxu0 0.0
    %5220 = vmatpush1.msra.mxu0 0.0
    %5221 = vmatprep.subr.mxu0 0.0
    %5222 = vmatpush1.msra.mxu0 0.0
    %5223 = vmatprep.subr.mxu0 0.0
    %5224 = vmatpush1.msra.mxu0 0.0
    %5225 = vmatprep.subr.mxu0 0.0
    %5226 = vmatpush1.msra.mxu0 0.0
    %5227 = vmatprep.subr.mxu0 0.0
    %5228 = vmatpush1.msra.mxu0 0.0
    %5229 = vmatprep.subr.mxu0 0.0
    %5230 = vmatpush1.msra.mxu0 0.0
    %5231 = vmatprep.subr.mxu0 0.0
    %5232 = vmatpush1.msra.mxu0 0.0
    %5233 = vmatprep.subr.mxu0 0.0
    %5234 = vmatpush1.msra.mxu0 0.0
    %5235 = vmatprep.subr.mxu0 0.0
    %5236 = vmatpush1.msra.mxu0 0.0
    %5237 = vmatprep.subr.mxu0 0.0
    %5238 = vmatpush1.msra.mxu0 0.0
    %5239 = vmatprep.subr.mxu0 0.0
    %5240 = vmatpush1.msra.mxu0 0.0
    %5241 = vmatprep.subr.mxu0 0.0
    %5242 = vmatpush1.msra.mxu0 0.0
    %5243 = vmatprep.subr.mxu0 0.0
    %5244 = vmatpush1.msra.mxu0 0.0
    %5245 = vmatprep.subr.mxu0 0.0
    %5246 = vmatpush1.msra.mxu0 0.0
    %5247 = vmatprep.subr.mxu0 0.0
    %5248 = vmatpush1.msra.mxu0 0.0
    %5249 = vmatprep.subr.mxu0 0.0
    %5250 = vmatpush1.msra.mxu0 0.0
    %5251 = vmatprep.subr.mxu0 0.0
    %5252 = vmatpush1.msra.mxu0 0.0
    %5253 = vmatprep.subr.mxu0 0.0
    %5254 = vmatpush1.msra.mxu0 0.0
    %5255 = vmatprep.subr.mxu0 0.0
    %5256 = vmatpush1.msra.mxu0 0.0
    %5257 = vmatprep.subr.mxu0 0.0
    %5258 = vmatpush1.msra.mxu0 0.0
    %5259 = vmatprep.subr.mxu0 0.0
    %5260 = vmatpush1.msra.mxu0 0.0
    %5261 = vmatprep.subr.mxu0 0.0
    %5262 = vmatpush1.msra.mxu0 0.0
    %5263 = vmatprep.subr.mxu0 0.0
    %5264 = vmatpush1.msra.mxu0 0.0
    %5265 = vmatprep.subr.mxu0 0.0
    %5266 = vmatpush1.msra.mxu0 0.0
    %5267 = vmatprep.subr.mxu0 0.0
    %5268 = vmatpush1.msra.mxu0 0.0
    %5269 = vmatprep.mubr.f32.mxu0 0.0
    %5270 = vmatmul.mubr.f32.gmra.mrb[0].mxu0 %v5197
    %v5271 = vpop.f32.mrb[0].mxu0
    %v5272 = vadd.f32 %v5195, %v5271
    %v5273 = vpop.f32.mrb[0].mxu0
    %5274 = vmatprep.mubr.f32.mxu0 0.0
    %5275 = vmatmul.mubr.f32.gmra.mrb[0].mxu0 %v5200
    %v5276 = vpop.f32.mrb[0].mxu0
    %v5277 = vadd.f32 %v5195, %v5276
    %v5278 = vpop.f32.mrb[0].mxu0
    %5279 = vmatprep.mubr.f32.mxu0 0.0
    %5280 = vmatmul.mubr.f32.gmra.mrb[0].mxu0 %v5203
    %v5281 = vpop.f32.mrb[0].mxu0
    %v5282 = vadd.f32 %v5195, %v5281
    %v5283 = vpop.f32.mrb[0].mxu0
    %5284 = vdwg.mxu0
    %v5285 = vld [vmem:[%s5] sm:$0xff]
    %v5286 = vld [vmem:[%s5 + $0x8] sm:$0xff]
    %v5287 = vld [vmem:[%s5 + $0x10] sm:$0xff]
    %s5288 = scalar_lea.vmem [#allocation2], 416
    %v5289 = vld [vmem:[%s5288] sm:$0xff]
    %v5290 = vld [vmem:[%s5288 + $0x8] sm:$0xff]
    %v5291 = vld [vmem:[%s5288 + $0x10] sm:$0xff]
    %v5292 = vld [vmem:[%s5288 + $0x18] sm:$0xff]
    %v5293 = vld [vmem:[%s12 + $0xa] sm:$0x1]
    %v5294 = vlaneseq
    %v5295 = vshrl.u32 %v5294, 7
    %v5296 = vsub.s32 0, %v5295
    %v5297 = vrot.slane %v5293, %v5296
    %v5299 = vsel %vm75, %v5285, 0
    %v5302 = vsel %vm75, %v5286, 0
    %v5305 = vsel %vm75, %v5287, 0
    %5307 = vmatprep.subr.mxu0 0.0
    %5308 = vmatpush1.msra.mxu0 %v5289
    %5309 = vmatprep.subr.mxu0 0.0
    %5310 = vmatpush1.msra.mxu0 %v5290
    %5311 = vmatprep.subr.mxu0 0.0
    %5312 = vmatpush1.msra.mxu0 %v5291
    %5313 = vmatprep.subr.mxu0 0.0
    %5314 = vmatpush1.msra.mxu0 %v5292
    %5315 = vmatprep.subr.mxu0 0.0
    %5316 = vmatpush1.msra.mxu0 0.0
    %5317 = vmatprep.subr.mxu0 0.0
    %5318 = vmatpush1.msra.mxu0 0.0
    %5319 = vmatprep.subr.mxu0 0.0
    %5320 = vmatpush1.msra.mxu0 0.0
    %5321 = vmatprep.subr.mxu0 0.0
    %5322 = vmatpush1.msra.mxu0 0.0
    %5323 = vmatprep.subr.mxu0 0.0
    %5324 = vmatpush1.msra.mxu0 0.0
    %5325 = vmatprep.subr.mxu0 0.0
    %5326 = vmatpush1.msra.mxu0 0.0
    %5327 = vmatprep.subr.mxu0 0.0
    %5328 = vmatpush1.msra.mxu0 0.0
    %5329 = vmatprep.subr.mxu0 0.0
    %5330 = vmatpush1.msra.mxu0 0.0
    %5331 = vmatprep.subr.mxu0 0.0
    %5332 = vmatpush1.msra.mxu0 0.0
    %5333 = vmatprep.subr.mxu0 0.0
    %5334 = vmatpush1.msra.mxu0 0.0
    %5335 = vmatprep.subr.mxu0 0.0
    %5336 = vmatpush1.msra.mxu0 0.0
    %5337 = vmatprep.subr.mxu0 0.0
    %5338 = vmatpush1.msra.mxu0 0.0
    %5339 = vmatprep.subr.mxu0 0.0
    %5340 = vmatpush1.msra.mxu0 0.0
    %5341 = vmatprep.subr.mxu0 0.0
    %5342 = vmatpush1.msra.mxu0 0.0
    %5343 = vmatprep.subr.mxu0 0.0
    %5344 = vmatpush1.msra.mxu0 0.0
    %5345 = vmatprep.subr.mxu0 0.0
    %5346 = vmatpush1.msra.mxu0 0.0
    %5347 = vmatprep.subr.mxu0 0.0
    %5348 = vmatpush1.msra.mxu0 0.0
    %5349 = vmatprep.subr.mxu0 0.0
    %5350 = vmatpush1.msra.mxu0 0.0
    %5351 = vmatprep.subr.mxu0 0.0
    %5352 = vmatpush1.msra.mxu0 0.0
    %5353 = vmatprep.subr.mxu0 0.0
    %5354 = vmatpush1.msra.mxu0 0.0
    %5355 = vmatprep.subr.mxu0 0.0
    %5356 = vmatpush1.msra.mxu0 0.0
    %5357 = vmatprep.subr.mxu0 0.0
    %5358 = vmatpush1.msra.mxu0 0.0
    %5359 = vmatprep.subr.mxu0 0.0
    %5360 = vmatpush1.msra.mxu0 0.0
    %5361 = vmatprep.subr.mxu0 0.0
    %5362 = vmatpush1.msra.mxu0 0.0
    %5363 = vmatprep.subr.mxu0 0.0
    %5364 = vmatpush1.msra.mxu0 0.0
    %5365 = vmatprep.subr.mxu0 0.0
    %5366 = vmatpush1.msra.mxu0 0.0
    %5367 = vmatprep.subr.mxu0 0.0
    %5368 = vmatpush1.msra.mxu0 0.0
    %5369 = vmatprep.subr.mxu0 0.0
    %5370 = vmatpush1.msra.mxu0 0.0
    %5371 = vmatprep.mubr.f32.mxu0 0.0
    %5372 = vmatmul.mubr.f32.gmra.mrb[0].mxu0 %v5299
    %v5373 = vpop.f32.mrb[0].mxu0
    %v5374 = vadd.f32 %v5297, %v5373
    %v5375 = vpop.f32.mrb[0].mxu0
    %5376 = vmatprep.mubr.f32.mxu0 0.0
    %5377 = vmatmul.mubr.f32.gmra.mrb[0].mxu0 %v5302
    %v5378 = vpop.f32.mrb[0].mxu0
    %v5379 = vadd.f32 %v5297, %v5378
    %v5380 = vpop.f32.mrb[0].mxu0
    %5381 = vmatprep.mubr.f32.mxu0 0.0
    %5382 = vmatmul.mubr.f32.gmra.mrb[0].mxu0 %v5305
    %v5383 = vpop.f32.mrb[0].mxu0
    %v5384 = vadd.f32 %v5297, %v5383
    %v5385 = vpop.f32.mrb[0].mxu0
    %5386 = vdwg.mxu0
    %v5387 = vld [vmem:[%s8] sm:$0xf]
    %v5388 = vld [vmem:[%s8 + $0x4] sm:$0xf]
    %v5389 = vld [vmem:[%s8 + $0x8] sm:$0xf]
    %v5390 = vld [vmem:[%s8 + $0xc] sm:$0xf]
    %v5391 = vld [vmem:[%s8 + $0x10] sm:$0xf]
    %v5392 = vld [vmem:[%s8 + $0x14] sm:$0xf]
    %v5393 = vld [vmem:[%s8 + $0x18] sm:$0xf]
    %v5394 = vld [vmem:[%s8 + $0x1c] sm:$0xf]
    %v5395 = vld [vmem:[%s8 + $0x20] sm:$0xf]
    %v5396 = vld [vmem:[%s8 + $0x24] sm:$0xf]
    %v5397 = vld [vmem:[%s8 + $0x28] sm:$0xf]
    %v5398 = vld [vmem:[%s8 + $0x2c] sm:$0xf]
    %v5399 = vunpack.c.l.bf16 %v5387
    %v5400 = vunpack.c.l.bf16 %v5388
    %v5401 = vunpack.c.l.bf16 %v5389
    %v5402 = vunpack.c.l.bf16 %v5390
    %v5403 = vunpack.c.l.bf16 %v5391
    %v5404 = vunpack.c.l.bf16 %v5392
    %v5405 = vunpack.c.l.bf16 %v5393
    %v5406 = vunpack.c.l.bf16 %v5394
    %v5407 = vunpack.c.l.bf16 %v5395
    %v5408 = vunpack.c.l.bf16 %v5396
    %v5409 = vunpack.c.l.bf16 %v5397
    %v5410 = vunpack.c.l.bf16 %v5398
    %vm5411 = vcmask 195584
    %v5413 = vsel %vm5411, %v5399, 0
    %v5416 = vsel %vm5411, %v5400, 0
    %v5419 = vsel %vm5411, %v5401, 0
    %v5422 = vsel %vm5411, %v5402, 0
    %v5425 = vsel %vm5411, %v5403, 0
    %v5428 = vsel %vm5411, %v5404, 0
    %v5431 = vsel %vm5411, %v5405, 0
    %v5434 = vsel %vm5411, %v5406, 0
    %v5437 = vsel %vm5411, %v5407, 0
    %v5440 = vsel %vm5411, %v5408, 0
    %v5443 = vsel %vm5411, %v5409, 0
    %v5446 = vsel %vm5411, %v5410, 0
    %5448 = vmatprep.subr.mxu0 0.0
    %5449 = vmatpush1.msra.mxu0 %v5272
    %5450 = vmatprep.subr.mxu0 0.0
    %5451 = vmatpush1.msra.mxu0 %v5277
    %5452 = vmatprep.subr.mxu0 0.0
    %5453 = vmatpush1.msra.mxu0 %v5282
    %5454 = vmatprep.subr.mxu0 0.0
    %5455 = vmatpush1.msra.mxu0 0.0
    %5456 = vmatprep.subr.mxu0 0.0
    %5457 = vmatpush1.msra.mxu0 0.0
    %5458 = vmatprep.subr.mxu0 0.0
    %5459 = vmatpush1.msra.mxu0 0.0
    %5460 = vmatprep.subr.mxu0 0.0
    %5461 = vmatpush1.msra.mxu0 0.0
    %5462 = vmatprep.subr.mxu0 0.0
    %5463 = vmatpush1.msra.mxu0 0.0
    %5464 = vmatprep.subr.mxu0 0.0
    %5465 = vmatpush1.msra.mxu0 0.0
    %5466 = vmatprep.subr.mxu0 0.0
    %5467 = vmatpush1.msra.mxu0 0.0
    %5468 = vmatprep.subr.mxu0 0.0
    %5469 = vmatpush1.msra.mxu0 0.0
    %5470 = vmatprep.subr.mxu0 0.0
    %5471 = vmatpush1.msra.mxu0 0.0
    %5472 = vmatprep.subr.mxu0 0.0
    %5473 = vmatpush1.msra.mxu0 0.0
    %5474 = vmatprep.subr.mxu0 0.0
    %5475 = vmatpush1.msra.mxu0 0.0
    %5476 = vmatprep.subr.mxu0 0.0
    %5477 = vmatpush1.msra.mxu0 0.0
    %5478 = vmatprep.subr.mxu0 0.0
    %5479 = vmatpush1.msra.mxu0 0.0
    %5480 = vmatprep.subr.mxu0 0.0
    %5481 = vmatpush1.msra.mxu0 0.0
    %5482 = vmatprep.subr.mxu0 0.0
    %5483 = vmatpush1.msra.mxu0 0.0
    %5484 = vmatprep.subr.mxu0 0.0
    %5485 = vmatpush1.msra.mxu0 0.0
    %5486 = vmatprep.subr.mxu0 0.0
    %5487 = vmatpush1.msra.mxu0 0.0
    %5488 = vmatprep.subr.mxu0 0.0
    %5489 = vmatpush1.msra.mxu0 0.0
    %5490 = vmatprep.subr.mxu0 0.0
    %5491 = vmatpush1.msra.mxu0 0.0
    %5492 = vmatprep.subr.mxu0 0.0
    %5493 = vmatpush1.msra.mxu0 0.0
    %5494 = vmatprep.subr.mxu0 0.0
    %5495 = vmatpush1.msra.mxu0 0.0
    %5496 = vmatprep.subr.mxu0 0.0
    %5497 = vmatpush1.msra.mxu0 0.0
    %5498 = vmatprep.subr.mxu0 0.0
    %5499 = vmatpush1.msra.mxu0 0.0
    %5500 = vmatprep.subr.mxu0 0.0
    %5501 = vmatpush1.msra.mxu0 0.0
    %5502 = vmatprep.subr.mxu0 0.0
    %5503 = vmatpush1.msra.mxu0 0.0
    %5504 = vmatprep.subr.mxu0 0.0
    %5505 = vmatpush1.msra.mxu0 0.0
    %5506 = vmatprep.subr.mxu0 0.0
    %5507 = vmatpush1.msra.mxu0 0.0
    %5508 = vmatprep.subr.mxu0 0.0
    %5509 = vmatpush1.msra.mxu0 0.0
    %5510 = vmatprep.subr.mxu0 0.0
    %5511 = vmatpush1.msra.mxu0 0.0
    %5512 = vmatprep.mubr.f32.mxu0 0.0
    %5513 = vmatmul.mubr.f32.gmra.mrb[0].mxu0 %v5413
    %v5514 = vpop.f32.mrb[0].mxu0
    %v5515 = vadd.f32 0.0, %v5514
    %v5516 = vpop.f32.mrb[0].mxu0
    %5517 = vmatprep.mubr.f32.mxu0 0.0
    %5518 = vmatmul.mubr.f32.gmra.mrb[0].mxu0 %v5416
    %v5519 = vpop.f32.mrb[0].mxu0
    %v5520 = vadd.f32 0.0, %v5519
    %v5521 = vpop.f32.mrb[0].mxu0
    %5522 = vmatprep.mubr.f32.mxu0 0.0
    %5523 = vmatmul.mubr.f32.gmra.mrb[0].mxu0 %v5419
    %v5524 = vpop.f32.mrb[0].mxu0
    %v5525 = vadd.f32 0.0, %v5524
    %v5526 = vpop.f32.mrb[0].mxu0
    %5527 = vmatprep.mubr.f32.mxu0 0.0
    %5528 = vmatmul.mubr.f32.gmra.mrb[0].mxu0 %v5422
    %v5529 = vpop.f32.mrb[0].mxu0
    %v5530 = vadd.f32 0.0, %v5529
    %v5531 = vpop.f32.mrb[0].mxu0
    %5532 = vmatprep.mubr.f32.mxu0 0.0
    %5533 = vmatmul.mubr.f32.gmra.mrb[0].mxu0 %v5425
    %v5534 = vpop.f32.mrb[0].mxu0
    %v5535 = vadd.f32 0.0, %v5534
    %v5536 = vpop.f32.mrb[0].mxu0
    %5537 = vmatprep.mubr.f32.mxu0 0.0
    %5538 = vmatmul.mubr.f32.gmra.mrb[0].mxu0 %v5428
    %v5539 = vpop.f32.mrb[0].mxu0
    %v5540 = vadd.f32 0.0, %v5539
    %v5541 = vpop.f32.mrb[0].mxu0
    %5542 = vmatprep.mubr.f32.mxu0 0.0
    %5543 = vmatmul.mubr.f32.gmra.mrb[0].mxu0 %v5431
    %v5544 = vpop.f32.mrb[0].mxu0
    %v5545 = vadd.f32 0.0, %v5544
    %v5546 = vpop.f32.mrb[0].mxu0
    %5547 = vmatprep.mubr.f32.mxu0 0.0
    %5548 = vmatmul.mubr.f32.gmra.mrb[0].mxu0 %v5434
    %v5549 = vpop.f32.mrb[0].mxu0
    %v5550 = vadd.f32 0.0, %v5549
    %v5551 = vpop.f32.mrb[0].mxu0
    %5552 = vmatprep.mubr.f32.mxu0 0.0
    %5553 = vmatmul.mubr.f32.gmra.mrb[0].mxu0 %v5437
    %v5554 = vpop.f32.mrb[0].mxu0
    %v5555 = vadd.f32 0.0, %v5554
    %v5556 = vpop.f32.mrb[0].mxu0
    %5557 = vmatprep.mubr.f32.mxu0 0.0
    %5558 = vmatmul.mubr.f32.gmra.mrb[0].mxu0 %v5440
    %v5559 = vpop.f32.mrb[0].mxu0
    %v5560 = vadd.f32 0.0, %v5559
    %v5561 = vpop.f32.mrb[0].mxu0
    %5562 = vmatprep.mubr.f32.mxu0 0.0
    %5563 = vmatmul.mubr.f32.gmra.mrb[0].mxu0 %v5443
    %v5564 = vpop.f32.mrb[0].mxu0
    %v5565 = vadd.f32 0.0, %v5564
    %v5566 = vpop.f32.mrb[0].mxu0
    %5567 = vmatprep.mubr.f32.mxu0 0.0
    %5568 = vmatmul.mubr.f32.gmra.mrb[0].mxu0 %v5446
    %v5569 = vpop.f32.mrb[0].mxu0
    %v5570 = vadd.f32 0.0, %v5569
    %v5571 = vpop.f32.mrb[0].mxu0
    %5572 = vdwg.mxu0
    %5573 = vmatprep.subr.mxu0 0.0
    %5574 = vmatpush1.msra.mxu0 %v5374
    %5575 = vmatprep.subr.mxu0 0.0
    %5576 = vmatpush1.msra.mxu0 %v5379
    %5577 = vmatprep.subr.mxu0 0.0
    %5578 = vmatpush1.msra.mxu0 %v5384
    %5579 = vmatprep.subr.mxu0 0.0
    %5580 = vmatpush1.msra.mxu0 0.0
    %5581 = vmatprep.subr.mxu0 0.0
    %5582 = vmatpush1.msra.mxu0 0.0
    %5583 = vmatprep.subr.mxu0 0.0
    %5584 = vmatpush1.msra.mxu0 0.0
    %5585 = vmatprep.subr.mxu0 0.0
    %5586 = vmatpush1.msra.mxu0 0.0
    %5587 = vmatprep.subr.mxu0 0.0
    %5588 = vmatpush1.msra.mxu0 0.0
    %5589 = vmatprep.subr.mxu0 0.0
    %5590 = vmatpush1.msra.mxu0 0.0
    %5591 = vmatprep.subr.mxu0 0.0
    %5592 = vmatpush1.msra.mxu0 0.0
    %5593 = vmatprep.subr.mxu0 0.0
    %5594 = vmatpush1.msra.mxu0 0.0
    %5595 = vmatprep.subr.mxu0 0.0
    %5596 = vmatpush1.msra.mxu0 0.0
    %5597 = vmatprep.subr.mxu0 0.0
    %5598 = vmatpush1.msra.mxu0 0.0
    %5599 = vmatprep.subr.mxu0 0.0
    %5600 = vmatpush1.msra.mxu0 0.0
    %5601 = vmatprep.subr.mxu0 0.0
    %5602 = vmatpush1.msra.mxu0 0.0
    %5603 = vmatprep.subr.mxu0 0.0
    %5604 = vmatpush1.msra.mxu0 0.0
    %5605 = vmatprep.subr.mxu0 0.0
    %5606 = vmatpush1.msra.mxu0 0.0
    %5607 = vmatprep.subr.mxu0 0.0
    %5608 = vmatpush1.msra.mxu0 0.0
    %5609 = vmatprep.subr.mxu0 0.0
    %5610 = vmatpush1.msra.mxu0 0.0
    %5611 = vmatprep.subr.mxu0 0.0
    %5612 = vmatpush1.msra.mxu0 0.0
    %5613 = vmatprep.subr.mxu0 0.0
    %5614 = vmatpush1.msra.mxu0 0.0
    %5615 = vmatprep.subr.mxu0 0.0
    %5616 = vmatpush1.msra.mxu0 0.0
    %5617 = vmatprep.subr.mxu0 0.0
    %5618 = vmatpush1.msra.mxu0 0.0
    %5619 = vmatprep.subr.mxu0 0.0
    %5620 = vmatpush1.msra.mxu0 0.0
    %5621 = vmatprep.subr.mxu0 0.0
    %5622 = vmatpush1.msra.mxu0 0.0
    %5623 = vmatprep.subr.mxu0 0.0
    %5624 = vmatpush1.msra.mxu0 0.0
    %5625 = vmatprep.subr.mxu0 0.0
    %5626 = vmatpush1.msra.mxu0 0.0
    %5627 = vmatprep.subr.mxu0 0.0
    %5628 = vmatpush1.msra.mxu0 0.0
    %5629 = vmatprep.subr.mxu0 0.0
    %5630 = vmatpush1.msra.mxu0 0.0
    %5631 = vmatprep.subr.mxu0 0.0
    %5632 = vmatpush1.msra.mxu0 0.0
    %5633 = vmatprep.subr.mxu0 0.0
    %5634 = vmatpush1.msra.mxu0 0.0
    %5635 = vmatprep.subr.mxu0 0.0
    %5636 = vmatpush1.msra.mxu0 0.0
    %5637 = vmatprep.mubr.f32.mxu0 0.0
    %5638 = vmatmul.mubr.f32.gmra.mrb[0].mxu0 %v5413
    %v5639 = vpop.f32.mrb[0].mxu0
    %v5640 = vadd.f32 0.0, %v5639
    %v5641 = vpop.f32.mrb[0].mxu0
    %5642 = vmatprep.mubr.f32.mxu0 0.0
    %5643 = vmatmul.mubr.f32.gmra.mrb[0].mxu0 %v5416
    %v5644 = vpop.f32.mrb[0].mxu0
    %v5645 = vadd.f32 0.0, %v5644
    %v5646 = vpop.f32.mrb[0].mxu0
    %5647 = vmatprep.mubr.f32.mxu0 0.0
    %5648 = vmatmul.mubr.f32.gmra.mrb[0].mxu0 %v5419
    %v5649 = vpop.f32.mrb[0].mxu0
    %v5650 = vadd.f32 0.0, %v5649
    %v5651 = vpop.f32.mrb[0].mxu0
    %5652 = vmatprep.mubr.f32.mxu0 0.0
    %5653 = vmatmul.mubr.f32.gmra.mrb[0].mxu0 %v5422
    %v5654 = vpop.f32.mrb[0].mxu0
    %v5655 = vadd.f32 0.0, %v5654
    %v5656 = vpop.f32.mrb[0].mxu0
    %5657 = vmatprep.mubr.f32.mxu0 0.0
    %5658 = vmatmul.mubr.f32.gmra.mrb[0].mxu0 %v5425
    %v5659 = vpop.f32.mrb[0].mxu0
    %v5660 = vadd.f32 0.0, %v5659
    %v5661 = vpop.f32.mrb[0].mxu0
    %5662 = vmatprep.mubr.f32.mxu0 0.0
    %5663 = vmatmul.mubr.f32.gmra.mrb[0].mxu0 %v5428
    %v5664 = vpop.f32.mrb[0].mxu0
    %v5665 = vadd.f32 0.0, %v5664
    %v5666 = vpop.f32.mrb[0].mxu0
    %5667 = vmatprep.mubr.f32.mxu0 0.0
    %5668 = vmatmul.mubr.f32.gmra.mrb[0].mxu0 %v5431
    %v5669 = vpop.f32.mrb[0].mxu0
    %v5670 = vadd.f32 0.0, %v5669
    %v5671 = vpop.f32.mrb[0].mxu0
    %5672 = vmatprep.mubr.f32.mxu0 0.0
    %5673 = vmatmul.mubr.f32.gmra.mrb[0].mxu0 %v5434
    %v5674 = vpop.f32.mrb[0].mxu0
    %v5675 = vadd.f32 0.0, %v5674
    %v5676 = vpop.f32.mrb[0].mxu0
    %5677 = vmatprep.mubr.f32.mxu0 0.0
    %5678 = vmatmul.mubr.f32.gmra.mrb[0].mxu0 %v5437
    %v5679 = vpop.f32.mrb[0].mxu0
    %v5680 = vadd.f32 0.0, %v5679
    %v5681 = vpop.f32.mrb[0].mxu0
    %5682 = vmatprep.mubr.f32.mxu0 0.0
    %5683 = vmatmul.mubr.f32.gmra.mrb[0].mxu0 %v5440
    %v5684 = vpop.f32.mrb[0].mxu0
    %v5685 = vadd.f32 0.0, %v5684
    %v5686 = vpop.f32.mrb[0].mxu0
    %5687 = vmatprep.mubr.f32.mxu0 0.0
    %5688 = vmatmul.mubr.f32.gmra.mrb[0].mxu0 %v5443
    %v5689 = vpop.f32.mrb[0].mxu0
    %v5690 = vadd.f32 0.0, %v5689
    %v5691 = vpop.f32.mrb[0].mxu0
    %5692 = vmatprep.mubr.f32.mxu0 0.0
    %5693 = vmatmul.mubr.f32.gmra.mrb[0].mxu0 %v5446
    %v5694 = vpop.f32.mrb[0].mxu0
    %v5695 = vadd.f32 0.0, %v5694
    %v5696 = vpop.f32.mrb[0].mxu0
    %5697 = vdwg.mxu0
    %v5698 = vadd.f32 %v5072, %v5515
    %v5699 = vadd.f32 %v5077, %v5520
    %v5700 = vadd.f32 %v5082, %v5525
    %v5701 = vadd.f32 %v5087, %v5530
    %v5702 = vadd.f32 %v5092, %v5535
    %v5703 = vadd.f32 %v5097, %v5540
    %v5704 = vadd.f32 %v5102, %v5545
    %v5705 = vadd.f32 %v5107, %v5550
    %v5706 = vadd.f32 %v5112, %v5555
    %v5707 = vadd.f32 %v5117, %v5560
    %v5708 = vadd.f32 %v5122, %v5565
    %v5709 = vadd.f32 %v5127, %v5570
    %v5710 = vmul.f32 %v4937, %v4441
    %v5711 = vmul.f32 %v4942, %v4446
    %v5712 = vmul.f32 %v4947, %v4451
    %v5713 = vmul.f32 %v4952, %v4456
    %v5714 = vmul.f32 %v4957, %v4461
    %v5715 = vmul.f32 %v4962, %v4466
    %v5716 = vmul.f32 %v4967, %v4471
    %v5717 = vmul.f32 %v4972, %v4476
    %v5718 = vmul.f32 %v4977, %v4481
    %v5719 = vmul.f32 %v4982, %v4486
    %v5720 = vmul.f32 %v4987, %v4491
    %v5721 = vmul.f32 %v4992, %v4496
    %v5722 = vmul.f32 %v5640, %v4566
    %v5723 = vmul.f32 %v5645, %v4571
    %v5724 = vmul.f32 %v5650, %v4576
    %v5725 = vmul.f32 %v5655, %v4581
    %v5726 = vmul.f32 %v5660, %v4586
    %v5727 = vmul.f32 %v5665, %v4591
    %v5728 = vmul.f32 %v5670, %v4596
    %v5729 = vmul.f32 %v5675, %v4601
    %v5730 = vmul.f32 %v5680, %v4606
    %v5731 = vmul.f32 %v5685, %v4611
    %v5732 = vmul.f32 %v5690, %v4616
    %v5733 = vmul.f32 %v5695, %v4621
    %v5734 = vadd.f32 %v5710, %v5722
    %v5735 = vadd.f32 %v5711, %v5723
    %v5736 = vadd.f32 %v5712, %v5724
    %v5737 = vadd.f32 %v5713, %v5725
    %v5738 = vadd.f32 %v5714, %v5726
    %v5739 = vadd.f32 %v5715, %v5727
    %v5740 = vadd.f32 %v5716, %v5728
    %v5741 = vadd.f32 %v5717, %v5729
    %v5742 = vadd.f32 %v5718, %v5730
    %v5743 = vadd.f32 %v5719, %v5731
    %v5744 = vadd.f32 %v5720, %v5732
    %v5745 = vadd.f32 %v5721, %v5733
    %v5746 = vld [vmem:[%s9] sm:$0xff]
    %v5747 = vld [vmem:[%s9 + $0x8] sm:$0xff]
    %v5748 = vld [vmem:[%s9 + $0x10] sm:$0xff]
    %v5749 = vld [vmem:[%s9 + $0x18] sm:$0xff]
    %v5751 = vsel %vm75, %v5734, 0
    %v5754 = vsel %vm75, %v5735, 0
    %v5757 = vsel %vm75, %v5736, 0
    %v5760 = vsel %vm75, %v5737, 0
    %v5763 = vsel %vm75, %v5738, 0
    %v5766 = vsel %vm75, %v5739, 0
    %v5769 = vsel %vm75, %v5740, 0
    %v5772 = vsel %vm75, %v5741, 0
    %v5775 = vsel %vm75, %v5742, 0
    %v5778 = vsel %vm75, %v5743, 0
    %v5781 = vsel %vm75, %v5744, 0
    %v5784 = vsel %vm75, %v5745, 0
    %5786 = vmatprep.subr.mxu0 0.0
    %5787 = vmatpush1.msra.mxu0 %v5746
    %5788 = vmatprep.subr.mxu0 0.0
    %5789 = vmatpush1.msra.mxu0 %v5747
    %5790 = vmatprep.subr.mxu0 0.0
    %5791 = vmatpush1.msra.mxu0 %v5748
    %5792 = vmatprep.subr.mxu0 0.0
    %5793 = vmatpush1.msra.mxu0 %v5749
    %5794 = vmatprep.subr.mxu0 0.0
    %5795 = vmatpush1.msra.mxu0 0.0
    %5796 = vmatprep.subr.mxu0 0.0
    %5797 = vmatpush1.msra.mxu0 0.0
    %5798 = vmatprep.subr.mxu0 0.0
    %5799 = vmatpush1.msra.mxu0 0.0
    %5800 = vmatprep.subr.mxu0 0.0
    %5801 = vmatpush1.msra.mxu0 0.0
    %5802 = vmatprep.subr.mxu0 0.0
    %5803 = vmatpush1.msra.mxu0 0.0
    %5804 = vmatprep.subr.mxu0 0.0
    %5805 = vmatpush1.msra.mxu0 0.0
    %5806 = vmatprep.subr.mxu0 0.0
    %5807 = vmatpush1.msra.mxu0 0.0
    %5808 = vmatprep.subr.mxu0 0.0
    %5809 = vmatpush1.msra.mxu0 0.0
    %5810 = vmatprep.subr.mxu0 0.0
    %5811 = vmatpush1.msra.mxu0 0.0
    %5812 = vmatprep.subr.mxu0 0.0
    %5813 = vmatpush1.msra.mxu0 0.0
    %5814 = vmatprep.subr.mxu0 0.0
    %5815 = vmatpush1.msra.mxu0 0.0
    %5816 = vmatprep.subr.mxu0 0.0
    %5817 = vmatpush1.msra.mxu0 0.0
    %5818 = vmatprep.subr.mxu0 0.0
    %5819 = vmatpush1.msra.mxu0 0.0
    %5820 = vmatprep.subr.mxu0 0.0
    %5821 = vmatpush1.msra.mxu0 0.0
    %5822 = vmatprep.subr.mxu0 0.0
    %5823 = vmatpush1.msra.mxu0 0.0
    %5824 = vmatprep.subr.mxu0 0.0
    %5825 = vmatpush1.msra.mxu0 0.0
    %5826 = vmatprep.subr.mxu0 0.0
    %5827 = vmatpush1.msra.mxu0 0.0
    %5828 = vmatprep.subr.mxu0 0.0
    %5829 = vmatpush1.msra.mxu0 0.0
    %5830 = vmatprep.subr.mxu0 0.0
    %5831 = vmatpush1.msra.mxu0 0.0
    %5832 = vmatprep.subr.mxu0 0.0
    %5833 = vmatpush1.msra.mxu0 0.0
    %5834 = vmatprep.subr.mxu0 0.0
    %5835 = vmatpush1.msra.mxu0 0.0
    %5836 = vmatprep.subr.mxu0 0.0
    %5837 = vmatpush1.msra.mxu0 0.0
    %5838 = vmatprep.subr.mxu0 0.0
    %5839 = vmatpush1.msra.mxu0 0.0
    %5840 = vmatprep.subr.mxu0 0.0
    %5841 = vmatpush1.msra.mxu0 0.0
    %5842 = vmatprep.subr.mxu0 0.0
    %5843 = vmatpush1.msra.mxu0 0.0
    %5844 = vmatprep.subr.mxu0 0.0
    %5845 = vmatpush1.msra.mxu0 0.0
    %5846 = vmatprep.subr.mxu0 0.0
    %5847 = vmatpush1.msra.mxu0 0.0
    %5848 = vmatprep.subr.mxu0 0.0
    %5849 = vmatpush1.msra.mxu0 0.0
    %5850 = vmatprep.mubr.f32.mxu0 0.0
    %5851 = vmatmul.mubr.f32.gmra.mrb[0].mxu0 %v5751
    %v5852 = vpop.f32.mrb[0].mxu0
    %v5853 = vadd.f32 0.0, %v5852
    %v5854 = vpop.f32.mrb[0].mxu0
    %5855 = vmatprep.mubr.f32.mxu0 0.0
    %5856 = vmatmul.mubr.f32.gmra.mrb[0].mxu0 %v5754
    %v5857 = vpop.f32.mrb[0].mxu0
    %v5858 = vadd.f32 0.0, %v5857
    %v5859 = vpop.f32.mrb[0].mxu0
    %5860 = vmatprep.mubr.f32.mxu0 0.0
    %5861 = vmatmul.mubr.f32.gmra.mrb[0].mxu0 %v5757
    %v5862 = vpop.f32.mrb[0].mxu0
    %v5863 = vadd.f32 0.0, %v5862
    %v5864 = vpop.f32.mrb[0].mxu0
    %5865 = vmatprep.mubr.f32.mxu0 0.0
    %5866 = vmatmul.mubr.f32.gmra.mrb[0].mxu0 %v5760
    %v5867 = vpop.f32.mrb[0].mxu0
    %v5868 = vadd.f32 0.0, %v5867
    %v5869 = vpop.f32.mrb[0].mxu0
    %5870 = vmatprep.mubr.f32.mxu0 0.0
    %5871 = vmatmul.mubr.f32.gmra.mrb[0].mxu0 %v5763
    %v5872 = vpop.f32.mrb[0].mxu0
    %v5873 = vadd.f32 0.0, %v5872
    %v5874 = vpop.f32.mrb[0].mxu0
    %5875 = vmatprep.mubr.f32.mxu0 0.0
    %5876 = vmatmul.mubr.f32.gmra.mrb[0].mxu0 %v5766
    %v5877 = vpop.f32.mrb[0].mxu0
    %v5878 = vadd.f32 0.0, %v5877
    %v5879 = vpop.f32.mrb[0].mxu0
    %5880 = vmatprep.mubr.f32.mxu0 0.0
    %5881 = vmatmul.mubr.f32.gmra.mrb[0].mxu0 %v5769
    %v5882 = vpop.f32.mrb[0].mxu0
    %v5883 = vadd.f32 0.0, %v5882
    %v5884 = vpop.f32.mrb[0].mxu0
    %5885 = vmatprep.mubr.f32.mxu0 0.0
    %5886 = vmatmul.mubr.f32.gmra.mrb[0].mxu0 %v5772
    %v5887 = vpop.f32.mrb[0].mxu0
    %v5888 = vadd.f32 0.0, %v5887
    %v5889 = vpop.f32.mrb[0].mxu0
    %5890 = vmatprep.mubr.f32.mxu0 0.0
    %5891 = vmatmul.mubr.f32.gmra.mrb[0].mxu0 %v5775
    %v5892 = vpop.f32.mrb[0].mxu0
    %v5893 = vadd.f32 0.0, %v5892
    %v5894 = vpop.f32.mrb[0].mxu0
    %5895 = vmatprep.mubr.f32.mxu0 0.0
    %5896 = vmatmul.mubr.f32.gmra.mrb[0].mxu0 %v5778
    %v5897 = vpop.f32.mrb[0].mxu0
    %v5898 = vadd.f32 0.0, %v5897
    %v5899 = vpop.f32.mrb[0].mxu0
    %5900 = vmatprep.mubr.f32.mxu0 0.0
    %5901 = vmatmul.mubr.f32.gmra.mrb[0].mxu0 %v5781
    %v5902 = vpop.f32.mrb[0].mxu0
    %v5903 = vadd.f32 0.0, %v5902
    %v5904 = vpop.f32.mrb[0].mxu0
    %5905 = vmatprep.mubr.f32.mxu0 0.0
    %5906 = vmatmul.mubr.f32.gmra.mrb[0].mxu0 %v5784
    %v5907 = vpop.f32.mrb[0].mxu0
    %v5908 = vadd.f32 0.0, %v5907
    %v5909 = vpop.f32.mrb[0].mxu0
    %5910 = vdwg.mxu0
    %vm5911 = vcmask 31744
    %v5912 = vsel %vm5911, %v5853, -inf
    %v5913 = vsel %vm5911, %v5858, -inf
    %v5914 = vsel %vm5911, %v5863, -inf
    %v5915 = vsel %vm5911, %v5868, -inf
    %v5916 = vsel %vm5911, %v5873, -inf
    %v5917 = vmax.f32 %v5912, %v5916
    %v5918 = vsel %vm5911, %v5878, -inf
    %v5919 = vmax.f32 %v5913, %v5918
    %v5920 = vsel %vm5911, %v5883, -inf
    %v5921 = vmax.f32 %v5914, %v5920
    %v5922 = vsel %vm5911, %v5888, -inf
    %v5923 = vmax.f32 %v5915, %v5922
    %v5924 = vsel %vm5911, %v5893, -inf
    %v5925 = vmax.f32 %v5917, %v5924
    %v5926 = vsel %vm5911, %v5898, -inf
    %v5927 = vmax.f32 %v5919, %v5926
    %v5928 = vsel %vm5911, %v5903, -inf
    %v5929 = vmax.f32 %v5921, %v5928
    %v5930 = vsel %vm5911, %v5908, -inf
    %v5931 = vmax.f32 %v5923, %v5930
    %v5932 = vmax.f32 %v5925, %v5927
    %v5933 = vmax.f32 %v5929, %v5931
    %v5934 = vmax.f32 %v5932, %v5933
    %v5935 = vrot.slane %v5934, 4
    %v5936 = vmax.f32 %v5934, %v5935
    %v5937 = vrot.slane %v5936, 2
    %v5938 = vmax.f32 %v5936, %v5937
    %v5939 = vrot.slane %v5938, 1
    %v5940 = vmax.f32 %v5938, %v5939
    %v5941 = vsub.f32 %v5853, %v5940
    %v5942 = vsub.f32 %v5858, %v5940
    %v5943 = vsub.f32 %v5863, %v5940
    %v5944 = vsub.f32 %v5868, %v5940
    %v5945 = vsub.f32 %v5873, %v5940
    %v5946 = vsub.f32 %v5878, %v5940
    %v5947 = vsub.f32 %v5883, %v5940
    %v5948 = vsub.f32 %v5888, %v5940
    %v5949 = vsub.f32 %v5893, %v5940
    %v5950 = vsub.f32 %v5898, %v5940
    %v5951 = vsub.f32 %v5903, %v5940
    %v5952 = vsub.f32 %v5908, %v5940
    %v5953 = vmul.f32 %v5941, 1.442695
    %v5954 = vpow.pop %v5953
    %v5955 = vmul.f32 %v5942, 1.442695
    %v5956 = vpow.pop %v5955
    %v5957 = vmul.f32 %v5943, 1.442695
    %v5958 = vpow.pop %v5957
    %v5959 = vmul.f32 %v5944, 1.442695
    %v5960 = vpow.pop %v5959
    %v5961 = vmul.f32 %v5945, 1.442695
    %v5962 = vpow.pop %v5961
    %v5963 = vmul.f32 %v5946, 1.442695
    %v5964 = vpow.pop %v5963
    %v5965 = vmul.f32 %v5947, 1.442695
    %v5966 = vpow.pop %v5965
    %v5967 = vmul.f32 %v5948, 1.442695
    %v5968 = vpow.pop %v5967
    %v5969 = vmul.f32 %v5949, 1.442695
    %v5970 = vpow.pop %v5969
    %v5971 = vmul.f32 %v5950, 1.442695
    %v5972 = vpow.pop %v5971
    %v5973 = vmul.f32 %v5951, 1.442695
    %v5974 = vpow.pop %v5973
    %v5975 = vmul.f32 %v5952, 1.442695
    %v5976 = vpow.pop %v5975
    %vm5977 = vcmask 785408
    %v5979 = vsel %vm5977, %v4334, 0
    %v5982 = vsel %vm5977, %v4335, 0
    %v5985 = vsel %vm5977, %v4336, 0
    %v5988 = vsel %vm5977, %v4337, 0
    %5990 = vmatprep.subr.mxu0 0.0
    %5991 = vmatpush1.msra.mxu0 %v5954
    %5992 = vmatprep.subr.mxu0 0.0
    %5993 = vmatpush1.msra.mxu0 %v5956
    %5994 = vmatprep.subr.mxu0 0.0
    %5995 = vmatpush1.msra.mxu0 %v5958
    %5996 = vmatprep.subr.mxu0 0.0
    %5997 = vmatpush1.msra.mxu0 %v5960
    %5998 = vmatprep.subr.mxu0 0.0
    %5999 = vmatpush1.msra.mxu0 %v5962
    %6000 = vmatprep.subr.mxu0 0.0
    %6001 = vmatpush1.msra.mxu0 %v5964
    %6002 = vmatprep.subr.mxu0 0.0
    %6003 = vmatpush1.msra.mxu0 %v5966
    %6004 = vmatprep.subr.mxu0 0.0
    %6005 = vmatpush1.msra.mxu0 %v5968
    %6006 = vmatprep.subr.mxu0 0.0
    %6007 = vmatpush1.msra.mxu0 %v5970
    %6008 = vmatprep.subr.mxu0 0.0
    %6009 = vmatpush1.msra.mxu0 %v5972
    %6010 = vmatprep.subr.mxu0 0.0
    %6011 = vmatpush1.msra.mxu0 %v5974
    %6012 = vmatprep.subr.mxu0 0.0
    %6013 = vmatpush1.msra.mxu0 %v5976
    %6014 = vmatprep.subr.mxu0 0.0
    %6015 = vmatpush1.msra.mxu0 0.0
    %6016 = vmatprep.subr.mxu0 0.0
    %6017 = vmatpush1.msra.mxu0 0.0
    %6018 = vmatprep.subr.mxu0 0.0
    %6019 = vmatpush1.msra.mxu0 0.0
    %6020 = vmatprep.subr.mxu0 0.0
    %6021 = vmatpush1.msra.mxu0 0.0
    %6022 = vmatprep.subr.mxu0 0.0
    %6023 = vmatpush1.msra.mxu0 0.0
    %6024 = vmatprep.subr.mxu0 0.0
    %6025 = vmatpush1.msra.mxu0 0.0
    %6026 = vmatprep.subr.mxu0 0.0
    %6027 = vmatpush1.msra.mxu0 0.0
    %6028 = vmatprep.subr.mxu0 0.0
    %6029 = vmatpush1.msra.mxu0 0.0
    %6030 = vmatprep.subr.mxu0 0.0
    %6031 = vmatpush1.msra.mxu0 0.0
    %6032 = vmatprep.subr.mxu0 0.0
    %6033 = vmatpush1.msra.mxu0 0.0
    %6034 = vmatprep.subr.mxu0 0.0
    %6035 = vmatpush1.msra.mxu0 0.0
    %6036 = vmatprep.subr.mxu0 0.0
    %6037 = vmatpush1.msra.mxu0 0.0
    %6038 = vmatprep.subr.mxu0 0.0
    %6039 = vmatpush1.msra.mxu0 0.0
    %6040 = vmatprep.subr.mxu0 0.0
    %6041 = vmatpush1.msra.mxu0 0.0
    %6042 = vmatprep.subr.mxu0 0.0
    %6043 = vmatpush1.msra.mxu0 0.0
    %6044 = vmatprep.subr.mxu0 0.0
    %6045 = vmatpush1.msra.mxu0 0.0
    %6046 = vmatprep.subr.mxu0 0.0
    %6047 = vmatpush1.msra.mxu0 0.0
    %6048 = vmatprep.subr.mxu0 0.0
    %6049 = vmatpush1.msra.mxu0 0.0
    %6050 = vmatprep.subr.mxu0 0.0
    %6051 = vmatpush1.msra.mxu0 0.0
    %6052 = vmatprep.subr.mxu0 0.0
    %6053 = vmatpush1.msra.mxu0 0.0
    %6054 = vmatprep.mubr.f32.mxu0 0.0
    %6055 = vmatmul.mubr.f32.gmra.mrb[0].mxu0 %v5979
    %v6056 = vpop.f32.mrb[0].mxu0
    %v6057 = vadd.f32 0.0, %v6056
    %v6058 = vpop.f32.mrb[0].mxu0
    %6059 = vmatprep.mubr.f32.mxu0 0.0
    %6060 = vmatmul.mubr.f32.gmra.mrb[0].mxu0 %v5982
    %v6061 = vpop.f32.mrb[0].mxu0
    %v6062 = vadd.f32 0.0, %v6061
    %v6063 = vpop.f32.mrb[0].mxu0
    %6064 = vmatprep.mubr.f32.mxu0 0.0
    %6065 = vmatmul.mubr.f32.gmra.mrb[0].mxu0 %v5985
    %v6066 = vpop.f32.mrb[0].mxu0
    %v6067 = vadd.f32 0.0, %v6066
    %v6068 = vpop.f32.mrb[0].mxu0
    %6069 = vmatprep.mubr.f32.mxu0 0.0
    %6070 = vmatmul.mubr.f32.gmra.mrb[0].mxu0 %v5988
    %v6071 = vpop.f32.mrb[0].mxu0
    %v6072 = vadd.f32 0.0, %v6071
    %v6073 = vpop.f32.mrb[0].mxu0
    %6074 = vdwg.mxu0
    %6075 = vmatprep.subr.mxu0 0.0
    %6076 = vmatpush1.msra.mxu0 %v6057
    %6077 = vmatprep.subr.mxu0 0.0
    %6078 = vmatpush1.msra.mxu0 %v6062
    %6079 = vmatprep.subr.mxu0 0.0
    %6080 = vmatpush1.msra.mxu0 %v6067
    %6081 = vmatprep.subr.mxu0 0.0
    %6082 = vmatpush1.msra.mxu0 %v6072
    %6083 = vmatprep.subr.mxu0 0.0
    %6084 = vmatpush1.msra.mxu0 0.0
    %6085 = vmatprep.subr.mxu0 0.0
    %6086 = vmatpush1.msra.mxu0 0.0
    %6087 = vmatprep.subr.mxu0 0.0
    %6088 = vmatpush1.msra.mxu0 0.0
    %6089 = vmatprep.subr.mxu0 0.0
    %6090 = vmatpush1.msra.mxu0 0.0
    %6091 = vmatprep.subr.mxu0 0.0
    %6092 = vmatpush1.msra.mxu0 0.0
    %6093 = vmatprep.subr.mxu0 0.0
    %6094 = vmatpush1.msra.mxu0 0.0
    %6095 = vmatprep.subr.mxu0 0.0
    %6096 = vmatpush1.msra.mxu0 0.0
    %6097 = vmatprep.subr.mxu0 0.0
    %6098 = vmatpush1.msra.mxu0 0.0
    %6099 = vmatprep.subr.mxu0 0.0
    %6100 = vmatpush1.msra.mxu0 0.0
    %6101 = vmatprep.subr.mxu0 0.0
    %6102 = vmatpush1.msra.mxu0 0.0
    %6103 = vmatprep.subr.mxu0 0.0
    %6104 = vmatpush1.msra.mxu0 0.0
    %6105 = vmatprep.subr.mxu0 0.0
    %6106 = vmatpush1.msra.mxu0 0.0
    %6107 = vmatprep.subr.mxu0 0.0
    %6108 = vmatpush1.msra.mxu0 0.0
    %6109 = vmatprep.subr.mxu0 0.0
    %6110 = vmatpush1.msra.mxu0 0.0
    %6111 = vmatprep.subr.mxu0 0.0
    %6112 = vmatpush1.msra.mxu0 0.0
    %6113 = vmatprep.subr.mxu0 0.0
    %6114 = vmatpush1.msra.mxu0 0.0
    %6115 = vmatprep.subr.mxu0 0.0
    %6116 = vmatpush1.msra.mxu0 0.0
    %6117 = vmatprep.subr.mxu0 0.0
    %6118 = vmatpush1.msra.mxu0 0.0
    %6119 = vmatprep.subr.mxu0 0.0
    %6120 = vmatpush1.msra.mxu0 0.0
    %6121 = vmatprep.subr.mxu0 0.0
    %6122 = vmatpush1.msra.mxu0 0.0
    %6123 = vmatprep.subr.mxu0 0.0
    %6124 = vmatpush1.msra.mxu0 0.0
    %6125 = vmatprep.subr.mxu0 0.0
    %6126 = vmatpush1.msra.mxu0 0.0
    %6127 = vmatprep.subr.mxu0 0.0
    %6128 = vmatpush1.msra.mxu0 0.0
    %6129 = vmatprep.subr.mxu0 0.0
    %6130 = vmatpush1.msra.mxu0 0.0
    %6131 = vmatprep.subr.mxu0 0.0
    %6132 = vmatpush1.msra.mxu0 0.0
    %6133 = vmatprep.subr.mxu0 0.0
    %6134 = vmatpush1.msra.mxu0 0.0
    %6135 = vmatprep.subr.mxu0 0.0
    %6136 = vmatpush1.msra.mxu0 0.0
    %6137 = vmatprep.subr.mxu0 0.0
    %6138 = vmatpush1.msra.mxu0 0.0
    %6139 = vmatprep.mubr.f32.mxu0 0.0
    %6140 = vmatmul.mubr.f32.gmra.mrb[0].mxu0 %v4339
    %v6141 = vpop.f32.mrb[0].mxu0
    %v6142 = vadd.f32 1e-16, %v6141
    %v6143 = vpop.f32.mrb[0].mxu0
    %6144 = vmatprep.mubr.f32.mxu0 0.0
    %6145 = vmatmul.mubr.f32.gmra.mrb[0].mxu0 %v4342
    %v6146 = vpop.f32.mrb[0].mxu0
    %v6147 = vadd.f32 1e-16, %v6146
    %v6148 = vpop.f32.mrb[0].mxu0
    %6149 = vmatprep.mubr.f32.mxu0 0.0
    %6150 = vmatmul.mubr.f32.gmra.mrb[0].mxu0 %v4345
    %v6151 = vpop.f32.mrb[0].mxu0
    %v6152 = vadd.f32 1e-16, %v6151
    %v6153 = vpop.f32.mrb[0].mxu0
    %6154 = vmatprep.mubr.f32.mxu0 0.0
    %6155 = vmatmul.mubr.f32.gmra.mrb[0].mxu0 %v4348
    %v6156 = vpop.f32.mrb[0].mxu0
    %v6157 = vadd.f32 1e-16, %v6156
    %v6158 = vpop.f32.mrb[0].mxu0
    %6159 = vmatprep.mubr.f32.mxu0 0.0
    %6160 = vmatmul.mubr.f32.gmra.mrb[0].mxu0 %v4351
    %v6161 = vpop.f32.mrb[0].mxu0
    %v6162 = vadd.f32 1e-16, %v6161
    %v6163 = vpop.f32.mrb[0].mxu0
    %6164 = vmatprep.mubr.f32.mxu0 0.0
    %6165 = vmatmul.mubr.f32.gmra.mrb[0].mxu0 %v4354
    %v6166 = vpop.f32.mrb[0].mxu0
    %v6167 = vadd.f32 1e-16, %v6166
    %v6168 = vpop.f32.mrb[0].mxu0
    %6169 = vmatprep.mubr.f32.mxu0 0.0
    %6170 = vmatmul.mubr.f32.gmra.mrb[0].mxu0 %v4357
    %v6171 = vpop.f32.mrb[0].mxu0
    %v6172 = vadd.f32 1e-16, %v6171
    %v6173 = vpop.f32.mrb[0].mxu0
    %6174 = vmatprep.mubr.f32.mxu0 0.0
    %6175 = vmatmul.mubr.f32.gmra.mrb[0].mxu0 %v4360
    %v6176 = vpop.f32.mrb[0].mxu0
    %v6177 = vadd.f32 1e-16, %v6176
    %v6178 = vpop.f32.mrb[0].mxu0
    %6179 = vmatprep.mubr.f32.mxu0 0.0
    %6180 = vmatmul.mubr.f32.gmra.mrb[0].mxu0 %v4363
    %v6181 = vpop.f32.mrb[0].mxu0
    %v6182 = vadd.f32 1e-16, %v6181
    %v6183 = vpop.f32.mrb[0].mxu0
    %6184 = vmatprep.mubr.f32.mxu0 0.0
    %6185 = vmatmul.mubr.f32.gmra.mrb[0].mxu0 %v4366
    %v6186 = vpop.f32.mrb[0].mxu0
    %v6187 = vadd.f32 1e-16, %v6186
    %v6188 = vpop.f32.mrb[0].mxu0
    %6189 = vmatprep.mubr.f32.mxu0 0.0
    %6190 = vmatmul.mubr.f32.gmra.mrb[0].mxu0 %v4369
    %v6191 = vpop.f32.mrb[0].mxu0
    %v6192 = vadd.f32 1e-16, %v6191
    %v6193 = vpop.f32.mrb[0].mxu0
    %6194 = vmatprep.mubr.f32.mxu0 0.0
    %6195 = vmatmul.mubr.f32.gmra.mrb[0].mxu0 %v4372
    %v6196 = vpop.f32.mrb[0].mxu0
    %v6197 = vadd.f32 1e-16, %v6196
    %v6198 = vpop.f32.mrb[0].mxu0
    %6199 = vdwg.mxu0
    %v6200 = vrcp.pop %v6142
    %v6201 = vrcp.pop %v6147
    %v6202 = vrcp.pop %v6152
    %v6203 = vrcp.pop %v6157
    %v6204 = vrcp.pop %v6162
    %v6205 = vrcp.pop %v6167
    %v6206 = vrcp.pop %v6172
    %v6207 = vrcp.pop %v6177
    %v6208 = vrcp.pop %v6182
    %v6209 = vrcp.pop %v6187
    %v6210 = vrcp.pop %v6192
    %v6211 = vrcp.pop %v6197
    %v6212 = vmul.f32 %v5954, %v6200
    %v6213 = vmul.f32 %v5956, %v6201
    %v6214 = vmul.f32 %v5958, %v6202
    %v6215 = vmul.f32 %v5960, %v6203
    %v6216 = vmul.f32 %v5962, %v6204
    %v6217 = vmul.f32 %v5964, %v6205
    %v6218 = vmul.f32 %v5966, %v6206
    %v6219 = vmul.f32 %v5968, %v6207
    %v6220 = vmul.f32 %v5970, %v6208
    %v6221 = vmul.f32 %v5972, %v6209
    %v6222 = vmul.f32 %v5974, %v6210
    %v6223 = vmul.f32 %v5976, %v6211
    %v6224 = vld [vmem:[%s10] sm:$0xf]
    %v6226 = vsel %vm5911, %v6212, 0
    %v6229 = vsel %vm5911, %v6213, 0
    %v6232 = vsel %vm5911, %v6214, 0
    %v6235 = vsel %vm5911, %v6215, 0
    %v6238 = vsel %vm5911, %v6216, 0
    %v6241 = vsel %vm5911, %v6217, 0
    %v6244 = vsel %vm5911, %v6218, 0
    %v6247 = vsel %vm5911, %v6219, 0
    %v6250 = vsel %vm5911, %v6220, 0
    %v6253 = vsel %vm5911, %v6221, 0
    %v6256 = vsel %vm5911, %v6222, 0
    %v6259 = vsel %vm5911, %v6223, 0
    %vm6261 = vcmask 1043456
    %v6263 = vsel %vm6261, %v6224, 0
    %6265 = vmatprep.subr.mxu0 0.0
    %6266 = vmatpush1.msra.mxu0 %v6263
    %6267 = vmatprep.subr.mxu0 0.0
    %6268 = vmatpush1.msra.mxu0 0.0
    %6269 = vmatprep.subr.mxu0 0.0
    %6270 = vmatpush1.msra.mxu0 0.0
    %6271 = vmatprep.subr.mxu0 0.0
    %6272 = vmatpush1.msra.mxu0 0.0
    %6273 = vmatprep.subr.mxu0 0.0
    %6274 = vmatpush1.msra.mxu0 0.0
    %6275 = vmatprep.subr.mxu0 0.0
    %6276 = vmatpush1.msra.mxu0 0.0
    %6277 = vmatprep.subr.mxu0 0.0
    %6278 = vmatpush1.msra.mxu0 0.0
    %6279 = vmatprep.subr.mxu0 0.0
    %6280 = vmatpush1.msra.mxu0 0.0
    %6281 = vmatprep.subr.mxu0 0.0
    %6282 = vmatpush1.msra.mxu0 0.0
    %6283 = vmatprep.subr.mxu0 0.0
    %6284 = vmatpush1.msra.mxu0 0.0
    %6285 = vmatprep.subr.mxu0 0.0
    %6286 = vmatpush1.msra.mxu0 0.0
    %6287 = vmatprep.subr.mxu0 0.0
    %6288 = vmatpush1.msra.mxu0 0.0
    %6289 = vmatprep.subr.mxu0 0.0
    %6290 = vmatpush1.msra.mxu0 0.0
    %6291 = vmatprep.subr.mxu0 0.0
    %6292 = vmatpush1.msra.mxu0 0.0
    %6293 = vmatprep.subr.mxu0 0.0
    %6294 = vmatpush1.msra.mxu0 0.0
    %6295 = vmatprep.subr.mxu0 0.0
    %6296 = vmatpush1.msra.mxu0 0.0
    %6297 = vmatprep.subr.mxu0 0.0
    %6298 = vmatpush1.msra.mxu0 0.0
    %6299 = vmatprep.subr.mxu0 0.0
    %6300 = vmatpush1.msra.mxu0 0.0
    %6301 = vmatprep.subr.mxu0 0.0
    %6302 = vmatpush1.msra.mxu0 0.0
    %6303 = vmatprep.subr.mxu0 0.0
    %6304 = vmatpush1.msra.mxu0 0.0
    %6305 = vmatprep.subr.mxu0 0.0
    %6306 = vmatpush1.msra.mxu0 0.0
    %6307 = vmatprep.subr.mxu0 0.0
    %6308 = vmatpush1.msra.mxu0 0.0
    %6309 = vmatprep.subr.mxu0 0.0
    %6310 = vmatpush1.msra.mxu0 0.0
    %6311 = vmatprep.subr.mxu0 0.0
    %6312 = vmatpush1.msra.mxu0 0.0
    %6313 = vmatprep.subr.mxu0 0.0
    %6314 = vmatpush1.msra.mxu0 0.0
    %6315 = vmatprep.subr.mxu0 0.0
    %6316 = vmatpush1.msra.mxu0 0.0
    %6317 = vmatprep.subr.mxu0 0.0
    %6318 = vmatpush1.msra.mxu0 0.0
    %6319 = vmatprep.subr.mxu0 0.0
    %6320 = vmatpush1.msra.mxu0 0.0
    %6321 = vmatprep.subr.mxu0 0.0
    %6322 = vmatpush1.msra.mxu0 0.0
    %6323 = vmatprep.subr.mxu0 0.0
    %6324 = vmatpush1.msra.mxu0 0.0
    %6325 = vmatprep.subr.mxu0 0.0
    %6326 = vmatpush1.msra.mxu0 0.0
    %6327 = vmatprep.subr.mxu0 0.0
    %6328 = vmatpush1.msra.mxu0 0.0
    %6329 = vmatprep.mubr.f32.mxu0 0.0
    %6330 = vmatmul.mubr.f32.gmra.mrb[0].mxu0 %v6226
    %v6331 = vpop.f32.mrb[0].mxu0
    %v6332 = vadd.f32 0.0, %v6331
    %v6333 = vpop.f32.mrb[0].mxu0
    %6334 = vmatprep.mubr.f32.mxu0 0.0
    %6335 = vmatmul.mubr.f32.gmra.mrb[0].mxu0 %v6229
    %v6336 = vpop.f32.mrb[0].mxu0
    %v6337 = vadd.f32 0.0, %v6336
    %v6338 = vpop.f32.mrb[0].mxu0
    %6339 = vmatprep.mubr.f32.mxu0 0.0
    %6340 = vmatmul.mubr.f32.gmra.mrb[0].mxu0 %v6232
    %v6341 = vpop.f32.mrb[0].mxu0
    %v6342 = vadd.f32 0.0, %v6341
    %v6343 = vpop.f32.mrb[0].mxu0
    %6344 = vmatprep.mubr.f32.mxu0 0.0
    %6345 = vmatmul.mubr.f32.gmra.mrb[0].mxu0 %v6235
    %v6346 = vpop.f32.mrb[0].mxu0
    %v6347 = vadd.f32 0.0, %v6346
    %v6348 = vpop.f32.mrb[0].mxu0
    %6349 = vmatprep.mubr.f32.mxu0 0.0
    %6350 = vmatmul.mubr.f32.gmra.mrb[0].mxu0 %v6238
    %v6351 = vpop.f32.mrb[0].mxu0
    %v6352 = vadd.f32 0.0, %v6351
    %v6353 = vpop.f32.mrb[0].mxu0
    %6354 = vmatprep.mubr.f32.mxu0 0.0
    %6355 = vmatmul.mubr.f32.gmra.mrb[0].mxu0 %v6241
    %v6356 = vpop.f32.mrb[0].mxu0
    %v6357 = vadd.f32 0.0, %v6356
    %v6358 = vpop.f32.mrb[0].mxu0
    %6359 = vmatprep.mubr.f32.mxu0 0.0
    %6360 = vmatmul.mubr.f32.gmra.mrb[0].mxu0 %v6244
    %v6361 = vpop.f32.mrb[0].mxu0
    %v6362 = vadd.f32 0.0, %v6361
    %v6363 = vpop.f32.mrb[0].mxu0
    %6364 = vmatprep.mubr.f32.mxu0 0.0
    %6365 = vmatmul.mubr.f32.gmra.mrb[0].mxu0 %v6247
    %v6366 = vpop.f32.mrb[0].mxu0
    %v6367 = vadd.f32 0.0, %v6366
    %v6368 = vpop.f32.mrb[0].mxu0
    %6369 = vmatprep.mubr.f32.mxu0 0.0
    %6370 = vmatmul.mubr.f32.gmra.mrb[0].mxu0 %v6250
    %v6371 = vpop.f32.mrb[0].mxu0
    %v6372 = vadd.f32 0.0, %v6371
    %v6373 = vpop.f32.mrb[0].mxu0
    %6374 = vmatprep.mubr.f32.mxu0 0.0
    %6375 = vmatmul.mubr.f32.gmra.mrb[0].mxu0 %v6253
    %v6376 = vpop.f32.mrb[0].mxu0
    %v6377 = vadd.f32 0.0, %v6376
    %v6378 = vpop.f32.mrb[0].mxu0
    %6379 = vmatprep.mubr.f32.mxu0 0.0
    %6380 = vmatmul.mubr.f32.gmra.mrb[0].mxu0 %v6256
    %v6381 = vpop.f32.mrb[0].mxu0
    %v6382 = vadd.f32 0.0, %v6381
    %v6383 = vpop.f32.mrb[0].mxu0
    %6384 = vmatprep.mubr.f32.mxu0 0.0
    %6385 = vmatmul.mubr.f32.gmra.mrb[0].mxu0 %v6259
    %v6386 = vpop.f32.mrb[0].mxu0
    %v6387 = vadd.f32 0.0, %v6386
    %v6388 = vpop.f32.mrb[0].mxu0
    %6389 = vdwg.mxu0
    %v6390 = vmul.f32 %v5698, %v6332
    %v6391 = vmul.f32 %v5699, %v6337
    %v6392 = vmul.f32 %v5700, %v6342
    %v6393 = vmul.f32 %v5701, %v6347
    %v6394 = vmul.f32 %v5702, %v6352
    %v6395 = vmul.f32 %v5703, %v6357
    %v6396 = vmul.f32 %v5704, %v6362
    %v6397 = vmul.f32 %v5705, %v6367
    %v6398 = vmul.f32 %v5706, %v6372
    %v6399 = vmul.f32 %v5707, %v6377
    %v6400 = vmul.f32 %v5708, %v6382
    %v6401 = vmul.f32 %v5709, %v6387
    %6402 = vmatprep.subr.mxu0 0.0
    %6403 = vmatpush1.msra.mxu0 %v6390
    %6404 = vmatprep.subr.mxu0 0.0
    %6405 = vmatpush1.msra.mxu0 %v6391
    %6406 = vmatprep.subr.mxu0 0.0
    %6407 = vmatpush1.msra.mxu0 %v6392
    %6408 = vmatprep.subr.mxu0 0.0
    %6409 = vmatpush1.msra.mxu0 %v6393
    %6410 = vmatprep.subr.mxu0 0.0
    %6411 = vmatpush1.msra.mxu0 %v6394
    %6412 = vmatprep.subr.mxu0 0.0
    %6413 = vmatpush1.msra.mxu0 %v6395
    %6414 = vmatprep.subr.mxu0 0.0
    %6415 = vmatpush1.msra.mxu0 %v6396
    %6416 = vmatprep.subr.mxu0 0.0
    %6417 = vmatpush1.msra.mxu0 %v6397
    %6418 = vmatprep.subr.mxu0 0.0
    %6419 = vmatpush1.msra.mxu0 %v6398
    %6420 = vmatprep.subr.mxu0 0.0
    %6421 = vmatpush1.msra.mxu0 %v6399
    %6422 = vmatprep.subr.mxu0 0.0
    %6423 = vmatpush1.msra.mxu0 %v6400
    %6424 = vmatprep.subr.mxu0 0.0
    %6425 = vmatpush1.msra.mxu0 %v6401
    %6426 = vmatprep.subr.mxu0 0.0
    %6427 = vmatpush1.msra.mxu0 0.0
    %6428 = vmatprep.subr.mxu0 0.0
    %6429 = vmatpush1.msra.mxu0 0.0
    %6430 = vmatprep.subr.mxu0 0.0
    %6431 = vmatpush1.msra.mxu0 0.0
    %6432 = vmatprep.subr.mxu0 0.0
    %6433 = vmatpush1.msra.mxu0 0.0
    %6434 = vmatprep.subr.mxu0 0.0
    %6435 = vmatpush1.msra.mxu0 0.0
    %6436 = vmatprep.subr.mxu0 0.0
    %6437 = vmatpush1.msra.mxu0 0.0
    %6438 = vmatprep.subr.mxu0 0.0
    %6439 = vmatpush1.msra.mxu0 0.0
    %6440 = vmatprep.subr.mxu0 0.0
    %6441 = vmatpush1.msra.mxu0 0.0
    %6442 = vmatprep.subr.mxu0 0.0
    %6443 = vmatpush1.msra.mxu0 0.0
    %6444 = vmatprep.subr.mxu0 0.0
    %6445 = vmatpush1.msra.mxu0 0.0
    %6446 = vmatprep.subr.mxu0 0.0
    %6447 = vmatpush1.msra.mxu0 0.0
    %6448 = vmatprep.subr.mxu0 0.0
    %6449 = vmatpush1.msra.mxu0 0.0
    %6450 = vmatprep.subr.mxu0 0.0
    %6451 = vmatpush1.msra.mxu0 0.0
    %6452 = vmatprep.subr.mxu0 0.0
    %6453 = vmatpush1.msra.mxu0 0.0
    %6454 = vmatprep.subr.mxu0 0.0
    %6455 = vmatpush1.msra.mxu0 0.0
    %6456 = vmatprep.subr.mxu0 0.0
    %6457 = vmatpush1.msra.mxu0 0.0
    %6458 = vmatprep.subr.mxu0 0.0
    %6459 = vmatpush1.msra.mxu0 0.0
    %6460 = vmatprep.subr.mxu0 0.0
    %6461 = vmatpush1.msra.mxu0 0.0
    %6462 = vmatprep.subr.mxu0 0.0
    %6463 = vmatpush1.msra.mxu0 0.0
    %6464 = vmatprep.subr.mxu0 0.0
    %6465 = vmatpush1.msra.mxu0 0.0
    %6466 = vmatprep.mubr.f32.mxu0 0.0
    %6467 = vmatmul.mubr.f32.gmra.mrb[0].mxu0 %v5979
    %v6468 = vpop.f32.mrb[0].mxu0
    %v6469 = vadd.f32 0.0, %v6468
    %v6470 = vpop.f32.mrb[0].mxu0
    %6471 = vmatprep.mubr.f32.mxu0 0.0
    %6472 = vmatmul.mubr.f32.gmra.mrb[0].mxu0 %v5982
    %v6473 = vpop.f32.mrb[0].mxu0
    %v6474 = vadd.f32 0.0, %v6473
    %v6475 = vpop.f32.mrb[0].mxu0
    %6476 = vmatprep.mubr.f32.mxu0 0.0
    %6477 = vmatmul.mubr.f32.gmra.mrb[0].mxu0 %v5985
    %v6478 = vpop.f32.mrb[0].mxu0
    %v6479 = vadd.f32 0.0, %v6478
    %v6480 = vpop.f32.mrb[0].mxu0
    %6481 = vmatprep.mubr.f32.mxu0 0.0
    %6482 = vmatmul.mubr.f32.gmra.mrb[0].mxu0 %v5988
    %v6483 = vpop.f32.mrb[0].mxu0
    %v6484 = vadd.f32 0.0, %v6483
    %v6485 = vpop.f32.mrb[0].mxu0
    %6486 = vdwg.mxu0
    %v6487 = vadd.f32 %v3976, %v6469
    %v6488 = vadd.f32 %v3981, %v6474
    %v6489 = vadd.f32 %v3986, %v6479
    %v6490 = vadd.f32 %v3991, %v6484
    %s6491 = scalar_lea.vmem [#allocation2], 448
    %v6492 = vld [vmem:[%s6491] sm:$0xff]
    %v6493 = vld [vmem:[%s6491 + $0x8] sm:$0xff]
    %v6494 = vld [vmem:[%s6491 + $0x10] sm:$0xff]
    %v6495 = vld [vmem:[%s6491 + $0x18] sm:$0xff]
    %v6496 = vld [vmem:[%s12 + $0xb] sm:$0x1]
    %v6497 = vlaneseq
    %v6498 = vshrl.u32 %v6497, 7
    %v6499 = vsub.s32 0, %v6498
    %v6500 = vrot.slane %v6496, %v6499
    %v6502 = vsel %vm75, %v6487, 0
    %v6505 = vsel %vm75, %v6488, 0
    %v6508 = vsel %vm75, %v6489, 0
    %v6511 = vsel %vm75, %v6490, 0
    %6513 = vmatprep.subr.mxu0 0.0
    %6514 = vmatpush1.msra.mxu0 %v6492
    %6515 = vmatprep.subr.mxu0 0.0
    %6516 = vmatpush1.msra.mxu0 %v6493
    %6517 = vmatprep.subr.mxu0 0.0
    %6518 = vmatpush1.msra.mxu0 %v6494
    %6519 = vmatprep.subr.mxu0 0.0
    %6520 = vmatpush1.msra.mxu0 %v6495
    %6521 = vmatprep.subr.mxu0 0.0
    %6522 = vmatpush1.msra.mxu0 0.0
    %6523 = vmatprep.subr.mxu0 0.0
    %6524 = vmatpush1.msra.mxu0 0.0
    %6525 = vmatprep.subr.mxu0 0.0
    %6526 = vmatpush1.msra.mxu0 0.0
    %6527 = vmatprep.subr.mxu0 0.0
    %6528 = vmatpush1.msra.mxu0 0.0
    %6529 = vmatprep.subr.mxu0 0.0
    %6530 = vmatpush1.msra.mxu0 0.0
    %6531 = vmatprep.subr.mxu0 0.0
    %6532 = vmatpush1.msra.mxu0 0.0
    %6533 = vmatprep.subr.mxu0 0.0
    %6534 = vmatpush1.msra.mxu0 0.0
    %6535 = vmatprep.subr.mxu0 0.0
    %6536 = vmatpush1.msra.mxu0 0.0
    %6537 = vmatprep.subr.mxu0 0.0
    %6538 = vmatpush1.msra.mxu0 0.0
    %6539 = vmatprep.subr.mxu0 0.0
    %6540 = vmatpush1.msra.mxu0 0.0
    %6541 = vmatprep.subr.mxu0 0.0
    %6542 = vmatpush1.msra.mxu0 0.0
    %6543 = vmatprep.subr.mxu0 0.0
    %6544 = vmatpush1.msra.mxu0 0.0
    %6545 = vmatprep.subr.mxu0 0.0
    %6546 = vmatpush1.msra.mxu0 0.0
    %6547 = vmatprep.subr.mxu0 0.0
    %6548 = vmatpush1.msra.mxu0 0.0
    %6549 = vmatprep.subr.mxu0 0.0
    %6550 = vmatpush1.msra.mxu0 0.0
    %6551 = vmatprep.subr.mxu0 0.0
    %6552 = vmatpush1.msra.mxu0 0.0
    %6553 = vmatprep.subr.mxu0 0.0
    %6554 = vmatpush1.msra.mxu0 0.0
    %6555 = vmatprep.subr.mxu0 0.0
    %6556 = vmatpush1.msra.mxu0 0.0
    %6557 = vmatprep.subr.mxu0 0.0
    %6558 = vmatpush1.msra.mxu0 0.0
    %6559 = vmatprep.subr.mxu0 0.0
    %6560 = vmatpush1.msra.mxu0 0.0
    %6561 = vmatprep.subr.mxu0 0.0
    %6562 = vmatpush1.msra.mxu0 0.0
    %6563 = vmatprep.subr.mxu0 0.0
    %6564 = vmatpush1.msra.mxu0 0.0
    %6565 = vmatprep.subr.mxu0 0.0
    %6566 = vmatpush1.msra.mxu0 0.0
    %6567 = vmatprep.subr.mxu0 0.0
    %6568 = vmatpush1.msra.mxu0 0.0
    %6569 = vmatprep.subr.mxu0 0.0
    %6570 = vmatpush1.msra.mxu0 0.0
    %6571 = vmatprep.subr.mxu0 0.0
    %6572 = vmatpush1.msra.mxu0 0.0
    %6573 = vmatprep.subr.mxu0 0.0
    %6574 = vmatpush1.msra.mxu0 0.0
    %6575 = vmatprep.subr.mxu0 0.0
    %6576 = vmatpush1.msra.mxu0 0.0
    %6577 = vmatprep.mubr.f32.mxu0 0.0
    %6578 = vmatmul.mubr.f32.gmra.mrb[0].mxu0 %v6502
    %v6579 = vpop.f32.mrb[0].mxu0
    %v6580 = vadd.f32 %v6500, %v6579
    %v6581 = vpop.f32.mrb[0].mxu0
    %6582 = vmatprep.mubr.f32.mxu0 0.0
    %6583 = vmatmul.mubr.f32.gmra.mrb[0].mxu0 %v6505
    %v6584 = vpop.f32.mrb[0].mxu0
    %v6585 = vadd.f32 %v6500, %v6584
    %v6586 = vpop.f32.mrb[0].mxu0
    %6587 = vmatprep.mubr.f32.mxu0 0.0
    %6588 = vmatmul.mubr.f32.gmra.mrb[0].mxu0 %v6508
    %v6589 = vpop.f32.mrb[0].mxu0
    %v6590 = vadd.f32 %v6500, %v6589
    %v6591 = vpop.f32.mrb[0].mxu0
    %6592 = vmatprep.mubr.f32.mxu0 0.0
    %6593 = vmatmul.mubr.f32.gmra.mrb[0].mxu0 %v6511
    %v6594 = vpop.f32.mrb[0].mxu0
    %v6595 = vadd.f32 %v6500, %v6594
    %v6596 = vpop.f32.mrb[0].mxu0
    %6597 = vdwg.mxu0
    %v6598 = vmax.f32 %v6580, 0.0
    %v6599 = vmax.f32 %v6585, 0.0
    %v6600 = vmax.f32 %v6590, 0.0
    %v6601 = vmax.f32 %v6595, 0.0
    %s6602 = scalar_lea.vmem [#allocation2], 480
    %v6603 = vld [vmem:[%s6602] sm:$0xff]
    %v6604 = vld [vmem:[%s6602 + $0x8] sm:$0xff]
    %v6605 = vld [vmem:[%s6602 + $0x10] sm:$0xff]
    %v6606 = vld [vmem:[%s6602 + $0x18] sm:$0xff]
    %v6607 = vld [vmem:[%s12 + $0xc] sm:$0x1]
    %v6608 = vlaneseq
    %v6609 = vshrl.u32 %v6608, 7
    %v6610 = vsub.s32 0, %v6609
    %v6611 = vrot.slane %v6607, %v6610
    %v6613 = vsel %vm75, %v6598, 0
    %v6616 = vsel %vm75, %v6599, 0
    %v6619 = vsel %vm75, %v6600, 0
    %v6622 = vsel %vm75, %v6601, 0
    %6624 = vmatprep.subr.mxu0 0.0
    %6625 = vmatpush1.msra.mxu0 %v6603
    %6626 = vmatprep.subr.mxu0 0.0
    %6627 = vmatpush1.msra.mxu0 %v6604
    %6628 = vmatprep.subr.mxu0 0.0
    %6629 = vmatpush1.msra.mxu0 %v6605
    %6630 = vmatprep.subr.mxu0 0.0
    %6631 = vmatpush1.msra.mxu0 %v6606
    %6632 = vmatprep.subr.mxu0 0.0
    %6633 = vmatpush1.msra.mxu0 0.0
    %6634 = vmatprep.subr.mxu0 0.0
    %6635 = vmatpush1.msra.mxu0 0.0
    %6636 = vmatprep.subr.mxu0 0.0
    %6637 = vmatpush1.msra.mxu0 0.0
    %6638 = vmatprep.subr.mxu0 0.0
    %6639 = vmatpush1.msra.mxu0 0.0
    %6640 = vmatprep.subr.mxu0 0.0
    %6641 = vmatpush1.msra.mxu0 0.0
    %6642 = vmatprep.subr.mxu0 0.0
    %6643 = vmatpush1.msra.mxu0 0.0
    %6644 = vmatprep.subr.mxu0 0.0
    %6645 = vmatpush1.msra.mxu0 0.0
    %6646 = vmatprep.subr.mxu0 0.0
    %6647 = vmatpush1.msra.mxu0 0.0
    %6648 = vmatprep.subr.mxu0 0.0
    %6649 = vmatpush1.msra.mxu0 0.0
    %6650 = vmatprep.subr.mxu0 0.0
    %6651 = vmatpush1.msra.mxu0 0.0
    %6652 = vmatprep.subr.mxu0 0.0
    %6653 = vmatpush1.msra.mxu0 0.0
    %6654 = vmatprep.subr.mxu0 0.0
    %6655 = vmatpush1.msra.mxu0 0.0
    %6656 = vmatprep.subr.mxu0 0.0
    %6657 = vmatpush1.msra.mxu0 0.0
    %6658 = vmatprep.subr.mxu0 0.0
    %6659 = vmatpush1.msra.mxu0 0.0
    %6660 = vmatprep.subr.mxu0 0.0
    %6661 = vmatpush1.msra.mxu0 0.0
    %6662 = vmatprep.subr.mxu0 0.0
    %6663 = vmatpush1.msra.mxu0 0.0
    %6664 = vmatprep.subr.mxu0 0.0
    %6665 = vmatpush1.msra.mxu0 0.0
    %6666 = vmatprep.subr.mxu0 0.0
    %6667 = vmatpush1.msra.mxu0 0.0
    %6668 = vmatprep.subr.mxu0 0.0
    %6669 = vmatpush1.msra.mxu0 0.0
    %6670 = vmatprep.subr.mxu0 0.0
    %6671 = vmatpush1.msra.mxu0 0.0
    %6672 = vmatprep.subr.mxu0 0.0
    %6673 = vmatpush1.msra.mxu0 0.0
    %6674 = vmatprep.subr.mxu0 0.0
    %6675 = vmatpush1.msra.mxu0 0.0
    %6676 = vmatprep.subr.mxu0 0.0
    %6677 = vmatpush1.msra.mxu0 0.0
    %6678 = vmatprep.subr.mxu0 0.0
    %6679 = vmatpush1.msra.mxu0 0.0
    %6680 = vmatprep.subr.mxu0 0.0
    %6681 = vmatpush1.msra.mxu0 0.0
    %6682 = vmatprep.subr.mxu0 0.0
    %6683 = vmatpush1.msra.mxu0 0.0
    %6684 = vmatprep.subr.mxu0 0.0
    %6685 = vmatpush1.msra.mxu0 0.0
    %6686 = vmatprep.subr.mxu0 0.0
    %6687 = vmatpush1.msra.mxu0 0.0
    %6688 = vmatprep.mubr.f32.mxu0 0.0
    %6689 = vmatmul.mubr.f32.gmra.mrb[0].mxu0 %v6613
    %v6690 = vpop.f32.mrb[0].mxu0
    %v6691 = vadd.f32 %v6611, %v6690
    %v6692 = vpop.f32.mrb[0].mxu0
    %6693 = vmatprep.mubr.f32.mxu0 0.0
    %6694 = vmatmul.mubr.f32.gmra.mrb[0].mxu0 %v6616
    %v6695 = vpop.f32.mrb[0].mxu0
    %v6696 = vadd.f32 %v6611, %v6695
    %v6697 = vpop.f32.mrb[0].mxu0
    %6698 = vmatprep.mubr.f32.mxu0 0.0
    %6699 = vmatmul.mubr.f32.gmra.mrb[0].mxu0 %v6619
    %v6700 = vpop.f32.mrb[0].mxu0
    %v6701 = vadd.f32 %v6611, %v6700
    %v6702 = vpop.f32.mrb[0].mxu0
    %6703 = vmatprep.mubr.f32.mxu0 0.0
    %6704 = vmatmul.mubr.f32.gmra.mrb[0].mxu0 %v6622
    %v6705 = vpop.f32.mrb[0].mxu0
    %v6706 = vadd.f32 %v6611, %v6705
    %v6707 = vpop.f32.mrb[0].mxu0
    %6708 = vdwg.mxu0
    %v6709 = vadd.f32 %v6487, %v6691
    %v6710 = vadd.f32 %v6488, %v6696
    %v6711 = vadd.f32 %v6489, %v6701
    %v6712 = vadd.f32 %v6490, %v6706
    %6713 = vst.msk [vmem:[#allocation5] sm:$0xff] %vm75, %v6709
    %6714 = vst.msk [vmem:[#allocation5 + $0x8] sm:$0xff] %vm75, %v6710
    %6715 = vst.msk [vmem:[#allocation5 + $0x10] sm:$0xff] %vm75, %v6711
    %6716 = vst.msk [vmem:[#allocation5 + $0x18] sm:$0xff] %vm75, %v6712
    // Predicated region
    $region66: #{route_encoder_layer.1} parent=1 // pred_check
      _
    $region67: #{route_encoder_layer.1} parent=1 // pred_check_branch
      %6718 = sbr.rel (0) target = $region69
    $region68: #{route_encoder_layer.1} parent=1 // pred_region
      %s6720 = ssub.s32 512, 512
      %6721 = vsyncadd [#allocation4], %s6720
      %s6722 = sshll.u32 [#allocation5], 4
      %s6723 = int_to_ptr.vmem [resolvable:$true] %s6722
      %6728 = dma.vmem_to_hbm [thread:$0]  %s6723, 512, %s15, [#allocation4], 128, 128, 8
    $region69: #{route_encoder_layer.1} parent=1 // pred_fallthru
      _
    // Predicated region
    $region70: #{route_encoder_layer.1} parent=1 // pred_check
      _
    $region71: #{route_encoder_layer.1} parent=1 // pred_check_branch
      %6730 = sbr.rel (0) target = $region73
    $region72: #{route_encoder_layer.1} parent=1 // pred_region
      %6731 = dma.done [#allocation4], 512
    $region73: #{route_encoder_layer.1} parent=1 // pred_fallthru
      _
    %6732 = vsyncpa [#allocation3], 1
    %6733 = vsyncpa [#allocation4], 1

</llo_original>
